<compile_context>
chip_gen: v5e
topology: v5e:2x2
jax: 0.10.0
libtpu: 0.0.40
codegen_flags: <defaults>
</compile_context>

<pallas_src>
import functools
import math

import numpy as np
import jax
import jax.numpy as jnp
from jax import lax
from jax.experimental import pallas as pl
from jax.experimental.pallas import tpu as pltpu


def _round_up(x, m):
    return (x + m - 1) // m * m


# ----------------------------- in-kernel helpers -----------------------------

def _layernorm(x, w, b, eps=1e-6):
    mu = jnp.mean(x, axis=-1, keepdims=True)
    var = jnp.mean((x - mu) ** 2, axis=-1, keepdims=True)
    return (x - mu) * lax.rsqrt(var + eps) * w + b


def _gelu(x):
    # TODO(synk): PyTorch nn.GELU default is the exact erf form; Mosaic has no
    # guaranteed erf lowering, so the tanh approximation is used here.
    c = math.sqrt(2.0 / math.pi)
    return 0.5 * x * (1.0 + jnp.tanh(c * (x + 0.044715 * x * x * x)))


def _bf16(x):
    return x.astype(jnp.bfloat16)


def _vit_block(x, wq, wk, wv, wo, w1, w2, vec_ref, base, *, Sp, S_real, D, H, Hd):
    """Pre-LN ViT block on a [Sp, D] token slab (single image).

    Padded tokens (index >= S_real) are masked out as attention *keys*; their
    own (query) rows carry garbage that is never read.
    """
    dh = D // H
    scale = 1.0 / math.sqrt(dh)

    ln1w = vec_ref[base + 0:base + 1, :D]
    ln1b = vec_ref[base + 1:base + 2, :D]
    bq = vec_ref[base + 2:base + 3, :D]
    bk = vec_ref[base + 3:base + 4, :D]
    bv = vec_ref[base + 4:base + 5, :D]
    bo = vec_ref[base + 5:base + 6, :D]
    ln2w = vec_ref[base + 6:base + 7, :D]
    ln2b = vec_ref[base + 7:base + 8, :D]
    b1 = vec_ref[base + 8:base + 9, :Hd]
    b2 = vec_ref[base + 9:base + 10, :D]

    # ---------------- multi-head self-attention ----------------
    h = _layernorm(x, ln1w, ln1b)
    hb = _bf16(h)
    q = (jnp.dot(hb, wq, preferred_element_type=jnp.float32) + bq).reshape(Sp, H, dh)
    k = (jnp.dot(hb, wk, preferred_element_type=jnp.float32) + bk).reshape(Sp, H, dh)
    v = (jnp.dot(hb, wv, preferred_element_type=jnp.float32) + bv).reshape(Sp, H, dh)

    # additive key-padding bias: 0 for real tokens, -1e30 for pad tokens.
    kidx = lax.broadcasted_iota(jnp.int32, (1, 1, Sp), 2)
    kbias = jnp.where(kidx < S_real, 0.0, -1e30).astype(jnp.float32)      # (1,1,Sp)

    s = jnp.einsum("qhd,khd->hqk", _bf16(q), _bf16(k),
                   preferred_element_type=jnp.float32) * scale + kbias    # (H,Sp,Sp)
    mx = jnp.max(s, axis=-1, keepdims=True)
    e = jnp.exp(s - mx)
    p = e * pl.reciprocal(jnp.sum(e, axis=-1, keepdims=True), approx=True)
    o = jnp.einsum("hqk,khd->qhd", _bf16(p), _bf16(v),
                   preferred_element_type=jnp.float32)                    # (Sp,H,dh)
    attn = jnp.dot(_bf16(o.reshape(Sp, D)), wo,
                   preferred_element_type=jnp.float32) + bo
    x = x + attn

    # ---------------- MLP ----------------
    h2 = _layernorm(x, ln2w, ln2b)
    m1 = _gelu(jnp.dot(_bf16(h2), w1, preferred_element_type=jnp.float32) + b1)
    m2 = jnp.dot(_bf16(m1), w2, preferred_element_type=jnp.float32) + b2
    return x + m2


# ------------------------------- fused kernels --------------------------------

def encoder_kernel(x_ref, add_ref, pw_ref, aw_ref, w1_ref, w2_ref, vec_ref,
                   e2dw_ref, out_ref, *, n_blocks, n_heads, Sp, S_real, D, Hd, OW):
    """patch-embed + cls/PE add + encoder blocks + encoder LN + enc->dec linear."""
    # `add` already carries (pos-embed + patch bias) for visible-patch rows and
    # (cls_token + pe[0]) for row 0 (whose pixel input is exactly zero).
    x = jnp.dot(_bf16(x_ref[0]), pw_ref[...],
                preferred_element_type=jnp.float32) + add_ref[0]          # (Sp, D)
    for blk in range(n_blocks):
        x = _vit_block(x, aw_ref[blk, 0], aw_ref[blk, 1], aw_ref[blk, 2],
                       aw_ref[blk, 3], w1_ref[blk], w2_ref[blk],
                       vec_ref, blk * 10,
                       Sp=Sp, S_real=S_real, D=D, H=n_heads, Hd=Hd)
    base = n_blocks * 10
    x = _layernorm(x, vec_ref[base:base + 1, :D], vec_ref[base + 1:base + 2, :D])
    e2db = vec_ref[base + 2:base + 3, :OW]
    # enc->dec weight is zero-padded to OW=128 lanes -> lane-dense unmasked store.
    out_ref[0] = jnp.dot(_bf16(x), e2dw_ref[...],
                         preferred_element_type=jnp.float32) + e2db


def decoder_kernel(y_ref, aw_ref, w1_ref, w2_ref, vec_ref, predw_ref, t_ref,
                   m_ref, pred_ref, parts_ref, *, n_blocks, n_heads, Sp, S_real,
                   D, Hd, OW, L):
    """decoder blocks + decoder LN + pixel prediction + masked normalized-MSE partials."""
    y = y_ref[0]                                                          # (Sp, D)
    for blk in range(n_blocks):
        y = _vit_block(y, aw_ref[blk, 0], aw_ref[blk, 1], aw_ref[blk, 2],
                       aw_ref[blk, 3], w1_ref[blk], w2_ref[blk],
                       vec_ref, blk * 10,
                       Sp=Sp, S_real=S_real, D=D, H=n_heads, Hd=Hd)
    base = n_blocks * 10
    y = _layernorm(y, vec_ref[base:base + 1, :D], vec_ref[base + 1:base + 2, :D])
    predb = vec_ref[base + 2:base + 3, :OW]
    pred = jnp.dot(_bf16(y), predw_ref[...],
                   preferred_element_type=jnp.float32) + predb            # (Sp, OW)
    pred_ref[0] = pred

    # normalized-pixel masked MSE. Targets are zero-padded to OW lanes and
    # pred's padding lanes are exactly zero (zero-padded weight/bias columns),
    # so lane-dense sums over OW equal the true sums over L.
    t = t_ref[0]                                                          # (Sp, OW)
    m = m_ref[0]                                                          # (Sp, 1)
    lmask = lax.broadcasted_iota(jnp.int32, (1, OW), 1) < L
    mu = jnp.sum(t, axis=-1, keepdims=True) * (1.0 / L)
    cen = jnp.where(lmask, t - mu, 0.0)
    var = jnp.sum(cen * cen, axis=-1, keepdims=True) * (1.0 / (L - 1))    # unbiased
    tn = cen * lax.rsqrt(var + 1e-6)
    diff = pred - tn
    mse = jnp.sum(diff * diff, axis=-1, keepdims=True) * (1.0 / L)        # (Sp, 1)
    num = jnp.sum(mse * m, keepdims=True)                                 # (1, 1)
    den = jnp.sum(m, keepdims=True)                                       # (1, 1)
    lidx = lax.broadcasted_iota(jnp.int32, (8, 128), 1)
    parts_ref[0] = jnp.where(lidx == 0, num, 0.0) + jnp.where(lidx == 1, den, 0.0)


# ------------------------------ kernel wrappers --------------------------------

def _const_spec(arr):
    nd = arr.ndim
    return pl.BlockSpec(arr.shape, lambda b: (0,) * nd)


def run_encoder(x_in, add, packed, cfg, B, Sp1, S1):
    De = cfg["enc_dim"]
    Hd = int(cfg["mlp_ratio"] * De)
    CPP = cfg["in_channels"] * cfg["patch_size"] ** 2
    OW = packed["enc_e2d_w"].shape[-1]
    kern = functools.partial(encoder_kernel, n_blocks=cfg["enc_depth"],
                             n_heads=cfg["enc_heads"], Sp=Sp1, S_real=S1,
                             D=De, Hd=Hd, OW=OW)
    return pl.pallas_call(
        kern,
        grid=(B,),
        in_specs=[
            pl.BlockSpec((1, Sp1, CPP), lambda b: (b, 0, 0)),
            pl.BlockSpec((1, Sp1, De), lambda b: (b, 0, 0)),
            _const_spec(packed["patch_w"]),
            _const_spec(packed["enc_attn_w"]),
            _const_spec(packed["enc_w1"]),
            _const_spec(packed["enc_w2"]),
            _const_spec(packed["enc_vecs"]),
            _const_spec(packed["enc_e2d_w"]),
        ],
        out_specs=pl.BlockSpec((1, Sp1, OW), lambda b: (b, 0, 0)),
        out_shape=jax.ShapeDtypeStruct((B, Sp1, OW), jnp.float32),
        compiler_params=pltpu.CompilerParams(dimension_semantics=("parallel",)),
    )(x_in, add, packed["patch_w"], packed["enc_attn_w"], packed["enc_w1"],
      packed["enc_w2"], packed["enc_vecs"], packed["enc_e2d_w"])


def run_decoder(y_in, t_pad, m_pad, packed, cfg, B, Sp2, S2):
    Dd = cfg["dec_dim"]
    Hd = int(cfg["mlp_ratio"] * Dd)
    L = cfg["patch_size"] ** 2 * cfg["in_channels"]
    OW = packed["pred_w"].shape[-1]
    kern = functools.partial(decoder_kernel, n_blocks=cfg["dec_depth"],
                             n_heads=cfg["dec_heads"], Sp=Sp2, S_real=S2,
                             D=Dd, Hd=Hd, OW=OW, L=L)
    return pl.pallas_call(
        kern,
        grid=(B,),
        in_specs=[
            pl.BlockSpec((1, Sp2, Dd), lambda b: (b, 0, 0)),
            _const_spec(packed["dec_attn_w"]),
            _const_spec(packed["dec_w1"]),
            _const_spec(packed["dec_w2"]),
            _const_spec(packed["dec_vecs"]),
            _const_spec(packed["pred_w"]),
            pl.BlockSpec((1, Sp2, OW), lambda b: (b, 0, 0)),
            pl.BlockSpec((1, Sp2, 1), lambda b: (b, 0, 0)),
        ],
        out_specs=(pl.BlockSpec((1, Sp2, OW), lambda b: (b, 0, 0)),
                   pl.BlockSpec((1, 8, 128), lambda b: (b, 0, 0))),
        out_shape=(jax.ShapeDtypeStruct((B, Sp2, OW), jnp.float32),
                   jax.ShapeDtypeStruct((B, 8, 128), jnp.float32)),
        compiler_params=pltpu.CompilerParams(dimension_semantics=("parallel",)),
    )(y_in, packed["dec_attn_w"], packed["dec_w1"], packed["dec_w2"],
      packed["dec_vecs"], packed["pred_w"], t_pad, m_pad)


# ------------------------------ parameter setup --------------------------------

def xavier_uniform(key, fan_in, fan_out):
    bound = math.sqrt(6.0 / (fan_in + fan_out))
    return jax.random.uniform(key, (fan_in, fan_out), jnp.float32, -bound, bound)


def get_2d_sincos_pe(embed_dim, grid_size, cls_token=True):
    def sincos_1d(dim, pos):
        omega = np.arange(dim // 2, dtype=np.float64) / (dim / 2.0)
        omega = 1.0 / (10000.0 ** omega)
        out = np.einsum("m,d->md", pos, omega)
        return np.concatenate([np.sin(out), np.cos(out)], axis=1)

    grid_h = np.arange(grid_size, dtype=np.float64)
    grid_w = np.arange(grid_size, dtype=np.float64)
    grid = np.stack(np.meshgrid(grid_w, grid_h), axis=0).reshape(2, -1)
    emb = np.concatenate([sincos_1d(embed_dim // 2, grid[0]),
                          sincos_1d(embed_dim // 2, grid[1])], axis=1)
    if cls_token:
        emb = np.concatenate([np.zeros((1, embed_dim)), emb], axis=0)
    return jnp.asarray(emb, dtype=jnp.float32)[None]          # [1, N(+1), D]


def init_block(key, dim, mlp_ratio):
    hdim = int(mlp_ratio * dim)
    ks = jax.random.split(key, 4)
    return {
        "ln1_w": jnp.ones((dim,), jnp.float32),
        "ln1_b": jnp.zeros((dim,), jnp.float32),
        "w_qkv": xavier_uniform(ks[0], dim, 3 * dim),
        "b_qkv": jnp.zeros((3 * dim,), jnp.float32),
        "w_proj": xavier_uniform(ks[1], dim, dim),
        "b_proj": jnp.zeros((dim,), jnp.float32),
        "ln2_w": jnp.ones((dim,), jnp.float32),
        "ln2_b": jnp.zeros((dim,), jnp.float32),
        "w_fc1": xavier_uniform(ks[2], dim, hdim),
        "b_fc1": jnp.zeros((hdim,), jnp.float32),
        "w_fc2": xavier_uniform(ks[3], hdim, dim),
        "b_fc2": jnp.zeros((dim,), jnp.float32),
    }


def init_vmvp_params(key, cfg):
    C, P = cfg["in_channels"], cfg["patch_size"]
    De, Dd, N = cfg["enc_dim"], cfg["dec_dim"], cfg["num_patches"]
    grid = int(N ** 0.5)
    ks = list(jax.random.split(key, 6 + cfg["enc_depth"] + cfg["dec_depth"]))
    it = iter(ks)

    params = {
        "cls_token": 0.02 * jax.random.normal(next(it), (1, 1, De), jnp.float32),
        "mask_token": 0.02 * jax.random.normal(next(it), (1, 1, Dd), jnp.float32),
        # PatchEmbed conv (kernel == stride == P) == linear over flattened (c, ph, pw)
        "patch_w": xavier_uniform(next(it), C * P * P, De),
        "patch_b": jnp.zeros((De,), jnp.float32),
        "encoder_pe": get_2d_sincos_pe(De, grid, cls_token=True),
        "decoder_pe": get_2d_sincos_pe(Dd, grid, cls_token=True),
        "enc_ln_w": jnp.ones((De,), jnp.float32),
        "enc_ln_b": jnp.zeros((De,), jnp.float32),
        "dec_ln_w": jnp.ones((Dd,), jnp.float32),
        "dec_ln_b": jnp.zeros((Dd,), jnp.float32),
    }
    params["encoder_blocks"] = [init_block(next(it), De, cfg["mlp_ratio"])
                                for _ in range(cfg["enc_depth"])]
    params["decoder_blocks"] = [init_block(next(it), Dd, cfg["mlp_ratio"])
                                for _ in range(cfg["dec_depth"])]
    params["e2d_w"] = xavier_uniform(next(it), De, Dd)
    params["e2d_b"] = jnp.zeros((Dd,), jnp.float32)
    params["pred_w"] = xavier_uniform(next(it), Dd, P * P * C)
    params["pred_b"] = jnp.zeros((P * P * C,), jnp.float32)
    return params


def _pad_row(v, width):
    v = jnp.asarray(v, jnp.float32).reshape(-1)
    return jnp.zeros((width,), jnp.float32).at[: v.shape[0]].set(v)


def _pad_cols(w, width):
    return jnp.zeros((w.shape[0], width), w.dtype).at[:, : w.shape[1]].set(w)


def pack_vmvp_params(params, cfg):
    """One-time bf16 cast + slab packing of all kernel weights (done outside jit)."""
    De, Dd = cfg["enc_dim"], cfg["dec_dim"]
    P, C = cfg["patch_size"], cfg["in_channels"]
    L = P * P * C
    HdE, HdD = int(cfg["mlp_ratio"] * De), int(cfg["mlp_ratio"] * Dd)
    OW1, OW2 = _round_up(Dd, 128), _round_up(L, 128)
    roww = max(_round_up(max(De, Dd, HdE, HdD), 128), OW1, OW2)

    def pack_blocks(blocks, D, extra_rows):
        aw, w1s, w2s, rows = [], [], [], []
        for bp in blocks:
            wq, wk, wv = bp["w_qkv"][:, :D], bp["w_qkv"][:, D:2 * D], bp["w_qkv"][:, 2 * D:]
            bq, bk, bv = bp["b_qkv"][:D], bp["b_qkv"][D:2 * D], bp["b_qkv"][2 * D:]
            aw.append(jnp.stack([wq, wk, wv, bp["w_proj"]]))
            w1s.append(bp["w_fc1"])
            w2s.append(bp["w_fc2"])
            for v in (bp["ln1_w"], bp["ln1_b"], bq, bk, bv, bp["b_proj"],
                      bp["ln2_w"], bp["ln2_b"], bp["b_fc1"], bp["b_fc2"]):
                rows.append(_pad_row(v, roww))
        rows += [_pad_row(v, roww) for v in extra_rows]
        return (jnp.stack(aw).astype(jnp.bfloat16),
                jnp.stack(w1s).astype(jnp.bfloat16),
                jnp.stack(w2s).astype(jnp.bfloat16),
                jnp.stack(rows))

    enc_aw, enc_w1, enc_w2, enc_vecs = pack_blocks(
        params["encoder_blocks"], De,
        [params["enc_ln_w"], params["enc_ln_b"], params["e2d_b"]])
    dec_aw, dec_w1, dec_w2, dec_vecs = pack_blocks(
        params["decoder_blocks"], Dd,
        [params["dec_ln_w"], params["dec_ln_b"], params["pred_b"]])

    return {
        "patch_w": params["patch_w"].astype(jnp.bfloat16),
        "patch_b": params["patch_b"],
        "cls_token": params["cls_token"],
        "mask_token": params["mask_token"],
        "encoder_pe": params["encoder_pe"],
        "decoder_pe": params["decoder_pe"],
        "enc_attn_w": enc_aw, "enc_w1": enc_w1, "enc_w2": enc_w2, "enc_vecs": enc_vecs,
        "enc_e2d_w": _pad_cols(params["e2d_w"], OW1).astype(jnp.bfloat16),
        "dec_attn_w": dec_aw, "dec_w1": dec_w1, "dec_w2": dec_w2, "dec_vecs": dec_vecs,
        "pred_w": _pad_cols(params["pred_w"], OW2).astype(jnp.bfloat16),
    }


# --------------------------------- glue ops ------------------------------------

def patchify_embed_order(imgs, P):
    # NCHW -> [B, N, C*P*P]; flatten order (c, ph, pw) matches Conv2d weight.view(D, -1)
    B, C, H, W = imgs.shape
    x = imgs.reshape(B, C, H // P, P, W // P, P)
    x = x.transpose(0, 2, 4, 1, 3, 5)
    return x.reshape(B, (H // P) * (W // P), C * P * P)


def patchify_loss_order(imgs, P):
    # matches rearrange 'b c (h ph) (w pw) -> b (h w) (ph pw c)'
    B, C, H, W = imgs.shape
    x = imgs.reshape(B, C, H // P, P, W // P, P)
    x = x.transpose(0, 2, 4, 3, 5, 1)
    return x.reshape(B, (H // P) * (W // P), P * P * C)


def vmvp_forward(packed, imgs, mask_key, cfg):
    B = imgs.shape[0]
    P, C, N = cfg["patch_size"], cfg["in_channels"], cfg["num_patches"]
    De, Dd = cfg["enc_dim"], cfg["dec_dim"]
    L = P * P * C
    CPP = C * P * P
    n_keep = int(N * (1 - cfg["mask_ratio"]))
    S1, S2 = 1 + n_keep, 1 + N
    Sp1, Sp2 = _round_up(S1, 8), _round_up(S2, 8)
    OW2 = packed["pred_w"].shape[-1]

    # ---------------- random masking (plain JAX glue) ----------------
    noise = jax.random.uniform(mask_key, (B, N))
    shuffle_idxs = jnp.argsort(noise, axis=1)
    restore_idxs = jnp.argsort(shuffle_idxs, axis=1)
    keep_idxs = shuffle_idxs[:, :n_keep]
    mask = jnp.ones((B, N), jnp.float32).at[:, :n_keep].set(0.0)
    mask = jnp.take_along_axis(mask, restore_idxs, axis=1)

    # ---------------- fused encoder kernel inputs ----------------
    patches_flat = patchify_embed_order(imgs, P)                      # [B, N, CPP]
    vis_flat = jnp.take_along_axis(patches_flat, keep_idxs[:, :, None], axis=1)
    enc_pe = packed["encoder_pe"]                                     # [1, N+1, De]
    vis_pe = jnp.take(enc_pe[0, 1:, :], keep_idxs, axis=0)            # [B, nk, De]
    cls_add = packed["cls_token"][0] + enc_pe[:, 0, :]                # [1, De]

    # row 0 = cls (zero pixels, cls_token+pe additive); rows 1..S1-1 = visible
    # patches (pe + patch bias additive); rows S1..Sp1-1 = zero padding.
    x_in = jnp.zeros((B, Sp1, CPP), jnp.float32).at[:, 1:S1, :].set(vis_flat)
    add = jnp.zeros((B, Sp1, De), jnp.float32)
    add = add.at[:, 0, :].set(jnp.broadcast_to(cls_add, (B, De)))
    add = add.at[:, 1:S1, :].set(vis_pe + packed["patch_b"])

    proj_p = run_encoder(x_in, add, packed, cfg, B, Sp1, S1)          # [B, Sp1, 128]
    proj = proj_p[:, :S1, :Dd]                                        # [B, S1, Dd]

    # ---------------- unshuffle + mask tokens (plain JAX glue) ----------------
    n_mask = N - n_keep
    mask_tokens = jnp.broadcast_to(packed["mask_token"], (B, n_mask, Dd))
    concat = jnp.concatenate([proj[:, 1:, :], mask_tokens], axis=1)   # [B, N, Dd]
    unshuf = jnp.take_along_axis(concat, restore_idxs[..., None], axis=1)
    y0 = jnp.concatenate([proj[:, :1, :], unshuf], axis=1) + packed["decoder_pe"]

    targets = patchify_loss_order(imgs, P)                            # [B, N, L]
    y0p = jnp.zeros((B, Sp2, Dd), jnp.float32).at[:, :S2, :].set(y0)
    t_pad = jnp.zeros((B, Sp2, OW2), jnp.float32).at[:, 1:S2, :L].set(targets)
    m_pad = jnp.zeros((B, Sp2, 1), jnp.float32).at[:, 1:S2, 0].set(mask)

    pred_p, parts = run_decoder(y0p, t_pad, m_pad, packed, cfg, B, Sp2, S2)
    recon = pred_p[:, 1:S2, :L]                                       # [B, N, L]
    loss = jnp.sum(parts[:, 0, 0]) / jnp.sum(parts[:, 0, 1])          # exact divide
    return loss, recon, mask


# ----------------------------------- main ---------------------------------------

if __name__ == "__main__":
    cfg = dict(resolution=16, patch_size=4, in_channels=3,
               enc_dim=32, enc_heads=4, enc_depth=2,
               dec_dim=32, dec_heads=4, dec_depth=1,
               mlp_ratio=4.0, mask_ratio=0.75)
    cfg["num_patches"] = (cfg["resolution"] // cfg["patch_size"]) ** 2

    key = jax.random.PRNGKey(0)
    k_params, k_img, k_mask = jax.random.split(key, 3)
    params = init_vmvp_params(k_params, cfg)
    packed = pack_vmvp_params(params, cfg)     # one-time bf16 cast + slab packing
    imgs = jax.random.normal(
        k_img, (2, cfg["in_channels"], cfg["resolution"], cfg["resolution"]),
        dtype=jnp.float32)

    fwd = jax.jit(lambda pk, im, k: vmvp_forward(pk, im, k, cfg))
    loss, recon, mask = fwd(packed, imgs, k_mask)
    jax.block_until_ready((loss, recon, mask))

    assert recon.shape == (2, cfg["num_patches"],
                           cfg["patch_size"] ** 2 * cfg["in_channels"])
    assert mask.shape == (2, cfg["num_patches"])
    assert bool(jnp.isfinite(loss))
    print("KERNEL_OK")
</pallas_src>

<mosaic_0001>
module attributes {stable_mosaic.version = 11 : i64} {
  func.func @encoder_kernel(%arg0: i32, %arg1: memref<1x8x48xf32, #tpu.memory_space<vmem>>, %arg2: memref<1x8x32xf32, #tpu.memory_space<vmem>>, %arg3: memref<48x32xbf16, #tpu.memory_space<vmem>>, %arg4: memref<2x4x32x32xbf16, #tpu.memory_space<vmem>>, %arg5: memref<2x32x128xbf16, #tpu.memory_space<vmem>>, %arg6: memref<2x128x32xbf16, #tpu.memory_space<vmem>>, %arg7: memref<23x128xf32, #tpu.memory_space<vmem>>, %arg8: memref<32x128xbf16, #tpu.memory_space<vmem>>, %arg9: memref<1x8x128xf32, #tpu.memory_space<vmem>>) attributes {dimension_semantics = [#tpu.dimension_semantics<parallel>], iteration_bounds = array<i64: 2>, scalar_prefetch = 0 : i64, scratch_operands = 0 : i64, tpu.core_type = #tpu.core_type<tc>, window_params = [{transform_indices = @transform_0, window_bounds = array<i64: 1, 8, 48>}, {transform_indices = @transform_1, window_bounds = array<i64: 1, 8, 32>}, {pipeline_mode = #tpu.pipeline_mode<synchronous>, transform_indices = @transform_2, window_bounds = array<i64: 48, 32>}, {pipeline_mode = #tpu.pipeline_mode<synchronous>, transform_indices = @transform_3, window_bounds = array<i64: 2, 4, 32, 32>}, {pipeline_mode = #tpu.pipeline_mode<synchronous>, transform_indices = @transform_4, window_bounds = array<i64: 2, 32, 128>}, {pipeline_mode = #tpu.pipeline_mode<synchronous>, transform_indices = @transform_5, window_bounds = array<i64: 2, 128, 32>}, {pipeline_mode = #tpu.pipeline_mode<synchronous>, transform_indices = @transform_6, window_bounds = array<i64: 23, 128>}, {pipeline_mode = #tpu.pipeline_mode<synchronous>, transform_indices = @transform_7, window_bounds = array<i64: 32, 128>}, {transform_indices = @transform_8, window_bounds = array<i64: 1, 8, 128>}]} {
    %c0 = arith.constant 0 : index
    %c0_0 = arith.constant 0 : index
    %c0_1 = arith.constant 0 : index
    %0 = vector.load %arg1[%c0, %c0_0, %c0_1] : memref<1x8x48xf32, #tpu.memory_space<vmem>>, vector<1x8x48xf32>
    %1 = vector.shape_cast %0 : vector<1x8x48xf32> to vector<8x48xf32>
    %2 = arith.truncf %1 : vector<8x48xf32> to vector<8x48xbf16>
    %c0_2 = arith.constant 0 : index
    %c0_3 = arith.constant 0 : index
    %3 = vector.load %arg3[%c0_2, %c0_3] : memref<48x32xbf16, #tpu.memory_space<vmem>>, vector<48x32xbf16>
    %cst = arith.constant dense<0.000000e+00> : vector<8x32xf32>
    %4 = tpu.matmul %2, %3, %cst {dimension_numbers = #tpu.dot_dimension_numbers<[1], [0], [0], [1], [0, 0, 1, 1], [], []>} : vector<8x48xbf16>, vector<48x32xbf16>, vector<8x32xf32> -> vector<8x32xf32>
    %c0_4 = arith.constant 0 : index
    %c0_5 = arith.constant 0 : index
    %c0_6 = arith.constant 0 : index
    %5 = vector.load %arg2[%c0_4, %c0_5, %c0_6] : memref<1x8x32xf32, #tpu.memory_space<vmem>>, vector<1x8x32xf32>
    %6 = vector.shape_cast %5 : vector<1x8x32xf32> to vector<8x32xf32>
    %7 = arith.addf %4, %6 : vector<8x32xf32>
    %c0_7 = arith.constant 0 : index
    %c0_8 = arith.constant 0 : index
    %c0_9 = arith.constant 0 : index
    %c0_10 = arith.constant 0 : index
    %8 = vector.load %arg4[%c0_7, %c0_8, %c0_9, %c0_10] : memref<2x4x32x32xbf16, #tpu.memory_space<vmem>>, vector<1x1x32x32xbf16>
    %9 = vector.shape_cast %8 : vector<1x1x32x32xbf16> to vector<32x32xbf16>
    %c0_11 = arith.constant 0 : index
    %c1 = arith.constant 1 : index
    %c0_12 = arith.constant 0 : index
    %c0_13 = arith.constant 0 : index
    %10 = vector.load %arg4[%c0_11, %c1, %c0_12, %c0_13] : memref<2x4x32x32xbf16, #tpu.memory_space<vmem>>, vector<1x1x32x32xbf16>
    %11 = vector.shape_cast %10 : vector<1x1x32x32xbf16> to vector<32x32xbf16>
    %c0_14 = arith.constant 0 : index
    %c2 = arith.constant 2 : index
    %c0_15 = arith.constant 0 : index
    %c0_16 = arith.constant 0 : index
    %12 = vector.load %arg4[%c0_14, %c2, %c0_15, %c0_16] : memref<2x4x32x32xbf16, #tpu.memory_space<vmem>>, vector<1x1x32x32xbf16>
    %13 = vector.shape_cast %12 : vector<1x1x32x32xbf16> to vector<32x32xbf16>
    %c0_17 = arith.constant 0 : index
    %c3 = arith.constant 3 : index
    %c0_18 = arith.constant 0 : index
    %c0_19 = arith.constant 0 : index
    %14 = vector.load %arg4[%c0_17, %c3, %c0_18, %c0_19] : memref<2x4x32x32xbf16, #tpu.memory_space<vmem>>, vector<1x1x32x32xbf16>
    %15 = vector.shape_cast %14 : vector<1x1x32x32xbf16> to vector<32x32xbf16>
    %c0_20 = arith.constant 0 : index
    %c0_21 = arith.constant 0 : index
    %c0_22 = arith.constant 0 : index
    %16 = vector.load %arg5[%c0_20, %c0_21, %c0_22] : memref<2x32x128xbf16, #tpu.memory_space<vmem>>, vector<1x32x128xbf16>
    %17 = vector.shape_cast %16 : vector<1x32x128xbf16> to vector<32x128xbf16>
    %c0_23 = arith.constant 0 : index
    %c0_24 = arith.constant 0 : index
    %c0_25 = arith.constant 0 : index
    %18 = vector.load %arg6[%c0_23, %c0_24, %c0_25] : memref<2x128x32xbf16, #tpu.memory_space<vmem>>, vector<1x128x32xbf16>
    %19 = vector.shape_cast %18 : vector<1x128x32xbf16> to vector<128x32xbf16>
    %c0_26 = arith.constant 0 : index
    %c0_27 = arith.constant 0 : index
    %20 = vector.load %arg7[%c0_26, %c0_27] : memref<23x128xf32, #tpu.memory_space<vmem>>, vector<1x32xf32>
    %c1_28 = arith.constant 1 : index
    %c0_29 = arith.constant 0 : index
    %21 = vector.load %arg7[%c1_28, %c0_29] : memref<23x128xf32, #tpu.memory_space<vmem>>, vector<1x32xf32>
    %c2_30 = arith.constant 2 : index
    %c0_31 = arith.constant 0 : index
    %22 = vector.load %arg7[%c2_30, %c0_31] : memref<23x128xf32, #tpu.memory_space<vmem>>, vector<1x32xf32>
    %c3_32 = arith.constant 3 : index
    %c0_33 = arith.constant 0 : index
    %23 = vector.load %arg7[%c3_32, %c0_33] : memref<23x128xf32, #tpu.memory_space<vmem>>, vector<1x32xf32>
    %c4 = arith.constant 4 : index
    %c0_34 = arith.constant 0 : index
    %24 = vector.load %arg7[%c4, %c0_34] : memref<23x128xf32, #tpu.memory_space<vmem>>, vector<1x32xf32>
    %c5 = arith.constant 5 : index
    %c0_35 = arith.constant 0 : index
    %25 = vector.load %arg7[%c5, %c0_35] : memref<23x128xf32, #tpu.memory_space<vmem>>, vector<1x32xf32>
    %c6 = arith.constant 6 : index
    %c0_36 = arith.constant 0 : index
    %26 = vector.load %arg7[%c6, %c0_36] : memref<23x128xf32, #tpu.memory_space<vmem>>, vector<1x32xf32>
    %c7 = arith.constant 7 : index
    %c0_37 = arith.constant 0 : index
    %27 = vector.load %arg7[%c7, %c0_37] : memref<23x128xf32, #tpu.memory_space<vmem>>, vector<1x32xf32>
    %c8 = arith.constant 8 : index
    %c0_38 = arith.constant 0 : index
    %28 = vector.load %arg7[%c8, %c0_38] : memref<23x128xf32, #tpu.memory_space<vmem>>, vector<1x128xf32>
    %c9 = arith.constant 9 : index
    %c0_39 = arith.constant 0 : index
    %29 = vector.load %arg7[%c9, %c0_39] : memref<23x128xf32, #tpu.memory_space<vmem>>, vector<1x32xf32>
    %cst_40 = arith.constant dense<0.000000e+00> : vector<8xf32>
    %30 = vector.multi_reduction <add>, %7, %cst_40 [1] : vector<8x32xf32> to vector<8xf32>
    %31 = vector.shape_cast %30 : vector<8xf32> to vector<8x1xf32>
    %cst_41 = arith.constant 3.200000e+01 : f32
    %32 = vector.broadcast %cst_41 : f32 to vector<8x1xf32>
    %33 = arith.divf %31, %32 : vector<8x1xf32>
    %34 = vector.broadcast %33 : vector<8x1xf32> to vector<8x32xf32>
    %35 = arith.subf %7, %34 : vector<8x32xf32>
    %36 = arith.mulf %35, %35 : vector<8x32xf32>
    %cst_42 = arith.constant dense<0.000000e+00> : vector<8xf32>
    %37 = vector.multi_reduction <add>, %36, %cst_42 [1] : vector<8x32xf32> to vector<8xf32>
    %38 = vector.shape_cast %37 : vector<8xf32> to vector<8x1xf32>
    %cst_43 = arith.constant 3.200000e+01 : f32
    %39 = vector.broadcast %cst_43 : f32 to vector<8x1xf32>
    %40 = arith.divf %38, %39 : vector<8x1xf32>
    %41 = vector.broadcast %33 : vector<8x1xf32> to vector<8x32xf32>
    %42 = arith.subf %7, %41 : vector<8x32xf32>
    %cst_44 = arith.constant 9.99999997E-7 : f32
    %43 = vector.broadcast %cst_44 : f32 to vector<8x1xf32>
    %44 = arith.addf %40, %43 : vector<8x1xf32>
    %45 = math.rsqrt %44 : vector<8x1xf32>
    %46 = vector.broadcast %45 : vector<8x1xf32> to vector<8x32xf32>
    %47 = arith.mulf %42, %46 : vector<8x32xf32>
    %48 = vector.broadcast %20 : vector<1x32xf32> to vector<8x32xf32>
    %49 = arith.mulf %47, %48 : vector<8x32xf32>
    %50 = vector.broadcast %21 : vector<1x32xf32> to vector<8x32xf32>
    %51 = arith.addf %49, %50 : vector<8x32xf32>
    %52 = arith.truncf %51 : vector<8x32xf32> to vector<8x32xbf16>
    %cst_45 = arith.constant dense<0.000000e+00> : vector<8x32xf32>
    %53 = tpu.matmul %52, %9, %cst_45 {dimension_numbers = #tpu.dot_dimension_numbers<[1], [0], [0], [1], [0, 0, 1, 1], [], []>} : vector<8x32xbf16>, vector<32x32xbf16>, vector<8x32xf32> -> vector<8x32xf32>
    %54 = vector.broadcast %22 : vector<1x32xf32> to vector<8x32xf32>
    %55 = arith.addf %53, %54 : vector<8x32xf32>
    %56 = vector.shape_cast %55 : vector<8x32xf32> to vector<8x4x8xf32>
    %cst_46 = arith.constant dense<0.000000e+00> : vector<8x32xf32>
    %57 = tpu.matmul %52, %11, %cst_46 {dimension_numbers = #tpu.dot_dimension_numbers<[1], [0], [0], [1], [0, 0, 1, 1], [], []>} : vector<8x32xbf16>, vector<32x32xbf16>, vector<8x32xf32> -> vector<8x32xf32>
    %58 = vector.broadcast %23 : vector<1x32xf32> to vector<8x32xf32>
    %59 = arith.addf %57, %58 : vector<8x32xf32>
    %60 = vector.shape_cast %59 : vector<8x32xf32> to vector<8x4x8xf32>
    %cst_47 = arith.constant dense<0.000000e+00> : vector<8x32xf32>
    %61 = tpu.matmul %52, %13, %cst_47 {dimension_numbers = #tpu.dot_dimension_numbers<[1], [0], [0], [1], [0, 0, 1, 1], [], []>} : vector<8x32xbf16>, vector<32x32xbf16>, vector<8x32xf32> -> vector<8x32xf32>
    %62 = vector.broadcast %24 : vector<1x32xf32> to vector<8x32xf32>
    %63 = arith.addf %61, %62 : vector<8x32xf32>
    %64 = vector.shape_cast %63 : vector<8x32xf32> to vector<8x4x8xf32>
    %65 = tpu.iota {dimensions = array<i32: 2>} : vector<1x1x8xi32>
    %c5_i32 = arith.constant 5 : i32
    %66 = vector.broadcast %c5_i32 : i32 to vector<1x1x8xi32>
    %67 = arith.cmpi slt, %65, %66 : vector<1x1x8xi32>
    %cst_48 = arith.constant 0.000000e+00 : f32
    %cst_49 = arith.constant -1.000000e+30 : f32
    %68 = vector.broadcast %cst_48 : f32 to vector<1x1x8xf32>
    %69 = vector.broadcast %cst_49 : f32 to vector<1x1x8xf32>
    %70 = arith.select %67, %68, %69 : vector<1x1x8xi1>, vector<1x1x8xf32>
    %71 = arith.truncf %56 : vector<8x4x8xf32> to vector<8x4x8xbf16>
    %72 = arith.truncf %60 : vector<8x4x8xf32> to vector<8x4x8xbf16>
    "tpu.trace_start"() <{level = 10 : i32, message = "qhd,khd->hqk"}> : () -> ()
    %cst_50 = arith.constant dense<0.000000e+00> : vector<4x8x8xf32>
    %73 = tpu.matmul %71, %72, %cst_50 {dimension_numbers = #tpu.dot_dimension_numbers<[2], [2], [0], [0], [0, 1, 0, 0, 1, 0], [1], [1]>} : vector<8x4x8xbf16>, vector<8x4x8xbf16>, vector<4x8x8xf32> -> vector<4x8x8xf32>
    "tpu.trace_stop"() : () -> ()
    %cst_51 = arith.constant 0.353553385 : f32
    %74 = vector.broadcast %cst_51 : f32 to vector<4x8x8xf32>
    %75 = arith.mulf %73, %74 : vector<4x8x8xf32>
    %76 = vector.broadcast %70 : vector<1x1x8xf32> to vector<4x8x8xf32>
    %77 = arith.addf %75, %76 : vector<4x8x8xf32>
    %cst_52 = arith.constant dense<0xFF800000> : vector<4x8xf32>
    %78 = vector.multi_reduction <maximumf>, %77, %cst_52 [2] : vector<4x8x8xf32> to vector<4x8xf32>
    %79 = vector.shape_cast %78 : vector<4x8xf32> to vector<4x8x1xf32>
    %80 = vector.broadcast %79 : vector<4x8x1xf32> to vector<4x8x8xf32>
    %81 = arith.subf %77, %80 : vector<4x8x8xf32>
    %82 = math.exp %81 : vector<4x8x8xf32>
    %cst_53 = arith.constant dense<0.000000e+00> : vector<4x8xf32>
    %83 = vector.multi_reduction <add>, %82, %cst_53 [2] : vector<4x8x8xf32> to vector<4x8xf32>
    %84 = vector.shape_cast %83 : vector<4x8xf32> to vector<4x8x1xf32>
    %85 = tpu.reciprocal %84 {approx = true} : vector<4x8x1xf32> -> vector<4x8x1xf32>
    %86 = vector.broadcast %85 : vector<4x8x1xf32> to vector<4x8x8xf32>
    %87 = arith.mulf %82, %86 : vector<4x8x8xf32>
    %88 = arith.truncf %87 : vector<4x8x8xf32> to vector<4x8x8xbf16>
    %89 = arith.truncf %64 : vector<8x4x8xf32> to vector<8x4x8xbf16>
    "tpu.trace_start"() <{level = 10 : i32, message = "hqk,khd->qhd"}> : () -> ()
    %cst_54 = arith.constant dense<0.000000e+00> : vector<4x8x8xf32>
    %90 = tpu.matmul %89, %88, %cst_54 {dimension_numbers = #tpu.dot_dimension_numbers<[0], [2], [2], [1], [0, 1, 0, 2, 1, 1], [1], [0]>} : vector<8x4x8xbf16>, vector<4x8x8xbf16>, vector<4x8x8xf32> -> vector<4x8x8xf32>
    %91 = tpu.transpose %90, [2, 0, 1] : vector<4x8x8xf32> -> vector<8x4x8xf32>
    "tpu.trace_stop"() : () -> ()
    %92 = vector.shape_cast %91 : vector<8x4x8xf32> to vector<8x32xf32>
    %93 = arith.truncf %92 : vector<8x32xf32> to vector<8x32xbf16>
    %cst_55 = arith.constant dense<0.000000e+00> : vector<8x32xf32>
    %94 = tpu.matmul %93, %15, %cst_55 {dimension_numbers = #tpu.dot_dimension_numbers<[1], [0], [0], [1], [0, 0, 1, 1], [], []>} : vector<8x32xbf16>, vector<32x32xbf16>, vector<8x32xf32> -> vector<8x32xf32>
    %95 = vector.broadcast %25 : vector<1x32xf32> to vector<8x32xf32>
    %96 = arith.addf %94, %95 : vector<8x32xf32>
    %97 = arith.addf %7, %96 : vector<8x32xf32>
    %cst_56 = arith.constant dense<0.000000e+00> : vector<8xf32>
    %98 = vector.multi_reduction <add>, %97, %cst_56 [1] : vector<8x32xf32> to vector<8xf32>
    %99 = vector.shape_cast %98 : vector<8xf32> to vector<8x1xf32>
    %cst_57 = arith.constant 3.200000e+01 : f32
    %100 = vector.broadcast %cst_57 : f32 to vector<8x1xf32>
    %101 = arith.divf %99, %100 : vector<8x1xf32>
    %102 = vector.broadcast %101 : vector<8x1xf32> to vector<8x32xf32>
    %103 = arith.subf %97, %102 : vector<8x32xf32>
    %104 = arith.mulf %103, %103 : vector<8x32xf32>
    %cst_58 = arith.constant dense<0.000000e+00> : vector<8xf32>
    %105 = vector.multi_reduction <add>, %104, %cst_58 [1] : vector<8x32xf32> to vector<8xf32>
    %106 = vector.shape_cast %105 : vector<8xf32> to vector<8x1xf32>
    %cst_59 = arith.constant 3.200000e+01 : f32
    %107 = vector.broadcast %cst_59 : f32 to vector<8x1xf32>
    %108 = arith.divf %106, %107 : vector<8x1xf32>
    %109 = vector.broadcast %101 : vector<8x1xf32> to vector<8x32xf32>
    %110 = arith.subf %97, %109 : vector<8x32xf32>
    %cst_60 = arith.constant 9.99999997E-7 : f32
    %111 = vector.broadcast %cst_60 : f32 to vector<8x1xf32>
    %112 = arith.addf %108, %111 : vector<8x1xf32>
    %113 = math.rsqrt %112 : vector<8x1xf32>
    %114 = vector.broadcast %113 : vector<8x1xf32> to vector<8x32xf32>
    %115 = arith.mulf %110, %114 : vector<8x32xf32>
    %116 = vector.broadcast %26 : vector<1x32xf32> to vector<8x32xf32>
    %117 = arith.mulf %115, %116 : vector<8x32xf32>
    %118 = vector.broadcast %27 : vector<1x32xf32> to vector<8x32xf32>
    %119 = arith.addf %117, %118 : vector<8x32xf32>
    %120 = arith.truncf %119 : vector<8x32xf32> to vector<8x32xbf16>
    %cst_61 = arith.constant dense<0.000000e+00> : vector<8x128xf32>
    %121 = tpu.matmul %120, %17, %cst_61 {dimension_numbers = #tpu.dot_dimension_numbers<[1], [0], [0], [1], [0, 0, 1, 1], [], []>} : vector<8x32xbf16>, vector<32x128xbf16>, vector<8x128xf32> -> vector<8x128xf32>
    %122 = vector.broadcast %28 : vector<1x128xf32> to vector<8x128xf32>
    %123 = arith.addf %121, %122 : vector<8x128xf32>
    %cst_62 = arith.constant 5.000000e-01 : f32
    %124 = vector.broadcast %cst_62 : f32 to vector<8x128xf32>
    %125 = arith.mulf %124, %123 : vector<8x128xf32>
    %cst_63 = arith.constant 4.471500e-02 : f32
    %126 = vector.broadcast %cst_63 : f32 to vector<8x128xf32>
    %127 = arith.mulf %126, %123 : vector<8x128xf32>
    %128 = arith.mulf %127, %123 : vector<8x128xf32>
    %129 = arith.mulf %128, %123 : vector<8x128xf32>
    %130 = arith.addf %123, %129 : vector<8x128xf32>
    %cst_64 = arith.constant 0.797884583 : f32
    %131 = vector.broadcast %cst_64 : f32 to vector<8x128xf32>
    %132 = arith.mulf %131, %130 : vector<8x128xf32>
    %133 = math.tanh %132 : vector<8x128xf32>
    %cst_65 = arith.constant 1.000000e+00 : f32
    %134 = vector.broadcast %cst_65 : f32 to vector<8x128xf32>
    %135 = arith.addf %134, %133 : vector<8x128xf32>
    %136 = arith.mulf %125, %135 : vector<8x128xf32>
    %137 = arith.truncf %136 : vector<8x128xf32> to vector<8x128xbf16>
    %cst_66 = arith.constant dense<0.000000e+00> : vector<8x32xf32>
    %138 = tpu.matmul %137, %19, %cst_66 {dimension_numbers = #tpu.dot_dimension_numbers<[1], [0], [0], [1], [0, 0, 1, 1], [], []>} : vector<8x128xbf16>, vector<128x32xbf16>, vector<8x32xf32> -> vector<8x32xf32>
    %139 = vector.broadcast %29 : vector<1x32xf32> to vector<8x32xf32>
    %140 = arith.addf %138, %139 : vector<8x32xf32>
    %141 = arith.addf %97, %140 : vector<8x32xf32>
    %c1_67 = arith.constant 1 : index
    %c0_68 = arith.constant 0 : index
    %c0_69 = arith.constant 0 : index
    %c0_70 = arith.constant 0 : index
    %142 = vector.load %arg4[%c1_67, %c0_68, %c0_69, %c0_70] : memref<2x4x32x32xbf16, #tpu.memory_space<vmem>>, vector<1x1x32x32xbf16>
    %143 = vector.shape_cast %142 : vector<1x1x32x32xbf16> to vector<32x32xbf16>
    %c1_71 = arith.constant 1 : index
    %c1_72 = arith.constant 1 : index
    %c0_73 = arith.constant 0 : index
    %c0_74 = arith.constant 0 : index
    %144 = vector.load %arg4[%c1_71, %c1_72, %c0_73, %c0_74] : memref<2x4x32x32xbf16, #tpu.memory_space<vmem>>, vector<1x1x32x32xbf16>
    %145 = vector.shape_cast %144 : vector<1x1x32x32xbf16> to vector<32x32xbf16>
    %c1_75 = arith.constant 1 : index
    %c2_76 = arith.constant 2 : index
    %c0_77 = arith.constant 0 : index
    %c0_78 = arith.constant 0 : index
    %146 = vector.load %arg4[%c1_75, %c2_76, %c0_77, %c0_78] : memref<2x4x32x32xbf16, #tpu.memory_space<vmem>>, vector<1x1x32x32xbf16>
    %147 = vector.shape_cast %146 : vector<1x1x32x32xbf16> to vector<32x32xbf16>
    %c1_79 = arith.constant 1 : index
    %c3_80 = arith.constant 3 : index
    %c0_81 = arith.constant 0 : index
    %c0_82 = arith.constant 0 : index
    %148 = vector.load %arg4[%c1_79, %c3_80, %c0_81, %c0_82] : memref<2x4x32x32xbf16, #tpu.memory_space<vmem>>, vector<1x1x32x32xbf16>
    %149 = vector.shape_cast %148 : vector<1x1x32x32xbf16> to vector<32x32xbf16>
    %c1_83 = arith.constant 1 : index
    %c0_84 = arith.constant 0 : index
    %c0_85 = arith.constant 0 : index
    %150 = vector.load %arg5[%c1_83, %c0_84, %c0_85] : memref<2x32x128xbf16, #tpu.memory_space<vmem>>, vector<1x32x128xbf16>
    %151 = vector.shape_cast %150 : vector<1x32x128xbf16> to vector<32x128xbf16>
    %c1_86 = arith.constant 1 : index
    %c0_87 = arith.constant 0 : index
    %c0_88 = arith.constant 0 : index
    %152 = vector.load %arg6[%c1_86, %c0_87, %c0_88] : memref<2x128x32xbf16, #tpu.memory_space<vmem>>, vector<1x128x32xbf16>
    %153 = vector.shape_cast %152 : vector<1x128x32xbf16> to vector<128x32xbf16>
    %c10 = arith.constant 10 : index
    %c0_89 = arith.constant 0 : index
    %154 = vector.load %arg7[%c10, %c0_89] : memref<23x128xf32, #tpu.memory_space<vmem>>, vector<1x32xf32>
    %c11 = arith.constant 11 : index
    %c0_90 = arith.constant 0 : index
    %155 = vector.load %arg7[%c11, %c0_90] : memref<23x128xf32, #tpu.memory_space<vmem>>, vector<1x32xf32>
    %c12 = arith.constant 12 : index
    %c0_91 = arith.constant 0 : index
    %156 = vector.load %arg7[%c12, %c0_91] : memref<23x128xf32, #tpu.memory_space<vmem>>, vector<1x32xf32>
    %c13 = arith.constant 13 : index
    %c0_92 = arith.constant 0 : index
    %157 = vector.load %arg7[%c13, %c0_92] : memref<23x128xf32, #tpu.memory_space<vmem>>, vector<1x32xf32>
    %c14 = arith.constant 14 : index
    %c0_93 = arith.constant 0 : index
    %158 = vector.load %arg7[%c14, %c0_93] : memref<23x128xf32, #tpu.memory_space<vmem>>, vector<1x32xf32>
    %c15 = arith.constant 15 : index
    %c0_94 = arith.constant 0 : index
    %159 = vector.load %arg7[%c15, %c0_94] : memref<23x128xf32, #tpu.memory_space<vmem>>, vector<1x32xf32>
    %c16 = arith.constant 16 : index
    %c0_95 = arith.constant 0 : index
    %160 = vector.load %arg7[%c16, %c0_95] : memref<23x128xf32, #tpu.memory_space<vmem>>, vector<1x32xf32>
    %c17 = arith.constant 17 : index
    %c0_96 = arith.constant 0 : index
    %161 = vector.load %arg7[%c17, %c0_96] : memref<23x128xf32, #tpu.memory_space<vmem>>, vector<1x32xf32>
    %c18 = arith.constant 18 : index
    %c0_97 = arith.constant 0 : index
    %162 = vector.load %arg7[%c18, %c0_97] : memref<23x128xf32, #tpu.memory_space<vmem>>, vector<1x128xf32>
    %c19 = arith.constant 19 : index
    %c0_98 = arith.constant 0 : index
    %163 = vector.load %arg7[%c19, %c0_98] : memref<23x128xf32, #tpu.memory_space<vmem>>, vector<1x32xf32>
    %cst_99 = arith.constant dense<0.000000e+00> : vector<8xf32>
    %164 = vector.multi_reduction <add>, %141, %cst_99 [1] : vector<8x32xf32> to vector<8xf32>
    %165 = vector.shape_cast %164 : vector<8xf32> to vector<8x1xf32>
    %cst_100 = arith.constant 3.200000e+01 : f32
    %166 = vector.broadcast %cst_100 : f32 to vector<8x1xf32>
    %167 = arith.divf %165, %166 : vector<8x1xf32>
    %168 = vector.broadcast %167 : vector<8x1xf32> to vector<8x32xf32>
    %169 = arith.subf %141, %168 : vector<8x32xf32>
    %170 = arith.mulf %169, %169 : vector<8x32xf32>
    %cst_101 = arith.constant dense<0.000000e+00> : vector<8xf32>
    %171 = vector.multi_reduction <add>, %170, %cst_101 [1] : vector<8x32xf32> to vector<8xf32>
    %172 = vector.shape_cast %171 : vector<8xf32> to vector<8x1xf32>
    %cst_102 = arith.constant 3.200000e+01 : f32
    %173 = vector.broadcast %cst_102 : f32 to vector<8x1xf32>
    %174 = arith.divf %172, %173 : vector<8x1xf32>
    %175 = vector.broadcast %167 : vector<8x1xf32> to vector<8x32xf32>
    %176 = arith.subf %141, %175 : vector<8x32xf32>
    %cst_103 = arith.constant 9.99999997E-7 : f32
    %177 = vector.broadcast %cst_103 : f32 to vector<8x1xf32>
    %178 = arith.addf %174, %177 : vector<8x1xf32>
    %179 = math.rsqrt %178 : vector<8x1xf32>
    %180 = vector.broadcast %179 : vector<8x1xf32> to vector<8x32xf32>
    %181 = arith.mulf %176, %180 : vector<8x32xf32>
    %182 = vector.broadcast %154 : vector<1x32xf32> to vector<8x32xf32>
    %183 = arith.mulf %181, %182 : vector<8x32xf32>
    %184 = vector.broadcast %155 : vector<1x32xf32> to vector<8x32xf32>
    %185 = arith.addf %183, %184 : vector<8x32xf32>
    %186 = arith.truncf %185 : vector<8x32xf32> to vector<8x32xbf16>
    %cst_104 = arith.constant dense<0.000000e+00> : vector<8x32xf32>
    %187 = tpu.matmul %186, %143, %cst_104 {dimension_numbers = #tpu.dot_dimension_numbers<[1], [0], [0], [1], [0, 0, 1, 1], [], []>} : vector<8x32xbf16>, vector<32x32xbf16>, vector<8x32xf32> -> vector<8x32xf32>
    %188 = vector.broadcast %156 : vector<1x32xf32> to vector<8x32xf32>
    %189 = arith.addf %187, %188 : vector<8x32xf32>
    %190 = vector.shape_cast %189 : vector<8x32xf32> to vector<8x4x8xf32>
    %cst_105 = arith.constant dense<0.000000e+00> : vector<8x32xf32>
    %191 = tpu.matmul %186, %145, %cst_105 {dimension_numbers = #tpu.dot_dimension_numbers<[1], [0], [0], [1], [0, 0, 1, 1], [], []>} : vector<8x32xbf16>, vector<32x32xbf16>, vector<8x32xf32> -> vector<8x32xf32>
    %192 = vector.broadcast %157 : vector<1x32xf32> to vector<8x32xf32>
    %193 = arith.addf %191, %192 : vector<8x32xf32>
    %194 = vector.shape_cast %193 : vector<8x32xf32> to vector<8x4x8xf32>
    %cst_106 = arith.constant dense<0.000000e+00> : vector<8x32xf32>
    %195 = tpu.matmul %186, %147, %cst_106 {dimension_numbers = #tpu.dot_dimension_numbers<[1], [0], [0], [1], [0, 0, 1, 1], [], []>} : vector<8x32xbf16>, vector<32x32xbf16>, vector<8x32xf32> -> vector<8x32xf32>
    %196 = vector.broadcast %158 : vector<1x32xf32> to vector<8x32xf32>
    %197 = arith.addf %195, %196 : vector<8x32xf32>
    %198 = vector.shape_cast %197 : vector<8x32xf32> to vector<8x4x8xf32>
    %199 = tpu.iota {dimensions = array<i32: 2>} : vector<1x1x8xi32>
    %c5_i32_107 = arith.constant 5 : i32
    %200 = vector.broadcast %c5_i32_107 : i32 to vector<1x1x8xi32>
    %201 = arith.cmpi slt, %199, %200 : vector<1x1x8xi32>
    %cst_108 = arith.constant 0.000000e+00 : f32
    %cst_109 = arith.constant -1.000000e+30 : f32
    %202 = vector.broadcast %cst_108 : f32 to vector<1x1x8xf32>
    %203 = vector.broadcast %cst_109 : f32 to vector<1x1x8xf32>
    %204 = arith.select %201, %202, %203 : vector<1x1x8xi1>, vector<1x1x8xf32>
    %205 = arith.truncf %190 : vector<8x4x8xf32> to vector<8x4x8xbf16>
    %206 = arith.truncf %194 : vector<8x4x8xf32> to vector<8x4x8xbf16>
    "tpu.trace_start"() <{level = 10 : i32, message = "qhd,khd->hqk"}> : () -> ()
    %cst_110 = arith.constant dense<0.000000e+00> : vector<4x8x8xf32>
    %207 = tpu.matmul %205, %206, %cst_110 {dimension_numbers = #tpu.dot_dimension_numbers<[2], [2], [0], [0], [0, 1, 0, 0, 1, 0], [1], [1]>} : vector<8x4x8xbf16>, vector<8x4x8xbf16>, vector<4x8x8xf32> -> vector<4x8x8xf32>
    "tpu.trace_stop"() : () -> ()
    %cst_111 = arith.constant 0.353553385 : f32
    %208 = vector.broadcast %cst_111 : f32 to vector<4x8x8xf32>
    %209 = arith.mulf %207, %208 : vector<4x8x8xf32>
    %210 = vector.broadcast %204 : vector<1x1x8xf32> to vector<4x8x8xf32>
    %211 = arith.addf %209, %210 : vector<4x8x8xf32>
    %cst_112 = arith.constant dense<0xFF800000> : vector<4x8xf32>
    %212 = vector.multi_reduction <maximumf>, %211, %cst_112 [2] : vector<4x8x8xf32> to vector<4x8xf32>
    %213 = vector.shape_cast %212 : vector<4x8xf32> to vector<4x8x1xf32>
    %214 = vector.broadcast %213 : vector<4x8x1xf32> to vector<4x8x8xf32>
    %215 = arith.subf %211, %214 : vector<4x8x8xf32>
    %216 = math.exp %215 : vector<4x8x8xf32>
    %cst_113 = arith.constant dense<0.000000e+00> : vector<4x8xf32>
    %217 = vector.multi_reduction <add>, %216, %cst_113 [2] : vector<4x8x8xf32> to vector<4x8xf32>
    %218 = vector.shape_cast %217 : vector<4x8xf32> to vector<4x8x1xf32>
    %219 = tpu.reciprocal %218 {approx = true} : vector<4x8x1xf32> -> vector<4x8x1xf32>
    %220 = vector.broadcast %219 : vector<4x8x1xf32> to vector<4x8x8xf32>
    %221 = arith.mulf %216, %220 : vector<4x8x8xf32>
    %222 = arith.truncf %221 : vector<4x8x8xf32> to vector<4x8x8xbf16>
    %223 = arith.truncf %198 : vector<8x4x8xf32> to vector<8x4x8xbf16>
    "tpu.trace_start"() <{level = 10 : i32, message = "hqk,khd->qhd"}> : () -> ()
    %cst_114 = arith.constant dense<0.000000e+00> : vector<4x8x8xf32>
    %224 = tpu.matmul %223, %222, %cst_114 {dimension_numbers = #tpu.dot_dimension_numbers<[0], [2], [2], [1], [0, 1, 0, 2, 1, 1], [1], [0]>} : vector<8x4x8xbf16>, vector<4x8x8xbf16>, vector<4x8x8xf32> -> vector<4x8x8xf32>
    %225 = tpu.transpose %224, [2, 0, 1] : vector<4x8x8xf32> -> vector<8x4x8xf32>
    "tpu.trace_stop"() : () -> ()
    %226 = vector.shape_cast %225 : vector<8x4x8xf32> to vector<8x32xf32>
    %227 = arith.truncf %226 : vector<8x32xf32> to vector<8x32xbf16>
    %cst_115 = arith.constant dense<0.000000e+00> : vector<8x32xf32>
    %228 = tpu.matmul %227, %149, %cst_115 {dimension_numbers = #tpu.dot_dimension_numbers<[1], [0], [0], [1], [0, 0, 1, 1], [], []>} : vector<8x32xbf16>, vector<32x32xbf16>, vector<8x32xf32> -> vector<8x32xf32>
    %229 = vector.broadcast %159 : vector<1x32xf32> to vector<8x32xf32>
    %230 = arith.addf %228, %229 : vector<8x32xf32>
    %231 = arith.addf %141, %230 : vector<8x32xf32>
    %cst_116 = arith.constant dense<0.000000e+00> : vector<8xf32>
    %232 = vector.multi_reduction <add>, %231, %cst_116 [1] : vector<8x32xf32> to vector<8xf32>
    %233 = vector.shape_cast %232 : vector<8xf32> to vector<8x1xf32>
    %cst_117 = arith.constant 3.200000e+01 : f32
    %234 = vector.broadcast %cst_117 : f32 to vector<8x1xf32>
    %235 = arith.divf %233, %234 : vector<8x1xf32>
    %236 = vector.broadcast %235 : vector<8x1xf32> to vector<8x32xf32>
    %237 = arith.subf %231, %236 : vector<8x32xf32>
    %238 = arith.mulf %237, %237 : vector<8x32xf32>
    %cst_118 = arith.constant dense<0.000000e+00> : vector<8xf32>
    %239 = vector.multi_reduction <add>, %238, %cst_118 [1] : vector<8x32xf32> to vector<8xf32>
    %240 = vector.shape_cast %239 : vector<8xf32> to vector<8x1xf32>
    %cst_119 = arith.constant 3.200000e+01 : f32
    %241 = vector.broadcast %cst_119 : f32 to vector<8x1xf32>
    %242 = arith.divf %240, %241 : vector<8x1xf32>
    %243 = vector.broadcast %235 : vector<8x1xf32> to vector<8x32xf32>
    %244 = arith.subf %231, %243 : vector<8x32xf32>
    %cst_120 = arith.constant 9.99999997E-7 : f32
    %245 = vector.broadcast %cst_120 : f32 to vector<8x1xf32>
    %246 = arith.addf %242, %245 : vector<8x1xf32>
    %247 = math.rsqrt %246 : vector<8x1xf32>
    %248 = vector.broadcast %247 : vector<8x1xf32> to vector<8x32xf32>
    %249 = arith.mulf %244, %248 : vector<8x32xf32>
    %250 = vector.broadcast %160 : vector<1x32xf32> to vector<8x32xf32>
    %251 = arith.mulf %249, %250 : vector<8x32xf32>
    %252 = vector.broadcast %161 : vector<1x32xf32> to vector<8x32xf32>
    %253 = arith.addf %251, %252 : vector<8x32xf32>
    %254 = arith.truncf %253 : vector<8x32xf32> to vector<8x32xbf16>
    %cst_121 = arith.constant dense<0.000000e+00> : vector<8x128xf32>
    %255 = tpu.matmul %254, %151, %cst_121 {dimension_numbers = #tpu.dot_dimension_numbers<[1], [0], [0], [1], [0, 0, 1, 1], [], []>} : vector<8x32xbf16>, vector<32x128xbf16>, vector<8x128xf32> -> vector<8x128xf32>
    %256 = vector.broadcast %162 : vector<1x128xf32> to vector<8x128xf32>
    %257 = arith.addf %255, %256 : vector<8x128xf32>
    %cst_122 = arith.constant 5.000000e-01 : f32
    %258 = vector.broadcast %cst_122 : f32 to vector<8x128xf32>
    %259 = arith.mulf %258, %257 : vector<8x128xf32>
    %cst_123 = arith.constant 4.471500e-02 : f32
    %260 = vector.broadcast %cst_123 : f32 to vector<8x128xf32>
    %261 = arith.mulf %260, %257 : vector<8x128xf32>
    %262 = arith.mulf %261, %257 : vector<8x128xf32>
    %263 = arith.mulf %262, %257 : vector<8x128xf32>
    %264 = arith.addf %257, %263 : vector<8x128xf32>
    %cst_124 = arith.constant 0.797884583 : f32
    %265 = vector.broadcast %cst_124 : f32 to vector<8x128xf32>
    %266 = arith.mulf %265, %264 : vector<8x128xf32>
    %267 = math.tanh %266 : vector<8x128xf32>
    %cst_125 = arith.constant 1.000000e+00 : f32
    %268 = vector.broadcast %cst_125 : f32 to vector<8x128xf32>
    %269 = arith.addf %268, %267 : vector<8x128xf32>
    %270 = arith.mulf %259, %269 : vector<8x128xf32>
    %271 = arith.truncf %270 : vector<8x128xf32> to vector<8x128xbf16>
    %cst_126 = arith.constant dense<0.000000e+00> : vector<8x32xf32>
    %272 = tpu.matmul %271, %153, %cst_126 {dimension_numbers = #tpu.dot_dimension_numbers<[1], [0], [0], [1], [0, 0, 1, 1], [], []>} : vector<8x128xbf16>, vector<128x32xbf16>, vector<8x32xf32> -> vector<8x32xf32>
    %273 = vector.broadcast %163 : vector<1x32xf32> to vector<8x32xf32>
    %274 = arith.addf %272, %273 : vector<8x32xf32>
    %275 = arith.addf %231, %274 : vector<8x32xf32>
    %c20 = arith.constant 20 : index
    %c0_127 = arith.constant 0 : index
    %276 = vector.load %arg7[%c20, %c0_127] : memref<23x128xf32, #tpu.memory_space<vmem>>, vector<1x32xf32>
    %c21 = arith.constant 21 : index
    %c0_128 = arith.constant 0 : index
    %277 = vector.load %arg7[%c21, %c0_128] : memref<23x128xf32, #tpu.memory_space<vmem>>, vector<1x32xf32>
    %cst_129 = arith.constant dense<0.000000e+00> : vector<8xf32>
    %278 = vector.multi_reduction <add>, %275, %cst_129 [1] : vector<8x32xf32> to vector<8xf32>
    %279 = vector.shape_cast %278 : vector<8xf32> to vector<8x1xf32>
    %cst_130 = arith.constant 3.200000e+01 : f32
    %280 = vector.broadcast %cst_130 : f32 to vector<8x1xf32>
    %281 = arith.divf %279, %280 : vector<8x1xf32>
    %282 = vector.broadcast %281 : vector<8x1xf32> to vector<8x32xf32>
    %283 = arith.subf %275, %282 : vector<8x32xf32>
    %284 = arith.mulf %283, %283 : vector<8x32xf32>
    %cst_131 = arith.constant dense<0.000000e+00> : vector<8xf32>
    %285 = vector.multi_reduction <add>, %284, %cst_131 [1] : vector<8x32xf32> to vector<8xf32>
    %286 = vector.shape_cast %285 : vector<8xf32> to vector<8x1xf32>
    %cst_132 = arith.constant 3.200000e+01 : f32
    %287 = vector.broadcast %cst_132 : f32 to vector<8x1xf32>
    %288 = arith.divf %286, %287 : vector<8x1xf32>
    %289 = vector.broadcast %281 : vector<8x1xf32> to vector<8x32xf32>
    %290 = arith.subf %275, %289 : vector<8x32xf32>
    %cst_133 = arith.constant 9.99999997E-7 : f32
    %291 = vector.broadcast %cst_133 : f32 to vector<8x1xf32>
    %292 = arith.addf %288, %291 : vector<8x1xf32>
    %293 = math.rsqrt %292 : vector<8x1xf32>
    %294 = vector.broadcast %293 : vector<8x1xf32> to vector<8x32xf32>
    %295 = arith.mulf %290, %294 : vector<8x32xf32>
    %296 = vector.broadcast %276 : vector<1x32xf32> to vector<8x32xf32>
    %297 = arith.mulf %295, %296 : vector<8x32xf32>
    %298 = vector.broadcast %277 : vector<1x32xf32> to vector<8x32xf32>
    %299 = arith.addf %297, %298 : vector<8x32xf32>
    %c22 = arith.constant 22 : index
    %c0_134 = arith.constant 0 : index
    %300 = vector.load %arg7[%c22, %c0_134] : memref<23x128xf32, #tpu.memory_space<vmem>>, vector<1x128xf32>
    %301 = arith.truncf %299 : vector<8x32xf32> to vector<8x32xbf16>
    %c0_135 = arith.constant 0 : index
    %c0_136 = arith.constant 0 : index
    %302 = vector.load %arg8[%c0_135, %c0_136] : memref<32x128xbf16, #tpu.memory_space<vmem>>, vector<32x128xbf16>
    %cst_137 = arith.constant dense<0.000000e+00> : vector<8x128xf32>
    %303 = tpu.matmul %301, %302, %cst_137 {dimension_numbers = #tpu.dot_dimension_numbers<[1], [0], [0], [1], [0, 0, 1, 1], [], []>} : vector<8x32xbf16>, vector<32x128xbf16>, vector<8x128xf32> -> vector<8x128xf32>
    %304 = vector.broadcast %300 : vector<1x128xf32> to vector<8x128xf32>
    %305 = arith.addf %303, %304 : vector<8x128xf32>
    %c0_138 = arith.constant 0 : index
    %c0_139 = arith.constant 0 : index
    %c0_140 = arith.constant 0 : index
    %306 = vector.load %arg9[%c0_138, %c0_139, %c0_140] : memref<1x8x128xf32, #tpu.memory_space<vmem>>, vector<1x8x128xf32>
    %307 = vector.shape_cast %306 : vector<1x8x128xf32> to vector<8x128xf32>
    %308 = vector.shape_cast %305 : vector<8x128xf32> to vector<1x8x128xf32>
    tpu.vector_store %arg9[%c0_138, %c0_139, %c0_140], %308 {strides = array<i32>} : memref<1x8x128xf32, #tpu.memory_space<vmem>>, vector<1x8x128xf32>,
    return
  }
  func.func @transform_0(%arg0: i32) -> (i32, i32, i32) {
    %c0_i32 = arith.constant 0 : i32
    %c0_i32_0 = arith.constant 0 : i32
    %c0_i32_1 = arith.constant 0 : i32
    return %arg0, %c0_i32, %c0_i32_0 : i32, i32, i32
  }
  func.func @transform_1(%arg0: i32) -> (i32, i32, i32) {
    %c0_i32 = arith.constant 0 : i32
    %c0_i32_0 = arith.constant 0 : i32
    %c0_i32_1 = arith.constant 0 : i32
    return %arg0, %c0_i32, %c0_i32_0 : i32, i32, i32
  }
  func.func @transform_2(%arg0: i32) -> (i32, i32) {
    %c0_i32 = arith.constant 0 : i32
    %c0_i32_0 = arith.constant 0 : i32
    %c0_i32_1 = arith.constant 0 : i32
    return %c0_i32, %c0_i32_0 : i32, i32
  }
  func.func @transform_3(%arg0: i32) -> (i32, i32, i32, i32) {
    %c0_i32 = arith.constant 0 : i32
    %c0_i32_0 = arith.constant 0 : i32
    %c0_i32_1 = arith.constant 0 : i32
    %c0_i32_2 = arith.constant 0 : i32
    %c0_i32_3 = arith.constant 0 : i32
    return %c0_i32, %c0_i32_0, %c0_i32_1, %c0_i32_2 : i32, i32, i32, i32
  }
  func.func @transform_4(%arg0: i32) -> (i32, i32, i32) {
    %c0_i32 = arith.constant 0 : i32
    %c0_i32_0 = arith.constant 0 : i32
    %c0_i32_1 = arith.constant 0 : i32
    %c0_i32_2 = arith.constant 0 : i32
    return %c0_i32, %c0_i32_0, %c0_i32_1 : i32, i32, i32
  }
  func.func @transform_5(%arg0: i32) -> (i32, i32, i32) {
    %c0_i32 = arith.constant 0 : i32
    %c0_i32_0 = arith.constant 0 : i32
    %c0_i32_1 = arith.constant 0 : i32
    %c0_i32_2 = arith.constant 0 : i32
    return %c0_i32, %c0_i32_0, %c0_i32_1 : i32, i32, i32
  }
  func.func @transform_6(%arg0: i32) -> (i32, i32) {
    %c0_i32 = arith.constant 0 : i32
    %c0_i32_0 = arith.constant 0 : i32
    %c0_i32_1 = arith.constant 0 : i32
    return %c0_i32, %c0_i32_0 : i32, i32
  }
  func.func @transform_7(%arg0: i32) -> (i32, i32) {
    %c0_i32 = arith.constant 0 : i32
    %c0_i32_0 = arith.constant 0 : i32
    %c0_i32_1 = arith.constant 0 : i32
    return %c0_i32, %c0_i32_0 : i32, i32
  }
  func.func @transform_8(%arg0: i32) -> (i32, i32, i32) {
    %c0_i32 = arith.constant 0 : i32
    %c0_i32_0 = arith.constant 0 : i32
    %c0_i32_1 = arith.constant 0 : i32
    return %arg0, %c0_i32, %c0_i32_0 : i32, i32, i32
  }
}

module attributes {stable_mosaic.version = 11 : i64} {
  func.func @decoder_kernel(%arg0: i32, %arg1: memref<1x24x32xf32, #tpu.memory_space<vmem>>, %arg2: memref<1x4x32x32xbf16, #tpu.memory_space<vmem>>, %arg3: memref<1x32x128xbf16, #tpu.memory_space<vmem>>, %arg4: memref<1x128x32xbf16, #tpu.memory_space<vmem>>, %arg5: memref<13x128xf32, #tpu.memory_space<vmem>>, %arg6: memref<32x128xbf16, #tpu.memory_space<vmem>>, %arg7: memref<1x24x128xf32, #tpu.memory_space<vmem>>, %arg8: memref<1x24x1xf32, #tpu.memory_space<vmem>>, %arg9: memref<1x24x128xf32, #tpu.memory_space<vmem>>, %arg10: memref<1x8x128xf32, #tpu.memory_space<vmem>>) attributes {dimension_semantics = [#tpu.dimension_semantics<parallel>], iteration_bounds = array<i64: 2>, scalar_prefetch = 0 : i64, scratch_operands = 0 : i64, tpu.core_type = #tpu.core_type<tc>, window_params = [{transform_indices = @transform_0, window_bounds = array<i64: 1, 24, 32>}, {pipeline_mode = #tpu.pipeline_mode<synchronous>, transform_indices = @transform_1, window_bounds = array<i64: 1, 4, 32, 32>}, {pipeline_mode = #tpu.pipeline_mode<synchronous>, transform_indices = @transform_2, window_bounds = array<i64: 1, 32, 128>}, {pipeline_mode = #tpu.pipeline_mode<synchronous>, transform_indices = @transform_3, window_bounds = array<i64: 1, 128, 32>}, {pipeline_mode = #tpu.pipeline_mode<synchronous>, transform_indices = @transform_4, window_bounds = array<i64: 13, 128>}, {pipeline_mode = #tpu.pipeline_mode<synchronous>, transform_indices = @transform_5, window_bounds = array<i64: 32, 128>}, {transform_indices = @transform_6, window_bounds = array<i64: 1, 24, 128>}, {transform_indices = @transform_7, window_bounds = array<i64: 1, 24, 1>}, {transform_indices = @transform_8, window_bounds = array<i64: 1, 24, 128>}, {transform_indices = @transform_9, window_bounds = array<i64: 1, 8, 128>}]} {
    %c0 = arith.constant 0 : index
    %c0_0 = arith.constant 0 : index
    %c0_1 = arith.constant 0 : index
    %0 = vector.load %arg1[%c0, %c0_0, %c0_1] : memref<1x24x32xf32, #tpu.memory_space<vmem>>, vector<1x24x32xf32>
    %1 = vector.shape_cast %0 : vector<1x24x32xf32> to vector<24x32xf32>
    %c0_2 = arith.constant 0 : index
    %c0_3 = arith.constant 0 : index
    %c0_4 = arith.constant 0 : index
    %c0_5 = arith.constant 0 : index
    %2 = vector.load %arg2[%c0_2, %c0_3, %c0_4, %c0_5] : memref<1x4x32x32xbf16, #tpu.memory_space<vmem>>, vector<1x1x32x32xbf16>
    %3 = vector.shape_cast %2 : vector<1x1x32x32xbf16> to vector<32x32xbf16>
    %c0_6 = arith.constant 0 : index
    %c1 = arith.constant 1 : index
    %c0_7 = arith.constant 0 : index
    %c0_8 = arith.constant 0 : index
    %4 = vector.load %arg2[%c0_6, %c1, %c0_7, %c0_8] : memref<1x4x32x32xbf16, #tpu.memory_space<vmem>>, vector<1x1x32x32xbf16>
    %5 = vector.shape_cast %4 : vector<1x1x32x32xbf16> to vector<32x32xbf16>
    %c0_9 = arith.constant 0 : index
    %c2 = arith.constant 2 : index
    %c0_10 = arith.constant 0 : index
    %c0_11 = arith.constant 0 : index
    %6 = vector.load %arg2[%c0_9, %c2, %c0_10, %c0_11] : memref<1x4x32x32xbf16, #tpu.memory_space<vmem>>, vector<1x1x32x32xbf16>
    %7 = vector.shape_cast %6 : vector<1x1x32x32xbf16> to vector<32x32xbf16>
    %c0_12 = arith.constant 0 : index
    %c3 = arith.constant 3 : index
    %c0_13 = arith.constant 0 : index
    %c0_14 = arith.constant 0 : index
    %8 = vector.load %arg2[%c0_12, %c3, %c0_13, %c0_14] : memref<1x4x32x32xbf16, #tpu.memory_space<vmem>>, vector<1x1x32x32xbf16>
    %9 = vector.shape_cast %8 : vector<1x1x32x32xbf16> to vector<32x32xbf16>
    %c0_15 = arith.constant 0 : index
    %c0_16 = arith.constant 0 : index
    %c0_17 = arith.constant 0 : index
    %10 = vector.load %arg3[%c0_15, %c0_16, %c0_17] : memref<1x32x128xbf16, #tpu.memory_space<vmem>>, vector<1x32x128xbf16>
    %11 = vector.shape_cast %10 : vector<1x32x128xbf16> to vector<32x128xbf16>
    %c0_18 = arith.constant 0 : index
    %c0_19 = arith.constant 0 : index
    %c0_20 = arith.constant 0 : index
    %12 = vector.load %arg4[%c0_18, %c0_19, %c0_20] : memref<1x128x32xbf16, #tpu.memory_space<vmem>>, vector<1x128x32xbf16>
    %13 = vector.shape_cast %12 : vector<1x128x32xbf16> to vector<128x32xbf16>
    %c0_21 = arith.constant 0 : index
    %c0_22 = arith.constant 0 : index
    %14 = vector.load %arg5[%c0_21, %c0_22] : memref<13x128xf32, #tpu.memory_space<vmem>>, vector<1x32xf32>
    %c1_23 = arith.constant 1 : index
    %c0_24 = arith.constant 0 : index
    %15 = vector.load %arg5[%c1_23, %c0_24] : memref<13x128xf32, #tpu.memory_space<vmem>>, vector<1x32xf32>
    %c2_25 = arith.constant 2 : index
    %c0_26 = arith.constant 0 : index
    %16 = vector.load %arg5[%c2_25, %c0_26] : memref<13x128xf32, #tpu.memory_space<vmem>>, vector<1x32xf32>
    %c3_27 = arith.constant 3 : index
    %c0_28 = arith.constant 0 : index
    %17 = vector.load %arg5[%c3_27, %c0_28] : memref<13x128xf32, #tpu.memory_space<vmem>>, vector<1x32xf32>
    %c4 = arith.constant 4 : index
    %c0_29 = arith.constant 0 : index
    %18 = vector.load %arg5[%c4, %c0_29] : memref<13x128xf32, #tpu.memory_space<vmem>>, vector<1x32xf32>
    %c5 = arith.constant 5 : index
    %c0_30 = arith.constant 0 : index
    %19 = vector.load %arg5[%c5, %c0_30] : memref<13x128xf32, #tpu.memory_space<vmem>>, vector<1x32xf32>
    %c6 = arith.constant 6 : index
    %c0_31 = arith.constant 0 : index
    %20 = vector.load %arg5[%c6, %c0_31] : memref<13x128xf32, #tpu.memory_space<vmem>>, vector<1x32xf32>
    %c7 = arith.constant 7 : index
    %c0_32 = arith.constant 0 : index
    %21 = vector.load %arg5[%c7, %c0_32] : memref<13x128xf32, #tpu.memory_space<vmem>>, vector<1x32xf32>
    %c8 = arith.constant 8 : index
    %c0_33 = arith.constant 0 : index
    %22 = vector.load %arg5[%c8, %c0_33] : memref<13x128xf32, #tpu.memory_space<vmem>>, vector<1x128xf32>
    %c9 = arith.constant 9 : index
    %c0_34 = arith.constant 0 : index
    %23 = vector.load %arg5[%c9, %c0_34] : memref<13x128xf32, #tpu.memory_space<vmem>>, vector<1x32xf32>
    %cst = arith.constant dense<0.000000e+00> : vector<24xf32>
    %24 = vector.multi_reduction <add>, %1, %cst [1] : vector<24x32xf32> to vector<24xf32>
    %25 = vector.shape_cast %24 : vector<24xf32> to vector<24x1xf32>
    %cst_35 = arith.constant 3.200000e+01 : f32
    %26 = vector.broadcast %cst_35 : f32 to vector<24x1xf32>
    %27 = arith.divf %25, %26 : vector<24x1xf32>
    %28 = vector.broadcast %27 : vector<24x1xf32> to vector<24x32xf32>
    %29 = arith.subf %1, %28 : vector<24x32xf32>
    %30 = arith.mulf %29, %29 : vector<24x32xf32>
    %cst_36 = arith.constant dense<0.000000e+00> : vector<24xf32>
    %31 = vector.multi_reduction <add>, %30, %cst_36 [1] : vector<24x32xf32> to vector<24xf32>
    %32 = vector.shape_cast %31 : vector<24xf32> to vector<24x1xf32>
    %cst_37 = arith.constant 3.200000e+01 : f32
    %33 = vector.broadcast %cst_37 : f32 to vector<24x1xf32>
    %34 = arith.divf %32, %33 : vector<24x1xf32>
    %35 = vector.broadcast %27 : vector<24x1xf32> to vector<24x32xf32>
    %36 = arith.subf %1, %35 : vector<24x32xf32>
    %cst_38 = arith.constant 9.99999997E-7 : f32
    %37 = vector.broadcast %cst_38 : f32 to vector<24x1xf32>
    %38 = arith.addf %34, %37 : vector<24x1xf32>
    %39 = math.rsqrt %38 : vector<24x1xf32>
    %40 = vector.broadcast %39 : vector<24x1xf32> to vector<24x32xf32>
    %41 = arith.mulf %36, %40 : vector<24x32xf32>
    %42 = vector.broadcast %14 : vector<1x32xf32> to vector<24x32xf32>
    %43 = arith.mulf %41, %42 : vector<24x32xf32>
    %44 = vector.broadcast %15 : vector<1x32xf32> to vector<24x32xf32>
    %45 = arith.addf %43, %44 : vector<24x32xf32>
    %46 = arith.truncf %45 : vector<24x32xf32> to vector<24x32xbf16>
    %cst_39 = arith.constant dense<0.000000e+00> : vector<24x32xf32>
    %47 = tpu.matmul %46, %3, %cst_39 {dimension_numbers = #tpu.dot_dimension_numbers<[1], [0], [0], [1], [0, 0, 1, 1], [], []>} : vector<24x32xbf16>, vector<32x32xbf16>, vector<24x32xf32> -> vector<24x32xf32>
    %48 = vector.broadcast %16 : vector<1x32xf32> to vector<24x32xf32>
    %49 = arith.addf %47, %48 : vector<24x32xf32>
    %50 = vector.shape_cast %49 : vector<24x32xf32> to vector<24x4x8xf32>
    %cst_40 = arith.constant dense<0.000000e+00> : vector<24x32xf32>
    %51 = tpu.matmul %46, %5, %cst_40 {dimension_numbers = #tpu.dot_dimension_numbers<[1], [0], [0], [1], [0, 0, 1, 1], [], []>} : vector<24x32xbf16>, vector<32x32xbf16>, vector<24x32xf32> -> vector<24x32xf32>
    %52 = vector.broadcast %17 : vector<1x32xf32> to vector<24x32xf32>
    %53 = arith.addf %51, %52 : vector<24x32xf32>
    %54 = vector.shape_cast %53 : vector<24x32xf32> to vector<24x4x8xf32>
    %cst_41 = arith.constant dense<0.000000e+00> : vector<24x32xf32>
    %55 = tpu.matmul %46, %7, %cst_41 {dimension_numbers = #tpu.dot_dimension_numbers<[1], [0], [0], [1], [0, 0, 1, 1], [], []>} : vector<24x32xbf16>, vector<32x32xbf16>, vector<24x32xf32> -> vector<24x32xf32>
    %56 = vector.broadcast %18 : vector<1x32xf32> to vector<24x32xf32>
    %57 = arith.addf %55, %56 : vector<24x32xf32>
    %58 = vector.shape_cast %57 : vector<24x32xf32> to vector<24x4x8xf32>
    %59 = tpu.iota {dimensions = array<i32: 2>} : vector<1x1x24xi32>
    %c17_i32 = arith.constant 17 : i32
    %60 = vector.broadcast %c17_i32 : i32 to vector<1x1x24xi32>
    %61 = arith.cmpi slt, %59, %60 : vector<1x1x24xi32>
    %cst_42 = arith.constant 0.000000e+00 : f32
    %cst_43 = arith.constant -1.000000e+30 : f32
    %62 = vector.broadcast %cst_42 : f32 to vector<1x1x24xf32>
    %63 = vector.broadcast %cst_43 : f32 to vector<1x1x24xf32>
    %64 = arith.select %61, %62, %63 : vector<1x1x24xi1>, vector<1x1x24xf32>
    %65 = arith.truncf %50 : vector<24x4x8xf32> to vector<24x4x8xbf16>
    %66 = arith.truncf %54 : vector<24x4x8xf32> to vector<24x4x8xbf16>
    "tpu.trace_start"() <{level = 10 : i32, message = "qhd,khd->hqk"}> : () -> ()
    %cst_44 = arith.constant dense<0.000000e+00> : vector<4x24x24xf32>
    %67 = tpu.matmul %65, %66, %cst_44 {dimension_numbers = #tpu.dot_dimension_numbers<[2], [2], [0], [0], [0, 1, 0, 0, 1, 0], [1], [1]>} : vector<24x4x8xbf16>, vector<24x4x8xbf16>, vector<4x24x24xf32> -> vector<4x24x24xf32>
    "tpu.trace_stop"() : () -> ()
    %cst_45 = arith.constant 0.353553385 : f32
    %68 = vector.broadcast %cst_45 : f32 to vector<4x24x24xf32>
    %69 = arith.mulf %67, %68 : vector<4x24x24xf32>
    %70 = vector.broadcast %64 : vector<1x1x24xf32> to vector<4x24x24xf32>
    %71 = arith.addf %69, %70 : vector<4x24x24xf32>
    %cst_46 = arith.constant dense<0xFF800000> : vector<4x24xf32>
    %72 = vector.multi_reduction <maximumf>, %71, %cst_46 [2] : vector<4x24x24xf32> to vector<4x24xf32>
    %73 = vector.shape_cast %72 : vector<4x24xf32> to vector<4x24x1xf32>
    %74 = vector.broadcast %73 : vector<4x24x1xf32> to vector<4x24x24xf32>
    %75 = arith.subf %71, %74 : vector<4x24x24xf32>
    %76 = math.exp %75 : vector<4x24x24xf32>
    %cst_47 = arith.constant dense<0.000000e+00> : vector<4x24xf32>
    %77 = vector.multi_reduction <add>, %76, %cst_47 [2] : vector<4x24x24xf32> to vector<4x24xf32>
    %78 = vector.shape_cast %77 : vector<4x24xf32> to vector<4x24x1xf32>
    %79 = tpu.reciprocal %78 {approx = true} : vector<4x24x1xf32> -> vector<4x24x1xf32>
    %80 = vector.broadcast %79 : vector<4x24x1xf32> to vector<4x24x24xf32>
    %81 = arith.mulf %76, %80 : vector<4x24x24xf32>
    %82 = arith.truncf %81 : vector<4x24x24xf32> to vector<4x24x24xbf16>
    %83 = arith.truncf %58 : vector<24x4x8xf32> to vector<24x4x8xbf16>
    "tpu.trace_start"() <{level = 10 : i32, message = "hqk,khd->qhd"}> : () -> ()
    %cst_48 = arith.constant dense<0.000000e+00> : vector<4x8x24xf32>
    %84 = tpu.matmul %83, %82, %cst_48 {dimension_numbers = #tpu.dot_dimension_numbers<[0], [2], [2], [1], [0, 1, 0, 2, 1, 1], [1], [0]>} : vector<24x4x8xbf16>, vector<4x24x24xbf16>, vector<4x8x24xf32> -> vector<4x8x24xf32>
    %85 = tpu.transpose %84, [2, 0, 1] : vector<4x8x24xf32> -> vector<24x4x8xf32>
    "tpu.trace_stop"() : () -> ()
    %86 = vector.shape_cast %85 : vector<24x4x8xf32> to vector<24x32xf32>
    %87 = arith.truncf %86 : vector<24x32xf32> to vector<24x32xbf16>
    %cst_49 = arith.constant dense<0.000000e+00> : vector<24x32xf32>
    %88 = tpu.matmul %87, %9, %cst_49 {dimension_numbers = #tpu.dot_dimension_numbers<[1], [0], [0], [1], [0, 0, 1, 1], [], []>} : vector<24x32xbf16>, vector<32x32xbf16>, vector<24x32xf32> -> vector<24x32xf32>
    %89 = vector.broadcast %19 : vector<1x32xf32> to vector<24x32xf32>
    %90 = arith.addf %88, %89 : vector<24x32xf32>
    %91 = arith.addf %1, %90 : vector<24x32xf32>
    %cst_50 = arith.constant dense<0.000000e+00> : vector<24xf32>
    %92 = vector.multi_reduction <add>, %91, %cst_50 [1] : vector<24x32xf32> to vector<24xf32>
    %93 = vector.shape_cast %92 : vector<24xf32> to vector<24x1xf32>
    %cst_51 = arith.constant 3.200000e+01 : f32
    %94 = vector.broadcast %cst_51 : f32 to vector<24x1xf32>
    %95 = arith.divf %93, %94 : vector<24x1xf32>
    %96 = vector.broadcast %95 : vector<24x1xf32> to vector<24x32xf32>
    %97 = arith.subf %91, %96 : vector<24x32xf32>
    %98 = arith.mulf %97, %97 : vector<24x32xf32>
    %cst_52 = arith.constant dense<0.000000e+00> : vector<24xf32>
    %99 = vector.multi_reduction <add>, %98, %cst_52 [1] : vector<24x32xf32> to vector<24xf32>
    %100 = vector.shape_cast %99 : vector<24xf32> to vector<24x1xf32>
    %cst_53 = arith.constant 3.200000e+01 : f32
    %101 = vector.broadcast %cst_53 : f32 to vector<24x1xf32>
    %102 = arith.divf %100, %101 : vector<24x1xf32>
    %103 = vector.broadcast %95 : vector<24x1xf32> to vector<24x32xf32>
    %104 = arith.subf %91, %103 : vector<24x32xf32>
    %cst_54 = arith.constant 9.99999997E-7 : f32
    %105 = vector.broadcast %cst_54 : f32 to vector<24x1xf32>
    %106 = arith.addf %102, %105 : vector<24x1xf32>
    %107 = math.rsqrt %106 : vector<24x1xf32>
    %108 = vector.broadcast %107 : vector<24x1xf32> to vector<24x32xf32>
    %109 = arith.mulf %104, %108 : vector<24x32xf32>
    %110 = vector.broadcast %20 : vector<1x32xf32> to vector<24x32xf32>
    %111 = arith.mulf %109, %110 : vector<24x32xf32>
    %112 = vector.broadcast %21 : vector<1x32xf32> to vector<24x32xf32>
    %113 = arith.addf %111, %112 : vector<24x32xf32>
    %114 = arith.truncf %113 : vector<24x32xf32> to vector<24x32xbf16>
    %cst_55 = arith.constant dense<0.000000e+00> : vector<24x128xf32>
    %115 = tpu.matmul %114, %11, %cst_55 {dimension_numbers = #tpu.dot_dimension_numbers<[1], [0], [0], [1], [0, 0, 1, 1], [], []>} : vector<24x32xbf16>, vector<32x128xbf16>, vector<24x128xf32> -> vector<24x128xf32>
    %116 = vector.broadcast %22 : vector<1x128xf32> to vector<24x128xf32>
    %117 = arith.addf %115, %116 : vector<24x128xf32>
    %cst_56 = arith.constant 5.000000e-01 : f32
    %118 = vector.broadcast %cst_56 : f32 to vector<24x128xf32>
    %119 = arith.mulf %118, %117 : vector<24x128xf32>
    %cst_57 = arith.constant 4.471500e-02 : f32
    %120 = vector.broadcast %cst_57 : f32 to vector<24x128xf32>
    %121 = arith.mulf %120, %117 : vector<24x128xf32>
    %122 = arith.mulf %121, %117 : vector<24x128xf32>
    %123 = arith.mulf %122, %117 : vector<24x128xf32>
    %124 = arith.addf %117, %123 : vector<24x128xf32>
    %cst_58 = arith.constant 0.797884583 : f32
    %125 = vector.broadcast %cst_58 : f32 to vector<24x128xf32>
    %126 = arith.mulf %125, %124 : vector<24x128xf32>
    %127 = math.tanh %126 : vector<24x128xf32>
    %cst_59 = arith.constant 1.000000e+00 : f32
    %128 = vector.broadcast %cst_59 : f32 to vector<24x128xf32>
    %129 = arith.addf %128, %127 : vector<24x128xf32>
    %130 = arith.mulf %119, %129 : vector<24x128xf32>
    %131 = arith.truncf %130 : vector<24x128xf32> to vector<24x128xbf16>
    %cst_60 = arith.constant dense<0.000000e+00> : vector<24x32xf32>
    %132 = tpu.matmul %131, %13, %cst_60 {dimension_numbers = #tpu.dot_dimension_numbers<[1], [0], [0], [1], [0, 0, 1, 1], [], []>} : vector<24x128xbf16>, vector<128x32xbf16>, vector<24x32xf32> -> vector<24x32xf32>
    %133 = vector.broadcast %23 : vector<1x32xf32> to vector<24x32xf32>
    %134 = arith.addf %132, %133 : vector<24x32xf32>
    %135 = arith.addf %91, %134 : vector<24x32xf32>
    %c10 = arith.constant 10 : index
    %c0_61 = arith.constant 0 : index
    %136 = vector.load %arg5[%c10, %c0_61] : memref<13x128xf32, #tpu.memory_space<vmem>>, vector<1x32xf32>
    %c11 = arith.constant 11 : index
    %c0_62 = arith.constant 0 : index
    %137 = vector.load %arg5[%c11, %c0_62] : memref<13x128xf32, #tpu.memory_space<vmem>>, vector<1x32xf32>
    %cst_63 = arith.constant dense<0.000000e+00> : vector<24xf32>
    %138 = vector.multi_reduction <add>, %135, %cst_63 [1] : vector<24x32xf32> to vector<24xf32>
    %139 = vector.shape_cast %138 : vector<24xf32> to vector<24x1xf32>
    %cst_64 = arith.constant 3.200000e+01 : f32
    %140 = vector.broadcast %cst_64 : f32 to vector<24x1xf32>
    %141 = arith.divf %139, %140 : vector<24x1xf32>
    %142 = vector.broadcast %141 : vector<24x1xf32> to vector<24x32xf32>
    %143 = arith.subf %135, %142 : vector<24x32xf32>
    %144 = arith.mulf %143, %143 : vector<24x32xf32>
    %cst_65 = arith.constant dense<0.000000e+00> : vector<24xf32>
    %145 = vector.multi_reduction <add>, %144, %cst_65 [1] : vector<24x32xf32> to vector<24xf32>
    %146 = vector.shape_cast %145 : vector<24xf32> to vector<24x1xf32>
    %cst_66 = arith.constant 3.200000e+01 : f32
    %147 = vector.broadcast %cst_66 : f32 to vector<24x1xf32>
    %148 = arith.divf %146, %147 : vector<24x1xf32>
    %149 = vector.broadcast %141 : vector<24x1xf32> to vector<24x32xf32>
    %150 = arith.subf %135, %149 : vector<24x32xf32>
    %cst_67 = arith.constant 9.99999997E-7 : f32
    %151 = vector.broadcast %cst_67 : f32 to vector<24x1xf32>
    %152 = arith.addf %148, %151 : vector<24x1xf32>
    %153 = math.rsqrt %152 : vector<24x1xf32>
    %154 = vector.broadcast %153 : vector<24x1xf32> to vector<24x32xf32>
    %155 = arith.mulf %150, %154 : vector<24x32xf32>
    %156 = vector.broadcast %136 : vector<1x32xf32> to vector<24x32xf32>
    %157 = arith.mulf %155, %156 : vector<24x32xf32>
    %158 = vector.broadcast %137 : vector<1x32xf32> to vector<24x32xf32>
    %159 = arith.addf %157, %158 : vector<24x32xf32>
    %c12 = arith.constant 12 : index
    %c0_68 = arith.constant 0 : index
    %160 = vector.load %arg5[%c12, %c0_68] : memref<13x128xf32, #tpu.memory_space<vmem>>, vector<1x128xf32>
    %161 = arith.truncf %159 : vector<24x32xf32> to vector<24x32xbf16>
    %c0_69 = arith.constant 0 : index
    %c0_70 = arith.constant 0 : index
    %162 = vector.load %arg6[%c0_69, %c0_70] : memref<32x128xbf16, #tpu.memory_space<vmem>>, vector<32x128xbf16>
    %cst_71 = arith.constant dense<0.000000e+00> : vector<24x128xf32>
    %163 = tpu.matmul %161, %162, %cst_71 {dimension_numbers = #tpu.dot_dimension_numbers<[1], [0], [0], [1], [0, 0, 1, 1], [], []>} : vector<24x32xbf16>, vector<32x128xbf16>, vector<24x128xf32> -> vector<24x128xf32>
    %164 = vector.broadcast %160 : vector<1x128xf32> to vector<24x128xf32>
    %165 = arith.addf %163, %164 : vector<24x128xf32>
    %c0_72 = arith.constant 0 : index
    %c0_73 = arith.constant 0 : index
    %c0_74 = arith.constant 0 : index
    %166 = vector.load %arg9[%c0_72, %c0_73, %c0_74] : memref<1x24x128xf32, #tpu.memory_space<vmem>>, vector<1x24x128xf32>
    %167 = vector.shape_cast %166 : vector<1x24x128xf32> to vector<24x128xf32>
    %168 = vector.shape_cast %165 : vector<24x128xf32> to vector<1x24x128xf32>
    tpu.vector_store %arg9[%c0_72, %c0_73, %c0_74], %168 {strides = array<i32>} : memref<1x24x128xf32, #tpu.memory_space<vmem>>, vector<1x24x128xf32>,
    %c0_75 = arith.constant 0 : index
    %c0_76 = arith.constant 0 : index
    %c0_77 = arith.constant 0 : index
    %169 = vector.load %arg7[%c0_75, %c0_76, %c0_77] : memref<1x24x128xf32, #tpu.memory_space<vmem>>, vector<1x24x128xf32>
    %170 = vector.shape_cast %169 : vector<1x24x128xf32> to vector<24x128xf32>
    %c0_78 = arith.constant 0 : index
    %c0_79 = arith.constant 0 : index
    %c0_80 = arith.constant 0 : index
    %171 = vector.load %arg8[%c0_78, %c0_79, %c0_80] : memref<1x24x1xf32, #tpu.memory_space<vmem>>, vector<1x24x1xf32>
    %172 = vector.shape_cast %171 : vector<1x24x1xf32> to vector<24x1xf32>
    %173 = tpu.iota {dimensions = array<i32: 1>} : vector<1x128xi32>
    %c48_i32 = arith.constant 48 : i32
    %174 = vector.broadcast %c48_i32 : i32 to vector<1x128xi32>
    %175 = arith.cmpi slt, %173, %174 : vector<1x128xi32>
    %cst_81 = arith.constant dense<0.000000e+00> : vector<24xf32>
    %176 = vector.multi_reduction <add>, %170, %cst_81 [1] : vector<24x128xf32> to vector<24xf32>
    %177 = vector.shape_cast %176 : vector<24xf32> to vector<24x1xf32>
    %cst_82 = arith.constant 0.020833334 : f32
    %178 = vector.broadcast %cst_82 : f32 to vector<24x1xf32>
    %179 = arith.mulf %177, %178 : vector<24x1xf32>
    %180 = vector.broadcast %179 : vector<24x1xf32> to vector<24x128xf32>
    %181 = arith.subf %170, %180 : vector<24x128xf32>
    %cst_83 = arith.constant 0.000000e+00 : f32
    %182 = vector.shape_cast %175 : vector<1x128xi1> to vector<1x128xi1>
    %183 = vector.broadcast %182 : vector<1x128xi1> to vector<24x128xi1>
    %184 = vector.broadcast %cst_83 : f32 to vector<24x128xf32>
    %185 = arith.select %183, %181, %184 : vector<24x128xi1>, vector<24x128xf32>
    %186 = arith.mulf %185, %185 : vector<24x128xf32>
    %cst_84 = arith.constant dense<0.000000e+00> : vector<24xf32>
    %187 = vector.multi_reduction <add>, %186, %cst_84 [1] : vector<24x128xf32> to vector<24xf32>
    %188 = vector.shape_cast %187 : vector<24xf32> to vector<24x1xf32>
    %cst_85 = arith.constant 0.0212765951 : f32
    %189 = vector.broadcast %cst_85 : f32 to vector<24x1xf32>
    %190 = arith.mulf %188, %189 : vector<24x1xf32>
    %cst_86 = arith.constant 9.99999997E-7 : f32
    %191 = vector.broadcast %cst_86 : f32 to vector<24x1xf32>
    %192 = arith.addf %190, %191 : vector<24x1xf32>
    %193 = math.rsqrt %192 : vector<24x1xf32>
    %194 = vector.broadcast %193 : vector<24x1xf32> to vector<24x128xf32>
    %195 = arith.mulf %185, %194 : vector<24x128xf32>
    %196 = arith.subf %165, %195 : vector<24x128xf32>
    %197 = arith.mulf %196, %196 : vector<24x128xf32>
    %cst_87 = arith.constant dense<0.000000e+00> : vector<24xf32>
    %198 = vector.multi_reduction <add>, %197, %cst_87 [1] : vector<24x128xf32> to vector<24xf32>
    %199 = vector.shape_cast %198 : vector<24xf32> to vector<24x1xf32>
    %cst_88 = arith.constant 0.020833334 : f32
    %200 = vector.broadcast %cst_88 : f32 to vector<24x1xf32>
    %201 = arith.mulf %199, %200 : vector<24x1xf32>
    %202 = arith.mulf %201, %172 : vector<24x1xf32>
    %203 = vector.shape_cast %202 : vector<24x1xf32> to vector<1x24x1xf32>
    %cst_89 = arith.constant dense<0.000000e+00> : vector<1xf32>
    %204 = vector.multi_reduction <add>, %203, %cst_89 [1, 2] : vector<1x24x1xf32> to vector<1xf32>
    %205 = vector.shape_cast %204 : vector<1xf32> to vector<1x1x1xf32>
    %206 = vector.extract %205[0, 0, 0] : f32 from vector<1x1x1xf32>
    %207 = vector.broadcast %206 : f32 to vector<1x1xf32>
    %208 = vector.shape_cast %172 : vector<24x1xf32> to vector<1x24x1xf32>
    %cst_90 = arith.constant dense<0.000000e+00> : vector<1xf32>
    %209 = vector.multi_reduction <add>, %208, %cst_90 [1, 2] : vector<1x24x1xf32> to vector<1xf32>
    %210 = vector.shape_cast %209 : vector<1xf32> to vector<1x1x1xf32>
    %211 = vector.extract %210[0, 0, 0] : f32 from vector<1x1x1xf32>
    %212 = vector.broadcast %211 : f32 to vector<1x1xf32>
    %213 = tpu.iota {dimensions = array<i32: 1>} : vector<8x128xi32>
    %c0_i32 = arith.constant 0 : i32
    %214 = vector.broadcast %c0_i32 : i32 to vector<8x128xi32>
    %215 = arith.cmpi eq, %213, %214 : vector<8x128xi32>
    %cst_91 = arith.constant 0.000000e+00 : f32
    %216 = vector.shape_cast %207 : vector<1x1xf32> to vector<1x1xf32>
    %217 = vector.broadcast %216 : vector<1x1xf32> to vector<8x128xf32>
    %218 = vector.broadcast %cst_91 : f32 to vector<8x128xf32>
    %219 = arith.select %215, %217, %218 : vector<8x128xi1>, vector<8x128xf32>
    %c1_i32 = arith.constant 1 : i32
    %220 = vector.broadcast %c1_i32 : i32 to vector<8x128xi32>
    %221 = arith.cmpi eq, %213, %220 : vector<8x128xi32>
    %cst_92 = arith.constant 0.000000e+00 : f32
    %222 = vector.shape_cast %212 : vector<1x1xf32> to vector<1x1xf32>
    %223 = vector.broadcast %222 : vector<1x1xf32> to vector<8x128xf32>
    %224 = vector.broadcast %cst_92 : f32 to vector<8x128xf32>
    %225 = arith.select %221, %223, %224 : vector<8x128xi1>, vector<8x128xf32>
    %226 = arith.addf %219, %225 : vector<8x128xf32>
    %c0_93 = arith.constant 0 : index
    %c0_94 = arith.constant 0 : index
    %c0_95 = arith.constant 0 : index
    %227 = vector.load %arg10[%c0_93, %c0_94, %c0_95] : memref<1x8x128xf32, #tpu.memory_space<vmem>>, vector<1x8x128xf32>
    %228 = vector.shape_cast %227 : vector<1x8x128xf32> to vector<8x128xf32>
    %229 = vector.shape_cast %226 : vector<8x128xf32> to vector<1x8x128xf32>
    tpu.vector_store %arg10[%c0_93, %c0_94, %c0_95], %229 {strides = array<i32>} : memref<1x8x128xf32, #tpu.memory_space<vmem>>, vector<1x8x128xf32>,
    return
  }
  func.func @transform_0(%arg0: i32) -> (i32, i32, i32) {
    %c0_i32 = arith.constant 0 : i32
    %c0_i32_0 = arith.constant 0 : i32
    %c0_i32_1 = arith.constant 0 : i32
    return %arg0, %c0_i32, %c0_i32_0 : i32, i32, i32
  }
  func.func @transform_1(%arg0: i32) -> (i32, i32, i32, i32) {
    %c0_i32 = arith.constant 0 : i32
    %c0_i32_0 = arith.constant 0 : i32
    %c0_i32_1 = arith.constant 0 : i32
    %c0_i32_2 = arith.constant 0 : i32
    %c0_i32_3 = arith.constant 0 : i32
    return %c0_i32, %c0_i32_0, %c0_i32_1, %c0_i32_2 : i32, i32, i32, i32
  }
  func.func @transform_2(%arg0: i32) -> (i32, i32, i32) {
    %c0_i32 = arith.constant 0 : i32
    %c0_i32_0 = arith.constant 0 : i32
    %c0_i32_1 = arith.constant 0 : i32
    %c0_i32_2 = arith.constant 0 : i32
    return %c0_i32, %c0_i32_0, %c0_i32_1 : i32, i32, i32
  }
  func.func @transform_3(%arg0: i32) -> (i32, i32, i32) {
    %c0_i32 = arith.constant 0 : i32
    %c0_i32_0 = arith.constant 0 : i32
    %c0_i32_1 = arith.constant 0 : i32
    %c0_i32_2 = arith.constant 0 : i32
    return %c0_i32, %c0_i32_0, %c0_i32_1 : i32, i32, i32
  }
  func.func @transform_4(%arg0: i32) -> (i32, i32) {
    %c0_i32 = arith.constant 0 : i32
    %c0_i32_0 = arith.constant 0 : i32
    %c0_i32_1 = arith.constant 0 : i32
    return %c0_i32, %c0_i32_0 : i32, i32
  }
  func.func @transform_5(%arg0: i32) -> (i32, i32) {
    %c0_i32 = arith.constant 0 : i32
    %c0_i32_0 = arith.constant 0 : i32
    %c0_i32_1 = arith.constant 0 : i32
    return %c0_i32, %c0_i32_0 : i32, i32
  }
  func.func @transform_6(%arg0: i32) -> (i32, i32, i32) {
    %c0_i32 = arith.constant 0 : i32
    %c0_i32_0 = arith.constant 0 : i32
    %c0_i32_1 = arith.constant 0 : i32
    return %arg0, %c0_i32, %c0_i32_0 : i32, i32, i32
  }
  func.func @transform_7(%arg0: i32) -> (i32, i32, i32) {
    %c0_i32 = arith.constant 0 : i32
    %c0_i32_0 = arith.constant 0 : i32
    %c0_i32_1 = arith.constant 0 : i32
    return %arg0, %c0_i32, %c0_i32_0 : i32, i32, i32
  }
  func.func @transform_8(%arg0: i32) -> (i32, i32, i32) {
    %c0_i32 = arith.constant 0 : i32
    %c0_i32_0 = arith.constant 0 : i32
    %c0_i32_1 = arith.constant 0 : i32
    return %arg0, %c0_i32, %c0_i32_0 : i32, i32, i32
  }
  func.func @transform_9(%arg0: i32) -> (i32, i32, i32) {
    %c0_i32 = arith.constant 0 : i32
    %c0_i32_0 = arith.constant 0 : i32
    %c0_i32_1 = arith.constant 0 : i32
    return %arg0, %c0_i32, %c0_i32_0 : i32, i32, i32
  }
}

</mosaic_0001>

<llo_original>
// kernel: _lambda_.2
$region0: #{_lambda_.2}
  #allocation0 [shape = 'u32[]', space=smem, size = 0x4, offset = 0x4, fixed_abs, tag = 'smem constant byte address 0x4 - core index']
  #allocation1 [shape = 'u32[72,128]{1,0:T(1,128)}', space=vmem, size = 0x9000, scoped, tag = 'internal scratch']
  %s0 = inlined_call_operand.vmem [shape: f32[2,8,48], index: 0, kind: input, shape index: {}]
  %s1 = inlined_call_operand.vmem [shape: f32[2,8,32], index: 1, kind: input, shape index: {}]
  %s2 = inlined_call_operand.vmem [shape: bf16[48,32], index: 2, kind: input, shape index: {}]
  %s3 = inlined_call_operand.vmem [shape: bf16[2,4,32,32], index: 3, kind: input, shape index: {}]
  %s4 = inlined_call_operand.vmem [shape: bf16[2,32,128], index: 4, kind: input, shape index: {}]
  %s5 = inlined_call_operand.vmem [shape: bf16[2,128,32], index: 5, kind: input, shape index: {}]
  %s6 = inlined_call_operand.vmem [shape: f32[23,128], index: 6, kind: input, shape index: {}]
  %s7 = inlined_call_operand.vmem [shape: bf16[32,128], index: 7, kind: input, shape index: {}]
  %s8 = inlined_call_operand.vmem [shape: f32[2,8,128], index: 8, kind: output, shape index: {}]
  %s9 = sld [smem:[#allocation0]]
  $region65: #{_lambda_.2} parent=0
    _
  %s11 = ssub.s32 1, %s9
  %s12 = scalar_select 0, %s11, %s9
  loop: start=0, step=1, limit=4
  $region2: #{_lambda_.2} parent=0 // loop_pre_header
    _
  $region3: #{_lambda_.2} parent=0 // loop_header
    %s14 = sphi 0, %s18
    %p15 = scmp.ge.s32.totalorder %s14, 4
    %s24 = sphi 0, %s26
    %s27 = sphi 0, %s24
    %s28 = sphi 0, %s27
    %s44 = sphi 0, %s28
    %s50 = sphi 0, %s52
    %s53 = sphi 0, %s50
    %s54 = sphi 0, %s53
    %s70 = sphi 0, %s54
    %s74 = sphi 0, %s74
    %s76 = sphi 0, %s74
    %s77 = sphi 0, %s76
    %s91 = sphi 0, %s77
    %s95 = sphi 0, %s95
    %s97 = sphi 0, %s95
    %s98 = sphi 0, %s97
    %s112 = sphi 0, %s98
    %s116 = sphi 0, %s116
    %s118 = sphi 0, %s116
    %s119 = sphi 0, %s118
    %s133 = sphi 0, %s119
    %s137 = sphi 0, %s137
    %s139 = sphi 0, %s137
    %s140 = sphi 0, %s139
    %s154 = sphi 0, %s140
    %s158 = sphi 0, %s158
    %s160 = sphi 0, %s158
    %s161 = sphi 0, %s160
    %s175 = sphi 0, %s161
    %s179 = sphi 0, %s179
    %s181 = sphi 0, %s179
    %s182 = sphi 0, %s181
    %s196 = sphi 0, %s182
    %s202 = sphi 0, %s204
    %s205 = sphi 0, %s202
    %s206 = sphi 0, %s205
    %s222 = sphi 0, %s206
  $region4: #{_lambda_.2} parent=0 // loop_header_branch
    %17 = sbr.rel (%p15) target = $region8
  $region5: #{_lambda_.2} parent=0 // loop_body
    %s19 = ssub.s32 %s14, 1
    %s20 = ssub.s32 %s14, 2
    %s21 = sadd.s32 %s14, 1
    %s22 = ssub.s32 %s14, %s21
    %p23 = scmp.eq.s32.totalorder %s22, 0
    %s25 = sadd.s32 %s24, 1
    %s26 = scalar_select %p23, %s24, %s25
    %p29 = pneg %p23
    %p30 = scmp.eq.s32.totalorder %s14, 1
    %p31 = por %p29, %p30
    %p32 = scmp.ne.s32.totalorder %s24, %s27
    %p33 = scmp.eq.s32.totalorder %s14, 0
    %p34 = por %p32, %p33
    %p35 = scmp.ne.s32.totalorder %s24, %s27
    %p36 = scmp.eq.s32.totalorder %s19, 1
    %p37 = por %p35, %p36
    %p38 = scmp.ne.s32.totalorder %s27, %s28
    %p39 = scmp.eq.s32.totalorder %s19, 0
    %p40 = por %p38, %p39
    %p41 = scmp.ne.s32.totalorder %s27, %s28
    %p42 = scmp.eq.s32.totalorder %s20, 1
    %p43 = por %p41, %p42
    %p45 = scmp.ne.s32.totalorder %s28, %s44
    %p46 = scmp.eq.s32.totalorder %s20, 0
    %p47 = por %p45, %p46
    %s48 = ssub.s32 %s14, %s21
    %p49 = scmp.eq.s32.totalorder %s48, 0
    %s51 = sadd.s32 %s50, 1
    %s52 = scalar_select %p49, %s50, %s51
    %p55 = pneg %p49
    %p56 = scmp.eq.s32.totalorder %s14, 1
    %p57 = por %p55, %p56
    %p58 = scmp.ne.s32.totalorder %s50, %s53
    %p59 = scmp.eq.s32.totalorder %s14, 0
    %p60 = por %p58, %p59
    %p61 = scmp.ne.s32.totalorder %s50, %s53
    %p62 = scmp.eq.s32.totalorder %s19, 1
    %p63 = por %p61, %p62
    %p64 = scmp.ne.s32.totalorder %s53, %s54
    %p65 = scmp.eq.s32.totalorder %s19, 0
    %p66 = por %p64, %p65
    %p67 = scmp.ne.s32.totalorder %s53, %s54
    %p68 = scmp.eq.s32.totalorder %s20, 1
    %p69 = por %p67, %p68
    %p71 = scmp.ne.s32.totalorder %s54, %s70
    %p72 = scmp.eq.s32.totalorder %s20, 0
    %p73 = por %p71, %p72
    %s75 = sadd.s32 %s74, 1
    %p78 = scmp.eq.s32.totalorder %s14, 1
    %p79 = scmp.ne.s32.totalorder %s74, %s76
    %p80 = scmp.eq.s32.totalorder %s14, 0
    %p81 = por %p79, %p80
    %p82 = scmp.ne.s32.totalorder %s74, %s76
    %p83 = scmp.eq.s32.totalorder %s19, 1
    %p84 = por %p82, %p83
    %p85 = scmp.ne.s32.totalorder %s76, %s77
    %p86 = scmp.eq.s32.totalorder %s19, 0
    %p87 = por %p85, %p86
    %p88 = scmp.ne.s32.totalorder %s76, %s77
    %p89 = scmp.eq.s32.totalorder %s20, 1
    %p90 = por %p88, %p89
    %p92 = scmp.ne.s32.totalorder %s77, %s91
    %p93 = scmp.eq.s32.totalorder %s20, 0
    %p94 = por %p92, %p93
    %s96 = sadd.s32 %s95, 1
    %p99 = scmp.eq.s32.totalorder %s14, 1
    %p100 = scmp.ne.s32.totalorder %s95, %s97
    %p101 = scmp.eq.s32.totalorder %s14, 0
    %p102 = por %p100, %p101
    %p103 = scmp.ne.s32.totalorder %s95, %s97
    %p104 = scmp.eq.s32.totalorder %s19, 1
    %p105 = por %p103, %p104
    %p106 = scmp.ne.s32.totalorder %s97, %s98
    %p107 = scmp.eq.s32.totalorder %s19, 0
    %p108 = por %p106, %p107
    %p109 = scmp.ne.s32.totalorder %s97, %s98
    %p110 = scmp.eq.s32.totalorder %s20, 1
    %p111 = por %p109, %p110
    %p113 = scmp.ne.s32.totalorder %s98, %s112
    %p114 = scmp.eq.s32.totalorder %s20, 0
    %p115 = por %p113, %p114
    %s117 = sadd.s32 %s116, 1
    %p120 = scmp.eq.s32.totalorder %s14, 1
    %p121 = scmp.ne.s32.totalorder %s116, %s118
    %p122 = scmp.eq.s32.totalorder %s14, 0
    %p123 = por %p121, %p122
    %p124 = scmp.ne.s32.totalorder %s116, %s118
    %p125 = scmp.eq.s32.totalorder %s19, 1
    %p126 = por %p124, %p125
    %p127 = scmp.ne.s32.totalorder %s118, %s119
    %p128 = scmp.eq.s32.totalorder %s19, 0
    %p129 = por %p127, %p128
    %p130 = scmp.ne.s32.totalorder %s118, %s119
    %p131 = scmp.eq.s32.totalorder %s20, 1
    %p132 = por %p130, %p131
    %p134 = scmp.ne.s32.totalorder %s119, %s133
    %p135 = scmp.eq.s32.totalorder %s20, 0
    %p136 = por %p134, %p135
    %s138 = sadd.s32 %s137, 1
    %p141 = scmp.eq.s32.totalorder %s14, 1
    %p142 = scmp.ne.s32.totalorder %s137, %s139
    %p143 = scmp.eq.s32.totalorder %s14, 0
    %p144 = por %p142, %p143
    %p145 = scmp.ne.s32.totalorder %s137, %s139
    %p146 = scmp.eq.s32.totalorder %s19, 1
    %p147 = por %p145, %p146
    %p148 = scmp.ne.s32.totalorder %s139, %s140
    %p149 = scmp.eq.s32.totalorder %s19, 0
    %p150 = por %p148, %p149
    %p151 = scmp.ne.s32.totalorder %s139, %s140
    %p152 = scmp.eq.s32.totalorder %s20, 1
    %p153 = por %p151, %p152
    %p155 = scmp.ne.s32.totalorder %s140, %s154
    %p156 = scmp.eq.s32.totalorder %s20, 0
    %p157 = por %p155, %p156
    %s159 = sadd.s32 %s158, 1
    %p162 = scmp.eq.s32.totalorder %s14, 1
    %p163 = scmp.ne.s32.totalorder %s158, %s160
    %p164 = scmp.eq.s32.totalorder %s14, 0
    %p165 = por %p163, %p164
    %p166 = scmp.ne.s32.totalorder %s158, %s160
    %p167 = scmp.eq.s32.totalorder %s19, 1
    %p168 = por %p166, %p167
    %p169 = scmp.ne.s32.totalorder %s160, %s161
    %p170 = scmp.eq.s32.totalorder %s19, 0
    %p171 = por %p169, %p170
    %p172 = scmp.ne.s32.totalorder %s160, %s161
    %p173 = scmp.eq.s32.totalorder %s20, 1
    %p174 = por %p172, %p173
    %p176 = scmp.ne.s32.totalorder %s161, %s175
    %p177 = scmp.eq.s32.totalorder %s20, 0
    %p178 = por %p176, %p177
    %s180 = sadd.s32 %s179, 1
    %p183 = scmp.eq.s32.totalorder %s14, 1
    %p184 = scmp.ne.s32.totalorder %s179, %s181
    %p185 = scmp.eq.s32.totalorder %s14, 0
    %p186 = por %p184, %p185
    %p187 = scmp.ne.s32.totalorder %s179, %s181
    %p188 = scmp.eq.s32.totalorder %s19, 1
    %p189 = por %p187, %p188
    %p190 = scmp.ne.s32.totalorder %s181, %s182
    %p191 = scmp.eq.s32.totalorder %s19, 0
    %p192 = por %p190, %p191
    %p193 = scmp.ne.s32.totalorder %s181, %s182
    %p194 = scmp.eq.s32.totalorder %s20, 1
    %p195 = por %p193, %p194
    %p197 = scmp.ne.s32.totalorder %s182, %s196
    %p198 = scmp.eq.s32.totalorder %s20, 0
    %p199 = por %p197, %p198
    %s200 = ssub.s32 %s14, %s21
    %p201 = scmp.eq.s32.totalorder %s200, 0
    %s203 = sadd.s32 %s202, 1
    %s204 = scalar_select %p201, %s202, %s203
    %p207 = pneg %p201
    %p208 = scmp.eq.s32.totalorder %s14, 1
    %p209 = por %p207, %p208
    %p210 = scmp.ne.s32.totalorder %s202, %s205
    %p211 = scmp.eq.s32.totalorder %s14, 0
    %p212 = por %p210, %p211
    %p213 = scmp.ne.s32.totalorder %s202, %s205
    %p214 = scmp.eq.s32.totalorder %s19, 1
    %p215 = por %p213, %p214
    %p216 = scmp.ne.s32.totalorder %s205, %s206
    %p217 = scmp.eq.s32.totalorder %s19, 0
    %p218 = por %p216, %p217
    %p219 = scmp.ne.s32.totalorder %s205, %s206
    %p220 = scmp.eq.s32.totalorder %s20, 1
    %p221 = por %p219, %p220
    %p223 = scmp.ne.s32.totalorder %s206, %s222
    %p224 = scmp.eq.s32.totalorder %s20, 0
    %p225 = por %p223, %p224
    %p226 = scmp.le.s32.totalorder 1, %s14
    %p227 = scmp.lt.s32.totalorder %s14, 3
    %p228 = pnand %p226, %p227
    %p229 = pneg %p228
    // Predicated region
    $region9: #{_lambda_.2} parent=5 // pred_check
      _
    $region10: #{_lambda_.2} parent=5 // pred_check_branch
      %231 = sbr.rel (%p228) target = $region12
    $region11: #{_lambda_.2} parent=5 // pred_region
      %s232 = ssub.s32 %s14, 1
      // Predicated region
      $region13: #{_lambda_.2} parent=11 // pred_check
        %p233 = pneg %p87
      $region14: #{_lambda_.2} parent=11 // pred_check_branch
        %235 = sbr.rel (%p233) target = $region16
      $region15: #{_lambda_.2} parent=11 // pred_region
        _
      $region16: #{_lambda_.2} parent=11 // pred_fallthru
        _
      // Predicated region
      $region17: #{_lambda_.2} parent=11 // pred_check
        %p236 = pneg %p108
      $region18: #{_lambda_.2} parent=11 // pred_check_branch
        %238 = sbr.rel (%p236) target = $region20
      $region19: #{_lambda_.2} parent=11 // pred_region
        _
      $region20: #{_lambda_.2} parent=11 // pred_fallthru
        _
      // Predicated region
      $region21: #{_lambda_.2} parent=11 // pred_check
        %p239 = pneg %p129
      $region22: #{_lambda_.2} parent=11 // pred_check_branch
        %241 = sbr.rel (%p239) target = $region24
      $region23: #{_lambda_.2} parent=11 // pred_region
        _
      $region24: #{_lambda_.2} parent=11 // pred_fallthru
        _
      // Predicated region
      $region25: #{_lambda_.2} parent=11 // pred_check
        %p242 = pneg %p150
      $region26: #{_lambda_.2} parent=11 // pred_check_branch
        %244 = sbr.rel (%p242) target = $region28
      $region27: #{_lambda_.2} parent=11 // pred_region
        _
      $region28: #{_lambda_.2} parent=11 // pred_fallthru
        _
      // Predicated region
      $region29: #{_lambda_.2} parent=11 // pred_check
        %p245 = pneg %p171
      $region30: #{_lambda_.2} parent=11 // pred_check_branch
        %247 = sbr.rel (%p245) target = $region32
      $region31: #{_lambda_.2} parent=11 // pred_region
        _
      $region32: #{_lambda_.2} parent=11 // pred_fallthru
        _
      // Predicated region
      $region33: #{_lambda_.2} parent=11 // pred_check
        %p248 = pneg %p192
      $region34: #{_lambda_.2} parent=11 // pred_check_branch
        %250 = sbr.rel (%p248) target = $region36
      $region35: #{_lambda_.2} parent=11 // pred_region
        _
      $region36: #{_lambda_.2} parent=11 // pred_fallthru
        _
    $region12: #{_lambda_.2} parent=5 // pred_fallthru
      _
    %p251 = scmp.lt.s32.totalorder %s14, 2
    // Predicated region
    $region37: #{_lambda_.2} parent=5 // pred_check
      %p252 = pneg %p251
    $region38: #{_lambda_.2} parent=5 // pred_check_branch
      %254 = sbr.rel (%p252) target = $region40
    $region39: #{_lambda_.2} parent=5 // pred_region
      // Predicated region
      $region41: #{_lambda_.2} parent=39 // pred_check
        %p255 = pneg %p34
      $region42: #{_lambda_.2} parent=39 // pred_check_branch
        %257 = sbr.rel (%p255) target = $region44
      $region43: #{_lambda_.2} parent=39 // pred_region
        %p258 = scmp.lt.s32.totalorder %s14, 1
        %s259 = scalar_select %p258, %s14, 1
        %s260 = smul.addr %s259, 8
        %s261 = scalar_lea.vmem %s0, %s260
      $region44: #{_lambda_.2} parent=39 // pred_fallthru
        _
      // Predicated region
      $region45: #{_lambda_.2} parent=39 // pred_check
        %p262 = pneg %p60
      $region46: #{_lambda_.2} parent=39 // pred_check_branch
        %264 = sbr.rel (%p262) target = $region48
      $region47: #{_lambda_.2} parent=39 // pred_region
        %p265 = scmp.lt.s32.totalorder %s14, 1
        %s266 = scalar_select %p265, %s14, 1
        %s267 = smul.addr %s266, 8
        %s268 = scalar_lea.vmem %s1, %s267
      $region48: #{_lambda_.2} parent=39 // pred_fallthru
        _
    $region40: #{_lambda_.2} parent=5 // pred_fallthru
      _
    %p269 = scmp.le.s32.totalorder 1, %s14
    %p270 = scmp.lt.s32.totalorder %s14, 3
    %p271 = pnand %p269, %p270
    %p272 = pneg %p271
    // Predicated region
    $region49: #{_lambda_.2} parent=5 // pred_check
      _
    $region50: #{_lambda_.2} parent=5 // pred_check_branch
      %274 = sbr.rel (%p271) target = $region52
    $region51: #{_lambda_.2} parent=5 // pred_region
      %s275 = ssub.s32 %s14, 1
      %p276 = scmp.lt.s32.totalorder %s19, 1
      %s277 = scalar_select %p276, %s19, 1
      %s278 = smul.addr %s277, 8
      %s279 = scalar_lea.vmem %s0, %s278
      %p280 = pneg %p40
      %p281 = pneg %p37
      %p282 = scmp.lt.s32.totalorder %s19, 1
      %s283 = scalar_select %p282, %s19, 1
      %s284 = smul.addr %s283, 8
      %s285 = scalar_lea.vmem %s1, %s284
      %p286 = pneg %p66
      %p287 = pneg %p63
      %p288 = pneg %p87
      %p289 = pneg %p84
      %p290 = pneg %p108
      %p291 = pneg %p105
      %p292 = pneg %p129
      %p293 = pneg %p126
      %p294 = pneg %p150
      %p295 = pneg %p147
      %p296 = pneg %p171
      %p297 = pneg %p168
      %p298 = pneg %p192
      %p299 = pneg %p189
      %p300 = pneg %p218
      %p301 = pneg %p215
      %p302 = scmp.lt.s32.totalorder %s19, 1
      %s303 = scalar_select %p302, %s19, 1
      %s304 = smul.addr %s303, 8
      %s305 = scalar_lea.vmem %s8, %s304
      %p306 = scmp.lt.s32.totalorder %s19, 1
      %s307 = scalar_select %p306, %s19, 1
      %s308 = smul.addr %s307, 8
      %s309 = scalar_lea.vmem %s0, %s308
      %p310 = scmp.lt.s32.totalorder %s19, 1
      %s311 = scalar_select %p310, %s19, 1
      %s312 = smul.addr %s311, 8
      %s313 = scalar_lea.vmem %s1, %s312
      %p314 = scmp.lt.s32.totalorder %s19, 1
      %s315 = scalar_select %p314, %s19, 1
      %s316 = smul.addr %s315, 8
      %s317 = scalar_lea.vmem %s8, %s316
      %v319 = vld [vmem:[%s309] sm:$0xff]
      %v320 = vpack.c.bf16 %v319, %v319
      %v321 = vld [vmem:[%s2] sm:$0xf]
      %v322 = vld [vmem:[%s2 + $0x4] sm:$0xf]
      %v323 = vld [vmem:[%s2 + $0x8] sm:$0xf]
      %v324 = vld [vmem:[%s2 + $0xc] sm:$0xf]
      %v325 = vld [vmem:[%s2 + $0x10] sm:$0xf]
      %v326 = vld [vmem:[%s2 + $0x14] sm:$0xf]
      %v327 = vld [vmem:[%s313] sm:$0xff]
      %v334 = vunpack.c.l.b16 %v321
      %v335 = vunpack.c.l.b16 %v322
      %v336 = vunpack.c.l.b16 %v323
      %v337 = vunpack.c.l.b16 %v324
      %v338 = vunpack.c.l.b16 %v325
      %v339 = vunpack.c.l.b16 %v326
      %v340 = vpack.c.b16 %v335, %v334
      %v341 = vpack.c.b16 %v337, %v336
      %v342 = vpack.c.b16 %v339, %v338
      %vm346 = vcmask 392192
      %v348 = vsel %vm346, %v320, 0
      %350 = vmatpush.bf16.msra.mxu0 0
      %351 = vmatpush.bf16.msra.mxu0 0
      %352 = vmatpush.bf16.msra.mxu0 0
      %353 = vmatpush.bf16.msra.mxu0 0
      %354 = vmatpush.bf16.msra.mxu0 0
      %355 = vmatpush.bf16.msra.mxu0 %v342
      %356 = vmatpush.bf16.msra.mxu0 %v341
      %357 = vmatpush.bf16.msra.mxu0 %v340
      %358 = vmatmul.bf16.gmra.mxu0 %v348
      %v359 = vpop.f32.mrf.mxu0
      %v360 = vadd.f32 %v327, %v359
      %v361 = vpop.f32.mrf.mxu0
      %362 = vdwg.mxu0
      %v363 = vld [vmem:[%s3] sm:$0xf]
      %v364 = vld [vmem:[%s3 + $0x4] sm:$0xf]
      %v365 = vld [vmem:[%s3 + $0x8] sm:$0xf]
      %v366 = vld [vmem:[%s3 + $0xc] sm:$0xf]
      %s367 = scalar_lea.vmem %s3, 16
      %v368 = vld [vmem:[%s367] sm:$0xf]
      %v369 = vld [vmem:[%s367 + $0x4] sm:$0xf]
      %v370 = vld [vmem:[%s367 + $0x8] sm:$0xf]
      %v371 = vld [vmem:[%s367 + $0xc] sm:$0xf]
      %s372 = scalar_lea.vmem %s3, 32
      %v373 = vld [vmem:[%s372] sm:$0xf]
      %v374 = vld [vmem:[%s372 + $0x4] sm:$0xf]
      %v375 = vld [vmem:[%s372 + $0x8] sm:$0xf]
      %v376 = vld [vmem:[%s372 + $0xc] sm:$0xf]
      %s377 = scalar_lea.vmem %s3, 48
      %v378 = vld [vmem:[%s377] sm:$0xf]
      %v379 = vld [vmem:[%s377 + $0x4] sm:$0xf]
      %v380 = vld [vmem:[%s377 + $0x8] sm:$0xf]
      %v381 = vld [vmem:[%s377 + $0xc] sm:$0xf]
      %v382 = vld [vmem:[%s4] sm:$0xf]
      %v383 = vld [vmem:[%s4 + $0x4] sm:$0xf]
      %v384 = vld [vmem:[%s4 + $0x8] sm:$0xf]
      %v385 = vld [vmem:[%s4 + $0xc] sm:$0xf]
      %v386 = vld [vmem:[%s5] sm:$0xf]
      %v387 = vld [vmem:[%s5 + $0x4] sm:$0xf]
      %v388 = vld [vmem:[%s5 + $0x8] sm:$0xf]
      %v389 = vld [vmem:[%s5 + $0xc] sm:$0xf]
      %v390 = vld [vmem:[%s5 + $0x10] sm:$0xf]
      %v391 = vld [vmem:[%s5 + $0x14] sm:$0xf]
      %v392 = vld [vmem:[%s5 + $0x18] sm:$0xf]
      %v393 = vld [vmem:[%s5 + $0x1c] sm:$0xf]
      %v394 = vld [vmem:[%s5 + $0x20] sm:$0xf]
      %v395 = vld [vmem:[%s5 + $0x24] sm:$0xf]
      %v396 = vld [vmem:[%s5 + $0x28] sm:$0xf]
      %v397 = vld [vmem:[%s5 + $0x2c] sm:$0xf]
      %v398 = vld [vmem:[%s5 + $0x30] sm:$0xf]
      %v399 = vld [vmem:[%s5 + $0x34] sm:$0xf]
      %v400 = vld [vmem:[%s5 + $0x38] sm:$0xf]
      %v401 = vld [vmem:[%s5 + $0x3c] sm:$0xf]
      %v402 = vld [vmem:[%s6] sm:$0x1]
      %v403 = vld [vmem:[%s6 + $0x1] sm:$0x1]
      %v404 = vld [vmem:[%s6 + $0x2] sm:$0x1]
      %v405 = vld [vmem:[%s6 + $0x3] sm:$0x1]
      %v406 = vld [vmem:[%s6 + $0x4] sm:$0x1]
      %v407 = vld [vmem:[%s6 + $0x5] sm:$0x1]
      %v408 = vld [vmem:[%s6 + $0x6] sm:$0x1]
      %v409 = vld [vmem:[%s6 + $0x7] sm:$0x1]
      %v410 = vld [vmem:[%s6 + $0x8] sm:$0x1]
      %v411 = vld [vmem:[%s6 + $0x9] sm:$0x1]
      %vm412 = vcmask 261120
      %v413 = vsel %vm412, %v360, 0.0
      %414 = vadd.xlane.f32.xlu0 %v413
      %v415 = vpop.xlane.xlu0 %414
      %v416 = vrcp.pop 32.0
      %v417 = vmul.f32 32.0, %v416
      %v418 = vsub.f32 1.0, %v417
      %v419 = vmul.f32 %v416, %v418
      %v420 = vadd.f32 %v416, %v419
      %vm421 = vweird.f32 %v416
      %v422 = vsel %vm421, %v416, %v420
      %v423 = vmul.f32 %v415, %v422
      %v424 = vsub.f32 %v360, %v423
      %v425 = vmul.f32 %v424, %v424
      %v426 = vsel %vm412, %v425, 0.0
      %427 = vadd.xlane.f32.xlu0 %v426
      %v428 = vpop.xlane.xlu0 %427
      %v429 = vmul.f32 %v428, %v422
      %v430 = vadd.f32 %v429, 1e-06
      %v431 = vrsqrt.pop %v430
      %v432 = vmul.f32 %v431, %v430
      %v433 = vmul.f32 %v432, %v431
      %v434 = vmul.f32 0.5, %v433
      %v435 = vsub.f32 1.5, %v434
      %v436 = vmul.f32 %v431, %v435
      %vm437 = vweird.f32 %v430
      %vm438 = vweird.f32 %v431
      %vm439 = vmor %vm437, %vm438
      %v440 = vsel %vm439, %v431, %v436
      %v441 = vmul.f32 %v424, %v440
      %v442 = vperm.slane %v402, 0
      %v443 = vmul.f32 %v441, %v442
      %v444 = vperm.slane %v403, 0
      %v445 = vadd.f32 %v443, %v444
      %v446 = vpack.c.bf16 %v445, %v445
      %v447 = vperm.slane %v404, 0
      %v452 = vunpack.c.l.b16 %v363
      %v453 = vunpack.c.l.b16 %v364
      %v454 = vunpack.c.l.b16 %v365
      %v455 = vunpack.c.l.b16 %v366
      %v456 = vpack.c.b16 %v453, %v452
      %v457 = vpack.c.b16 %v455, %v454
      %v461 = vsel %vm412, %v446, 0
      %463 = vmatpush.bf16.msra.mxu0 0
      %464 = vmatpush.bf16.msra.mxu0 0
      %465 = vmatpush.bf16.msra.mxu0 0
      %466 = vmatpush.bf16.msra.mxu0 0
      %467 = vmatpush.bf16.msra.mxu0 0
      %468 = vmatpush.bf16.msra.mxu0 0
      %469 = vmatpush.bf16.msra.mxu0 %v457
      %470 = vmatpush.bf16.msra.mxu0 %v456
      %471 = vmatmul.bf16.gmra.mxu0 %v461
      %v472 = vpop.f32.mrf.mxu0
      %v473 = vadd.f32 %v447, %v472
      %v474 = vpop.f32.mrf.mxu0
      %475 = vdwg.mxu0
      %477 = vrot.lane.b32.xlu0 %v473, 120
      %v478 = vpop.permute.xlu0 %477
      %480 = vrot.lane.b32.xlu0 %v473, 112
      %v481 = vpop.permute.xlu0 %480
      %483 = vrot.lane.b32.xlu0 %v473, 104
      %v484 = vpop.permute.xlu0 %483
      %v486 = vrot.slane %v481, 4
      %vm487 = vcmask 1047556
      %v488 = vsel %vm487, %v486, %v473
      %v489 = vrot.slane %v473, 4
      %v490 = vsel %vm487, %v481, %v489
      %v492 = vunpack.c.l.s4 1983009808
      %v493 = vunpack.c.0.s8 %v492
      %v494 = vperm.slane %v488, %v493
      %v496 = vunpack.c.l.s4 1983009808
      %v497 = vunpack.c.0.s8 %v496
      %v498 = vperm.slane %v490, %v497
      %v499 = vrot.slane %v484, 4
      %v500 = vsel %vm487, %v499, %v478
      %v501 = vrot.slane %v478, 4
      %v502 = vsel %vm487, %v484, %v501
      %v504 = vunpack.c.l.s4 1983009808
      %v505 = vunpack.c.0.s8 %v504
      %v506 = vperm.slane %v500, %v505
      %v508 = vunpack.c.l.s4 1983009808
      %v509 = vunpack.c.0.s8 %v508
      %v510 = vperm.slane %v502, %v509
      %v511 = vrot.slane %v506, 4
      %v512 = vsel %vm487, %v511, %v494
      %v513 = vrot.slane %v494, 4
      %v514 = vsel %vm487, %v506, %v513
      %v516 = vunpack.c.l.s4 1934713408
      %v517 = vunpack.c.0.s8 %v516
      %v518 = vperm.slane %v512, %v517
      %v520 = vunpack.c.l.s4 1934713408
      %v521 = vunpack.c.0.s8 %v520
      %v522 = vperm.slane %v514, %v521
      %v523 = vrot.slane %v510, 4
      %v524 = vsel %vm487, %v523, %v498
      %v525 = vrot.slane %v498, 4
      %v526 = vsel %vm487, %v510, %v525
      %v528 = vunpack.c.l.s4 1934713408
      %v529 = vunpack.c.0.s8 %v528
      %v530 = vperm.slane %v524, %v529
      %v532 = vunpack.c.l.s4 1934713408
      %v533 = vunpack.c.0.s8 %v532
      %v534 = vperm.slane %v526, %v533
      %v535 = vrot.slane %v518, 4
      %v536 = vsel %vm487, 0.0, %v535
      %v537 = vrot.slane %v522, 4
      %v538 = vsel %vm487, 0.0, %v537
      %v539 = vrot.slane %v530, 4
      %v540 = vsel %vm487, 0.0, %v539
      %v541 = vrot.slane %v534, 4
      %v542 = vsel %vm487, 0.0, %v541
      %v543 = vperm.slane %v405, 0
      %v548 = vunpack.c.l.b16 %v368
      %v549 = vunpack.c.l.b16 %v369
      %v550 = vunpack.c.l.b16 %v370
      %v551 = vunpack.c.l.b16 %v371
      %v552 = vpack.c.b16 %v549, %v548
      %v553 = vpack.c.b16 %v551, %v550
      %556 = vmatpush.bf16.msra.mxu0 0
      %557 = vmatpush.bf16.msra.mxu0 0
      %558 = vmatpush.bf16.msra.mxu0 0
      %559 = vmatpush.bf16.msra.mxu0 0
      %560 = vmatpush.bf16.msra.mxu0 0
      %561 = vmatpush.bf16.msra.mxu0 0
      %562 = vmatpush.bf16.msra.mxu0 %v553
      %563 = vmatpush.bf16.msra.mxu0 %v552
      %564 = vmatmul.bf16.gmra.mxu0 %v461
      %v565 = vpop.f32.mrf.mxu0
      %v566 = vadd.f32 %v543, %v565
      %v567 = vpop.f32.mrf.mxu0
      %568 = vdwg.mxu0
      %570 = vrot.lane.b32.xlu0 %v566, 120
      %v571 = vpop.permute.xlu0 %570
      %573 = vrot.lane.b32.xlu0 %v566, 112
      %v574 = vpop.permute.xlu0 %573
      %576 = vrot.lane.b32.xlu0 %v566, 104
      %v577 = vpop.permute.xlu0 %576
      %v579 = vrot.slane %v574, 4
      %v580 = vsel %vm487, %v579, %v566
      %v581 = vrot.slane %v566, 4
      %v582 = vsel %vm487, %v574, %v581
      %v584 = vunpack.c.l.s4 1983009808
      %v585 = vunpack.c.0.s8 %v584
      %v586 = vperm.slane %v580, %v585
      %v588 = vunpack.c.l.s4 1983009808
      %v589 = vunpack.c.0.s8 %v588
      %v590 = vperm.slane %v582, %v589
      %v591 = vrot.slane %v577, 4
      %v592 = vsel %vm487, %v591, %v571
      %v593 = vrot.slane %v571, 4
      %v594 = vsel %vm487, %v577, %v593
      %v596 = vunpack.c.l.s4 1983009808
      %v597 = vunpack.c.0.s8 %v596
      %v598 = vperm.slane %v592, %v597
      %v600 = vunpack.c.l.s4 1983009808
      %v601 = vunpack.c.0.s8 %v600
      %v602 = vperm.slane %v594, %v601
      %v603 = vrot.slane %v598, 4
      %v604 = vsel %vm487, %v603, %v586
      %v605 = vrot.slane %v586, 4
      %v606 = vsel %vm487, %v598, %v605
      %v608 = vunpack.c.l.s4 1934713408
      %v609 = vunpack.c.0.s8 %v608
      %v610 = vperm.slane %v604, %v609
      %v612 = vunpack.c.l.s4 1934713408
      %v613 = vunpack.c.0.s8 %v612
      %v614 = vperm.slane %v606, %v613
      %v615 = vrot.slane %v602, 4
      %v616 = vsel %vm487, %v615, %v590
      %v617 = vrot.slane %v590, 4
      %v618 = vsel %vm487, %v602, %v617
      %v620 = vunpack.c.l.s4 1934713408
      %v621 = vunpack.c.0.s8 %v620
      %v622 = vperm.slane %v616, %v621
      %v624 = vunpack.c.l.s4 1934713408
      %v625 = vunpack.c.0.s8 %v624
      %v626 = vperm.slane %v618, %v625
      %v627 = vrot.slane %v610, 4
      %v628 = vsel %vm487, 0.0, %v627
      %v629 = vrot.slane %v614, 4
      %v630 = vsel %vm487, 0.0, %v629
      %v631 = vrot.slane %v622, 4
      %v632 = vsel %vm487, 0.0, %v631
      %v633 = vrot.slane %v626, 4
      %v634 = vsel %vm487, 0.0, %v633
      %v635 = vperm.slane %v406, 0
      %v640 = vunpack.c.l.b16 %v373
      %v641 = vunpack.c.l.b16 %v374
      %v642 = vunpack.c.l.b16 %v375
      %v643 = vunpack.c.l.b16 %v376
      %v644 = vpack.c.b16 %v641, %v640
      %v645 = vpack.c.b16 %v643, %v642
      %648 = vmatpush.bf16.msra.mxu0 0
      %649 = vmatpush.bf16.msra.mxu0 0
      %650 = vmatpush.bf16.msra.mxu0 0
      %651 = vmatpush.bf16.msra.mxu0 0
      %652 = vmatpush.bf16.msra.mxu0 0
      %653 = vmatpush.bf16.msra.mxu0 0
      %654 = vmatpush.bf16.msra.mxu0 %v645
      %655 = vmatpush.bf16.msra.mxu0 %v644
      %656 = vmatmul.bf16.gmra.mxu0 %v461
      %v657 = vpop.f32.mrf.mxu0
      %v658 = vadd.f32 %v635, %v657
      %v659 = vpop.f32.mrf.mxu0
      %660 = vdwg.mxu0
      %662 = vrot.lane.b32.xlu0 %v658, 120
      %v663 = vpop.permute.xlu0 %662
      %665 = vrot.lane.b32.xlu0 %v658, 112
      %v666 = vpop.permute.xlu0 %665
      %668 = vrot.lane.b32.xlu0 %v658, 104
      %v669 = vpop.permute.xlu0 %668
      %v671 = vrot.slane %v666, 4
      %v672 = vsel %vm487, %v671, %v658
      %v673 = vrot.slane %v658, 4
      %v674 = vsel %vm487, %v666, %v673
      %v676 = vunpack.c.l.s4 1983009808
      %v677 = vunpack.c.0.s8 %v676
      %v678 = vperm.slane %v672, %v677
      %v680 = vunpack.c.l.s4 1983009808
      %v681 = vunpack.c.0.s8 %v680
      %v682 = vperm.slane %v674, %v681
      %v683 = vrot.slane %v669, 4
      %v684 = vsel %vm487, %v683, %v663
      %v685 = vrot.slane %v663, 4
      %v686 = vsel %vm487, %v669, %v685
      %v688 = vunpack.c.l.s4 1983009808
      %v689 = vunpack.c.0.s8 %v688
      %v690 = vperm.slane %v684, %v689
      %v692 = vunpack.c.l.s4 1983009808
      %v693 = vunpack.c.0.s8 %v692
      %v694 = vperm.slane %v686, %v693
      %v695 = vrot.slane %v690, 4
      %v696 = vsel %vm487, %v695, %v678
      %v697 = vrot.slane %v678, 4
      %v698 = vsel %vm487, %v690, %v697
      %v700 = vunpack.c.l.s4 1934713408
      %v701 = vunpack.c.0.s8 %v700
      %v702 = vperm.slane %v696, %v701
      %v704 = vunpack.c.l.s4 1934713408
      %v705 = vunpack.c.0.s8 %v704
      %v706 = vperm.slane %v698, %v705
      %v707 = vrot.slane %v694, 4
      %v708 = vsel %vm487, %v707, %v682
      %v709 = vrot.slane %v682, 4
      %v710 = vsel %vm487, %v694, %v709
      %v712 = vunpack.c.l.s4 1934713408
      %v713 = vunpack.c.0.s8 %v712
      %v714 = vperm.slane %v708, %v713
      %v716 = vunpack.c.l.s4 1934713408
      %v717 = vunpack.c.0.s8 %v716
      %v718 = vperm.slane %v710, %v717
      %v719 = vrot.slane %v702, 4
      %v720 = vsel %vm487, 0.0, %v719
      %v721 = vrot.slane %v706, 4
      %v722 = vsel %vm487, 0.0, %v721
      %v723 = vrot.slane %v714, 4
      %v724 = vsel %vm487, 0.0, %v723
      %v725 = vrot.slane %v718, 4
      %v726 = vsel %vm487, 0.0, %v725
      %v727 = vlaneseq
      %v728 = vand.u32 %v727, 127
      %vm729 = vcmp.lt.s32.totalorder %v728, 5
      %v730 = vsel %vm729, 0.0, -1e+30
      %v731 = vpack.c.bf16 %v518, %v518
      %v732 = vpack.c.bf16 %v536, %v536
      %v733 = vpack.c.bf16 %v522, %v522
      %v734 = vpack.c.bf16 %v538, %v538
      %v735 = vpack.c.bf16 %v530, %v530
      %v736 = vpack.c.bf16 %v540, %v540
      %v737 = vpack.c.bf16 %v534, %v534
      %v738 = vpack.c.bf16 %v542, %v542
      %v739 = vpack.c.bf16 %v610, %v610
      %v740 = vpack.c.bf16 %v628, %v628
      %v741 = vpack.c.bf16 %v614, %v614
      %v742 = vpack.c.bf16 %v630, %v630
      %v743 = vpack.c.bf16 %v622, %v622
      %v744 = vpack.c.bf16 %v632, %v632
      %v745 = vpack.c.bf16 %v626, %v626
      %v746 = vpack.c.bf16 %v634, %v634
      %v747 = vrot.slane %v735, 4
      %vm748 = vcmask 1047556
      %v749 = vsel %vm748, %v747, %v731
      %v751 = vunpack.c.l.s4 1983009808
      %v752 = vunpack.c.0.s8 %v751
      %v753 = vperm.slane %v749, %v752
      %v754 = vrot.slane %v737, 4
      %v755 = vsel %vm748, %v754, %v733
      %v757 = vunpack.c.l.s4 1983009808
      %v758 = vunpack.c.0.s8 %v757
      %v759 = vperm.slane %v755, %v758
      %v760 = vrot.slane %v759, 4
      %v761 = vsel %vm748, %v760, %v753
      %v763 = vunpack.c.l.s4 1934713408
      %v764 = vunpack.c.0.s8 %v763
      %v765 = vperm.slane %v761, %v764
      %v766 = vrot.slane %v765, 4
      %v767 = vsel %vm748, 0, %v766
      %v768 = vrot.slane %v736, 4
      %v769 = vsel %vm748, %v768, %v732
      %v771 = vunpack.c.l.s4 1983009808
      %v772 = vunpack.c.0.s8 %v771
      %v773 = vperm.slane %v769, %v772
      %v774 = vrot.slane %v738, 4
      %v775 = vsel %vm748, %v774, %v734
      %v777 = vunpack.c.l.s4 1983009808
      %v778 = vunpack.c.0.s8 %v777
      %v779 = vperm.slane %v775, %v778
      %v780 = vrot.slane %v779, 4
      %v781 = vsel %vm748, %v780, %v773
      %v783 = vunpack.c.l.s4 1934713408
      %v784 = vunpack.c.0.s8 %v783
      %v785 = vperm.slane %v781, %v784
      %v786 = vrot.slane %v785, 4
      %v787 = vsel %vm748, 0, %v786
      %v790 = vpack.i.b16 %v785, %v765
      %v791 = vshrl.u32 %v765, 16
      %v792 = vshrl.u32 %v785, 16
      %v793 = vpack.i.b16 %v792, %v791
      %v796 = vpack.i.b16 %v787, %v767
      %v797 = vshrl.u32 %v767, 16
      %v798 = vshrl.u32 %v787, 16
      %v799 = vpack.i.b16 %v798, %v797
      %800 = vxpose.xlu0.c.b16.start [1/8] %v739, 128
      %801 = vxpose.xlu0.c.b16.cont [2/8] 0, 128
      %802 = vxpose.xlu0.c.b16.cont [3/8] 0, 128
      %803 = vxpose.xlu0.c.b16.cont [4/8] 0, 128
      %804 = vxpose.xlu0.c.b16.cont [5/8] 0, 128
      %805 = vxpose.xlu0.c.b16.cont [6/8] 0, 128
      %806 = vxpose.xlu0.c.b16.cont [7/8] 0, 128
      %807 = vxpose.xlu0.c.b16.end [8/8] 0, 128
      %v808 = vpop.trf.xlu0
      %v809 = vpop.trf.xlu0
      %v810 = vpop.trf.xlu0
      %v811 = vpop.trf.xlu0
      %v812 = vpop.trf.xlu0
      %v813 = vpop.trf.xlu0
      %v814 = vpop.trf.xlu0
      %v815 = vpop.trf.xlu0
      %816 = vxpose.xlu0.c.b16.start [1/8] %v740, 128
      %817 = vxpose.xlu0.c.b16.cont [2/8] 0, 128
      %818 = vxpose.xlu0.c.b16.cont [3/8] 0, 128
      %819 = vxpose.xlu0.c.b16.cont [4/8] 0, 128
      %820 = vxpose.xlu0.c.b16.cont [5/8] 0, 128
      %821 = vxpose.xlu0.c.b16.cont [6/8] 0, 128
      %822 = vxpose.xlu0.c.b16.cont [7/8] 0, 128
      %823 = vxpose.xlu0.c.b16.end [8/8] 0, 128
      %v824 = vpop.trf.xlu0
      %v825 = vpop.trf.xlu0
      %v826 = vpop.trf.xlu0
      %v827 = vpop.trf.xlu0
      %v828 = vpop.trf.xlu0
      %v829 = vpop.trf.xlu0
      %v830 = vpop.trf.xlu0
      %v831 = vpop.trf.xlu0
      %832 = vxpose.xlu0.c.b16.start [1/8] %v741, 128
      %833 = vxpose.xlu0.c.b16.cont [2/8] 0, 128
      %834 = vxpose.xlu0.c.b16.cont [3/8] 0, 128
      %835 = vxpose.xlu0.c.b16.cont [4/8] 0, 128
      %836 = vxpose.xlu0.c.b16.cont [5/8] 0, 128
      %837 = vxpose.xlu0.c.b16.cont [6/8] 0, 128
      %838 = vxpose.xlu0.c.b16.cont [7/8] 0, 128
      %839 = vxpose.xlu0.c.b16.end [8/8] 0, 128
      %v840 = vpop.trf.xlu0
      %v841 = vpop.trf.xlu0
      %v842 = vpop.trf.xlu0
      %v843 = vpop.trf.xlu0
      %v844 = vpop.trf.xlu0
      %v845 = vpop.trf.xlu0
      %v846 = vpop.trf.xlu0
      %v847 = vpop.trf.xlu0
      %848 = vxpose.xlu0.c.b16.start [1/8] %v742, 128
      %849 = vxpose.xlu0.c.b16.cont [2/8] 0, 128
      %850 = vxpose.xlu0.c.b16.cont [3/8] 0, 128
      %851 = vxpose.xlu0.c.b16.cont [4/8] 0, 128
      %852 = vxpose.xlu0.c.b16.cont [5/8] 0, 128
      %853 = vxpose.xlu0.c.b16.cont [6/8] 0, 128
      %854 = vxpose.xlu0.c.b16.cont [7/8] 0, 128
      %855 = vxpose.xlu0.c.b16.end [8/8] 0, 128
      %v856 = vpop.trf.xlu0
      %v857 = vpop.trf.xlu0
      %v858 = vpop.trf.xlu0
      %v859 = vpop.trf.xlu0
      %v860 = vpop.trf.xlu0
      %v861 = vpop.trf.xlu0
      %v862 = vpop.trf.xlu0
      %v863 = vpop.trf.xlu0
      %864 = vxpose.xlu0.c.b16.start [1/8] %v743, 128
      %865 = vxpose.xlu0.c.b16.cont [2/8] 0, 128
      %866 = vxpose.xlu0.c.b16.cont [3/8] 0, 128
      %867 = vxpose.xlu0.c.b16.cont [4/8] 0, 128
      %868 = vxpose.xlu0.c.b16.cont [5/8] 0, 128
      %869 = vxpose.xlu0.c.b16.cont [6/8] 0, 128
      %870 = vxpose.xlu0.c.b16.cont [7/8] 0, 128
      %871 = vxpose.xlu0.c.b16.end [8/8] 0, 128
      %v872 = vpop.trf.xlu0
      %v873 = vpop.trf.xlu0
      %v874 = vpop.trf.xlu0
      %v875 = vpop.trf.xlu0
      %v876 = vpop.trf.xlu0
      %v877 = vpop.trf.xlu0
      %v878 = vpop.trf.xlu0
      %v879 = vpop.trf.xlu0
      %880 = vxpose.xlu0.c.b16.start [1/8] %v744, 128
      %881 = vxpose.xlu0.c.b16.cont [2/8] 0, 128
      %882 = vxpose.xlu0.c.b16.cont [3/8] 0, 128
      %883 = vxpose.xlu0.c.b16.cont [4/8] 0, 128
      %884 = vxpose.xlu0.c.b16.cont [5/8] 0, 128
      %885 = vxpose.xlu0.c.b16.cont [6/8] 0, 128
      %886 = vxpose.xlu0.c.b16.cont [7/8] 0, 128
      %887 = vxpose.xlu0.c.b16.end [8/8] 0, 128
      %v888 = vpop.trf.xlu0
      %v889 = vpop.trf.xlu0
      %v890 = vpop.trf.xlu0
      %v891 = vpop.trf.xlu0
      %v892 = vpop.trf.xlu0
      %v893 = vpop.trf.xlu0
      %v894 = vpop.trf.xlu0
      %v895 = vpop.trf.xlu0
      %896 = vxpose.xlu0.c.b16.start [1/8] %v745, 128
      %897 = vxpose.xlu0.c.b16.cont [2/8] 0, 128
      %898 = vxpose.xlu0.c.b16.cont [3/8] 0, 128
      %899 = vxpose.xlu0.c.b16.cont [4/8] 0, 128
      %900 = vxpose.xlu0.c.b16.cont [5/8] 0, 128
      %901 = vxpose.xlu0.c.b16.cont [6/8] 0, 128
      %902 = vxpose.xlu0.c.b16.cont [7/8] 0, 128
      %903 = vxpose.xlu0.c.b16.end [8/8] 0, 128
      %v904 = vpop.trf.xlu0
      %v905 = vpop.trf.xlu0
      %v906 = vpop.trf.xlu0
      %v907 = vpop.trf.xlu0
      %v908 = vpop.trf.xlu0
      %v909 = vpop.trf.xlu0
      %v910 = vpop.trf.xlu0
      %v911 = vpop.trf.xlu0
      %912 = vxpose.xlu0.c.b16.start [1/8] %v746, 128
      %913 = vxpose.xlu0.c.b16.cont [2/8] 0, 128
      %914 = vxpose.xlu0.c.b16.cont [3/8] 0, 128
      %915 = vxpose.xlu0.c.b16.cont [4/8] 0, 128
      %916 = vxpose.xlu0.c.b16.cont [5/8] 0, 128
      %917 = vxpose.xlu0.c.b16.cont [6/8] 0, 128
      %918 = vxpose.xlu0.c.b16.cont [7/8] 0, 128
      %919 = vxpose.xlu0.c.b16.end [8/8] 0, 128
      %v920 = vpop.trf.xlu0
      %v921 = vpop.trf.xlu0
      %v922 = vpop.trf.xlu0
      %v923 = vpop.trf.xlu0
      %v924 = vpop.trf.xlu0
      %v925 = vpop.trf.xlu0
      %v926 = vpop.trf.xlu0
      %v927 = vpop.trf.xlu0
      %v928 = vrot.slane %v872, 4
      %v929 = vsel %vm748, %v928, %v808
      %v931 = vunpack.c.l.s4 1983009808
      %v932 = vunpack.c.0.s8 %v931
      %v933 = vperm.slane %v929, %v932
      %v934 = vrot.slane %v904, 4
      %v935 = vsel %vm748, %v934, %v840
      %v937 = vunpack.c.l.s4 1983009808
      %v938 = vunpack.c.0.s8 %v937
      %v939 = vperm.slane %v935, %v938
      %v940 = vrot.slane %v939, 4
      %v941 = vsel %vm748, %v940, %v933
      %v942 = vrot.slane %v933, 4
      %v943 = vsel %vm748, %v939, %v942
      %v945 = vunpack.c.l.s4 1934713408
      %v946 = vunpack.c.0.s8 %v945
      %v947 = vperm.slane %v941, %v946
      %v949 = vunpack.c.l.s4 1934713408
      %v950 = vunpack.c.0.s8 %v949
      %v951 = vperm.slane %v943, %v950
      %v952 = vrot.slane %v947, 4
      %v953 = vsel %vm748, 0, %v952
      %v954 = vrot.slane %v951, 4
      %v955 = vsel %vm748, 0, %v954
      %v956 = vrot.slane %v888, 4
      %v957 = vsel %vm748, %v956, %v824
      %v959 = vunpack.c.l.s4 1983009808
      %v960 = vunpack.c.0.s8 %v959
      %v961 = vperm.slane %v957, %v960
      %v962 = vrot.slane %v920, 4
      %v963 = vsel %vm748, %v962, %v856
      %v965 = vunpack.c.l.s4 1983009808
      %v966 = vunpack.c.0.s8 %v965
      %v967 = vperm.slane %v963, %v966
      %v968 = vrot.slane %v967, 4
      %v969 = vsel %vm748, %v968, %v961
      %v970 = vrot.slane %v961, 4
      %v971 = vsel %vm748, %v967, %v970
      %v973 = vunpack.c.l.s4 1934713408
      %v974 = vunpack.c.0.s8 %v973
      %v975 = vperm.slane %v969, %v974
      %v977 = vunpack.c.l.s4 1934713408
      %v978 = vunpack.c.0.s8 %v977
      %v979 = vperm.slane %v971, %v978
      %v980 = vrot.slane %v975, 4
      %v981 = vsel %vm748, 0, %v980
      %v982 = vrot.slane %v979, 4
      %v983 = vsel %vm748, 0, %v982
      %v986 = vpack.i.b16 %v975, %v947
      %v988 = vshrl.u32 %v947, 16
      %v989 = vshrl.u32 %v975, 16
      %v990 = vpack.i.b16 %v989, %v988
      %v994 = vpack.i.b16 %v981, %v953
      %v996 = vshrl.u32 %v953, 16
      %v997 = vshrl.u32 %v981, 16
      %v998 = vpack.i.b16 %v997, %v996
      %v1002 = vpack.i.b16 %v979, %v951
      %v1004 = vshrl.u32 %v951, 16
      %v1005 = vshrl.u32 %v979, 16
      %v1006 = vpack.i.b16 %v1005, %v1004
      %v1010 = vpack.i.b16 %v983, %v955
      %v1012 = vshrl.u32 %v955, 16
      %v1013 = vshrl.u32 %v983, 16
      %v1014 = vpack.i.b16 %v1013, %v1012
      %1016 = vxpose.xlu0.c.b16.start [1/8] %v986, 128
      %1017 = vxpose.xlu0.c.b16.cont [2/8] 0, 128
      %1018 = vxpose.xlu0.c.b16.cont [3/8] 0, 128
      %1019 = vxpose.xlu0.c.b16.cont [4/8] 0, 128
      %1020 = vxpose.xlu0.c.b16.cont [5/8] 0, 128
      %1021 = vxpose.xlu0.c.b16.cont [6/8] 0, 128
      %1022 = vxpose.xlu0.c.b16.cont [7/8] 0, 128
      %1023 = vxpose.xlu0.c.b16.end [8/8] 0, 128
      %v1024 = vpop.trf.xlu0
      %v1025 = vpop.trf.xlu0
      %v1026 = vpop.trf.xlu0
      %v1027 = vpop.trf.xlu0
      %v1028 = vpop.trf.xlu0
      %v1029 = vpop.trf.xlu0
      %v1030 = vpop.trf.xlu0
      %v1031 = vpop.trf.xlu0
      %1032 = vxpose.xlu0.c.b16.start [1/8] %v990, 128
      %1033 = vxpose.xlu0.c.b16.cont [2/8] 0, 128
      %1034 = vxpose.xlu0.c.b16.cont [3/8] 0, 128
      %1035 = vxpose.xlu0.c.b16.cont [4/8] 0, 128
      %1036 = vxpose.xlu0.c.b16.cont [5/8] 0, 128
      %1037 = vxpose.xlu0.c.b16.cont [6/8] 0, 128
      %1038 = vxpose.xlu0.c.b16.cont [7/8] 0, 128
      %1039 = vxpose.xlu0.c.b16.end [8/8] 0, 128
      %v1040 = vpop.trf.xlu0
      %v1041 = vpop.trf.xlu0
      %v1042 = vpop.trf.xlu0
      %v1043 = vpop.trf.xlu0
      %v1044 = vpop.trf.xlu0
      %v1045 = vpop.trf.xlu0
      %v1046 = vpop.trf.xlu0
      %v1047 = vpop.trf.xlu0
      %1048 = vxpose.xlu0.c.b16.start [1/8] %v994, 128
      %1049 = vxpose.xlu0.c.b16.cont [2/8] 0, 128
      %1050 = vxpose.xlu0.c.b16.cont [3/8] 0, 128
      %1051 = vxpose.xlu0.c.b16.cont [4/8] 0, 128
      %1052 = vxpose.xlu0.c.b16.cont [5/8] 0, 128
      %1053 = vxpose.xlu0.c.b16.cont [6/8] 0, 128
      %1054 = vxpose.xlu0.c.b16.cont [7/8] 0, 128
      %1055 = vxpose.xlu0.c.b16.end [8/8] 0, 128
      %v1056 = vpop.trf.xlu0
      %v1057 = vpop.trf.xlu0
      %v1058 = vpop.trf.xlu0
      %v1059 = vpop.trf.xlu0
      %v1060 = vpop.trf.xlu0
      %v1061 = vpop.trf.xlu0
      %v1062 = vpop.trf.xlu0
      %v1063 = vpop.trf.xlu0
      %1064 = vxpose.xlu0.c.b16.start [1/8] %v998, 128
      %1065 = vxpose.xlu0.c.b16.cont [2/8] 0, 128
      %1066 = vxpose.xlu0.c.b16.cont [3/8] 0, 128
      %1067 = vxpose.xlu0.c.b16.cont [4/8] 0, 128
      %1068 = vxpose.xlu0.c.b16.cont [5/8] 0, 128
      %1069 = vxpose.xlu0.c.b16.cont [6/8] 0, 128
      %1070 = vxpose.xlu0.c.b16.cont [7/8] 0, 128
      %1071 = vxpose.xlu0.c.b16.end [8/8] 0, 128
      %v1072 = vpop.trf.xlu0
      %v1073 = vpop.trf.xlu0
      %v1074 = vpop.trf.xlu0
      %v1075 = vpop.trf.xlu0
      %v1076 = vpop.trf.xlu0
      %v1077 = vpop.trf.xlu0
      %v1078 = vpop.trf.xlu0
      %v1079 = vpop.trf.xlu0
      %1080 = vxpose.xlu0.c.b16.start [1/8] %v1002, 128
      %1081 = vxpose.xlu0.c.b16.cont [2/8] 0, 128
      %1082 = vxpose.xlu0.c.b16.cont [3/8] 0, 128
      %1083 = vxpose.xlu0.c.b16.cont [4/8] 0, 128
      %1084 = vxpose.xlu0.c.b16.cont [5/8] 0, 128
      %1085 = vxpose.xlu0.c.b16.cont [6/8] 0, 128
      %1086 = vxpose.xlu0.c.b16.cont [7/8] 0, 128
      %1087 = vxpose.xlu0.c.b16.end [8/8] 0, 128
      %v1088 = vpop.trf.xlu0
      %v1089 = vpop.trf.xlu0
      %v1090 = vpop.trf.xlu0
      %v1091 = vpop.trf.xlu0
      %v1092 = vpop.trf.xlu0
      %v1093 = vpop.trf.xlu0
      %v1094 = vpop.trf.xlu0
      %v1095 = vpop.trf.xlu0
      %1096 = vxpose.xlu0.c.b16.start [1/8] %v1006, 128
      %1097 = vxpose.xlu0.c.b16.cont [2/8] 0, 128
      %1098 = vxpose.xlu0.c.b16.cont [3/8] 0, 128
      %1099 = vxpose.xlu0.c.b16.cont [4/8] 0, 128
      %1100 = vxpose.xlu0.c.b16.cont [5/8] 0, 128
      %1101 = vxpose.xlu0.c.b16.cont [6/8] 0, 128
      %1102 = vxpose.xlu0.c.b16.cont [7/8] 0, 128
      %1103 = vxpose.xlu0.c.b16.end [8/8] 0, 128
      %v1104 = vpop.trf.xlu0
      %v1105 = vpop.trf.xlu0
      %v1106 = vpop.trf.xlu0
      %v1107 = vpop.trf.xlu0
      %v1108 = vpop.trf.xlu0
      %v1109 = vpop.trf.xlu0
      %v1110 = vpop.trf.xlu0
      %v1111 = vpop.trf.xlu0
      %1112 = vxpose.xlu0.c.b16.start [1/8] %v1010, 128
      %1113 = vxpose.xlu0.c.b16.cont [2/8] 0, 128
      %1114 = vxpose.xlu0.c.b16.cont [3/8] 0, 128
      %1115 = vxpose.xlu0.c.b16.cont [4/8] 0, 128
      %1116 = vxpose.xlu0.c.b16.cont [5/8] 0, 128
      %1117 = vxpose.xlu0.c.b16.cont [6/8] 0, 128
      %1118 = vxpose.xlu0.c.b16.cont [7/8] 0, 128
      %1119 = vxpose.xlu0.c.b16.end [8/8] 0, 128
      %v1120 = vpop.trf.xlu0
      %v1121 = vpop.trf.xlu0
      %v1122 = vpop.trf.xlu0
      %v1123 = vpop.trf.xlu0
      %v1124 = vpop.trf.xlu0
      %v1125 = vpop.trf.xlu0
      %v1126 = vpop.trf.xlu0
      %v1127 = vpop.trf.xlu0
      %1128 = vxpose.xlu0.c.b16.start [1/8] %v1014, 128
      %1129 = vxpose.xlu0.c.b16.cont [2/8] 0, 128
      %1130 = vxpose.xlu0.c.b16.cont [3/8] 0, 128
      %1131 = vxpose.xlu0.c.b16.cont [4/8] 0, 128
      %1132 = vxpose.xlu0.c.b16.cont [5/8] 0, 128
      %1133 = vxpose.xlu0.c.b16.cont [6/8] 0, 128
      %1134 = vxpose.xlu0.c.b16.cont [7/8] 0, 128
      %1135 = vxpose.xlu0.c.b16.end [8/8] 0, 128
      %v1136 = vpop.trf.xlu0
      %v1137 = vpop.trf.xlu0
      %v1138 = vpop.trf.xlu0
      %v1139 = vpop.trf.xlu0
      %v1140 = vpop.trf.xlu0
      %v1141 = vpop.trf.xlu0
      %v1142 = vpop.trf.xlu0
      %v1143 = vpop.trf.xlu0
      %v1144 = vrot.slane %v1088, 4
      %v1145 = vsel %vm748, %v1144, %v1024
      %v1147 = vunpack.c.l.s4 1983009808
      %v1148 = vunpack.c.0.s8 %v1147
      %v1149 = vperm.slane %v1145, %v1148
      %v1150 = vrot.slane %v1120, 4
      %v1151 = vsel %vm748, %v1150, %v1056
      %v1153 = vunpack.c.l.s4 1983009808
      %v1154 = vunpack.c.0.s8 %v1153
      %v1155 = vperm.slane %v1151, %v1154
      %v1156 = vrot.slane %v1155, 4
      %v1157 = vsel %vm748, %v1156, %v1149
      %v1159 = vunpack.c.l.s4 1934713408
      %v1160 = vunpack.c.0.s8 %v1159
      %v1161 = vperm.slane %v1157, %v1160
      %v1162 = vrot.slane %v1161, 4
      %v1163 = vsel %vm748, 0, %v1162
      %v1164 = vrot.slane %v1104, 4
      %v1165 = vsel %vm748, %v1164, %v1040
      %v1167 = vunpack.c.l.s4 1983009808
      %v1168 = vunpack.c.0.s8 %v1167
      %v1169 = vperm.slane %v1165, %v1168
      %v1170 = vrot.slane %v1136, 4
      %v1171 = vsel %vm748, %v1170, %v1072
      %v1173 = vunpack.c.l.s4 1983009808
      %v1174 = vunpack.c.0.s8 %v1173
      %v1175 = vperm.slane %v1171, %v1174
      %v1176 = vrot.slane %v1175, 4
      %v1177 = vsel %vm748, %v1176, %v1169
      %v1179 = vunpack.c.l.s4 1934713408
      %v1180 = vunpack.c.0.s8 %v1179
      %v1181 = vperm.slane %v1177, %v1180
      %v1182 = vrot.slane %v1181, 4
      %v1183 = vsel %vm748, 0, %v1182
      %v1186 = vpack.i.b16 %v1181, %v1161
      %v1187 = vshrl.u32 %v1161, 16
      %v1188 = vshrl.u32 %v1181, 16
      %v1189 = vpack.i.b16 %v1188, %v1187
      %v1192 = vpack.i.b16 %v1183, %v1163
      %v1193 = vshrl.u32 %v1163, 16
      %v1194 = vshrl.u32 %v1183, 16
      %v1195 = vpack.i.b16 %v1194, %v1193
      %vm1196 = vcmask 64512
      %v1198 = vsel %vm1196, %v790, 0
      %vm1200 = vcmask 1043456
      %v1202 = vsel %vm1200, %v1186, 0
      %1204 = vmatpush.bf16.msra.mxu0 0
      %1205 = vmatpush.bf16.msra.mxu0 0
      %1206 = vmatpush.bf16.msra.mxu0 0
      %1207 = vmatpush.bf16.msra.mxu0 0
      %1208 = vmatpush.bf16.msra.mxu0 0
      %1209 = vmatpush.bf16.msra.mxu0 0
      %1210 = vmatpush.bf16.msra.mxu0 0
      %1211 = vmatpush.bf16.msra.mxu0 %v1202
      %1212 = vmatmul.bf16.gmra.mxu0 %v1198
      %v1213 = vpop.f32.mrf.mxu0
      %v1214 = vadd.f32 0.0, %v1213
      %v1215 = vpop.f32.mrf.mxu0
      %1216 = vdwg.mxu0
      %v1218 = vsel %vm1196, %v793, 0
      %v1221 = vsel %vm1200, %v1189, 0
      %1223 = vmatpush.bf16.msra.mxu0 0
      %1224 = vmatpush.bf16.msra.mxu0 0
      %1225 = vmatpush.bf16.msra.mxu0 0
      %1226 = vmatpush.bf16.msra.mxu0 0
      %1227 = vmatpush.bf16.msra.mxu0 0
      %1228 = vmatpush.bf16.msra.mxu0 0
      %1229 = vmatpush.bf16.msra.mxu0 0
      %1230 = vmatpush.bf16.msra.mxu0 %v1221
      %1231 = vmatmul.bf16.gmra.mxu0 %v1218
      %v1232 = vpop.f32.mrf.mxu0
      %v1233 = vadd.f32 0.0, %v1232
      %v1234 = vpop.f32.mrf.mxu0
      %1235 = vdwg.mxu0
      %v1237 = vsel %vm1196, %v796, 0
      %v1240 = vsel %vm1200, %v1192, 0
      %1242 = vmatpush.bf16.msra.mxu0 0
      %1243 = vmatpush.bf16.msra.mxu0 0
      %1244 = vmatpush.bf16.msra.mxu0 0
      %1245 = vmatpush.bf16.msra.mxu0 0
      %1246 = vmatpush.bf16.msra.mxu0 0
      %1247 = vmatpush.bf16.msra.mxu0 0
      %1248 = vmatpush.bf16.msra.mxu0 0
      %1249 = vmatpush.bf16.msra.mxu0 %v1240
      %1250 = vmatmul.bf16.gmra.mxu0 %v1237
      %v1251 = vpop.f32.mrf.mxu0
      %v1252 = vadd.f32 0.0, %v1251
      %v1253 = vpop.f32.mrf.mxu0
      %1254 = vdwg.mxu0
      %v1256 = vsel %vm1196, %v799, 0
      %v1259 = vsel %vm1200, %v1195, 0
      %1261 = vmatpush.bf16.msra.mxu0 0
      %1262 = vmatpush.bf16.msra.mxu0 0
      %1263 = vmatpush.bf16.msra.mxu0 0
      %1264 = vmatpush.bf16.msra.mxu0 0
      %1265 = vmatpush.bf16.msra.mxu0 0
      %1266 = vmatpush.bf16.msra.mxu0 0
      %1267 = vmatpush.bf16.msra.mxu0 0
      %1268 = vmatpush.bf16.msra.mxu0 %v1259
      %1269 = vmatmul.bf16.gmra.mxu0 %v1256
      %v1270 = vpop.f32.mrf.mxu0
      %v1271 = vadd.f32 0.0, %v1270
      %v1272 = vpop.f32.mrf.mxu0
      %1273 = vdwg.mxu0
      %v1274 = vmul.f32 %v1214, 0.35355338
      %v1275 = vmul.f32 %v1233, 0.35355338
      %v1276 = vmul.f32 %v1252, 0.35355338
      %v1277 = vmul.f32 %v1271, 0.35355338
      %v1278 = vadd.f32 %v1274, %v730
      %v1279 = vadd.f32 %v1275, %v730
      %v1280 = vadd.f32 %v1276, %v730
      %v1281 = vadd.f32 %v1277, %v730
      %v1282 = vsel %vm1196, %v1278, -inf
      %1283 = vmax.xlane.f32.xlu0 %v1282
      %v1284 = vpop.xlane.xlu0 %1283
      %v1285 = vsel %vm1196, %v1279, -inf
      %1286 = vmax.xlane.f32.xlu0 %v1285
      %v1287 = vpop.xlane.xlu0 %1286
      %v1288 = vsel %vm1196, %v1280, -inf
      %1289 = vmax.xlane.f32.xlu0 %v1288
      %v1290 = vpop.xlane.xlu0 %1289
      %v1291 = vsel %vm1196, %v1281, -inf
      %1292 = vmax.xlane.f32.xlu0 %v1291
      %v1293 = vpop.xlane.xlu0 %1292
      %v1294 = vsub.f32 %v1278, %v1284
      %v1295 = vsub.f32 %v1279, %v1287
      %v1296 = vsub.f32 %v1280, %v1290
      %v1297 = vsub.f32 %v1281, %v1293
      %v1298 = vmul.f32 %v1294, 1.442695
      %v1299 = vpow.pop %v1298
      %v1300 = vmul.f32 %v1295, 1.442695
      %v1301 = vpow.pop %v1300
      %v1302 = vmul.f32 %v1296, 1.442695
      %v1303 = vpow.pop %v1302
      %v1304 = vmul.f32 %v1297, 1.442695
      %v1305 = vpow.pop %v1304
      %v1306 = vsel %vm1196, %v1299, 0.0
      %1307 = vadd.xlane.f32.xlu0 %v1306
      %v1308 = vpop.xlane.xlu0 %1307
      %v1309 = vsel %vm1196, %v1301, 0.0
      %1310 = vadd.xlane.f32.xlu0 %v1309
      %v1311 = vpop.xlane.xlu0 %1310
      %v1312 = vsel %vm1196, %v1303, 0.0
      %1313 = vadd.xlane.f32.xlu0 %v1312
      %v1314 = vpop.xlane.xlu0 %1313
      %v1315 = vsel %vm1196, %v1305, 0.0
      %1316 = vadd.xlane.f32.xlu0 %v1315
      %v1317 = vpop.xlane.xlu0 %1316
      %v1318 = vrcp.pop %v1308
      %v1319 = vrcp.pop %v1311
      %v1320 = vrcp.pop %v1314
      %v1321 = vrcp.pop %v1317
      %v1322 = vmul.f32 %v1299, %v1318
      %v1323 = vmul.f32 %v1301, %v1319
      %v1324 = vmul.f32 %v1303, %v1320
      %v1325 = vmul.f32 %v1305, %v1321
      %v1326 = vpack.c.bf16 %v1322, %v1322
      %v1327 = vpack.c.bf16 %v1323, %v1323
      %v1328 = vpack.c.bf16 %v1324, %v1324
      %v1329 = vpack.c.bf16 %v1325, %v1325
      %v1330 = vpack.c.bf16 %v702, %v702
      %v1331 = vpack.c.bf16 %v720, %v720
      %v1332 = vpack.c.bf16 %v706, %v706
      %v1333 = vpack.c.bf16 %v722, %v722
      %v1334 = vpack.c.bf16 %v714, %v714
      %v1335 = vpack.c.bf16 %v724, %v724
      %v1336 = vpack.c.bf16 %v718, %v718
      %v1337 = vpack.c.bf16 %v726, %v726
      %1338 = vxpose.xlu0.c.b16.start [1/8] %v1330, 128
      %1339 = vxpose.xlu0.c.b16.cont [2/8] 0, 128
      %1340 = vxpose.xlu0.c.b16.cont [3/8] 0, 128
      %1341 = vxpose.xlu0.c.b16.cont [4/8] 0, 128
      %1342 = vxpose.xlu0.c.b16.cont [5/8] 0, 128
      %1343 = vxpose.xlu0.c.b16.cont [6/8] 0, 128
      %1344 = vxpose.xlu0.c.b16.cont [7/8] 0, 128
      %1345 = vxpose.xlu0.c.b16.end [8/8] 0, 128
      %v1346 = vpop.trf.xlu0
      %v1347 = vpop.trf.xlu0
      %v1348 = vpop.trf.xlu0
      %v1349 = vpop.trf.xlu0
      %v1350 = vpop.trf.xlu0
      %v1351 = vpop.trf.xlu0
      %v1352 = vpop.trf.xlu0
      %v1353 = vpop.trf.xlu0
      %1354 = vxpose.xlu0.c.b16.start [1/8] %v1331, 128
      %1355 = vxpose.xlu0.c.b16.cont [2/8] 0, 128
      %1356 = vxpose.xlu0.c.b16.cont [3/8] 0, 128
      %1357 = vxpose.xlu0.c.b16.cont [4/8] 0, 128
      %1358 = vxpose.xlu0.c.b16.cont [5/8] 0, 128
      %1359 = vxpose.xlu0.c.b16.cont [6/8] 0, 128
      %1360 = vxpose.xlu0.c.b16.cont [7/8] 0, 128
      %1361 = vxpose.xlu0.c.b16.end [8/8] 0, 128
      %v1362 = vpop.trf.xlu0
      %v1363 = vpop.trf.xlu0
      %v1364 = vpop.trf.xlu0
      %v1365 = vpop.trf.xlu0
      %v1366 = vpop.trf.xlu0
      %v1367 = vpop.trf.xlu0
      %v1368 = vpop.trf.xlu0
      %v1369 = vpop.trf.xlu0
      %1370 = vxpose.xlu0.c.b16.start [1/8] %v1332, 128
      %1371 = vxpose.xlu0.c.b16.cont [2/8] 0, 128
      %1372 = vxpose.xlu0.c.b16.cont [3/8] 0, 128
      %1373 = vxpose.xlu0.c.b16.cont [4/8] 0, 128
      %1374 = vxpose.xlu0.c.b16.cont [5/8] 0, 128
      %1375 = vxpose.xlu0.c.b16.cont [6/8] 0, 128
      %1376 = vxpose.xlu0.c.b16.cont [7/8] 0, 128
      %1377 = vxpose.xlu0.c.b16.end [8/8] 0, 128
      %v1378 = vpop.trf.xlu0
      %v1379 = vpop.trf.xlu0
      %v1380 = vpop.trf.xlu0
      %v1381 = vpop.trf.xlu0
      %v1382 = vpop.trf.xlu0
      %v1383 = vpop.trf.xlu0
      %v1384 = vpop.trf.xlu0
      %v1385 = vpop.trf.xlu0
      %1386 = vxpose.xlu0.c.b16.start [1/8] %v1333, 128
      %1387 = vxpose.xlu0.c.b16.cont [2/8] 0, 128
      %1388 = vxpose.xlu0.c.b16.cont [3/8] 0, 128
      %1389 = vxpose.xlu0.c.b16.cont [4/8] 0, 128
      %1390 = vxpose.xlu0.c.b16.cont [5/8] 0, 128
      %1391 = vxpose.xlu0.c.b16.cont [6/8] 0, 128
      %1392 = vxpose.xlu0.c.b16.cont [7/8] 0, 128
      %1393 = vxpose.xlu0.c.b16.end [8/8] 0, 128
      %v1394 = vpop.trf.xlu0
      %v1395 = vpop.trf.xlu0
      %v1396 = vpop.trf.xlu0
      %v1397 = vpop.trf.xlu0
      %v1398 = vpop.trf.xlu0
      %v1399 = vpop.trf.xlu0
      %v1400 = vpop.trf.xlu0
      %v1401 = vpop.trf.xlu0
      %1402 = vxpose.xlu0.c.b16.start [1/8] %v1334, 128
      %1403 = vxpose.xlu0.c.b16.cont [2/8] 0, 128
      %1404 = vxpose.xlu0.c.b16.cont [3/8] 0, 128
      %1405 = vxpose.xlu0.c.b16.cont [4/8] 0, 128
      %1406 = vxpose.xlu0.c.b16.cont [5/8] 0, 128
      %1407 = vxpose.xlu0.c.b16.cont [6/8] 0, 128
      %1408 = vxpose.xlu0.c.b16.cont [7/8] 0, 128
      %1409 = vxpose.xlu0.c.b16.end [8/8] 0, 128
      %v1410 = vpop.trf.xlu0
      %v1411 = vpop.trf.xlu0
      %v1412 = vpop.trf.xlu0
      %v1413 = vpop.trf.xlu0
      %v1414 = vpop.trf.xlu0
      %v1415 = vpop.trf.xlu0
      %v1416 = vpop.trf.xlu0
      %v1417 = vpop.trf.xlu0
      %1418 = vxpose.xlu0.c.b16.start [1/8] %v1335, 128
      %1419 = vxpose.xlu0.c.b16.cont [2/8] 0, 128
      %1420 = vxpose.xlu0.c.b16.cont [3/8] 0, 128
      %1421 = vxpose.xlu0.c.b16.cont [4/8] 0, 128
      %1422 = vxpose.xlu0.c.b16.cont [5/8] 0, 128
      %1423 = vxpose.xlu0.c.b16.cont [6/8] 0, 128
      %1424 = vxpose.xlu0.c.b16.cont [7/8] 0, 128
      %1425 = vxpose.xlu0.c.b16.end [8/8] 0, 128
      %v1426 = vpop.trf.xlu0
      %v1427 = vpop.trf.xlu0
      %v1428 = vpop.trf.xlu0
      %v1429 = vpop.trf.xlu0
      %v1430 = vpop.trf.xlu0
      %v1431 = vpop.trf.xlu0
      %v1432 = vpop.trf.xlu0
      %v1433 = vpop.trf.xlu0
      %1434 = vxpose.xlu0.c.b16.start [1/8] %v1336, 128
      %1435 = vxpose.xlu0.c.b16.cont [2/8] 0, 128
      %1436 = vxpose.xlu0.c.b16.cont [3/8] 0, 128
      %1437 = vxpose.xlu0.c.b16.cont [4/8] 0, 128
      %1438 = vxpose.xlu0.c.b16.cont [5/8] 0, 128
      %1439 = vxpose.xlu0.c.b16.cont [6/8] 0, 128
      %1440 = vxpose.xlu0.c.b16.cont [7/8] 0, 128
      %1441 = vxpose.xlu0.c.b16.end [8/8] 0, 128
      %v1442 = vpop.trf.xlu0
      %v1443 = vpop.trf.xlu0
      %v1444 = vpop.trf.xlu0
      %v1445 = vpop.trf.xlu0
      %v1446 = vpop.trf.xlu0
      %v1447 = vpop.trf.xlu0
      %v1448 = vpop.trf.xlu0
      %v1449 = vpop.trf.xlu0
      %1450 = vxpose.xlu0.c.b16.start [1/8] %v1337, 128
      %1451 = vxpose.xlu0.c.b16.cont [2/8] 0, 128
      %1452 = vxpose.xlu0.c.b16.cont [3/8] 0, 128
      %1453 = vxpose.xlu0.c.b16.cont [4/8] 0, 128
      %1454 = vxpose.xlu0.c.b16.cont [5/8] 0, 128
      %1455 = vxpose.xlu0.c.b16.cont [6/8] 0, 128
      %1456 = vxpose.xlu0.c.b16.cont [7/8] 0, 128
      %1457 = vxpose.xlu0.c.b16.end [8/8] 0, 128
      %v1458 = vpop.trf.xlu0
      %v1459 = vpop.trf.xlu0
      %v1460 = vpop.trf.xlu0
      %v1461 = vpop.trf.xlu0
      %v1462 = vpop.trf.xlu0
      %v1463 = vpop.trf.xlu0
      %v1464 = vpop.trf.xlu0
      %v1465 = vpop.trf.xlu0
      %v1466 = vrot.slane %v1410, 4
      %v1467 = vsel %vm748, %v1466, %v1346
      %v1469 = vunpack.c.l.s4 1983009808
      %v1470 = vunpack.c.0.s8 %v1469
      %v1471 = vperm.slane %v1467, %v1470
      %v1472 = vrot.slane %v1442, 4
      %v1473 = vsel %vm748, %v1472, %v1378
      %v1475 = vunpack.c.l.s4 1983009808
      %v1476 = vunpack.c.0.s8 %v1475
      %v1477 = vperm.slane %v1473, %v1476
      %v1478 = vrot.slane %v1477, 4
      %v1479 = vsel %vm748, %v1478, %v1471
      %v1480 = vrot.slane %v1471, 4
      %v1481 = vsel %vm748, %v1477, %v1480
      %v1483 = vunpack.c.l.s4 1934713408
      %v1484 = vunpack.c.0.s8 %v1483
      %v1485 = vperm.slane %v1479, %v1484
      %v1487 = vunpack.c.l.s4 1934713408
      %v1488 = vunpack.c.0.s8 %v1487
      %v1489 = vperm.slane %v1481, %v1488
      %v1490 = vrot.slane %v1485, 4
      %v1491 = vsel %vm748, 0, %v1490
      %v1492 = vrot.slane %v1489, 4
      %v1493 = vsel %vm748, 0, %v1492
      %v1494 = vrot.slane %v1426, 4
      %v1495 = vsel %vm748, %v1494, %v1362
      %v1497 = vunpack.c.l.s4 1983009808
      %v1498 = vunpack.c.0.s8 %v1497
      %v1499 = vperm.slane %v1495, %v1498
      %v1500 = vrot.slane %v1458, 4
      %v1501 = vsel %vm748, %v1500, %v1394
      %v1503 = vunpack.c.l.s4 1983009808
      %v1504 = vunpack.c.0.s8 %v1503
      %v1505 = vperm.slane %v1501, %v1504
      %v1506 = vrot.slane %v1505, 4
      %v1507 = vsel %vm748, %v1506, %v1499
      %v1508 = vrot.slane %v1499, 4
      %v1509 = vsel %vm748, %v1505, %v1508
      %v1511 = vunpack.c.l.s4 1934713408
      %v1512 = vunpack.c.0.s8 %v1511
      %v1513 = vperm.slane %v1507, %v1512
      %v1515 = vunpack.c.l.s4 1934713408
      %v1516 = vunpack.c.0.s8 %v1515
      %v1517 = vperm.slane %v1509, %v1516
      %v1518 = vrot.slane %v1513, 4
      %v1519 = vsel %vm748, 0, %v1518
      %v1520 = vrot.slane %v1517, 4
      %v1521 = vsel %vm748, 0, %v1520
      %v1524 = vpack.i.b16 %v1513, %v1485
      %v1526 = vshrl.u32 %v1485, 16
      %v1527 = vshrl.u32 %v1513, 16
      %v1528 = vpack.i.b16 %v1527, %v1526
      %v1532 = vpack.i.b16 %v1519, %v1491
      %v1534 = vshrl.u32 %v1491, 16
      %v1535 = vshrl.u32 %v1519, 16
      %v1536 = vpack.i.b16 %v1535, %v1534
      %v1540 = vpack.i.b16 %v1517, %v1489
      %v1542 = vshrl.u32 %v1489, 16
      %v1543 = vshrl.u32 %v1517, 16
      %v1544 = vpack.i.b16 %v1543, %v1542
      %v1548 = vpack.i.b16 %v1521, %v1493
      %v1550 = vshrl.u32 %v1493, 16
      %v1551 = vshrl.u32 %v1521, 16
      %v1552 = vpack.i.b16 %v1551, %v1550
      %1554 = vxpose.xlu0.c.b16.start [1/8] %v1524, 128
      %1555 = vxpose.xlu0.c.b16.cont [2/8] 0, 128
      %1556 = vxpose.xlu0.c.b16.cont [3/8] 0, 128
      %1557 = vxpose.xlu0.c.b16.cont [4/8] 0, 128
      %1558 = vxpose.xlu0.c.b16.cont [5/8] 0, 128
      %1559 = vxpose.xlu0.c.b16.cont [6/8] 0, 128
      %1560 = vxpose.xlu0.c.b16.cont [7/8] 0, 128
      %1561 = vxpose.xlu0.c.b16.end [8/8] 0, 128
      %v1562 = vpop.trf.xlu0
      %v1563 = vpop.trf.xlu0
      %v1564 = vpop.trf.xlu0
      %v1565 = vpop.trf.xlu0
      %v1566 = vpop.trf.xlu0
      %v1567 = vpop.trf.xlu0
      %v1568 = vpop.trf.xlu0
      %v1569 = vpop.trf.xlu0
      %1570 = vxpose.xlu0.c.b16.start [1/8] %v1528, 128
      %1571 = vxpose.xlu0.c.b16.cont [2/8] 0, 128
      %1572 = vxpose.xlu0.c.b16.cont [3/8] 0, 128
      %1573 = vxpose.xlu0.c.b16.cont [4/8] 0, 128
      %1574 = vxpose.xlu0.c.b16.cont [5/8] 0, 128
      %1575 = vxpose.xlu0.c.b16.cont [6/8] 0, 128
      %1576 = vxpose.xlu0.c.b16.cont [7/8] 0, 128
      %1577 = vxpose.xlu0.c.b16.end [8/8] 0, 128
      %v1578 = vpop.trf.xlu0
      %v1579 = vpop.trf.xlu0
      %v1580 = vpop.trf.xlu0
      %v1581 = vpop.trf.xlu0
      %v1582 = vpop.trf.xlu0
      %v1583 = vpop.trf.xlu0
      %v1584 = vpop.trf.xlu0
      %v1585 = vpop.trf.xlu0
      %1586 = vxpose.xlu0.c.b16.start [1/8] %v1532, 128
      %1587 = vxpose.xlu0.c.b16.cont [2/8] 0, 128
      %1588 = vxpose.xlu0.c.b16.cont [3/8] 0, 128
      %1589 = vxpose.xlu0.c.b16.cont [4/8] 0, 128
      %1590 = vxpose.xlu0.c.b16.cont [5/8] 0, 128
      %1591 = vxpose.xlu0.c.b16.cont [6/8] 0, 128
      %1592 = vxpose.xlu0.c.b16.cont [7/8] 0, 128
      %1593 = vxpose.xlu0.c.b16.end [8/8] 0, 128
      %v1594 = vpop.trf.xlu0
      %v1595 = vpop.trf.xlu0
      %v1596 = vpop.trf.xlu0
      %v1597 = vpop.trf.xlu0
      %v1598 = vpop.trf.xlu0
      %v1599 = vpop.trf.xlu0
      %v1600 = vpop.trf.xlu0
      %v1601 = vpop.trf.xlu0
      %1602 = vxpose.xlu0.c.b16.start [1/8] %v1536, 128
      %1603 = vxpose.xlu0.c.b16.cont [2/8] 0, 128
      %1604 = vxpose.xlu0.c.b16.cont [3/8] 0, 128
      %1605 = vxpose.xlu0.c.b16.cont [4/8] 0, 128
      %1606 = vxpose.xlu0.c.b16.cont [5/8] 0, 128
      %1607 = vxpose.xlu0.c.b16.cont [6/8] 0, 128
      %1608 = vxpose.xlu0.c.b16.cont [7/8] 0, 128
      %1609 = vxpose.xlu0.c.b16.end [8/8] 0, 128
      %v1610 = vpop.trf.xlu0
      %v1611 = vpop.trf.xlu0
      %v1612 = vpop.trf.xlu0
      %v1613 = vpop.trf.xlu0
      %v1614 = vpop.trf.xlu0
      %v1615 = vpop.trf.xlu0
      %v1616 = vpop.trf.xlu0
      %v1617 = vpop.trf.xlu0
      %1618 = vxpose.xlu0.c.b16.start [1/8] %v1540, 128
      %1619 = vxpose.xlu0.c.b16.cont [2/8] 0, 128
      %1620 = vxpose.xlu0.c.b16.cont [3/8] 0, 128
      %1621 = vxpose.xlu0.c.b16.cont [4/8] 0, 128
      %1622 = vxpose.xlu0.c.b16.cont [5/8] 0, 128
      %1623 = vxpose.xlu0.c.b16.cont [6/8] 0, 128
      %1624 = vxpose.xlu0.c.b16.cont [7/8] 0, 128
      %1625 = vxpose.xlu0.c.b16.end [8/8] 0, 128
      %v1626 = vpop.trf.xlu0
      %v1627 = vpop.trf.xlu0
      %v1628 = vpop.trf.xlu0
      %v1629 = vpop.trf.xlu0
      %v1630 = vpop.trf.xlu0
      %v1631 = vpop.trf.xlu0
      %v1632 = vpop.trf.xlu0
      %v1633 = vpop.trf.xlu0
      %1634 = vxpose.xlu0.c.b16.start [1/8] %v1544, 128
      %1635 = vxpose.xlu0.c.b16.cont [2/8] 0, 128
      %1636 = vxpose.xlu0.c.b16.cont [3/8] 0, 128
      %1637 = vxpose.xlu0.c.b16.cont [4/8] 0, 128
      %1638 = vxpose.xlu0.c.b16.cont [5/8] 0, 128
      %1639 = vxpose.xlu0.c.b16.cont [6/8] 0, 128
      %1640 = vxpose.xlu0.c.b16.cont [7/8] 0, 128
      %1641 = vxpose.xlu0.c.b16.end [8/8] 0, 128
      %v1642 = vpop.trf.xlu0
      %v1643 = vpop.trf.xlu0
      %v1644 = vpop.trf.xlu0
      %v1645 = vpop.trf.xlu0
      %v1646 = vpop.trf.xlu0
      %v1647 = vpop.trf.xlu0
      %v1648 = vpop.trf.xlu0
      %v1649 = vpop.trf.xlu0
      %1650 = vxpose.xlu0.c.b16.start [1/8] %v1548, 128
      %1651 = vxpose.xlu0.c.b16.cont [2/8] 0, 128
      %1652 = vxpose.xlu0.c.b16.cont [3/8] 0, 128
      %1653 = vxpose.xlu0.c.b16.cont [4/8] 0, 128
      %1654 = vxpose.xlu0.c.b16.cont [5/8] 0, 128
      %1655 = vxpose.xlu0.c.b16.cont [6/8] 0, 128
      %1656 = vxpose.xlu0.c.b16.cont [7/8] 0, 128
      %1657 = vxpose.xlu0.c.b16.end [8/8] 0, 128
      %v1658 = vpop.trf.xlu0
      %v1659 = vpop.trf.xlu0
      %v1660 = vpop.trf.xlu0
      %v1661 = vpop.trf.xlu0
      %v1662 = vpop.trf.xlu0
      %v1663 = vpop.trf.xlu0
      %v1664 = vpop.trf.xlu0
      %v1665 = vpop.trf.xlu0
      %1666 = vxpose.xlu0.c.b16.start [1/8] %v1552, 128
      %1667 = vxpose.xlu0.c.b16.cont [2/8] 0, 128
      %1668 = vxpose.xlu0.c.b16.cont [3/8] 0, 128
      %1669 = vxpose.xlu0.c.b16.cont [4/8] 0, 128
      %1670 = vxpose.xlu0.c.b16.cont [5/8] 0, 128
      %1671 = vxpose.xlu0.c.b16.cont [6/8] 0, 128
      %1672 = vxpose.xlu0.c.b16.cont [7/8] 0, 128
      %1673 = vxpose.xlu0.c.b16.end [8/8] 0, 128
      %v1674 = vpop.trf.xlu0
      %v1675 = vpop.trf.xlu0
      %v1676 = vpop.trf.xlu0
      %v1677 = vpop.trf.xlu0
      %v1678 = vpop.trf.xlu0
      %v1679 = vpop.trf.xlu0
      %v1680 = vpop.trf.xlu0
      %v1681 = vpop.trf.xlu0
      %v1682 = vrot.slane %v1626, 4
      %v1683 = vsel %vm748, %v1682, %v1562
      %v1685 = vunpack.c.l.s4 1983009808
      %v1686 = vunpack.c.0.s8 %v1685
      %v1687 = vperm.slane %v1683, %v1686
      %v1688 = vrot.slane %v1658, 4
      %v1689 = vsel %vm748, %v1688, %v1594
      %v1691 = vunpack.c.l.s4 1983009808
      %v1692 = vunpack.c.0.s8 %v1691
      %v1693 = vperm.slane %v1689, %v1692
      %v1694 = vrot.slane %v1693, 4
      %v1695 = vsel %vm748, %v1694, %v1687
      %v1697 = vunpack.c.l.s4 1934713408
      %v1698 = vunpack.c.0.s8 %v1697
      %v1699 = vperm.slane %v1695, %v1698
      %v1700 = vrot.slane %v1699, 4
      %v1701 = vsel %vm748, 0, %v1700
      %v1702 = vrot.slane %v1642, 4
      %v1703 = vsel %vm748, %v1702, %v1578
      %v1705 = vunpack.c.l.s4 1983009808
      %v1706 = vunpack.c.0.s8 %v1705
      %v1707 = vperm.slane %v1703, %v1706
      %v1708 = vrot.slane %v1674, 4
      %v1709 = vsel %vm748, %v1708, %v1610
      %v1711 = vunpack.c.l.s4 1983009808
      %v1712 = vunpack.c.0.s8 %v1711
      %v1713 = vperm.slane %v1709, %v1712
      %v1714 = vrot.slane %v1713, 4
      %v1715 = vsel %vm748, %v1714, %v1707
      %v1717 = vunpack.c.l.s4 1934713408
      %v1718 = vunpack.c.0.s8 %v1717
      %v1719 = vperm.slane %v1715, %v1718
      %v1720 = vrot.slane %v1719, 4
      %v1721 = vsel %vm748, 0, %v1720
      %v1724 = vpack.i.b16 %v1719, %v1699
      %v1725 = vshrl.u32 %v1699, 16
      %v1726 = vshrl.u32 %v1719, 16
      %v1727 = vpack.i.b16 %v1726, %v1725
      %v1730 = vpack.i.b16 %v1721, %v1701
      %v1731 = vshrl.u32 %v1701, 16
      %v1732 = vshrl.u32 %v1721, 16
      %v1733 = vpack.i.b16 %v1732, %v1731
      %v1735 = vsel %vm1196, %v1724, 0
      %v1738 = vsel %vm1196, %v1326, 0
      %1740 = vmatpush.bf16.xpose.msra.mxu0 0
      %1741 = vmatpush.bf16.xpose.msra.mxu0 0
      %1742 = vmatpush.bf16.xpose.msra.mxu0 0
      %1743 = vmatpush.bf16.xpose.msra.mxu0 0
      %1744 = vmatpush.bf16.xpose.msra.mxu0 0
      %1745 = vmatpush.bf16.xpose.msra.mxu0 0
      %1746 = vmatpush.bf16.xpose.msra.mxu0 0
      %1747 = vmatpush.bf16.xpose.msra.mxu0 %v1738
      %1748 = vmatmul.bf16.gmra.mxu0 %v1735
      %v1749 = vpop.f32.mrf.mxu0
      %v1750 = vadd.f32 0.0, %v1749
      %v1751 = vpop.f32.mrf.mxu0
      %1752 = vdwg.mxu0
      %v1754 = vsel %vm1196, %v1727, 0
      %v1757 = vsel %vm1196, %v1327, 0
      %1759 = vmatpush.bf16.xpose.msra.mxu0 0
      %1760 = vmatpush.bf16.xpose.msra.mxu0 0
      %1761 = vmatpush.bf16.xpose.msra.mxu0 0
      %1762 = vmatpush.bf16.xpose.msra.mxu0 0
      %1763 = vmatpush.bf16.xpose.msra.mxu0 0
      %1764 = vmatpush.bf16.xpose.msra.mxu0 0
      %1765 = vmatpush.bf16.xpose.msra.mxu0 0
      %1766 = vmatpush.bf16.xpose.msra.mxu0 %v1757
      %1767 = vmatmul.bf16.gmra.mxu0 %v1754
      %v1768 = vpop.f32.mrf.mxu0
      %v1769 = vadd.f32 0.0, %v1768
      %v1770 = vpop.f32.mrf.mxu0
      %1771 = vdwg.mxu0
      %v1773 = vsel %vm1196, %v1730, 0
      %v1776 = vsel %vm1196, %v1328, 0
      %1778 = vmatpush.bf16.xpose.msra.mxu0 0
      %1779 = vmatpush.bf16.xpose.msra.mxu0 0
      %1780 = vmatpush.bf16.xpose.msra.mxu0 0
      %1781 = vmatpush.bf16.xpose.msra.mxu0 0
      %1782 = vmatpush.bf16.xpose.msra.mxu0 0
      %1783 = vmatpush.bf16.xpose.msra.mxu0 0
      %1784 = vmatpush.bf16.xpose.msra.mxu0 0
      %1785 = vmatpush.bf16.xpose.msra.mxu0 %v1776
      %1786 = vmatmul.bf16.gmra.mxu0 %v1773
      %v1787 = vpop.f32.mrf.mxu0
      %v1788 = vadd.f32 0.0, %v1787
      %v1789 = vpop.f32.mrf.mxu0
      %1790 = vdwg.mxu0
      %v1792 = vsel %vm1196, %v1733, 0
      %v1795 = vsel %vm1196, %v1329, 0
      %1797 = vmatpush.bf16.xpose.msra.mxu0 0
      %1798 = vmatpush.bf16.xpose.msra.mxu0 0
      %1799 = vmatpush.bf16.xpose.msra.mxu0 0
      %1800 = vmatpush.bf16.xpose.msra.mxu0 0
      %1801 = vmatpush.bf16.xpose.msra.mxu0 0
      %1802 = vmatpush.bf16.xpose.msra.mxu0 0
      %1803 = vmatpush.bf16.xpose.msra.mxu0 0
      %1804 = vmatpush.bf16.xpose.msra.mxu0 %v1795
      %1805 = vmatmul.bf16.gmra.mxu0 %v1792
      %v1806 = vpop.f32.mrf.mxu0
      %v1807 = vadd.f32 0.0, %v1806
      %v1808 = vpop.f32.mrf.mxu0
      %1809 = vdwg.mxu0
      %1810 = vxpose.xlu0.b32.start [1/16] %v1750, 128
      %1811 = vxpose.xlu0.b32.cont [2/16] 0.0, 128
      %1812 = vxpose.xlu0.b32.cont [3/16] 0.0, 128
      %1813 = vxpose.xlu0.b32.cont [4/16] 0.0, 128
      %1814 = vxpose.xlu0.b32.cont [5/16] 0.0, 128
      %1815 = vxpose.xlu0.b32.cont [6/16] 0.0, 128
      %1816 = vxpose.xlu0.b32.cont [7/16] 0.0, 128
      %1817 = vxpose.xlu0.b32.cont [8/16] 0.0, 128
      %1818 = vxpose.xlu0.b32.cont [9/16] 0.0, 128
      %1819 = vxpose.xlu0.b32.cont [10/16] 0.0, 128
      %1820 = vxpose.xlu0.b32.cont [11/16] 0.0, 128
      %1821 = vxpose.xlu0.b32.cont [12/16] 0.0, 128
      %1822 = vxpose.xlu0.b32.cont [13/16] 0.0, 128
      %1823 = vxpose.xlu0.b32.cont [14/16] 0.0, 128
      %1824 = vxpose.xlu0.b32.cont [15/16] 0.0, 128
      %1825 = vxpose.xlu0.b32.end [16/16] 0.0, 128
      %v1826 = vpop.trf.xlu0
      %v1827 = vpop.trf.xlu0
      %v1828 = vpop.trf.xlu0
      %v1829 = vpop.trf.xlu0
      %v1830 = vpop.trf.xlu0
      %v1831 = vpop.trf.xlu0
      %v1832 = vpop.trf.xlu0
      %v1833 = vpop.trf.xlu0
      %v1834 = vpop.trf.xlu0
      %v1835 = vpop.trf.xlu0
      %v1836 = vpop.trf.xlu0
      %v1837 = vpop.trf.xlu0
      %v1838 = vpop.trf.xlu0
      %v1839 = vpop.trf.xlu0
      %v1840 = vpop.trf.xlu0
      %v1841 = vpop.trf.xlu0
      %1842 = vxpose.xlu0.b32.start [1/16] %v1769, 128
      %1843 = vxpose.xlu0.b32.cont [2/16] 0.0, 128
      %1844 = vxpose.xlu0.b32.cont [3/16] 0.0, 128
      %1845 = vxpose.xlu0.b32.cont [4/16] 0.0, 128
      %1846 = vxpose.xlu0.b32.cont [5/16] 0.0, 128
      %1847 = vxpose.xlu0.b32.cont [6/16] 0.0, 128
      %1848 = vxpose.xlu0.b32.cont [7/16] 0.0, 128
      %1849 = vxpose.xlu0.b32.cont [8/16] 0.0, 128
      %1850 = vxpose.xlu0.b32.cont [9/16] 0.0, 128
      %1851 = vxpose.xlu0.b32.cont [10/16] 0.0, 128
      %1852 = vxpose.xlu0.b32.cont [11/16] 0.0, 128
      %1853 = vxpose.xlu0.b32.cont [12/16] 0.0, 128
      %1854 = vxpose.xlu0.b32.cont [13/16] 0.0, 128
      %1855 = vxpose.xlu0.b32.cont [14/16] 0.0, 128
      %1856 = vxpose.xlu0.b32.cont [15/16] 0.0, 128
      %1857 = vxpose.xlu0.b32.end [16/16] 0.0, 128
      %v1858 = vpop.trf.xlu0
      %v1859 = vpop.trf.xlu0
      %v1860 = vpop.trf.xlu0
      %v1861 = vpop.trf.xlu0
      %v1862 = vpop.trf.xlu0
      %v1863 = vpop.trf.xlu0
      %v1864 = vpop.trf.xlu0
      %v1865 = vpop.trf.xlu0
      %v1866 = vpop.trf.xlu0
      %v1867 = vpop.trf.xlu0
      %v1868 = vpop.trf.xlu0
      %v1869 = vpop.trf.xlu0
      %v1870 = vpop.trf.xlu0
      %v1871 = vpop.trf.xlu0
      %v1872 = vpop.trf.xlu0
      %v1873 = vpop.trf.xlu0
      %1874 = vxpose.xlu0.b32.start [1/16] %v1788, 128
      %1875 = vxpose.xlu0.b32.cont [2/16] 0.0, 128
      %1876 = vxpose.xlu0.b32.cont [3/16] 0.0, 128
      %1877 = vxpose.xlu0.b32.cont [4/16] 0.0, 128
      %1878 = vxpose.xlu0.b32.cont [5/16] 0.0, 128
      %1879 = vxpose.xlu0.b32.cont [6/16] 0.0, 128
      %1880 = vxpose.xlu0.b32.cont [7/16] 0.0, 128
      %1881 = vxpose.xlu0.b32.cont [8/16] 0.0, 128
      %1882 = vxpose.xlu0.b32.cont [9/16] 0.0, 128
      %1883 = vxpose.xlu0.b32.cont [10/16] 0.0, 128
      %1884 = vxpose.xlu0.b32.cont [11/16] 0.0, 128
      %1885 = vxpose.xlu0.b32.cont [12/16] 0.0, 128
      %1886 = vxpose.xlu0.b32.cont [13/16] 0.0, 128
      %1887 = vxpose.xlu0.b32.cont [14/16] 0.0, 128
      %1888 = vxpose.xlu0.b32.cont [15/16] 0.0, 128
      %1889 = vxpose.xlu0.b32.end [16/16] 0.0, 128
      %v1890 = vpop.trf.xlu0
      %v1891 = vpop.trf.xlu0
      %v1892 = vpop.trf.xlu0
      %v1893 = vpop.trf.xlu0
      %v1894 = vpop.trf.xlu0
      %v1895 = vpop.trf.xlu0
      %v1896 = vpop.trf.xlu0
      %v1897 = vpop.trf.xlu0
      %v1898 = vpop.trf.xlu0
      %v1899 = vpop.trf.xlu0
      %v1900 = vpop.trf.xlu0
      %v1901 = vpop.trf.xlu0
      %v1902 = vpop.trf.xlu0
      %v1903 = vpop.trf.xlu0
      %v1904 = vpop.trf.xlu0
      %v1905 = vpop.trf.xlu0
      %1906 = vxpose.xlu0.b32.start [1/16] %v1807, 128
      %1907 = vxpose.xlu0.b32.cont [2/16] 0.0, 128
      %1908 = vxpose.xlu0.b32.cont [3/16] 0.0, 128
      %1909 = vxpose.xlu0.b32.cont [4/16] 0.0, 128
      %1910 = vxpose.xlu0.b32.cont [5/16] 0.0, 128
      %1911 = vxpose.xlu0.b32.cont [6/16] 0.0, 128
      %1912 = vxpose.xlu0.b32.cont [7/16] 0.0, 128
      %1913 = vxpose.xlu0.b32.cont [8/16] 0.0, 128
      %1914 = vxpose.xlu0.b32.cont [9/16] 0.0, 128
      %1915 = vxpose.xlu0.b32.cont [10/16] 0.0, 128
      %1916 = vxpose.xlu0.b32.cont [11/16] 0.0, 128
      %1917 = vxpose.xlu0.b32.cont [12/16] 0.0, 128
      %1918 = vxpose.xlu0.b32.cont [13/16] 0.0, 128
      %1919 = vxpose.xlu0.b32.cont [14/16] 0.0, 128
      %1920 = vxpose.xlu0.b32.cont [15/16] 0.0, 128
      %1921 = vxpose.xlu0.b32.end [16/16] 0.0, 128
      %v1922 = vpop.trf.xlu0
      %v1923 = vpop.trf.xlu0
      %v1924 = vpop.trf.xlu0
      %v1925 = vpop.trf.xlu0
      %v1926 = vpop.trf.xlu0
      %v1927 = vpop.trf.xlu0
      %v1928 = vpop.trf.xlu0
      %v1929 = vpop.trf.xlu0
      %v1930 = vpop.trf.xlu0
      %v1931 = vpop.trf.xlu0
      %v1932 = vpop.trf.xlu0
      %v1933 = vpop.trf.xlu0
      %v1934 = vpop.trf.xlu0
      %v1935 = vpop.trf.xlu0
      %v1936 = vpop.trf.xlu0
      %v1937 = vpop.trf.xlu0
      %v1938 = vrot.slane %v1890, 4
      %v1939 = vsel %vm487, %v1938, %v1826
      %v1940 = vrot.slane %v1826, 4
      %v1941 = vsel %vm487, %v1890, %v1940
      %v1943 = vunpack.c.l.s4 1983009808
      %v1944 = vunpack.c.0.s8 %v1943
      %v1945 = vperm.slane %v1939, %v1944
      %v1947 = vunpack.c.l.s4 1983009808
      %v1948 = vunpack.c.0.s8 %v1947
      %v1949 = vperm.slane %v1941, %v1948
      %v1950 = vrot.slane %v1922, 4
      %v1951 = vsel %vm487, %v1950, %v1858
      %v1952 = vrot.slane %v1858, 4
      %v1953 = vsel %vm487, %v1922, %v1952
      %v1955 = vunpack.c.l.s4 1983009808
      %v1956 = vunpack.c.0.s8 %v1955
      %v1957 = vperm.slane %v1951, %v1956
      %v1959 = vunpack.c.l.s4 1983009808
      %v1960 = vunpack.c.0.s8 %v1959
      %v1961 = vperm.slane %v1953, %v1960
      %v1962 = vrot.slane %v1957, 4
      %v1963 = vsel %vm487, %v1962, %v1945
      %v1964 = vrot.slane %v1945, 4
      %v1965 = vsel %vm487, %v1957, %v1964
      %v1967 = vunpack.c.l.s4 1934713408
      %v1968 = vunpack.c.0.s8 %v1967
      %v1969 = vperm.slane %v1963, %v1968
      %v1971 = vunpack.c.l.s4 1934713408
      %v1972 = vunpack.c.0.s8 %v1971
      %v1973 = vperm.slane %v1965, %v1972
      %v1974 = vrot.slane %v1961, 4
      %v1975 = vsel %vm487, %v1974, %v1949
      %v1976 = vrot.slane %v1949, 4
      %v1977 = vsel %vm487, %v1961, %v1976
      %v1979 = vunpack.c.l.s4 1934713408
      %v1980 = vunpack.c.0.s8 %v1979
      %v1981 = vperm.slane %v1975, %v1980
      %v1983 = vunpack.c.l.s4 1934713408
      %v1984 = vunpack.c.0.s8 %v1983
      %v1985 = vperm.slane %v1977, %v1984
      %v1986 = vrot.slane %v1969, 4
      %v1987 = vsel %vm487, 0.0, %v1986
      %v1988 = vrot.slane %v1973, 4
      %v1989 = vsel %vm487, 0.0, %v1988
      %v1990 = vrot.slane %v1981, 4
      %v1991 = vsel %vm487, 0.0, %v1990
      %v1992 = vrot.slane %v1985, 4
      %v1993 = vsel %vm487, 0.0, %v1992
      %v1994 = vsel %vm487, %v1988, %v1969
      %v1996 = vunpack.c.l.s4 1983009808
      %v1997 = vunpack.c.0.s8 %v1996
      %v1998 = vperm.slane %v1994, %v1997
      %v1999 = vrot.slane %v1989, 4
      %v2000 = vsel %vm487, %v1999, %v1987
      %v2002 = vunpack.c.l.s4 1983009808
      %v2003 = vunpack.c.0.s8 %v2002
      %v2004 = vperm.slane %v2000, %v2003
      %v2005 = vsel %vm487, %v1992, %v1981
      %v2007 = vunpack.c.l.s4 1983009808
      %v2008 = vunpack.c.0.s8 %v2007
      %v2009 = vperm.slane %v2005, %v2008
      %v2010 = vrot.slane %v1993, 4
      %v2011 = vsel %vm487, %v2010, %v1991
      %v2013 = vunpack.c.l.s4 1983009808
      %v2014 = vunpack.c.0.s8 %v2013
      %v2015 = vperm.slane %v2011, %v2014
      %v2016 = vrot.slane %v2004, 4
      %v2017 = vsel %vm487, %v2016, %v1998
      %v2018 = vrot.slane %v1998, 4
      %v2019 = vsel %vm487, %v2004, %v2018
      %v2021 = vunpack.c.l.s4 1934713408
      %v2022 = vunpack.c.0.s8 %v2021
      %v2023 = vperm.slane %v2017, %v2022
      %v2025 = vunpack.c.l.s4 1934713408
      %v2026 = vunpack.c.0.s8 %v2025
      %v2027 = vperm.slane %v2019, %v2026
      %v2028 = vrot.slane %v2015, 4
      %v2029 = vsel %vm487, %v2028, %v2009
      %v2030 = vrot.slane %v2009, 4
      %v2031 = vsel %vm487, %v2015, %v2030
      %v2033 = vunpack.c.l.s4 1934713408
      %v2034 = vunpack.c.0.s8 %v2033
      %v2035 = vperm.slane %v2029, %v2034
      %v2037 = vunpack.c.l.s4 1934713408
      %v2038 = vunpack.c.0.s8 %v2037
      %v2039 = vperm.slane %v2031, %v2038
      %v2040 = vrot.slane %v2035, 4
      %v2041 = vsel %vm487, %v2040, %v2023
      %v2042 = vrot.slane %v2023, 4
      %v2043 = vsel %vm487, %v2035, %v2042
      %v2044 = vrot.slane %v2039, 4
      %v2045 = vsel %vm487, %v2044, %v2027
      %v2046 = vrot.slane %v2027, 4
      %v2047 = vsel %vm487, %v2039, %v2046
      %2049 = vrot.lane.b32.xlu0 %v2043, 8
      %v2050 = vpop.permute.xlu0 %2049
      %2053 = vrot.lane.b32.xlu0 %v2045, 16
      %v2054 = vpop.permute.xlu0 %2053
      %2057 = vrot.lane.b32.xlu0 %v2047, 24
      %v2058 = vpop.permute.xlu0 %2057
      %v2060 = vsel %vm1196, %v2041, %v2050
      %vm2061 = vcmask 130048
      %v2062 = vsel %vm2061, %v2060, %v2054
      %vm2063 = vcmask 195584
      %v2064 = vsel %vm2063, %v2062, %v2058
      %v2065 = vpack.c.bf16 %v2064, %v2064
      %v2066 = vperm.slane %v407, 0
      %v2071 = vunpack.c.l.b16 %v378
      %v2072 = vunpack.c.l.b16 %v379
      %v2073 = vunpack.c.l.b16 %v380
      %v2074 = vunpack.c.l.b16 %v381
      %v2075 = vpack.c.b16 %v2072, %v2071
      %v2076 = vpack.c.b16 %v2074, %v2073
      %v2080 = vsel %vm412, %v2065, 0
      %2082 = vmatpush.bf16.msra.mxu0 0
      %2083 = vmatpush.bf16.msra.mxu0 0
      %2084 = vmatpush.bf16.msra.mxu0 0
      %2085 = vmatpush.bf16.msra.mxu0 0
      %2086 = vmatpush.bf16.msra.mxu0 0
      %2087 = vmatpush.bf16.msra.mxu0 0
      %2088 = vmatpush.bf16.msra.mxu0 %v2076
      %2089 = vmatpush.bf16.msra.mxu0 %v2075
      %2090 = vmatmul.bf16.gmra.mxu0 %v2080
      %v2091 = vpop.f32.mrf.mxu0
      %v2092 = vadd.f32 %v2066, %v2091
      %v2093 = vpop.f32.mrf.mxu0
      %2094 = vdwg.mxu0
      %v2095 = vadd.f32 %v360, %v2092
      %v2096 = vsel %vm412, %v2095, 0.0
      %2097 = vadd.xlane.f32.xlu0 %v2096
      %v2098 = vpop.xlane.xlu0 %2097
      %v2099 = vmul.f32 %v2098, %v422
      %v2100 = vsub.f32 %v2095, %v2099
      %v2101 = vmul.f32 %v2100, %v2100
      %v2102 = vsel %vm412, %v2101, 0.0
      %2103 = vadd.xlane.f32.xlu0 %v2102
      %v2104 = vpop.xlane.xlu0 %2103
      %v2105 = vmul.f32 %v2104, %v422
      %v2106 = vadd.f32 %v2105, 1e-06
      %v2107 = vrsqrt.pop %v2106
      %v2108 = vmul.f32 %v2107, %v2106
      %v2109 = vmul.f32 %v2108, %v2107
      %v2110 = vmul.f32 0.5, %v2109
      %v2111 = vsub.f32 1.5, %v2110
      %v2112 = vmul.f32 %v2107, %v2111
      %vm2113 = vweird.f32 %v2106
      %vm2114 = vweird.f32 %v2107
      %vm2115 = vmor %vm2113, %vm2114
      %v2116 = vsel %vm2115, %v2107, %v2112
      %v2117 = vmul.f32 %v2100, %v2116
      %v2118 = vperm.slane %v408, 0
      %v2119 = vmul.f32 %v2117, %v2118
      %v2120 = vperm.slane %v409, 0
      %v2121 = vadd.f32 %v2119, %v2120
      %v2122 = vpack.c.bf16 %v2121, %v2121
      %v2123 = vperm.slane %v410, 0
      %v2128 = vunpack.c.l.b16 %v382
      %v2129 = vunpack.c.l.b16 %v383
      %v2130 = vunpack.c.l.b16 %v384
      %v2131 = vunpack.c.l.b16 %v385
      %v2132 = vpack.c.b16 %v2129, %v2128
      %v2133 = vpack.c.b16 %v2131, %v2130
      %v2137 = vsel %vm412, %v2122, 0
      %2139 = vmatpush.bf16.msra.mxu0 0
      %2140 = vmatpush.bf16.msra.mxu0 0
      %2141 = vmatpush.bf16.msra.mxu0 0
      %2142 = vmatpush.bf16.msra.mxu0 0
      %2143 = vmatpush.bf16.msra.mxu0 0
      %2144 = vmatpush.bf16.msra.mxu0 0
      %2145 = vmatpush.bf16.msra.mxu0 %v2133
      %2146 = vmatpush.bf16.msra.mxu0 %v2132
      %2147 = vmatmul.bf16.gmra.mxu0 %v2137
      %v2148 = vpop.f32.mrf.mxu0
      %v2149 = vadd.f32 %v2123, %v2148
      %v2150 = vpop.f32.mrf.mxu0
      %2151 = vdwg.mxu0
      %v2152 = vmul.f32 %v2149, 0.5
      %v2153 = vmul.f32 %v2149, 0.044715
      %v2154 = vmul.f32 %v2153, %v2149
      %v2155 = vmul.f32 %v2154, %v2149
      %v2156 = vadd.f32 %v2149, %v2155
      %v2157 = vmul.f32 %v2156, 0.7978846
      %v2158 = vtanh.pop %v2157
      %v2159 = vadd.f32 %v2158, 1.0
      %v2160 = vmul.f32 %v2152, %v2159
      %v2161 = vpack.c.bf16 %v2160, %v2160
      %v2162 = vperm.slane %v411, 0
      %v2179 = vunpack.c.l.b16 %v386
      %v2180 = vunpack.c.l.b16 %v387
      %v2181 = vunpack.c.l.b16 %v388
      %v2182 = vunpack.c.l.b16 %v389
      %v2183 = vunpack.c.l.b16 %v390
      %v2184 = vunpack.c.l.b16 %v391
      %v2185 = vunpack.c.l.b16 %v392
      %v2186 = vunpack.c.l.b16 %v393
      %v2187 = vunpack.c.l.b16 %v394
      %v2188 = vunpack.c.l.b16 %v395
      %v2189 = vunpack.c.l.b16 %v396
      %v2190 = vunpack.c.l.b16 %v397
      %v2191 = vunpack.c.l.b16 %v398
      %v2192 = vunpack.c.l.b16 %v399
      %v2193 = vunpack.c.l.b16 %v400
      %v2194 = vunpack.c.l.b16 %v401
      %v2195 = vpack.c.b16 %v2180, %v2179
      %v2196 = vpack.c.b16 %v2182, %v2181
      %v2197 = vpack.c.b16 %v2184, %v2183
      %v2198 = vpack.c.b16 %v2186, %v2185
      %v2199 = vpack.c.b16 %v2188, %v2187
      %v2200 = vpack.c.b16 %v2190, %v2189
      %v2201 = vpack.c.b16 %v2192, %v2191
      %v2202 = vpack.c.b16 %v2194, %v2193
      %2211 = vmatpush.bf16.msra.mxu0 %v2202
      %2212 = vmatpush.bf16.msra.mxu0 %v2201
      %2213 = vmatpush.bf16.msra.mxu0 %v2200
      %2214 = vmatpush.bf16.msra.mxu0 %v2199
      %2215 = vmatpush.bf16.msra.mxu0 %v2198
      %2216 = vmatpush.bf16.msra.mxu0 %v2197
      %2217 = vmatpush.bf16.msra.mxu0 %v2196
      %2218 = vmatpush.bf16.msra.mxu0 %v2195
      %2219 = vmatmul.bf16.gmra.mxu0 %v2161
      %v2220 = vpop.f32.mrf.mxu0
      %v2221 = vadd.f32 %v2162, %v2220
      %v2222 = vpop.f32.mrf.mxu0
      %2223 = vdwg.mxu0
      %v2224 = vadd.f32 %v2095, %v2221
      %s2225 = scalar_lea.vmem %s3, 64
      %v2226 = vld [vmem:[%s2225] sm:$0xf]
      %v2227 = vld [vmem:[%s2225 + $0x4] sm:$0xf]
      %v2228 = vld [vmem:[%s2225 + $0x8] sm:$0xf]
      %v2229 = vld [vmem:[%s2225 + $0xc] sm:$0xf]
      %s2230 = scalar_lea.vmem %s3, 80
      %v2231 = vld [vmem:[%s2230] sm:$0xf]
      %v2232 = vld [vmem:[%s2230 + $0x4] sm:$0xf]
      %v2233 = vld [vmem:[%s2230 + $0x8] sm:$0xf]
      %v2234 = vld [vmem:[%s2230 + $0xc] sm:$0xf]
      %s2235 = scalar_lea.vmem %s3, 96
      %v2236 = vld [vmem:[%s2235] sm:$0xf]
      %v2237 = vld [vmem:[%s2235 + $0x4] sm:$0xf]
      %v2238 = vld [vmem:[%s2235 + $0x8] sm:$0xf]
      %v2239 = vld [vmem:[%s2235 + $0xc] sm:$0xf]
      %s2240 = scalar_lea.vmem %s3, 112
      %v2241 = vld [vmem:[%s2240] sm:$0xf]
      %v2242 = vld [vmem:[%s2240 + $0x4] sm:$0xf]
      %v2243 = vld [vmem:[%s2240 + $0x8] sm:$0xf]
      %v2244 = vld [vmem:[%s2240 + $0xc] sm:$0xf]
      %s2245 = scalar_lea.vmem %s4, 16
      %v2246 = vld [vmem:[%s2245] sm:$0xf]
      %v2247 = vld [vmem:[%s2245 + $0x4] sm:$0xf]
      %v2248 = vld [vmem:[%s2245 + $0x8] sm:$0xf]
      %v2249 = vld [vmem:[%s2245 + $0xc] sm:$0xf]
      %s2250 = scalar_lea.vmem %s5, 64
      %v2251 = vld [vmem:[%s2250] sm:$0xf]
      %v2252 = vld [vmem:[%s2250 + $0x4] sm:$0xf]
      %v2253 = vld [vmem:[%s2250 + $0x8] sm:$0xf]
      %v2254 = vld [vmem:[%s2250 + $0xc] sm:$0xf]
      %v2255 = vld [vmem:[%s2250 + $0x10] sm:$0xf]
      %v2256 = vld [vmem:[%s2250 + $0x14] sm:$0xf]
      %v2257 = vld [vmem:[%s2250 + $0x18] sm:$0xf]
      %v2258 = vld [vmem:[%s2250 + $0x1c] sm:$0xf]
      %v2259 = vld [vmem:[%s2250 + $0x20] sm:$0xf]
      %v2260 = vld [vmem:[%s2250 + $0x24] sm:$0xf]
      %v2261 = vld [vmem:[%s2250 + $0x28] sm:$0xf]
      %v2262 = vld [vmem:[%s2250 + $0x2c] sm:$0xf]
      %v2263 = vld [vmem:[%s2250 + $0x30] sm:$0xf]
      %v2264 = vld [vmem:[%s2250 + $0x34] sm:$0xf]
      %v2265 = vld [vmem:[%s2250 + $0x38] sm:$0xf]
      %v2266 = vld [vmem:[%s2250 + $0x3c] sm:$0xf]
      %v2267 = vld [vmem:[%s6 + $0xa] sm:$0x1]
      %v2268 = vld [vmem:[%s6 + $0xb] sm:$0x1]
      %v2269 = vld [vmem:[%s6 + $0xc] sm:$0x1]
      %v2270 = vld [vmem:[%s6 + $0xd] sm:$0x1]
      %v2271 = vld [vmem:[%s6 + $0xe] sm:$0x1]
      %v2272 = vld [vmem:[%s6 + $0xf] sm:$0x1]
      %v2273 = vld [vmem:[%s6 + $0x10] sm:$0x1]
      %v2274 = vld [vmem:[%s6 + $0x11] sm:$0x1]
      %v2275 = vld [vmem:[%s6 + $0x12] sm:$0x1]
      %v2276 = vld [vmem:[%s6 + $0x13] sm:$0x1]
      %v2277 = vsel %vm412, %v2224, 0.0
      %2278 = vadd.xlane.f32.xlu0 %v2277
      %v2279 = vpop.xlane.xlu0 %2278
      %v2280 = vmul.f32 %v2279, %v422
      %v2281 = vsub.f32 %v2224, %v2280
      %v2282 = vmul.f32 %v2281, %v2281
      %v2283 = vsel %vm412, %v2282, 0.0
      %2284 = vadd.xlane.f32.xlu0 %v2283
      %v2285 = vpop.xlane.xlu0 %2284
      %v2286 = vmul.f32 %v2285, %v422
      %v2287 = vadd.f32 %v2286, 1e-06
      %v2288 = vrsqrt.pop %v2287
      %v2289 = vmul.f32 %v2288, %v2287
      %v2290 = vmul.f32 %v2289, %v2288
      %v2291 = vmul.f32 0.5, %v2290
      %v2292 = vsub.f32 1.5, %v2291
      %v2293 = vmul.f32 %v2288, %v2292
      %vm2294 = vweird.f32 %v2287
      %vm2295 = vweird.f32 %v2288
      %vm2296 = vmor %vm2294, %vm2295
      %v2297 = vsel %vm2296, %v2288, %v2293
      %v2298 = vmul.f32 %v2281, %v2297
      %v2299 = vperm.slane %v2267, 0
      %v2300 = vmul.f32 %v2298, %v2299
      %v2301 = vperm.slane %v2268, 0
      %v2302 = vadd.f32 %v2300, %v2301
      %v2303 = vpack.c.bf16 %v2302, %v2302
      %v2304 = vperm.slane %v2269, 0
      %v2309 = vunpack.c.l.b16 %v2226
      %v2310 = vunpack.c.l.b16 %v2227
      %v2311 = vunpack.c.l.b16 %v2228
      %v2312 = vunpack.c.l.b16 %v2229
      %v2313 = vpack.c.b16 %v2310, %v2309
      %v2314 = vpack.c.b16 %v2312, %v2311
      %v2318 = vsel %vm412, %v2303, 0
      %2320 = vmatpush.bf16.msra.mxu0 0
      %2321 = vmatpush.bf16.msra.mxu0 0
      %2322 = vmatpush.bf16.msra.mxu0 0
      %2323 = vmatpush.bf16.msra.mxu0 0
      %2324 = vmatpush.bf16.msra.mxu0 0
      %2325 = vmatpush.bf16.msra.mxu0 0
      %2326 = vmatpush.bf16.msra.mxu0 %v2314
      %2327 = vmatpush.bf16.msra.mxu0 %v2313
      %2328 = vmatmul.bf16.gmra.mxu0 %v2318
      %v2329 = vpop.f32.mrf.mxu0
      %v2330 = vadd.f32 %v2304, %v2329
      %v2331 = vpop.f32.mrf.mxu0
      %2332 = vdwg.mxu0
      %2334 = vrot.lane.b32.xlu0 %v2330, 120
      %v2335 = vpop.permute.xlu0 %2334
      %2337 = vrot.lane.b32.xlu0 %v2330, 112
      %v2338 = vpop.permute.xlu0 %2337
      %2340 = vrot.lane.b32.xlu0 %v2330, 104
      %v2341 = vpop.permute.xlu0 %2340
      %v2343 = vrot.slane %v2338, 4
      %v2344 = vsel %vm487, %v2343, %v2330
      %v2345 = vrot.slane %v2330, 4
      %v2346 = vsel %vm487, %v2338, %v2345
      %v2348 = vunpack.c.l.s4 1983009808
      %v2349 = vunpack.c.0.s8 %v2348
      %v2350 = vperm.slane %v2344, %v2349
      %v2352 = vunpack.c.l.s4 1983009808
      %v2353 = vunpack.c.0.s8 %v2352
      %v2354 = vperm.slane %v2346, %v2353
      %v2355 = vrot.slane %v2341, 4
      %v2356 = vsel %vm487, %v2355, %v2335
      %v2357 = vrot.slane %v2335, 4
      %v2358 = vsel %vm487, %v2341, %v2357
      %v2360 = vunpack.c.l.s4 1983009808
      %v2361 = vunpack.c.0.s8 %v2360
      %v2362 = vperm.slane %v2356, %v2361
      %v2364 = vunpack.c.l.s4 1983009808
      %v2365 = vunpack.c.0.s8 %v2364
      %v2366 = vperm.slane %v2358, %v2365
      %v2367 = vrot.slane %v2362, 4
      %v2368 = vsel %vm487, %v2367, %v2350
      %v2369 = vrot.slane %v2350, 4
      %v2370 = vsel %vm487, %v2362, %v2369
      %v2372 = vunpack.c.l.s4 1934713408
      %v2373 = vunpack.c.0.s8 %v2372
      %v2374 = vperm.slane %v2368, %v2373
      %v2376 = vunpack.c.l.s4 1934713408
      %v2377 = vunpack.c.0.s8 %v2376
      %v2378 = vperm.slane %v2370, %v2377
      %v2379 = vrot.slane %v2366, 4
      %v2380 = vsel %vm487, %v2379, %v2354
      %v2381 = vrot.slane %v2354, 4
      %v2382 = vsel %vm487, %v2366, %v2381
      %v2384 = vunpack.c.l.s4 1934713408
      %v2385 = vunpack.c.0.s8 %v2384
      %v2386 = vperm.slane %v2380, %v2385
      %v2388 = vunpack.c.l.s4 1934713408
      %v2389 = vunpack.c.0.s8 %v2388
      %v2390 = vperm.slane %v2382, %v2389
      %v2391 = vrot.slane %v2374, 4
      %v2392 = vsel %vm487, 0.0, %v2391
      %v2393 = vrot.slane %v2378, 4
      %v2394 = vsel %vm487, 0.0, %v2393
      %v2395 = vrot.slane %v2386, 4
      %v2396 = vsel %vm487, 0.0, %v2395
      %v2397 = vrot.slane %v2390, 4
      %v2398 = vsel %vm487, 0.0, %v2397
      %v2399 = vperm.slane %v2270, 0
      %v2404 = vunpack.c.l.b16 %v2231
      %v2405 = vunpack.c.l.b16 %v2232
      %v2406 = vunpack.c.l.b16 %v2233
      %v2407 = vunpack.c.l.b16 %v2234
      %v2408 = vpack.c.b16 %v2405, %v2404
      %v2409 = vpack.c.b16 %v2407, %v2406
      %2412 = vmatpush.bf16.msra.mxu0 0
      %2413 = vmatpush.bf16.msra.mxu0 0
      %2414 = vmatpush.bf16.msra.mxu0 0
      %2415 = vmatpush.bf16.msra.mxu0 0
      %2416 = vmatpush.bf16.msra.mxu0 0
      %2417 = vmatpush.bf16.msra.mxu0 0
      %2418 = vmatpush.bf16.msra.mxu0 %v2409
      %2419 = vmatpush.bf16.msra.mxu0 %v2408
      %2420 = vmatmul.bf16.gmra.mxu0 %v2318
      %v2421 = vpop.f32.mrf.mxu0
      %v2422 = vadd.f32 %v2399, %v2421
      %v2423 = vpop.f32.mrf.mxu0
      %2424 = vdwg.mxu0
      %2426 = vrot.lane.b32.xlu0 %v2422, 120
      %v2427 = vpop.permute.xlu0 %2426
      %2429 = vrot.lane.b32.xlu0 %v2422, 112
      %v2430 = vpop.permute.xlu0 %2429
      %2432 = vrot.lane.b32.xlu0 %v2422, 104
      %v2433 = vpop.permute.xlu0 %2432
      %v2435 = vrot.slane %v2430, 4
      %v2436 = vsel %vm487, %v2435, %v2422
      %v2437 = vrot.slane %v2422, 4
      %v2438 = vsel %vm487, %v2430, %v2437
      %v2440 = vunpack.c.l.s4 1983009808
      %v2441 = vunpack.c.0.s8 %v2440
      %v2442 = vperm.slane %v2436, %v2441
      %v2444 = vunpack.c.l.s4 1983009808
      %v2445 = vunpack.c.0.s8 %v2444
      %v2446 = vperm.slane %v2438, %v2445
      %v2447 = vrot.slane %v2433, 4
      %v2448 = vsel %vm487, %v2447, %v2427
      %v2449 = vrot.slane %v2427, 4
      %v2450 = vsel %vm487, %v2433, %v2449
      %v2452 = vunpack.c.l.s4 1983009808
      %v2453 = vunpack.c.0.s8 %v2452
      %v2454 = vperm.slane %v2448, %v2453
      %v2456 = vunpack.c.l.s4 1983009808
      %v2457 = vunpack.c.0.s8 %v2456
      %v2458 = vperm.slane %v2450, %v2457
      %v2459 = vrot.slane %v2454, 4
      %v2460 = vsel %vm487, %v2459, %v2442
      %v2461 = vrot.slane %v2442, 4
      %v2462 = vsel %vm487, %v2454, %v2461
      %v2464 = vunpack.c.l.s4 1934713408
      %v2465 = vunpack.c.0.s8 %v2464
      %v2466 = vperm.slane %v2460, %v2465
      %v2468 = vunpack.c.l.s4 1934713408
      %v2469 = vunpack.c.0.s8 %v2468
      %v2470 = vperm.slane %v2462, %v2469
      %v2471 = vrot.slane %v2458, 4
      %v2472 = vsel %vm487, %v2471, %v2446
      %v2473 = vrot.slane %v2446, 4
      %v2474 = vsel %vm487, %v2458, %v2473
      %v2476 = vunpack.c.l.s4 1934713408
      %v2477 = vunpack.c.0.s8 %v2476
      %v2478 = vperm.slane %v2472, %v2477
      %v2480 = vunpack.c.l.s4 1934713408
      %v2481 = vunpack.c.0.s8 %v2480
      %v2482 = vperm.slane %v2474, %v2481
      %v2483 = vrot.slane %v2466, 4
      %v2484 = vsel %vm487, 0.0, %v2483
      %v2485 = vrot.slane %v2470, 4
      %v2486 = vsel %vm487, 0.0, %v2485
      %v2487 = vrot.slane %v2478, 4
      %v2488 = vsel %vm487, 0.0, %v2487
      %v2489 = vrot.slane %v2482, 4
      %v2490 = vsel %vm487, 0.0, %v2489
      %v2491 = vperm.slane %v2271, 0
      %v2496 = vunpack.c.l.b16 %v2236
      %v2497 = vunpack.c.l.b16 %v2237
      %v2498 = vunpack.c.l.b16 %v2238
      %v2499 = vunpack.c.l.b16 %v2239
      %v2500 = vpack.c.b16 %v2497, %v2496
      %v2501 = vpack.c.b16 %v2499, %v2498
      %2504 = vmatpush.bf16.msra.mxu0 0
      %2505 = vmatpush.bf16.msra.mxu0 0
      %2506 = vmatpush.bf16.msra.mxu0 0
      %2507 = vmatpush.bf16.msra.mxu0 0
      %2508 = vmatpush.bf16.msra.mxu0 0
      %2509 = vmatpush.bf16.msra.mxu0 0
      %2510 = vmatpush.bf16.msra.mxu0 %v2501
      %2511 = vmatpush.bf16.msra.mxu0 %v2500
      %2512 = vmatmul.bf16.gmra.mxu0 %v2318
      %v2513 = vpop.f32.mrf.mxu0
      %v2514 = vadd.f32 %v2491, %v2513
      %v2515 = vpop.f32.mrf.mxu0
      %2516 = vdwg.mxu0
      %2518 = vrot.lane.b32.xlu0 %v2514, 120
      %v2519 = vpop.permute.xlu0 %2518
      %2521 = vrot.lane.b32.xlu0 %v2514, 112
      %v2522 = vpop.permute.xlu0 %2521
      %2524 = vrot.lane.b32.xlu0 %v2514, 104
      %v2525 = vpop.permute.xlu0 %2524
      %v2527 = vrot.slane %v2522, 4
      %v2528 = vsel %vm487, %v2527, %v2514
      %v2529 = vrot.slane %v2514, 4
      %v2530 = vsel %vm487, %v2522, %v2529
      %v2532 = vunpack.c.l.s4 1983009808
      %v2533 = vunpack.c.0.s8 %v2532
      %v2534 = vperm.slane %v2528, %v2533
      %v2536 = vunpack.c.l.s4 1983009808
      %v2537 = vunpack.c.0.s8 %v2536
      %v2538 = vperm.slane %v2530, %v2537
      %v2539 = vrot.slane %v2525, 4
      %v2540 = vsel %vm487, %v2539, %v2519
      %v2541 = vrot.slane %v2519, 4
      %v2542 = vsel %vm487, %v2525, %v2541
      %v2544 = vunpack.c.l.s4 1983009808
      %v2545 = vunpack.c.0.s8 %v2544
      %v2546 = vperm.slane %v2540, %v2545
      %v2548 = vunpack.c.l.s4 1983009808
      %v2549 = vunpack.c.0.s8 %v2548
      %v2550 = vperm.slane %v2542, %v2549
      %v2551 = vrot.slane %v2546, 4
      %v2552 = vsel %vm487, %v2551, %v2534
      %v2553 = vrot.slane %v2534, 4
      %v2554 = vsel %vm487, %v2546, %v2553
      %v2556 = vunpack.c.l.s4 1934713408
      %v2557 = vunpack.c.0.s8 %v2556
      %v2558 = vperm.slane %v2552, %v2557
      %v2560 = vunpack.c.l.s4 1934713408
      %v2561 = vunpack.c.0.s8 %v2560
      %v2562 = vperm.slane %v2554, %v2561
      %v2563 = vrot.slane %v2550, 4
      %v2564 = vsel %vm487, %v2563, %v2538
      %v2565 = vrot.slane %v2538, 4
      %v2566 = vsel %vm487, %v2550, %v2565
      %v2568 = vunpack.c.l.s4 1934713408
      %v2569 = vunpack.c.0.s8 %v2568
      %v2570 = vperm.slane %v2564, %v2569
      %v2572 = vunpack.c.l.s4 1934713408
      %v2573 = vunpack.c.0.s8 %v2572
      %v2574 = vperm.slane %v2566, %v2573
      %v2575 = vrot.slane %v2558, 4
      %v2576 = vsel %vm487, 0.0, %v2575
      %v2577 = vrot.slane %v2562, 4
      %v2578 = vsel %vm487, 0.0, %v2577
      %v2579 = vrot.slane %v2570, 4
      %v2580 = vsel %vm487, 0.0, %v2579
      %v2581 = vrot.slane %v2574, 4
      %v2582 = vsel %vm487, 0.0, %v2581
      %v2583 = vpack.c.bf16 %v2374, %v2374
      %v2584 = vpack.c.bf16 %v2392, %v2392
      %v2585 = vpack.c.bf16 %v2378, %v2378
      %v2586 = vpack.c.bf16 %v2394, %v2394
      %v2587 = vpack.c.bf16 %v2386, %v2386
      %v2588 = vpack.c.bf16 %v2396, %v2396
      %v2589 = vpack.c.bf16 %v2390, %v2390
      %v2590 = vpack.c.bf16 %v2398, %v2398
      %v2591 = vpack.c.bf16 %v2466, %v2466
      %v2592 = vpack.c.bf16 %v2484, %v2484
      %v2593 = vpack.c.bf16 %v2470, %v2470
      %v2594 = vpack.c.bf16 %v2486, %v2486
      %v2595 = vpack.c.bf16 %v2478, %v2478
      %v2596 = vpack.c.bf16 %v2488, %v2488
      %v2597 = vpack.c.bf16 %v2482, %v2482
      %v2598 = vpack.c.bf16 %v2490, %v2490
      %v2599 = vrot.slane %v2587, 4
      %v2600 = vsel %vm748, %v2599, %v2583
      %v2602 = vunpack.c.l.s4 1983009808
      %v2603 = vunpack.c.0.s8 %v2602
      %v2604 = vperm.slane %v2600, %v2603
      %v2605 = vrot.slane %v2589, 4
      %v2606 = vsel %vm748, %v2605, %v2585
      %v2608 = vunpack.c.l.s4 1983009808
      %v2609 = vunpack.c.0.s8 %v2608
      %v2610 = vperm.slane %v2606, %v2609
      %v2611 = vrot.slane %v2610, 4
      %v2612 = vsel %vm748, %v2611, %v2604
      %v2614 = vunpack.c.l.s4 1934713408
      %v2615 = vunpack.c.0.s8 %v2614
      %v2616 = vperm.slane %v2612, %v2615
      %v2617 = vrot.slane %v2616, 4
      %v2618 = vsel %vm748, 0, %v2617
      %v2619 = vrot.slane %v2588, 4
      %v2620 = vsel %vm748, %v2619, %v2584
      %v2622 = vunpack.c.l.s4 1983009808
      %v2623 = vunpack.c.0.s8 %v2622
      %v2624 = vperm.slane %v2620, %v2623
      %v2625 = vrot.slane %v2590, 4
      %v2626 = vsel %vm748, %v2625, %v2586
      %v2628 = vunpack.c.l.s4 1983009808
      %v2629 = vunpack.c.0.s8 %v2628
      %v2630 = vperm.slane %v2626, %v2629
      %v2631 = vrot.slane %v2630, 4
      %v2632 = vsel %vm748, %v2631, %v2624
      %v2634 = vunpack.c.l.s4 1934713408
      %v2635 = vunpack.c.0.s8 %v2634
      %v2636 = vperm.slane %v2632, %v2635
      %v2637 = vrot.slane %v2636, 4
      %v2638 = vsel %vm748, 0, %v2637
      %v2641 = vpack.i.b16 %v2636, %v2616
      %v2642 = vshrl.u32 %v2616, 16
      %v2643 = vshrl.u32 %v2636, 16
      %v2644 = vpack.i.b16 %v2643, %v2642
      %v2647 = vpack.i.b16 %v2638, %v2618
      %v2648 = vshrl.u32 %v2618, 16
      %v2649 = vshrl.u32 %v2638, 16
      %v2650 = vpack.i.b16 %v2649, %v2648
      %2651 = vxpose.xlu0.c.b16.start [1/8] %v2591, 128
      %2652 = vxpose.xlu0.c.b16.cont [2/8] 0, 128
      %2653 = vxpose.xlu0.c.b16.cont [3/8] 0, 128
      %2654 = vxpose.xlu0.c.b16.cont [4/8] 0, 128
      %2655 = vxpose.xlu0.c.b16.cont [5/8] 0, 128
      %2656 = vxpose.xlu0.c.b16.cont [6/8] 0, 128
      %2657 = vxpose.xlu0.c.b16.cont [7/8] 0, 128
      %2658 = vxpose.xlu0.c.b16.end [8/8] 0, 128
      %v2659 = vpop.trf.xlu0
      %v2660 = vpop.trf.xlu0
      %v2661 = vpop.trf.xlu0
      %v2662 = vpop.trf.xlu0
      %v2663 = vpop.trf.xlu0
      %v2664 = vpop.trf.xlu0
      %v2665 = vpop.trf.xlu0
      %v2666 = vpop.trf.xlu0
      %2667 = vxpose.xlu0.c.b16.start [1/8] %v2592, 128
      %2668 = vxpose.xlu0.c.b16.cont [2/8] 0, 128
      %2669 = vxpose.xlu0.c.b16.cont [3/8] 0, 128
      %2670 = vxpose.xlu0.c.b16.cont [4/8] 0, 128
      %2671 = vxpose.xlu0.c.b16.cont [5/8] 0, 128
      %2672 = vxpose.xlu0.c.b16.cont [6/8] 0, 128
      %2673 = vxpose.xlu0.c.b16.cont [7/8] 0, 128
      %2674 = vxpose.xlu0.c.b16.end [8/8] 0, 128
      %v2675 = vpop.trf.xlu0
      %v2676 = vpop.trf.xlu0
      %v2677 = vpop.trf.xlu0
      %v2678 = vpop.trf.xlu0
      %v2679 = vpop.trf.xlu0
      %v2680 = vpop.trf.xlu0
      %v2681 = vpop.trf.xlu0
      %v2682 = vpop.trf.xlu0
      %2683 = vxpose.xlu0.c.b16.start [1/8] %v2593, 128
      %2684 = vxpose.xlu0.c.b16.cont [2/8] 0, 128
      %2685 = vxpose.xlu0.c.b16.cont [3/8] 0, 128
      %2686 = vxpose.xlu0.c.b16.cont [4/8] 0, 128
      %2687 = vxpose.xlu0.c.b16.cont [5/8] 0, 128
      %2688 = vxpose.xlu0.c.b16.cont [6/8] 0, 128
      %2689 = vxpose.xlu0.c.b16.cont [7/8] 0, 128
      %2690 = vxpose.xlu0.c.b16.end [8/8] 0, 128
      %v2691 = vpop.trf.xlu0
      %v2692 = vpop.trf.xlu0
      %v2693 = vpop.trf.xlu0
      %v2694 = vpop.trf.xlu0
      %v2695 = vpop.trf.xlu0
      %v2696 = vpop.trf.xlu0
      %v2697 = vpop.trf.xlu0
      %v2698 = vpop.trf.xlu0
      %2699 = vxpose.xlu0.c.b16.start [1/8] %v2594, 128
      %2700 = vxpose.xlu0.c.b16.cont [2/8] 0, 128
      %2701 = vxpose.xlu0.c.b16.cont [3/8] 0, 128
      %2702 = vxpose.xlu0.c.b16.cont [4/8] 0, 128
      %2703 = vxpose.xlu0.c.b16.cont [5/8] 0, 128
      %2704 = vxpose.xlu0.c.b16.cont [6/8] 0, 128
      %2705 = vxpose.xlu0.c.b16.cont [7/8] 0, 128
      %2706 = vxpose.xlu0.c.b16.end [8/8] 0, 128
      %v2707 = vpop.trf.xlu0
      %v2708 = vpop.trf.xlu0
      %v2709 = vpop.trf.xlu0
      %v2710 = vpop.trf.xlu0
      %v2711 = vpop.trf.xlu0
      %v2712 = vpop.trf.xlu0
      %v2713 = vpop.trf.xlu0
      %v2714 = vpop.trf.xlu0
      %2715 = vxpose.xlu0.c.b16.start [1/8] %v2595, 128
      %2716 = vxpose.xlu0.c.b16.cont [2/8] 0, 128
      %2717 = vxpose.xlu0.c.b16.cont [3/8] 0, 128
      %2718 = vxpose.xlu0.c.b16.cont [4/8] 0, 128
      %2719 = vxpose.xlu0.c.b16.cont [5/8] 0, 128
      %2720 = vxpose.xlu0.c.b16.cont [6/8] 0, 128
      %2721 = vxpose.xlu0.c.b16.cont [7/8] 0, 128
      %2722 = vxpose.xlu0.c.b16.end [8/8] 0, 128
      %v2723 = vpop.trf.xlu0
      %v2724 = vpop.trf.xlu0
      %v2725 = vpop.trf.xlu0
      %v2726 = vpop.trf.xlu0
      %v2727 = vpop.trf.xlu0
      %v2728 = vpop.trf.xlu0
      %v2729 = vpop.trf.xlu0
      %v2730 = vpop.trf.xlu0
      %2731 = vxpose.xlu0.c.b16.start [1/8] %v2596, 128
      %2732 = vxpose.xlu0.c.b16.cont [2/8] 0, 128
      %2733 = vxpose.xlu0.c.b16.cont [3/8] 0, 128
      %2734 = vxpose.xlu0.c.b16.cont [4/8] 0, 128
      %2735 = vxpose.xlu0.c.b16.cont [5/8] 0, 128
      %2736 = vxpose.xlu0.c.b16.cont [6/8] 0, 128
      %2737 = vxpose.xlu0.c.b16.cont [7/8] 0, 128
      %2738 = vxpose.xlu0.c.b16.end [8/8] 0, 128
      %v2739 = vpop.trf.xlu0
      %v2740 = vpop.trf.xlu0
      %v2741 = vpop.trf.xlu0
      %v2742 = vpop.trf.xlu0
      %v2743 = vpop.trf.xlu0
      %v2744 = vpop.trf.xlu0
      %v2745 = vpop.trf.xlu0
      %v2746 = vpop.trf.xlu0
      %2747 = vxpose.xlu0.c.b16.start [1/8] %v2597, 128
      %2748 = vxpose.xlu0.c.b16.cont [2/8] 0, 128
      %2749 = vxpose.xlu0.c.b16.cont [3/8] 0, 128
      %2750 = vxpose.xlu0.c.b16.cont [4/8] 0, 128
      %2751 = vxpose.xlu0.c.b16.cont [5/8] 0, 128
      %2752 = vxpose.xlu0.c.b16.cont [6/8] 0, 128
      %2753 = vxpose.xlu0.c.b16.cont [7/8] 0, 128
      %2754 = vxpose.xlu0.c.b16.end [8/8] 0, 128
      %v2755 = vpop.trf.xlu0
      %v2756 = vpop.trf.xlu0
      %v2757 = vpop.trf.xlu0
      %v2758 = vpop.trf.xlu0
      %v2759 = vpop.trf.xlu0
      %v2760 = vpop.trf.xlu0
      %v2761 = vpop.trf.xlu0
      %v2762 = vpop.trf.xlu0
      %2763 = vxpose.xlu0.c.b16.start [1/8] %v2598, 128
      %2764 = vxpose.xlu0.c.b16.cont [2/8] 0, 128
      %2765 = vxpose.xlu0.c.b16.cont [3/8] 0, 128
      %2766 = vxpose.xlu0.c.b16.cont [4/8] 0, 128
      %2767 = vxpose.xlu0.c.b16.cont [5/8] 0, 128
      %2768 = vxpose.xlu0.c.b16.cont [6/8] 0, 128
      %2769 = vxpose.xlu0.c.b16.cont [7/8] 0, 128
      %2770 = vxpose.xlu0.c.b16.end [8/8] 0, 128
      %v2771 = vpop.trf.xlu0
      %v2772 = vpop.trf.xlu0
      %v2773 = vpop.trf.xlu0
      %v2774 = vpop.trf.xlu0
      %v2775 = vpop.trf.xlu0
      %v2776 = vpop.trf.xlu0
      %v2777 = vpop.trf.xlu0
      %v2778 = vpop.trf.xlu0
      %v2779 = vrot.slane %v2723, 4
      %v2780 = vsel %vm748, %v2779, %v2659
      %v2782 = vunpack.c.l.s4 1983009808
      %v2783 = vunpack.c.0.s8 %v2782
      %v2784 = vperm.slane %v2780, %v2783
      %v2785 = vrot.slane %v2755, 4
      %v2786 = vsel %vm748, %v2785, %v2691
      %v2788 = vunpack.c.l.s4 1983009808
      %v2789 = vunpack.c.0.s8 %v2788
      %v2790 = vperm.slane %v2786, %v2789
      %v2791 = vrot.slane %v2790, 4
      %v2792 = vsel %vm748, %v2791, %v2784
      %v2793 = vrot.slane %v2784, 4
      %v2794 = vsel %vm748, %v2790, %v2793
      %v2796 = vunpack.c.l.s4 1934713408
      %v2797 = vunpack.c.0.s8 %v2796
      %v2798 = vperm.slane %v2792, %v2797
      %v2800 = vunpack.c.l.s4 1934713408
      %v2801 = vunpack.c.0.s8 %v2800
      %v2802 = vperm.slane %v2794, %v2801
      %v2803 = vrot.slane %v2798, 4
      %v2804 = vsel %vm748, 0, %v2803
      %v2805 = vrot.slane %v2802, 4
      %v2806 = vsel %vm748, 0, %v2805
      %v2807 = vrot.slane %v2739, 4
      %v2808 = vsel %vm748, %v2807, %v2675
      %v2810 = vunpack.c.l.s4 1983009808
      %v2811 = vunpack.c.0.s8 %v2810
      %v2812 = vperm.slane %v2808, %v2811
      %v2813 = vrot.slane %v2771, 4
      %v2814 = vsel %vm748, %v2813, %v2707
      %v2816 = vunpack.c.l.s4 1983009808
      %v2817 = vunpack.c.0.s8 %v2816
      %v2818 = vperm.slane %v2814, %v2817
      %v2819 = vrot.slane %v2818, 4
      %v2820 = vsel %vm748, %v2819, %v2812
      %v2821 = vrot.slane %v2812, 4
      %v2822 = vsel %vm748, %v2818, %v2821
      %v2824 = vunpack.c.l.s4 1934713408
      %v2825 = vunpack.c.0.s8 %v2824
      %v2826 = vperm.slane %v2820, %v2825
      %v2828 = vunpack.c.l.s4 1934713408
      %v2829 = vunpack.c.0.s8 %v2828
      %v2830 = vperm.slane %v2822, %v2829
      %v2831 = vrot.slane %v2826, 4
      %v2832 = vsel %vm748, 0, %v2831
      %v2833 = vrot.slane %v2830, 4
      %v2834 = vsel %vm748, 0, %v2833
      %v2837 = vpack.i.b16 %v2826, %v2798
      %v2839 = vshrl.u32 %v2798, 16
      %v2840 = vshrl.u32 %v2826, 16
      %v2841 = vpack.i.b16 %v2840, %v2839
      %v2845 = vpack.i.b16 %v2832, %v2804
      %v2847 = vshrl.u32 %v2804, 16
      %v2848 = vshrl.u32 %v2832, 16
      %v2849 = vpack.i.b16 %v2848, %v2847
      %v2853 = vpack.i.b16 %v2830, %v2802
      %v2855 = vshrl.u32 %v2802, 16
      %v2856 = vshrl.u32 %v2830, 16
      %v2857 = vpack.i.b16 %v2856, %v2855
      %v2861 = vpack.i.b16 %v2834, %v2806
      %v2863 = vshrl.u32 %v2806, 16
      %v2864 = vshrl.u32 %v2834, 16
      %v2865 = vpack.i.b16 %v2864, %v2863
      %2867 = vxpose.xlu0.c.b16.start [1/8] %v2837, 128
      %2868 = vxpose.xlu0.c.b16.cont [2/8] 0, 128
      %2869 = vxpose.xlu0.c.b16.cont [3/8] 0, 128
      %2870 = vxpose.xlu0.c.b16.cont [4/8] 0, 128
      %2871 = vxpose.xlu0.c.b16.cont [5/8] 0, 128
      %2872 = vxpose.xlu0.c.b16.cont [6/8] 0, 128
      %2873 = vxpose.xlu0.c.b16.cont [7/8] 0, 128
      %2874 = vxpose.xlu0.c.b16.end [8/8] 0, 128
      %v2875 = vpop.trf.xlu0
      %v2876 = vpop.trf.xlu0
      %v2877 = vpop.trf.xlu0
      %v2878 = vpop.trf.xlu0
      %v2879 = vpop.trf.xlu0
      %v2880 = vpop.trf.xlu0
      %v2881 = vpop.trf.xlu0
      %v2882 = vpop.trf.xlu0
      %2883 = vxpose.xlu0.c.b16.start [1/8] %v2841, 128
      %2884 = vxpose.xlu0.c.b16.cont [2/8] 0, 128
      %2885 = vxpose.xlu0.c.b16.cont [3/8] 0, 128
      %2886 = vxpose.xlu0.c.b16.cont [4/8] 0, 128
      %2887 = vxpose.xlu0.c.b16.cont [5/8] 0, 128
      %2888 = vxpose.xlu0.c.b16.cont [6/8] 0, 128
      %2889 = vxpose.xlu0.c.b16.cont [7/8] 0, 128
      %2890 = vxpose.xlu0.c.b16.end [8/8] 0, 128
      %v2891 = vpop.trf.xlu0
      %v2892 = vpop.trf.xlu0
      %v2893 = vpop.trf.xlu0
      %v2894 = vpop.trf.xlu0
      %v2895 = vpop.trf.xlu0
      %v2896 = vpop.trf.xlu0
      %v2897 = vpop.trf.xlu0
      %v2898 = vpop.trf.xlu0
      %2899 = vxpose.xlu0.c.b16.start [1/8] %v2845, 128
      %2900 = vxpose.xlu0.c.b16.cont [2/8] 0, 128
      %2901 = vxpose.xlu0.c.b16.cont [3/8] 0, 128
      %2902 = vxpose.xlu0.c.b16.cont [4/8] 0, 128
      %2903 = vxpose.xlu0.c.b16.cont [5/8] 0, 128
      %2904 = vxpose.xlu0.c.b16.cont [6/8] 0, 128
      %2905 = vxpose.xlu0.c.b16.cont [7/8] 0, 128
      %2906 = vxpose.xlu0.c.b16.end [8/8] 0, 128
      %v2907 = vpop.trf.xlu0
      %v2908 = vpop.trf.xlu0
      %v2909 = vpop.trf.xlu0
      %v2910 = vpop.trf.xlu0
      %v2911 = vpop.trf.xlu0
      %v2912 = vpop.trf.xlu0
      %v2913 = vpop.trf.xlu0
      %v2914 = vpop.trf.xlu0
      %2915 = vxpose.xlu0.c.b16.start [1/8] %v2849, 128
      %2916 = vxpose.xlu0.c.b16.cont [2/8] 0, 128
      %2917 = vxpose.xlu0.c.b16.cont [3/8] 0, 128
      %2918 = vxpose.xlu0.c.b16.cont [4/8] 0, 128
      %2919 = vxpose.xlu0.c.b16.cont [5/8] 0, 128
      %2920 = vxpose.xlu0.c.b16.cont [6/8] 0, 128
      %2921 = vxpose.xlu0.c.b16.cont [7/8] 0, 128
      %2922 = vxpose.xlu0.c.b16.end [8/8] 0, 128
      %v2923 = vpop.trf.xlu0
      %v2924 = vpop.trf.xlu0
      %v2925 = vpop.trf.xlu0
      %v2926 = vpop.trf.xlu0
      %v2927 = vpop.trf.xlu0
      %v2928 = vpop.trf.xlu0
      %v2929 = vpop.trf.xlu0
      %v2930 = vpop.trf.xlu0
      %2931 = vxpose.xlu0.c.b16.start [1/8] %v2853, 128
      %2932 = vxpose.xlu0.c.b16.cont [2/8] 0, 128
      %2933 = vxpose.xlu0.c.b16.cont [3/8] 0, 128
      %2934 = vxpose.xlu0.c.b16.cont [4/8] 0, 128
      %2935 = vxpose.xlu0.c.b16.cont [5/8] 0, 128
      %2936 = vxpose.xlu0.c.b16.cont [6/8] 0, 128
      %2937 = vxpose.xlu0.c.b16.cont [7/8] 0, 128
      %2938 = vxpose.xlu0.c.b16.end [8/8] 0, 128
      %v2939 = vpop.trf.xlu0
      %v2940 = vpop.trf.xlu0
      %v2941 = vpop.trf.xlu0
      %v2942 = vpop.trf.xlu0
      %v2943 = vpop.trf.xlu0
      %v2944 = vpop.trf.xlu0
      %v2945 = vpop.trf.xlu0
      %v2946 = vpop.trf.xlu0
      %2947 = vxpose.xlu0.c.b16.start [1/8] %v2857, 128
      %2948 = vxpose.xlu0.c.b16.cont [2/8] 0, 128
      %2949 = vxpose.xlu0.c.b16.cont [3/8] 0, 128
      %2950 = vxpose.xlu0.c.b16.cont [4/8] 0, 128
      %2951 = vxpose.xlu0.c.b16.cont [5/8] 0, 128
      %2952 = vxpose.xlu0.c.b16.cont [6/8] 0, 128
      %2953 = vxpose.xlu0.c.b16.cont [7/8] 0, 128
      %2954 = vxpose.xlu0.c.b16.end [8/8] 0, 128
      %v2955 = vpop.trf.xlu0
      %v2956 = vpop.trf.xlu0
      %v2957 = vpop.trf.xlu0
      %v2958 = vpop.trf.xlu0
      %v2959 = vpop.trf.xlu0
      %v2960 = vpop.trf.xlu0
      %v2961 = vpop.trf.xlu0
      %v2962 = vpop.trf.xlu0
      %2963 = vxpose.xlu0.c.b16.start [1/8] %v2861, 128
      %2964 = vxpose.xlu0.c.b16.cont [2/8] 0, 128
      %2965 = vxpose.xlu0.c.b16.cont [3/8] 0, 128
      %2966 = vxpose.xlu0.c.b16.cont [4/8] 0, 128
      %2967 = vxpose.xlu0.c.b16.cont [5/8] 0, 128
      %2968 = vxpose.xlu0.c.b16.cont [6/8] 0, 128
      %2969 = vxpose.xlu0.c.b16.cont [7/8] 0, 128
      %2970 = vxpose.xlu0.c.b16.end [8/8] 0, 128
      %v2971 = vpop.trf.xlu0
      %v2972 = vpop.trf.xlu0
      %v2973 = vpop.trf.xlu0
      %v2974 = vpop.trf.xlu0
      %v2975 = vpop.trf.xlu0
      %v2976 = vpop.trf.xlu0
      %v2977 = vpop.trf.xlu0
      %v2978 = vpop.trf.xlu0
      %2979 = vxpose.xlu0.c.b16.start [1/8] %v2865, 128
      %2980 = vxpose.xlu0.c.b16.cont [2/8] 0, 128
      %2981 = vxpose.xlu0.c.b16.cont [3/8] 0, 128
      %2982 = vxpose.xlu0.c.b16.cont [4/8] 0, 128
      %2983 = vxpose.xlu0.c.b16.cont [5/8] 0, 128
      %2984 = vxpose.xlu0.c.b16.cont [6/8] 0, 128
      %2985 = vxpose.xlu0.c.b16.cont [7/8] 0, 128
      %2986 = vxpose.xlu0.c.b16.end [8/8] 0, 128
      %v2987 = vpop.trf.xlu0
      %v2988 = vpop.trf.xlu0
      %v2989 = vpop.trf.xlu0
      %v2990 = vpop.trf.xlu0
      %v2991 = vpop.trf.xlu0
      %v2992 = vpop.trf.xlu0
      %v2993 = vpop.trf.xlu0
      %v2994 = vpop.trf.xlu0
      %v2995 = vrot.slane %v2939, 4
      %v2996 = vsel %vm748, %v2995, %v2875
      %v2998 = vunpack.c.l.s4 1983009808
      %v2999 = vunpack.c.0.s8 %v2998
      %v3000 = vperm.slane %v2996, %v2999
      %v3001 = vrot.slane %v2971, 4
      %v3002 = vsel %vm748, %v3001, %v2907
      %v3004 = vunpack.c.l.s4 1983009808
      %v3005 = vunpack.c.0.s8 %v3004
      %v3006 = vperm.slane %v3002, %v3005
      %v3007 = vrot.slane %v3006, 4
      %v3008 = vsel %vm748, %v3007, %v3000
      %v3010 = vunpack.c.l.s4 1934713408
      %v3011 = vunpack.c.0.s8 %v3010
      %v3012 = vperm.slane %v3008, %v3011
      %v3013 = vrot.slane %v3012, 4
      %v3014 = vsel %vm748, 0, %v3013
      %v3015 = vrot.slane %v2955, 4
      %v3016 = vsel %vm748, %v3015, %v2891
      %v3018 = vunpack.c.l.s4 1983009808
      %v3019 = vunpack.c.0.s8 %v3018
      %v3020 = vperm.slane %v3016, %v3019
      %v3021 = vrot.slane %v2987, 4
      %v3022 = vsel %vm748, %v3021, %v2923
      %v3024 = vunpack.c.l.s4 1983009808
      %v3025 = vunpack.c.0.s8 %v3024
      %v3026 = vperm.slane %v3022, %v3025
      %v3027 = vrot.slane %v3026, 4
      %v3028 = vsel %vm748, %v3027, %v3020
      %v3030 = vunpack.c.l.s4 1934713408
      %v3031 = vunpack.c.0.s8 %v3030
      %v3032 = vperm.slane %v3028, %v3031
      %v3033 = vrot.slane %v3032, 4
      %v3034 = vsel %vm748, 0, %v3033
      %v3037 = vpack.i.b16 %v3032, %v3012
      %v3038 = vshrl.u32 %v3012, 16
      %v3039 = vshrl.u32 %v3032, 16
      %v3040 = vpack.i.b16 %v3039, %v3038
      %v3043 = vpack.i.b16 %v3034, %v3014
      %v3044 = vshrl.u32 %v3014, 16
      %v3045 = vshrl.u32 %v3034, 16
      %v3046 = vpack.i.b16 %v3045, %v3044
      %v3048 = vsel %vm1196, %v2641, 0
      %v3051 = vsel %vm1200, %v3037, 0
      %3053 = vmatpush.bf16.msra.mxu0 0
      %3054 = vmatpush.bf16.msra.mxu0 0
      %3055 = vmatpush.bf16.msra.mxu0 0
      %3056 = vmatpush.bf16.msra.mxu0 0
      %3057 = vmatpush.bf16.msra.mxu0 0
      %3058 = vmatpush.bf16.msra.mxu0 0
      %3059 = vmatpush.bf16.msra.mxu0 0
      %3060 = vmatpush.bf16.msra.mxu0 %v3051
      %3061 = vmatmul.bf16.gmra.mxu0 %v3048
      %v3062 = vpop.f32.mrf.mxu0
      %v3063 = vadd.f32 0.0, %v3062
      %v3064 = vpop.f32.mrf.mxu0
      %3065 = vdwg.mxu0
      %v3067 = vsel %vm1196, %v2644, 0
      %v3070 = vsel %vm1200, %v3040, 0
      %3072 = vmatpush.bf16.msra.mxu0 0
      %3073 = vmatpush.bf16.msra.mxu0 0
      %3074 = vmatpush.bf16.msra.mxu0 0
      %3075 = vmatpush.bf16.msra.mxu0 0
      %3076 = vmatpush.bf16.msra.mxu0 0
      %3077 = vmatpush.bf16.msra.mxu0 0
      %3078 = vmatpush.bf16.msra.mxu0 0
      %3079 = vmatpush.bf16.msra.mxu0 %v3070
      %3080 = vmatmul.bf16.gmra.mxu0 %v3067
      %v3081 = vpop.f32.mrf.mxu0
      %v3082 = vadd.f32 0.0, %v3081
      %v3083 = vpop.f32.mrf.mxu0
      %3084 = vdwg.mxu0
      %v3086 = vsel %vm1196, %v2647, 0
      %v3089 = vsel %vm1200, %v3043, 0
      %3091 = vmatpush.bf16.msra.mxu0 0
      %3092 = vmatpush.bf16.msra.mxu0 0
      %3093 = vmatpush.bf16.msra.mxu0 0
      %3094 = vmatpush.bf16.msra.mxu0 0
      %3095 = vmatpush.bf16.msra.mxu0 0
      %3096 = vmatpush.bf16.msra.mxu0 0
      %3097 = vmatpush.bf16.msra.mxu0 0
      %3098 = vmatpush.bf16.msra.mxu0 %v3089
      %3099 = vmatmul.bf16.gmra.mxu0 %v3086
      %v3100 = vpop.f32.mrf.mxu0
      %v3101 = vadd.f32 0.0, %v3100
      %v3102 = vpop.f32.mrf.mxu0
      %3103 = vdwg.mxu0
      %v3105 = vsel %vm1196, %v2650, 0
      %v3108 = vsel %vm1200, %v3046, 0
      %3110 = vmatpush.bf16.msra.mxu0 0
      %3111 = vmatpush.bf16.msra.mxu0 0
      %3112 = vmatpush.bf16.msra.mxu0 0
      %3113 = vmatpush.bf16.msra.mxu0 0
      %3114 = vmatpush.bf16.msra.mxu0 0
      %3115 = vmatpush.bf16.msra.mxu0 0
      %3116 = vmatpush.bf16.msra.mxu0 0
      %3117 = vmatpush.bf16.msra.mxu0 %v3108
      %3118 = vmatmul.bf16.gmra.mxu0 %v3105
      %v3119 = vpop.f32.mrf.mxu0
      %v3120 = vadd.f32 0.0, %v3119
      %v3121 = vpop.f32.mrf.mxu0
      %3122 = vdwg.mxu0
      %v3123 = vmul.f32 %v3063, 0.35355338
      %v3124 = vmul.f32 %v3082, 0.35355338
      %v3125 = vmul.f32 %v3101, 0.35355338
      %v3126 = vmul.f32 %v3120, 0.35355338
      %v3127 = vadd.f32 %v3123, %v730
      %v3128 = vadd.f32 %v3124, %v730
      %v3129 = vadd.f32 %v3125, %v730
      %v3130 = vadd.f32 %v3126, %v730
      %v3131 = vsel %vm1196, %v3127, -inf
      %3132 = vmax.xlane.f32.xlu0 %v3131
      %v3133 = vpop.xlane.xlu0 %3132
      %v3134 = vsel %vm1196, %v3128, -inf
      %3135 = vmax.xlane.f32.xlu0 %v3134
      %v3136 = vpop.xlane.xlu0 %3135
      %v3137 = vsel %vm1196, %v3129, -inf
      %3138 = vmax.xlane.f32.xlu0 %v3137
      %v3139 = vpop.xlane.xlu0 %3138
      %v3140 = vsel %vm1196, %v3130, -inf
      %3141 = vmax.xlane.f32.xlu0 %v3140
      %v3142 = vpop.xlane.xlu0 %3141
      %v3143 = vsub.f32 %v3127, %v3133
      %v3144 = vsub.f32 %v3128, %v3136
      %v3145 = vsub.f32 %v3129, %v3139
      %v3146 = vsub.f32 %v3130, %v3142
      %v3147 = vmul.f32 %v3143, 1.442695
      %v3148 = vpow.pop %v3147
      %v3149 = vmul.f32 %v3144, 1.442695
      %v3150 = vpow.pop %v3149
      %v3151 = vmul.f32 %v3145, 1.442695
      %v3152 = vpow.pop %v3151
      %v3153 = vmul.f32 %v3146, 1.442695
      %v3154 = vpow.pop %v3153
      %v3155 = vsel %vm1196, %v3148, 0.0
      %3156 = vadd.xlane.f32.xlu0 %v3155
      %v3157 = vpop.xlane.xlu0 %3156
      %v3158 = vsel %vm1196, %v3150, 0.0
      %3159 = vadd.xlane.f32.xlu0 %v3158
      %v3160 = vpop.xlane.xlu0 %3159
      %v3161 = vsel %vm1196, %v3152, 0.0
      %3162 = vadd.xlane.f32.xlu0 %v3161
      %v3163 = vpop.xlane.xlu0 %3162
      %v3164 = vsel %vm1196, %v3154, 0.0
      %3165 = vadd.xlane.f32.xlu0 %v3164
      %v3166 = vpop.xlane.xlu0 %3165
      %v3167 = vrcp.pop %v3157
      %v3168 = vrcp.pop %v3160
      %v3169 = vrcp.pop %v3163
      %v3170 = vrcp.pop %v3166
      %v3171 = vmul.f32 %v3148, %v3167
      %v3172 = vmul.f32 %v3150, %v3168
      %v3173 = vmul.f32 %v3152, %v3169
      %v3174 = vmul.f32 %v3154, %v3170
      %v3175 = vpack.c.bf16 %v3171, %v3171
      %v3176 = vpack.c.bf16 %v3172, %v3172
      %v3177 = vpack.c.bf16 %v3173, %v3173
      %v3178 = vpack.c.bf16 %v3174, %v3174
      %v3179 = vpack.c.bf16 %v2558, %v2558
      %v3180 = vpack.c.bf16 %v2576, %v2576
      %v3181 = vpack.c.bf16 %v2562, %v2562
      %v3182 = vpack.c.bf16 %v2578, %v2578
      %v3183 = vpack.c.bf16 %v2570, %v2570
      %v3184 = vpack.c.bf16 %v2580, %v2580
      %v3185 = vpack.c.bf16 %v2574, %v2574
      %v3186 = vpack.c.bf16 %v2582, %v2582
      %3187 = vxpose.xlu0.c.b16.start [1/8] %v3179, 128
      %3188 = vxpose.xlu0.c.b16.cont [2/8] 0, 128
      %3189 = vxpose.xlu0.c.b16.cont [3/8] 0, 128
      %3190 = vxpose.xlu0.c.b16.cont [4/8] 0, 128
      %3191 = vxpose.xlu0.c.b16.cont [5/8] 0, 128
      %3192 = vxpose.xlu0.c.b16.cont [6/8] 0, 128
      %3193 = vxpose.xlu0.c.b16.cont [7/8] 0, 128
      %3194 = vxpose.xlu0.c.b16.end [8/8] 0, 128
      %v3195 = vpop.trf.xlu0
      %v3196 = vpop.trf.xlu0
      %v3197 = vpop.trf.xlu0
      %v3198 = vpop.trf.xlu0
      %v3199 = vpop.trf.xlu0
      %v3200 = vpop.trf.xlu0
      %v3201 = vpop.trf.xlu0
      %v3202 = vpop.trf.xlu0
      %3203 = vxpose.xlu0.c.b16.start [1/8] %v3180, 128
      %3204 = vxpose.xlu0.c.b16.cont [2/8] 0, 128
      %3205 = vxpose.xlu0.c.b16.cont [3/8] 0, 128
      %3206 = vxpose.xlu0.c.b16.cont [4/8] 0, 128
      %3207 = vxpose.xlu0.c.b16.cont [5/8] 0, 128
      %3208 = vxpose.xlu0.c.b16.cont [6/8] 0, 128
      %3209 = vxpose.xlu0.c.b16.cont [7/8] 0, 128
      %3210 = vxpose.xlu0.c.b16.end [8/8] 0, 128
      %v3211 = vpop.trf.xlu0
      %v3212 = vpop.trf.xlu0
      %v3213 = vpop.trf.xlu0
      %v3214 = vpop.trf.xlu0
      %v3215 = vpop.trf.xlu0
      %v3216 = vpop.trf.xlu0
      %v3217 = vpop.trf.xlu0
      %v3218 = vpop.trf.xlu0
      %3219 = vxpose.xlu0.c.b16.start [1/8] %v3181, 128
      %3220 = vxpose.xlu0.c.b16.cont [2/8] 0, 128
      %3221 = vxpose.xlu0.c.b16.cont [3/8] 0, 128
      %3222 = vxpose.xlu0.c.b16.cont [4/8] 0, 128
      %3223 = vxpose.xlu0.c.b16.cont [5/8] 0, 128
      %3224 = vxpose.xlu0.c.b16.cont [6/8] 0, 128
      %3225 = vxpose.xlu0.c.b16.cont [7/8] 0, 128
      %3226 = vxpose.xlu0.c.b16.end [8/8] 0, 128
      %v3227 = vpop.trf.xlu0
      %v3228 = vpop.trf.xlu0
      %v3229 = vpop.trf.xlu0
      %v3230 = vpop.trf.xlu0
      %v3231 = vpop.trf.xlu0
      %v3232 = vpop.trf.xlu0
      %v3233 = vpop.trf.xlu0
      %v3234 = vpop.trf.xlu0
      %3235 = vxpose.xlu0.c.b16.start [1/8] %v3182, 128
      %3236 = vxpose.xlu0.c.b16.cont [2/8] 0, 128
      %3237 = vxpose.xlu0.c.b16.cont [3/8] 0, 128
      %3238 = vxpose.xlu0.c.b16.cont [4/8] 0, 128
      %3239 = vxpose.xlu0.c.b16.cont [5/8] 0, 128
      %3240 = vxpose.xlu0.c.b16.cont [6/8] 0, 128
      %3241 = vxpose.xlu0.c.b16.cont [7/8] 0, 128
      %3242 = vxpose.xlu0.c.b16.end [8/8] 0, 128
      %v3243 = vpop.trf.xlu0
      %v3244 = vpop.trf.xlu0
      %v3245 = vpop.trf.xlu0
      %v3246 = vpop.trf.xlu0
      %v3247 = vpop.trf.xlu0
      %v3248 = vpop.trf.xlu0
      %v3249 = vpop.trf.xlu0
      %v3250 = vpop.trf.xlu0
      %3251 = vxpose.xlu0.c.b16.start [1/8] %v3183, 128
      %3252 = vxpose.xlu0.c.b16.cont [2/8] 0, 128
      %3253 = vxpose.xlu0.c.b16.cont [3/8] 0, 128
      %3254 = vxpose.xlu0.c.b16.cont [4/8] 0, 128
      %3255 = vxpose.xlu0.c.b16.cont [5/8] 0, 128
      %3256 = vxpose.xlu0.c.b16.cont [6/8] 0, 128
      %3257 = vxpose.xlu0.c.b16.cont [7/8] 0, 128
      %3258 = vxpose.xlu0.c.b16.end [8/8] 0, 128
      %v3259 = vpop.trf.xlu0
      %v3260 = vpop.trf.xlu0
      %v3261 = vpop.trf.xlu0
      %v3262 = vpop.trf.xlu0
      %v3263 = vpop.trf.xlu0
      %v3264 = vpop.trf.xlu0
      %v3265 = vpop.trf.xlu0
      %v3266 = vpop.trf.xlu0
      %3267 = vxpose.xlu0.c.b16.start [1/8] %v3184, 128
      %3268 = vxpose.xlu0.c.b16.cont [2/8] 0, 128
      %3269 = vxpose.xlu0.c.b16.cont [3/8] 0, 128
      %3270 = vxpose.xlu0.c.b16.cont [4/8] 0, 128
      %3271 = vxpose.xlu0.c.b16.cont [5/8] 0, 128
      %3272 = vxpose.xlu0.c.b16.cont [6/8] 0, 128
      %3273 = vxpose.xlu0.c.b16.cont [7/8] 0, 128
      %3274 = vxpose.xlu0.c.b16.end [8/8] 0, 128
      %v3275 = vpop.trf.xlu0
      %v3276 = vpop.trf.xlu0
      %v3277 = vpop.trf.xlu0
      %v3278 = vpop.trf.xlu0
      %v3279 = vpop.trf.xlu0
      %v3280 = vpop.trf.xlu0
      %v3281 = vpop.trf.xlu0
      %v3282 = vpop.trf.xlu0
      %3283 = vxpose.xlu0.c.b16.start [1/8] %v3185, 128
      %3284 = vxpose.xlu0.c.b16.cont [2/8] 0, 128
      %3285 = vxpose.xlu0.c.b16.cont [3/8] 0, 128
      %3286 = vxpose.xlu0.c.b16.cont [4/8] 0, 128
      %3287 = vxpose.xlu0.c.b16.cont [5/8] 0, 128
      %3288 = vxpose.xlu0.c.b16.cont [6/8] 0, 128
      %3289 = vxpose.xlu0.c.b16.cont [7/8] 0, 128
      %3290 = vxpose.xlu0.c.b16.end [8/8] 0, 128
      %v3291 = vpop.trf.xlu0
      %v3292 = vpop.trf.xlu0
      %v3293 = vpop.trf.xlu0
      %v3294 = vpop.trf.xlu0
      %v3295 = vpop.trf.xlu0
      %v3296 = vpop.trf.xlu0
      %v3297 = vpop.trf.xlu0
      %v3298 = vpop.trf.xlu0
      %3299 = vxpose.xlu0.c.b16.start [1/8] %v3186, 128
      %3300 = vxpose.xlu0.c.b16.cont [2/8] 0, 128
      %3301 = vxpose.xlu0.c.b16.cont [3/8] 0, 128
      %3302 = vxpose.xlu0.c.b16.cont [4/8] 0, 128
      %3303 = vxpose.xlu0.c.b16.cont [5/8] 0, 128
      %3304 = vxpose.xlu0.c.b16.cont [6/8] 0, 128
      %3305 = vxpose.xlu0.c.b16.cont [7/8] 0, 128
      %3306 = vxpose.xlu0.c.b16.end [8/8] 0, 128
      %v3307 = vpop.trf.xlu0
      %v3308 = vpop.trf.xlu0
      %v3309 = vpop.trf.xlu0
      %v3310 = vpop.trf.xlu0
      %v3311 = vpop.trf.xlu0
      %v3312 = vpop.trf.xlu0
      %v3313 = vpop.trf.xlu0
      %v3314 = vpop.trf.xlu0
      %v3315 = vrot.slane %v3259, 4
      %v3316 = vsel %vm748, %v3315, %v3195
      %v3318 = vunpack.c.l.s4 1983009808
      %v3319 = vunpack.c.0.s8 %v3318
      %v3320 = vperm.slane %v3316, %v3319
      %v3321 = vrot.slane %v3291, 4
      %v3322 = vsel %vm748, %v3321, %v3227
      %v3324 = vunpack.c.l.s4 1983009808
      %v3325 = vunpack.c.0.s8 %v3324
      %v3326 = vperm.slane %v3322, %v3325
      %v3327 = vrot.slane %v3326, 4
      %v3328 = vsel %vm748, %v3327, %v3320
      %v3329 = vrot.slane %v3320, 4
      %v3330 = vsel %vm748, %v3326, %v3329
      %v3332 = vunpack.c.l.s4 1934713408
      %v3333 = vunpack.c.0.s8 %v3332
      %v3334 = vperm.slane %v3328, %v3333
      %v3336 = vunpack.c.l.s4 1934713408
      %v3337 = vunpack.c.0.s8 %v3336
      %v3338 = vperm.slane %v3330, %v3337
      %v3339 = vrot.slane %v3334, 4
      %v3340 = vsel %vm748, 0, %v3339
      %v3341 = vrot.slane %v3338, 4
      %v3342 = vsel %vm748, 0, %v3341
      %v3343 = vrot.slane %v3275, 4
      %v3344 = vsel %vm748, %v3343, %v3211
      %v3346 = vunpack.c.l.s4 1983009808
      %v3347 = vunpack.c.0.s8 %v3346
      %v3348 = vperm.slane %v3344, %v3347
      %v3349 = vrot.slane %v3307, 4
      %v3350 = vsel %vm748, %v3349, %v3243
      %v3352 = vunpack.c.l.s4 1983009808
      %v3353 = vunpack.c.0.s8 %v3352
      %v3354 = vperm.slane %v3350, %v3353
      %v3355 = vrot.slane %v3354, 4
      %v3356 = vsel %vm748, %v3355, %v3348
      %v3357 = vrot.slane %v3348, 4
      %v3358 = vsel %vm748, %v3354, %v3357
      %v3360 = vunpack.c.l.s4 1934713408
      %v3361 = vunpack.c.0.s8 %v3360
      %v3362 = vperm.slane %v3356, %v3361
      %v3364 = vunpack.c.l.s4 1934713408
      %v3365 = vunpack.c.0.s8 %v3364
      %v3366 = vperm.slane %v3358, %v3365
      %v3367 = vrot.slane %v3362, 4
      %v3368 = vsel %vm748, 0, %v3367
      %v3369 = vrot.slane %v3366, 4
      %v3370 = vsel %vm748, 0, %v3369
      %v3373 = vpack.i.b16 %v3362, %v3334
      %v3375 = vshrl.u32 %v3334, 16
      %v3376 = vshrl.u32 %v3362, 16
      %v3377 = vpack.i.b16 %v3376, %v3375
      %v3381 = vpack.i.b16 %v3368, %v3340
      %v3383 = vshrl.u32 %v3340, 16
      %v3384 = vshrl.u32 %v3368, 16
      %v3385 = vpack.i.b16 %v3384, %v3383
      %v3389 = vpack.i.b16 %v3366, %v3338
      %v3391 = vshrl.u32 %v3338, 16
      %v3392 = vshrl.u32 %v3366, 16
      %v3393 = vpack.i.b16 %v3392, %v3391
      %v3397 = vpack.i.b16 %v3370, %v3342
      %v3399 = vshrl.u32 %v3342, 16
      %v3400 = vshrl.u32 %v3370, 16
      %v3401 = vpack.i.b16 %v3400, %v3399
      %3403 = vxpose.xlu0.c.b16.start [1/8] %v3373, 128
      %3404 = vxpose.xlu0.c.b16.cont [2/8] 0, 128
      %3405 = vxpose.xlu0.c.b16.cont [3/8] 0, 128
      %3406 = vxpose.xlu0.c.b16.cont [4/8] 0, 128
      %3407 = vxpose.xlu0.c.b16.cont [5/8] 0, 128
      %3408 = vxpose.xlu0.c.b16.cont [6/8] 0, 128
      %3409 = vxpose.xlu0.c.b16.cont [7/8] 0, 128
      %3410 = vxpose.xlu0.c.b16.end [8/8] 0, 128
      %v3411 = vpop.trf.xlu0
      %v3412 = vpop.trf.xlu0
      %v3413 = vpop.trf.xlu0
      %v3414 = vpop.trf.xlu0
      %v3415 = vpop.trf.xlu0
      %v3416 = vpop.trf.xlu0
      %v3417 = vpop.trf.xlu0
      %v3418 = vpop.trf.xlu0
      %3419 = vxpose.xlu0.c.b16.start [1/8] %v3377, 128
      %3420 = vxpose.xlu0.c.b16.cont [2/8] 0, 128
      %3421 = vxpose.xlu0.c.b16.cont [3/8] 0, 128
      %3422 = vxpose.xlu0.c.b16.cont [4/8] 0, 128
      %3423 = vxpose.xlu0.c.b16.cont [5/8] 0, 128
      %3424 = vxpose.xlu0.c.b16.cont [6/8] 0, 128
      %3425 = vxpose.xlu0.c.b16.cont [7/8] 0, 128
      %3426 = vxpose.xlu0.c.b16.end [8/8] 0, 128
      %v3427 = vpop.trf.xlu0
      %v3428 = vpop.trf.xlu0
      %v3429 = vpop.trf.xlu0
      %v3430 = vpop.trf.xlu0
      %v3431 = vpop.trf.xlu0
      %v3432 = vpop.trf.xlu0
      %v3433 = vpop.trf.xlu0
      %v3434 = vpop.trf.xlu0
      %3435 = vxpose.xlu0.c.b16.start [1/8] %v3381, 128
      %3436 = vxpose.xlu0.c.b16.cont [2/8] 0, 128
      %3437 = vxpose.xlu0.c.b16.cont [3/8] 0, 128
      %3438 = vxpose.xlu0.c.b16.cont [4/8] 0, 128
      %3439 = vxpose.xlu0.c.b16.cont [5/8] 0, 128
      %3440 = vxpose.xlu0.c.b16.cont [6/8] 0, 128
      %3441 = vxpose.xlu0.c.b16.cont [7/8] 0, 128
      %3442 = vxpose.xlu0.c.b16.end [8/8] 0, 128
      %v3443 = vpop.trf.xlu0
      %v3444 = vpop.trf.xlu0
      %v3445 = vpop.trf.xlu0
      %v3446 = vpop.trf.xlu0
      %v3447 = vpop.trf.xlu0
      %v3448 = vpop.trf.xlu0
      %v3449 = vpop.trf.xlu0
      %v3450 = vpop.trf.xlu0
      %3451 = vxpose.xlu0.c.b16.start [1/8] %v3385, 128
      %3452 = vxpose.xlu0.c.b16.cont [2/8] 0, 128
      %3453 = vxpose.xlu0.c.b16.cont [3/8] 0, 128
      %3454 = vxpose.xlu0.c.b16.cont [4/8] 0, 128
      %3455 = vxpose.xlu0.c.b16.cont [5/8] 0, 128
      %3456 = vxpose.xlu0.c.b16.cont [6/8] 0, 128
      %3457 = vxpose.xlu0.c.b16.cont [7/8] 0, 128
      %3458 = vxpose.xlu0.c.b16.end [8/8] 0, 128
      %v3459 = vpop.trf.xlu0
      %v3460 = vpop.trf.xlu0
      %v3461 = vpop.trf.xlu0
      %v3462 = vpop.trf.xlu0
      %v3463 = vpop.trf.xlu0
      %v3464 = vpop.trf.xlu0
      %v3465 = vpop.trf.xlu0
      %v3466 = vpop.trf.xlu0
      %3467 = vxpose.xlu0.c.b16.start [1/8] %v3389, 128
      %3468 = vxpose.xlu0.c.b16.cont [2/8] 0, 128
      %3469 = vxpose.xlu0.c.b16.cont [3/8] 0, 128
      %3470 = vxpose.xlu0.c.b16.cont [4/8] 0, 128
      %3471 = vxpose.xlu0.c.b16.cont [5/8] 0, 128
      %3472 = vxpose.xlu0.c.b16.cont [6/8] 0, 128
      %3473 = vxpose.xlu0.c.b16.cont [7/8] 0, 128
      %3474 = vxpose.xlu0.c.b16.end [8/8] 0, 128
      %v3475 = vpop.trf.xlu0
      %v3476 = vpop.trf.xlu0
      %v3477 = vpop.trf.xlu0
      %v3478 = vpop.trf.xlu0
      %v3479 = vpop.trf.xlu0
      %v3480 = vpop.trf.xlu0
      %v3481 = vpop.trf.xlu0
      %v3482 = vpop.trf.xlu0
      %3483 = vxpose.xlu0.c.b16.start [1/8] %v3393, 128
      %3484 = vxpose.xlu0.c.b16.cont [2/8] 0, 128
      %3485 = vxpose.xlu0.c.b16.cont [3/8] 0, 128
      %3486 = vxpose.xlu0.c.b16.cont [4/8] 0, 128
      %3487 = vxpose.xlu0.c.b16.cont [5/8] 0, 128
      %3488 = vxpose.xlu0.c.b16.cont [6/8] 0, 128
      %3489 = vxpose.xlu0.c.b16.cont [7/8] 0, 128
      %3490 = vxpose.xlu0.c.b16.end [8/8] 0, 128
      %v3491 = vpop.trf.xlu0
      %v3492 = vpop.trf.xlu0
      %v3493 = vpop.trf.xlu0
      %v3494 = vpop.trf.xlu0
      %v3495 = vpop.trf.xlu0
      %v3496 = vpop.trf.xlu0
      %v3497 = vpop.trf.xlu0
      %v3498 = vpop.trf.xlu0
      %3499 = vxpose.xlu0.c.b16.start [1/8] %v3397, 128
      %3500 = vxpose.xlu0.c.b16.cont [2/8] 0, 128
      %3501 = vxpose.xlu0.c.b16.cont [3/8] 0, 128
      %3502 = vxpose.xlu0.c.b16.cont [4/8] 0, 128
      %3503 = vxpose.xlu0.c.b16.cont [5/8] 0, 128
      %3504 = vxpose.xlu0.c.b16.cont [6/8] 0, 128
      %3505 = vxpose.xlu0.c.b16.cont [7/8] 0, 128
      %3506 = vxpose.xlu0.c.b16.end [8/8] 0, 128
      %v3507 = vpop.trf.xlu0
      %v3508 = vpop.trf.xlu0
      %v3509 = vpop.trf.xlu0
      %v3510 = vpop.trf.xlu0
      %v3511 = vpop.trf.xlu0
      %v3512 = vpop.trf.xlu0
      %v3513 = vpop.trf.xlu0
      %v3514 = vpop.trf.xlu0
      %3515 = vxpose.xlu0.c.b16.start [1/8] %v3401, 128
      %3516 = vxpose.xlu0.c.b16.cont [2/8] 0, 128
      %3517 = vxpose.xlu0.c.b16.cont [3/8] 0, 128
      %3518 = vxpose.xlu0.c.b16.cont [4/8] 0, 128
      %3519 = vxpose.xlu0.c.b16.cont [5/8] 0, 128
      %3520 = vxpose.xlu0.c.b16.cont [6/8] 0, 128
      %3521 = vxpose.xlu0.c.b16.cont [7/8] 0, 128
      %3522 = vxpose.xlu0.c.b16.end [8/8] 0, 128
      %v3523 = vpop.trf.xlu0
      %v3524 = vpop.trf.xlu0
      %v3525 = vpop.trf.xlu0
      %v3526 = vpop.trf.xlu0
      %v3527 = vpop.trf.xlu0
      %v3528 = vpop.trf.xlu0
      %v3529 = vpop.trf.xlu0
      %v3530 = vpop.trf.xlu0
      %v3531 = vrot.slane %v3475, 4
      %v3532 = vsel %vm748, %v3531, %v3411
      %v3534 = vunpack.c.l.s4 1983009808
      %v3535 = vunpack.c.0.s8 %v3534
      %v3536 = vperm.slane %v3532, %v3535
      %v3537 = vrot.slane %v3507, 4
      %v3538 = vsel %vm748, %v3537, %v3443
      %v3540 = vunpack.c.l.s4 1983009808
      %v3541 = vunpack.c.0.s8 %v3540
      %v3542 = vperm.slane %v3538, %v3541
      %v3543 = vrot.slane %v3542, 4
      %v3544 = vsel %vm748, %v3543, %v3536
      %v3546 = vunpack.c.l.s4 1934713408
      %v3547 = vunpack.c.0.s8 %v3546
      %v3548 = vperm.slane %v3544, %v3547
      %v3549 = vrot.slane %v3548, 4
      %v3550 = vsel %vm748, 0, %v3549
      %v3551 = vrot.slane %v3491, 4
      %v3552 = vsel %vm748, %v3551, %v3427
      %v3554 = vunpack.c.l.s4 1983009808
      %v3555 = vunpack.c.0.s8 %v3554
      %v3556 = vperm.slane %v3552, %v3555
      %v3557 = vrot.slane %v3523, 4
      %v3558 = vsel %vm748, %v3557, %v3459
      %v3560 = vunpack.c.l.s4 1983009808
      %v3561 = vunpack.c.0.s8 %v3560
      %v3562 = vperm.slane %v3558, %v3561
      %v3563 = vrot.slane %v3562, 4
      %v3564 = vsel %vm748, %v3563, %v3556
      %v3566 = vunpack.c.l.s4 1934713408
      %v3567 = vunpack.c.0.s8 %v3566
      %v3568 = vperm.slane %v3564, %v3567
      %v3569 = vrot.slane %v3568, 4
      %v3570 = vsel %vm748, 0, %v3569
      %v3573 = vpack.i.b16 %v3568, %v3548
      %v3574 = vshrl.u32 %v3548, 16
      %v3575 = vshrl.u32 %v3568, 16
      %v3576 = vpack.i.b16 %v3575, %v3574
      %v3579 = vpack.i.b16 %v3570, %v3550
      %v3580 = vshrl.u32 %v3550, 16
      %v3581 = vshrl.u32 %v3570, 16
      %v3582 = vpack.i.b16 %v3581, %v3580
      %v3584 = vsel %vm1196, %v3573, 0
      %v3587 = vsel %vm1196, %v3175, 0
      %3589 = vmatpush.bf16.xpose.msra.mxu0 0
      %3590 = vmatpush.bf16.xpose.msra.mxu0 0
      %3591 = vmatpush.bf16.xpose.msra.mxu0 0
      %3592 = vmatpush.bf16.xpose.msra.mxu0 0
      %3593 = vmatpush.bf16.xpose.msra.mxu0 0
      %3594 = vmatpush.bf16.xpose.msra.mxu0 0
      %3595 = vmatpush.bf16.xpose.msra.mxu0 0
      %3596 = vmatpush.bf16.xpose.msra.mxu0 %v3587
      %3597 = vmatmul.bf16.gmra.mxu0 %v3584
      %v3598 = vpop.f32.mrf.mxu0
      %v3599 = vadd.f32 0.0, %v3598
      %v3600 = vpop.f32.mrf.mxu0
      %3601 = vdwg.mxu0
      %v3603 = vsel %vm1196, %v3576, 0
      %v3606 = vsel %vm1196, %v3176, 0
      %3608 = vmatpush.bf16.xpose.msra.mxu0 0
      %3609 = vmatpush.bf16.xpose.msra.mxu0 0
      %3610 = vmatpush.bf16.xpose.msra.mxu0 0
      %3611 = vmatpush.bf16.xpose.msra.mxu0 0
      %3612 = vmatpush.bf16.xpose.msra.mxu0 0
      %3613 = vmatpush.bf16.xpose.msra.mxu0 0
      %3614 = vmatpush.bf16.xpose.msra.mxu0 0
      %3615 = vmatpush.bf16.xpose.msra.mxu0 %v3606
      %3616 = vmatmul.bf16.gmra.mxu0 %v3603
      %v3617 = vpop.f32.mrf.mxu0
      %v3618 = vadd.f32 0.0, %v3617
      %v3619 = vpop.f32.mrf.mxu0
      %3620 = vdwg.mxu0
      %v3622 = vsel %vm1196, %v3579, 0
      %v3625 = vsel %vm1196, %v3177, 0
      %3627 = vmatpush.bf16.xpose.msra.mxu0 0
      %3628 = vmatpush.bf16.xpose.msra.mxu0 0
      %3629 = vmatpush.bf16.xpose.msra.mxu0 0
      %3630 = vmatpush.bf16.xpose.msra.mxu0 0
      %3631 = vmatpush.bf16.xpose.msra.mxu0 0
      %3632 = vmatpush.bf16.xpose.msra.mxu0 0
      %3633 = vmatpush.bf16.xpose.msra.mxu0 0
      %3634 = vmatpush.bf16.xpose.msra.mxu0 %v3625
      %3635 = vmatmul.bf16.gmra.mxu0 %v3622
      %v3636 = vpop.f32.mrf.mxu0
      %v3637 = vadd.f32 0.0, %v3636
      %v3638 = vpop.f32.mrf.mxu0
      %3639 = vdwg.mxu0
      %v3641 = vsel %vm1196, %v3582, 0
      %v3644 = vsel %vm1196, %v3178, 0
      %3646 = vmatpush.bf16.xpose.msra.mxu0 0
      %3647 = vmatpush.bf16.xpose.msra.mxu0 0
      %3648 = vmatpush.bf16.xpose.msra.mxu0 0
      %3649 = vmatpush.bf16.xpose.msra.mxu0 0
      %3650 = vmatpush.bf16.xpose.msra.mxu0 0
      %3651 = vmatpush.bf16.xpose.msra.mxu0 0
      %3652 = vmatpush.bf16.xpose.msra.mxu0 0
      %3653 = vmatpush.bf16.xpose.msra.mxu0 %v3644
      %3654 = vmatmul.bf16.gmra.mxu0 %v3641
      %v3655 = vpop.f32.mrf.mxu0
      %v3656 = vadd.f32 0.0, %v3655
      %v3657 = vpop.f32.mrf.mxu0
      %3658 = vdwg.mxu0
      %3659 = vxpose.xlu0.b32.start [1/16] %v3599, 128
      %3660 = vxpose.xlu0.b32.cont [2/16] 0.0, 128
      %3661 = vxpose.xlu0.b32.cont [3/16] 0.0, 128
      %3662 = vxpose.xlu0.b32.cont [4/16] 0.0, 128
      %3663 = vxpose.xlu0.b32.cont [5/16] 0.0, 128
      %3664 = vxpose.xlu0.b32.cont [6/16] 0.0, 128
      %3665 = vxpose.xlu0.b32.cont [7/16] 0.0, 128
      %3666 = vxpose.xlu0.b32.cont [8/16] 0.0, 128
      %3667 = vxpose.xlu0.b32.cont [9/16] 0.0, 128
      %3668 = vxpose.xlu0.b32.cont [10/16] 0.0, 128
      %3669 = vxpose.xlu0.b32.cont [11/16] 0.0, 128
      %3670 = vxpose.xlu0.b32.cont [12/16] 0.0, 128
      %3671 = vxpose.xlu0.b32.cont [13/16] 0.0, 128
      %3672 = vxpose.xlu0.b32.cont [14/16] 0.0, 128
      %3673 = vxpose.xlu0.b32.cont [15/16] 0.0, 128
      %3674 = vxpose.xlu0.b32.end [16/16] 0.0, 128
      %v3675 = vpop.trf.xlu0
      %v3676 = vpop.trf.xlu0
      %v3677 = vpop.trf.xlu0
      %v3678 = vpop.trf.xlu0
      %v3679 = vpop.trf.xlu0
      %v3680 = vpop.trf.xlu0
      %v3681 = vpop.trf.xlu0
      %v3682 = vpop.trf.xlu0
      %v3683 = vpop.trf.xlu0
      %v3684 = vpop.trf.xlu0
      %v3685 = vpop.trf.xlu0
      %v3686 = vpop.trf.xlu0
      %v3687 = vpop.trf.xlu0
      %v3688 = vpop.trf.xlu0
      %v3689 = vpop.trf.xlu0
      %v3690 = vpop.trf.xlu0
      %3691 = vxpose.xlu0.b32.start [1/16] %v3618, 128
      %3692 = vxpose.xlu0.b32.cont [2/16] 0.0, 128
      %3693 = vxpose.xlu0.b32.cont [3/16] 0.0, 128
      %3694 = vxpose.xlu0.b32.cont [4/16] 0.0, 128
      %3695 = vxpose.xlu0.b32.cont [5/16] 0.0, 128
      %3696 = vxpose.xlu0.b32.cont [6/16] 0.0, 128
      %3697 = vxpose.xlu0.b32.cont [7/16] 0.0, 128
      %3698 = vxpose.xlu0.b32.cont [8/16] 0.0, 128
      %3699 = vxpose.xlu0.b32.cont [9/16] 0.0, 128
      %3700 = vxpose.xlu0.b32.cont [10/16] 0.0, 128
      %3701 = vxpose.xlu0.b32.cont [11/16] 0.0, 128
      %3702 = vxpose.xlu0.b32.cont [12/16] 0.0, 128
      %3703 = vxpose.xlu0.b32.cont [13/16] 0.0, 128
      %3704 = vxpose.xlu0.b32.cont [14/16] 0.0, 128
      %3705 = vxpose.xlu0.b32.cont [15/16] 0.0, 128
      %3706 = vxpose.xlu0.b32.end [16/16] 0.0, 128
      %v3707 = vpop.trf.xlu0
      %v3708 = vpop.trf.xlu0
      %v3709 = vpop.trf.xlu0
      %v3710 = vpop.trf.xlu0
      %v3711 = vpop.trf.xlu0
      %v3712 = vpop.trf.xlu0
      %v3713 = vpop.trf.xlu0
      %v3714 = vpop.trf.xlu0
      %v3715 = vpop.trf.xlu0
      %v3716 = vpop.trf.xlu0
      %v3717 = vpop.trf.xlu0
      %v3718 = vpop.trf.xlu0
      %v3719 = vpop.trf.xlu0
      %v3720 = vpop.trf.xlu0
      %v3721 = vpop.trf.xlu0
      %v3722 = vpop.trf.xlu0
      %3723 = vxpose.xlu0.b32.start [1/16] %v3637, 128
      %3724 = vxpose.xlu0.b32.cont [2/16] 0.0, 128
      %3725 = vxpose.xlu0.b32.cont [3/16] 0.0, 128
      %3726 = vxpose.xlu0.b32.cont [4/16] 0.0, 128
      %3727 = vxpose.xlu0.b32.cont [5/16] 0.0, 128
      %3728 = vxpose.xlu0.b32.cont [6/16] 0.0, 128
      %3729 = vxpose.xlu0.b32.cont [7/16] 0.0, 128
      %3730 = vxpose.xlu0.b32.cont [8/16] 0.0, 128
      %3731 = vxpose.xlu0.b32.cont [9/16] 0.0, 128
      %3732 = vxpose.xlu0.b32.cont [10/16] 0.0, 128
      %3733 = vxpose.xlu0.b32.cont [11/16] 0.0, 128
      %3734 = vxpose.xlu0.b32.cont [12/16] 0.0, 128
      %3735 = vxpose.xlu0.b32.cont [13/16] 0.0, 128
      %3736 = vxpose.xlu0.b32.cont [14/16] 0.0, 128
      %3737 = vxpose.xlu0.b32.cont [15/16] 0.0, 128
      %3738 = vxpose.xlu0.b32.end [16/16] 0.0, 128
      %v3739 = vpop.trf.xlu0
      %v3740 = vpop.trf.xlu0
      %v3741 = vpop.trf.xlu0
      %v3742 = vpop.trf.xlu0
      %v3743 = vpop.trf.xlu0
      %v3744 = vpop.trf.xlu0
      %v3745 = vpop.trf.xlu0
      %v3746 = vpop.trf.xlu0
      %v3747 = vpop.trf.xlu0
      %v3748 = vpop.trf.xlu0
      %v3749 = vpop.trf.xlu0
      %v3750 = vpop.trf.xlu0
      %v3751 = vpop.trf.xlu0
      %v3752 = vpop.trf.xlu0
      %v3753 = vpop.trf.xlu0
      %v3754 = vpop.trf.xlu0
      %3755 = vxpose.xlu0.b32.start [1/16] %v3656, 128
      %3756 = vxpose.xlu0.b32.cont [2/16] 0.0, 128
      %3757 = vxpose.xlu0.b32.cont [3/16] 0.0, 128
      %3758 = vxpose.xlu0.b32.cont [4/16] 0.0, 128
      %3759 = vxpose.xlu0.b32.cont [5/16] 0.0, 128
      %3760 = vxpose.xlu0.b32.cont [6/16] 0.0, 128
      %3761 = vxpose.xlu0.b32.cont [7/16] 0.0, 128
      %3762 = vxpose.xlu0.b32.cont [8/16] 0.0, 128
      %3763 = vxpose.xlu0.b32.cont [9/16] 0.0, 128
      %3764 = vxpose.xlu0.b32.cont [10/16] 0.0, 128
      %3765 = vxpose.xlu0.b32.cont [11/16] 0.0, 128
      %3766 = vxpose.xlu0.b32.cont [12/16] 0.0, 128
      %3767 = vxpose.xlu0.b32.cont [13/16] 0.0, 128
      %3768 = vxpose.xlu0.b32.cont [14/16] 0.0, 128
      %3769 = vxpose.xlu0.b32.cont [15/16] 0.0, 128
      %3770 = vxpose.xlu0.b32.end [16/16] 0.0, 128
      %v3771 = vpop.trf.xlu0
      %v3772 = vpop.trf.xlu0
      %v3773 = vpop.trf.xlu0
      %v3774 = vpop.trf.xlu0
      %v3775 = vpop.trf.xlu0
      %v3776 = vpop.trf.xlu0
      %v3777 = vpop.trf.xlu0
      %v3778 = vpop.trf.xlu0
      %v3779 = vpop.trf.xlu0
      %v3780 = vpop.trf.xlu0
      %v3781 = vpop.trf.xlu0
      %v3782 = vpop.trf.xlu0
      %v3783 = vpop.trf.xlu0
      %v3784 = vpop.trf.xlu0
      %v3785 = vpop.trf.xlu0
      %v3786 = vpop.trf.xlu0
      %v3787 = vrot.slane %v3739, 4
      %v3788 = vsel %vm487, %v3787, %v3675
      %v3789 = vrot.slane %v3675, 4
      %v3790 = vsel %vm487, %v3739, %v3789
      %v3792 = vunpack.c.l.s4 1983009808
      %v3793 = vunpack.c.0.s8 %v3792
      %v3794 = vperm.slane %v3788, %v3793
      %v3796 = vunpack.c.l.s4 1983009808
      %v3797 = vunpack.c.0.s8 %v3796
      %v3798 = vperm.slane %v3790, %v3797
      %v3799 = vrot.slane %v3771, 4
      %v3800 = vsel %vm487, %v3799, %v3707
      %v3801 = vrot.slane %v3707, 4
      %v3802 = vsel %vm487, %v3771, %v3801
      %v3804 = vunpack.c.l.s4 1983009808
      %v3805 = vunpack.c.0.s8 %v3804
      %v3806 = vperm.slane %v3800, %v3805
      %v3808 = vunpack.c.l.s4 1983009808
      %v3809 = vunpack.c.0.s8 %v3808
      %v3810 = vperm.slane %v3802, %v3809
      %v3811 = vrot.slane %v3806, 4
      %v3812 = vsel %vm487, %v3811, %v3794
      %v3813 = vrot.slane %v3794, 4
      %v3814 = vsel %vm487, %v3806, %v3813
      %v3816 = vunpack.c.l.s4 1934713408
      %v3817 = vunpack.c.0.s8 %v3816
      %v3818 = vperm.slane %v3812, %v3817
      %v3820 = vunpack.c.l.s4 1934713408
      %v3821 = vunpack.c.0.s8 %v3820
      %v3822 = vperm.slane %v3814, %v3821
      %v3823 = vrot.slane %v3810, 4
      %v3824 = vsel %vm487, %v3823, %v3798
      %v3825 = vrot.slane %v3798, 4
      %v3826 = vsel %vm487, %v3810, %v3825
      %v3828 = vunpack.c.l.s4 1934713408
      %v3829 = vunpack.c.0.s8 %v3828
      %v3830 = vperm.slane %v3824, %v3829
      %v3832 = vunpack.c.l.s4 1934713408
      %v3833 = vunpack.c.0.s8 %v3832
      %v3834 = vperm.slane %v3826, %v3833
      %v3835 = vrot.slane %v3818, 4
      %v3836 = vsel %vm487, 0.0, %v3835
      %v3837 = vrot.slane %v3822, 4
      %v3838 = vsel %vm487, 0.0, %v3837
      %v3839 = vrot.slane %v3830, 4
      %v3840 = vsel %vm487, 0.0, %v3839
      %v3841 = vrot.slane %v3834, 4
      %v3842 = vsel %vm487, 0.0, %v3841
      %v3843 = vsel %vm487, %v3837, %v3818
      %v3845 = vunpack.c.l.s4 1983009808
      %v3846 = vunpack.c.0.s8 %v3845
      %v3847 = vperm.slane %v3843, %v3846
      %v3848 = vrot.slane %v3838, 4
      %v3849 = vsel %vm487, %v3848, %v3836
      %v3851 = vunpack.c.l.s4 1983009808
      %v3852 = vunpack.c.0.s8 %v3851
      %v3853 = vperm.slane %v3849, %v3852
      %v3854 = vsel %vm487, %v3841, %v3830
      %v3856 = vunpack.c.l.s4 1983009808
      %v3857 = vunpack.c.0.s8 %v3856
      %v3858 = vperm.slane %v3854, %v3857
      %v3859 = vrot.slane %v3842, 4
      %v3860 = vsel %vm487, %v3859, %v3840
      %v3862 = vunpack.c.l.s4 1983009808
      %v3863 = vunpack.c.0.s8 %v3862
      %v3864 = vperm.slane %v3860, %v3863
      %v3865 = vrot.slane %v3853, 4
      %v3866 = vsel %vm487, %v3865, %v3847
      %v3867 = vrot.slane %v3847, 4
      %v3868 = vsel %vm487, %v3853, %v3867
      %v3870 = vunpack.c.l.s4 1934713408
      %v3871 = vunpack.c.0.s8 %v3870
      %v3872 = vperm.slane %v3866, %v3871
      %v3874 = vunpack.c.l.s4 1934713408
      %v3875 = vunpack.c.0.s8 %v3874
      %v3876 = vperm.slane %v3868, %v3875
      %v3877 = vrot.slane %v3864, 4
      %v3878 = vsel %vm487, %v3877, %v3858
      %v3879 = vrot.slane %v3858, 4
      %v3880 = vsel %vm487, %v3864, %v3879
      %v3882 = vunpack.c.l.s4 1934713408
      %v3883 = vunpack.c.0.s8 %v3882
      %v3884 = vperm.slane %v3878, %v3883
      %v3886 = vunpack.c.l.s4 1934713408
      %v3887 = vunpack.c.0.s8 %v3886
      %v3888 = vperm.slane %v3880, %v3887
      %v3889 = vrot.slane %v3884, 4
      %v3890 = vsel %vm487, %v3889, %v3872
      %v3891 = vrot.slane %v3872, 4
      %v3892 = vsel %vm487, %v3884, %v3891
      %v3893 = vrot.slane %v3888, 4
      %v3894 = vsel %vm487, %v3893, %v3876
      %v3895 = vrot.slane %v3876, 4
      %v3896 = vsel %vm487, %v3888, %v3895
      %3898 = vrot.lane.b32.xlu0 %v3892, 8
      %v3899 = vpop.permute.xlu0 %3898
      %3902 = vrot.lane.b32.xlu0 %v3894, 16
      %v3903 = vpop.permute.xlu0 %3902
      %3906 = vrot.lane.b32.xlu0 %v3896, 24
      %v3907 = vpop.permute.xlu0 %3906
      %v3909 = vsel %vm1196, %v3890, %v3899
      %v3910 = vsel %vm2061, %v3909, %v3903
      %v3911 = vsel %vm2063, %v3910, %v3907
      %v3912 = vpack.c.bf16 %v3911, %v3911
      %v3913 = vperm.slane %v2272, 0
      %v3918 = vunpack.c.l.b16 %v2241
      %v3919 = vunpack.c.l.b16 %v2242
      %v3920 = vunpack.c.l.b16 %v2243
      %v3921 = vunpack.c.l.b16 %v2244
      %v3922 = vpack.c.b16 %v3919, %v3918
      %v3923 = vpack.c.b16 %v3921, %v3920
      %v3927 = vsel %vm412, %v3912, 0
      %3929 = vmatpush.bf16.msra.mxu0 0
      %3930 = vmatpush.bf16.msra.mxu0 0
      %3931 = vmatpush.bf16.msra.mxu0 0
      %3932 = vmatpush.bf16.msra.mxu0 0
      %3933 = vmatpush.bf16.msra.mxu0 0
      %3934 = vmatpush.bf16.msra.mxu0 0
      %3935 = vmatpush.bf16.msra.mxu0 %v3923
      %3936 = vmatpush.bf16.msra.mxu0 %v3922
      %3937 = vmatmul.bf16.gmra.mxu0 %v3927
      %v3938 = vpop.f32.mrf.mxu0
      %v3939 = vadd.f32 %v3913, %v3938
      %v3940 = vpop.f32.mrf.mxu0
      %3941 = vdwg.mxu0
      %v3942 = vadd.f32 %v2224, %v3939
      %v3943 = vsel %vm412, %v3942, 0.0
      %3944 = vadd.xlane.f32.xlu0 %v3943
      %v3945 = vpop.xlane.xlu0 %3944
      %v3946 = vmul.f32 %v3945, %v422
      %v3947 = vsub.f32 %v3942, %v3946
      %v3948 = vmul.f32 %v3947, %v3947
      %v3949 = vsel %vm412, %v3948, 0.0
      %3950 = vadd.xlane.f32.xlu0 %v3949
      %v3951 = vpop.xlane.xlu0 %3950
      %v3952 = vmul.f32 %v3951, %v422
      %v3953 = vadd.f32 %v3952, 1e-06
      %v3954 = vrsqrt.pop %v3953
      %v3955 = vmul.f32 %v3954, %v3953
      %v3956 = vmul.f32 %v3955, %v3954
      %v3957 = vmul.f32 0.5, %v3956
      %v3958 = vsub.f32 1.5, %v3957
      %v3959 = vmul.f32 %v3954, %v3958
      %vm3960 = vweird.f32 %v3953
      %vm3961 = vweird.f32 %v3954
      %vm3962 = vmor %vm3960, %vm3961
      %v3963 = vsel %vm3962, %v3954, %v3959
      %v3964 = vmul.f32 %v3947, %v3963
      %v3965 = vperm.slane %v2273, 0
      %v3966 = vmul.f32 %v3964, %v3965
      %v3967 = vperm.slane %v2274, 0
      %v3968 = vadd.f32 %v3966, %v3967
      %v3969 = vpack.c.bf16 %v3968, %v3968
      %v3970 = vperm.slane %v2275, 0
      %v3975 = vunpack.c.l.b16 %v2246
      %v3976 = vunpack.c.l.b16 %v2247
      %v3977 = vunpack.c.l.b16 %v2248
      %v3978 = vunpack.c.l.b16 %v2249
      %v3979 = vpack.c.b16 %v3976, %v3975
      %v3980 = vpack.c.b16 %v3978, %v3977
      %v3984 = vsel %vm412, %v3969, 0
      %3986 = vmatpush.bf16.msra.mxu0 0
      %3987 = vmatpush.bf16.msra.mxu0 0
      %3988 = vmatpush.bf16.msra.mxu0 0
      %3989 = vmatpush.bf16.msra.mxu0 0
      %3990 = vmatpush.bf16.msra.mxu0 0
      %3991 = vmatpush.bf16.msra.mxu0 0
      %3992 = vmatpush.bf16.msra.mxu0 %v3980
      %3993 = vmatpush.bf16.msra.mxu0 %v3979
      %3994 = vmatmul.bf16.gmra.mxu0 %v3984
      %v3995 = vpop.f32.mrf.mxu0
      %v3996 = vadd.f32 %v3970, %v3995
      %v3997 = vpop.f32.mrf.mxu0
      %3998 = vdwg.mxu0
      %v3999 = vmul.f32 %v3996, 0.5
      %v4000 = vmul.f32 %v3996, 0.044715
      %v4001 = vmul.f32 %v4000, %v3996
      %v4002 = vmul.f32 %v4001, %v3996
      %v4003 = vadd.f32 %v3996, %v4002
      %v4004 = vmul.f32 %v4003, 0.7978846
      %v4005 = vtanh.pop %v4004
      %v4006 = vadd.f32 %v4005, 1.0
      %v4007 = vmul.f32 %v3999, %v4006
      %v4008 = vpack.c.bf16 %v4007, %v4007
      %v4009 = vperm.slane %v2276, 0
      %v4026 = vunpack.c.l.b16 %v2251
      %v4027 = vunpack.c.l.b16 %v2252
      %v4028 = vunpack.c.l.b16 %v2253
      %v4029 = vunpack.c.l.b16 %v2254
      %v4030 = vunpack.c.l.b16 %v2255
      %v4031 = vunpack.c.l.b16 %v2256
      %v4032 = vunpack.c.l.b16 %v2257
      %v4033 = vunpack.c.l.b16 %v2258
      %v4034 = vunpack.c.l.b16 %v2259
      %v4035 = vunpack.c.l.b16 %v2260
      %v4036 = vunpack.c.l.b16 %v2261
      %v4037 = vunpack.c.l.b16 %v2262
      %v4038 = vunpack.c.l.b16 %v2263
      %v4039 = vunpack.c.l.b16 %v2264
      %v4040 = vunpack.c.l.b16 %v2265
      %v4041 = vunpack.c.l.b16 %v2266
      %v4042 = vpack.c.b16 %v4027, %v4026
      %v4043 = vpack.c.b16 %v4029, %v4028
      %v4044 = vpack.c.b16 %v4031, %v4030
      %v4045 = vpack.c.b16 %v4033, %v4032
      %v4046 = vpack.c.b16 %v4035, %v4034
      %v4047 = vpack.c.b16 %v4037, %v4036
      %v4048 = vpack.c.b16 %v4039, %v4038
      %v4049 = vpack.c.b16 %v4041, %v4040
      %4058 = vmatpush.bf16.msra.mxu0 %v4049
      %4059 = vmatpush.bf16.msra.mxu0 %v4048
      %4060 = vmatpush.bf16.msra.mxu0 %v4047
      %4061 = vmatpush.bf16.msra.mxu0 %v4046
      %4062 = vmatpush.bf16.msra.mxu0 %v4045
      %4063 = vmatpush.bf16.msra.mxu0 %v4044
      %4064 = vmatpush.bf16.msra.mxu0 %v4043
      %4065 = vmatpush.bf16.msra.mxu0 %v4042
      %4066 = vmatmul.bf16.gmra.mxu0 %v4008
      %v4067 = vpop.f32.mrf.mxu0
      %v4068 = vadd.f32 %v4009, %v4067
      %v4069 = vpop.f32.mrf.mxu0
      %4070 = vdwg.mxu0
      %v4071 = vadd.f32 %v3942, %v4068
      %v4072 = vld [vmem:[%s6 + $0x14] sm:$0x1]
      %v4073 = vld [vmem:[%s6 + $0x15] sm:$0x1]
      %v4074 = vsel %vm412, %v4071, 0.0
      %4075 = vadd.xlane.f32.xlu0 %v4074
      %v4076 = vpop.xlane.xlu0 %4075
      %v4077 = vmul.f32 %v4076, %v422
      %v4078 = vsub.f32 %v4071, %v4077
      %v4079 = vmul.f32 %v4078, %v4078
      %v4080 = vsel %vm412, %v4079, 0.0
      %4081 = vadd.xlane.f32.xlu0 %v4080
      %v4082 = vpop.xlane.xlu0 %4081
      %v4083 = vmul.f32 %v4082, %v422
      %v4084 = vadd.f32 %v4083, 1e-06
      %v4085 = vrsqrt.pop %v4084
      %v4086 = vmul.f32 %v4085, %v4084
      %v4087 = vmul.f32 %v4086, %v4085
      %v4088 = vmul.f32 0.5, %v4087
      %v4089 = vsub.f32 1.5, %v4088
      %v4090 = vmul.f32 %v4085, %v4089
      %vm4091 = vweird.f32 %v4084
      %vm4092 = vweird.f32 %v4085
      %vm4093 = vmor %vm4091, %vm4092
      %v4094 = vsel %vm4093, %v4085, %v4090
      %v4095 = vmul.f32 %v4078, %v4094
      %v4096 = vperm.slane %v4072, 0
      %v4097 = vmul.f32 %v4095, %v4096
      %v4098 = vperm.slane %v4073, 0
      %v4099 = vadd.f32 %v4097, %v4098
      %v4100 = vld [vmem:[%s6 + $0x16] sm:$0x1]
      %v4101 = vpack.c.bf16 %v4099, %v4099
      %v4102 = vld [vmem:[%s7] sm:$0xf]
      %v4103 = vld [vmem:[%s7 + $0x4] sm:$0xf]
      %v4104 = vld [vmem:[%s7 + $0x8] sm:$0xf]
      %v4105 = vld [vmem:[%s7 + $0xc] sm:$0xf]
      %v4106 = vperm.slane %v4100, 0
      %v4111 = vunpack.c.l.b16 %v4102
      %v4112 = vunpack.c.l.b16 %v4103
      %v4113 = vunpack.c.l.b16 %v4104
      %v4114 = vunpack.c.l.b16 %v4105
      %v4115 = vpack.c.b16 %v4112, %v4111
      %v4116 = vpack.c.b16 %v4114, %v4113
      %v4120 = vsel %vm412, %v4101, 0
      %4122 = vmatpush.bf16.msra.mxu0 0
      %4123 = vmatpush.bf16.msra.mxu0 0
      %4124 = vmatpush.bf16.msra.mxu0 0
      %4125 = vmatpush.bf16.msra.mxu0 0
      %4126 = vmatpush.bf16.msra.mxu0 0
      %4127 = vmatpush.bf16.msra.mxu0 0
      %4128 = vmatpush.bf16.msra.mxu0 %v4116
      %4129 = vmatpush.bf16.msra.mxu0 %v4115
      %4130 = vmatmul.bf16.gmra.mxu0 %v4120
      %v4131 = vpop.f32.mrf.mxu0
      %v4132 = vadd.f32 %v4106, %v4131
      %v4133 = vpop.f32.mrf.mxu0
      %4134 = vdwg.mxu0
      %4135 = vst [vmem:[%s317] sm:$0xff] %v4132
      %p4136 = scmp.lt.s32.totalorder %s19, 1
      %s4137 = scalar_select %p4136, %s19, 1
      %s4138 = smul.addr %s4137, 8
      %s4139 = scalar_lea.vmem %s8, %s4138
      // Predicated region
      $region53: #{_lambda_.2} parent=51 // pred_check
        %p4140 = pneg %p215
      $region54: #{_lambda_.2} parent=51 // pred_check_branch
        %4142 = sbr.rel (%p4140) target = $region56
      $region55: #{_lambda_.2} parent=51 // pred_region
        _
      $region56: #{_lambda_.2} parent=51 // pred_fallthru
        _
    $region52: #{_lambda_.2} parent=5 // pred_fallthru
      _
    %p4143 = scmp.le.s32.totalorder 2, %s14
    // Predicated region
    $region57: #{_lambda_.2} parent=5 // pred_check
      %p4144 = pneg %p4143
    $region58: #{_lambda_.2} parent=5 // pred_check_branch
      %4146 = sbr.rel (%p4144) target = $region60
    $region59: #{_lambda_.2} parent=5 // pred_region
      %s4147 = ssub.s32 %s14, 2
      // Predicated region
      $region61: #{_lambda_.2} parent=59 // pred_check
        %p4148 = pneg %p221
      $region62: #{_lambda_.2} parent=59 // pred_check_branch
        %4150 = sbr.rel (%p4148) target = $region64
      $region63: #{_lambda_.2} parent=59 // pred_region
        %p4151 = scmp.lt.s32.totalorder %s20, 1
        %s4152 = scalar_select %p4151, %s20, 1
        %s4153 = smul.addr %s4152, 8
        %s4154 = scalar_lea.vmem %s8, %s4153
      $region64: #{_lambda_.2} parent=59 // pred_fallthru
        _
    $region60: #{_lambda_.2} parent=5 // pred_fallthru
      _
  $region6: #{_lambda_.2} parent=0 // loop_footer
    %s18 = sadd.s32 1, %s14
  $region7: #{_lambda_.2} parent=0 // loop_footer_branch
    %13 = sbr.rel target = $region3
  $region8: #{_lambda_.2} parent=0 // loop_exit
    _

// kernel: _lambda_.3
$region0: #{_lambda_.3}
  #allocation0 [shape = 'u32[]', space=smem, size = 0x4, offset = 0x4, fixed_abs, tag = 'smem constant byte address 0x4 - core index']
  #allocation1 [shape = 'u32[72,128]{1,0:T(1,128)}', space=vmem, size = 0x9000, scoped, tag = 'internal scratch']
  %s0 = inlined_call_operand.vmem [shape: f32[2,24,32], index: 0, kind: input, shape index: {}]
  %s1 = inlined_call_operand.vmem [shape: bf16[1,4,32,32], index: 1, kind: input, shape index: {}]
  %s2 = inlined_call_operand.vmem [shape: bf16[1,32,128], index: 2, kind: input, shape index: {}]
  %s3 = inlined_call_operand.vmem [shape: bf16[1,128,32], index: 3, kind: input, shape index: {}]
  %s4 = inlined_call_operand.vmem [shape: f32[13,128], index: 4, kind: input, shape index: {}]
  %s5 = inlined_call_operand.vmem [shape: bf16[32,128], index: 5, kind: input, shape index: {}]
  %s6 = inlined_call_operand.vmem [shape: f32[2,24,128], index: 6, kind: input, shape index: {}]
  %s7 = inlined_call_operand.vmem [shape: f32[2,24,1], index: 7, kind: input, shape index: {}]
  %s8 = inlined_call_operand.vmem [shape: f32[2,24,128], index: 8, kind: output, shape index: {0}]
  %s9 = inlined_call_operand.vmem [shape: f32[2,8,128], index: 9, kind: output, shape index: {1}]
  %10 = xla_tuple %s8, %s9
  %s11 = sld [smem:[#allocation0]]
  $region73: #{_lambda_.3} parent=0
    _
  %s13 = ssub.s32 1, %s11
  %s14 = scalar_select 0, %s13, %s11
  loop: start=0, step=1, limit=4
  $region2: #{_lambda_.3} parent=0 // loop_pre_header
    _
  $region3: #{_lambda_.3} parent=0 // loop_header
    %s16 = sphi 0, %s20
    %p17 = scmp.ge.s32.totalorder %s16, 4
    %s26 = sphi 0, %s28
    %s29 = sphi 0, %s26
    %s30 = sphi 0, %s29
    %s46 = sphi 0, %s30
    %s50 = sphi 0, %s50
    %s52 = sphi 0, %s50
    %s53 = sphi 0, %s52
    %s67 = sphi 0, %s53
    %s71 = sphi 0, %s71
    %s73 = sphi 0, %s71
    %s74 = sphi 0, %s73
    %s88 = sphi 0, %s74
    %s92 = sphi 0, %s92
    %s94 = sphi 0, %s92
    %s95 = sphi 0, %s94
    %s109 = sphi 0, %s95
    %s113 = sphi 0, %s113
    %s115 = sphi 0, %s113
    %s116 = sphi 0, %s115
    %s130 = sphi 0, %s116
    %s134 = sphi 0, %s134
    %s136 = sphi 0, %s134
    %s137 = sphi 0, %s136
    %s151 = sphi 0, %s137
    %s157 = sphi 0, %s159
    %s160 = sphi 0, %s157
    %s161 = sphi 0, %s160
    %s177 = sphi 0, %s161
    %s183 = sphi 0, %s185
    %s186 = sphi 0, %s183
    %s187 = sphi 0, %s186
    %s203 = sphi 0, %s187
    %s209 = sphi 0, %s211
    %s212 = sphi 0, %s209
    %s213 = sphi 0, %s212
    %s229 = sphi 0, %s213
    %s235 = sphi 0, %s237
    %s238 = sphi 0, %s235
    %s239 = sphi 0, %s238
    %s255 = sphi 0, %s239
  $region4: #{_lambda_.3} parent=0 // loop_header_branch
    %19 = sbr.rel (%p17) target = $region8
  $region5: #{_lambda_.3} parent=0 // loop_body
    %s21 = ssub.s32 %s16, 1
    %s22 = ssub.s32 %s16, 2
    %s23 = sadd.s32 %s16, 1
    %s24 = ssub.s32 %s16, %s23
    %p25 = scmp.eq.s32.totalorder %s24, 0
    %s27 = sadd.s32 %s26, 1
    %s28 = scalar_select %p25, %s26, %s27
    %p31 = pneg %p25
    %p32 = scmp.eq.s32.totalorder %s16, 1
    %p33 = por %p31, %p32
    %p34 = scmp.ne.s32.totalorder %s26, %s29
    %p35 = scmp.eq.s32.totalorder %s16, 0
    %p36 = por %p34, %p35
    %p37 = scmp.ne.s32.totalorder %s26, %s29
    %p38 = scmp.eq.s32.totalorder %s21, 1
    %p39 = por %p37, %p38
    %p40 = scmp.ne.s32.totalorder %s29, %s30
    %p41 = scmp.eq.s32.totalorder %s21, 0
    %p42 = por %p40, %p41
    %p43 = scmp.ne.s32.totalorder %s29, %s30
    %p44 = scmp.eq.s32.totalorder %s22, 1
    %p45 = por %p43, %p44
    %p47 = scmp.ne.s32.totalorder %s30, %s46
    %p48 = scmp.eq.s32.totalorder %s22, 0
    %p49 = por %p47, %p48
    %s51 = sadd.s32 %s50, 1
    %p54 = scmp.eq.s32.totalorder %s16, 1
    %p55 = scmp.ne.s32.totalorder %s50, %s52
    %p56 = scmp.eq.s32.totalorder %s16, 0
    %p57 = por %p55, %p56
    %p58 = scmp.ne.s32.totalorder %s50, %s52
    %p59 = scmp.eq.s32.totalorder %s21, 1
    %p60 = por %p58, %p59
    %p61 = scmp.ne.s32.totalorder %s52, %s53
    %p62 = scmp.eq.s32.totalorder %s21, 0
    %p63 = por %p61, %p62
    %p64 = scmp.ne.s32.totalorder %s52, %s53
    %p65 = scmp.eq.s32.totalorder %s22, 1
    %p66 = por %p64, %p65
    %p68 = scmp.ne.s32.totalorder %s53, %s67
    %p69 = scmp.eq.s32.totalorder %s22, 0
    %p70 = por %p68, %p69
    %s72 = sadd.s32 %s71, 1
    %p75 = scmp.eq.s32.totalorder %s16, 1
    %p76 = scmp.ne.s32.totalorder %s71, %s73
    %p77 = scmp.eq.s32.totalorder %s16, 0
    %p78 = por %p76, %p77
    %p79 = scmp.ne.s32.totalorder %s71, %s73
    %p80 = scmp.eq.s32.totalorder %s21, 1
    %p81 = por %p79, %p80
    %p82 = scmp.ne.s32.totalorder %s73, %s74
    %p83 = scmp.eq.s32.totalorder %s21, 0
    %p84 = por %p82, %p83
    %p85 = scmp.ne.s32.totalorder %s73, %s74
    %p86 = scmp.eq.s32.totalorder %s22, 1
    %p87 = por %p85, %p86
    %p89 = scmp.ne.s32.totalorder %s74, %s88
    %p90 = scmp.eq.s32.totalorder %s22, 0
    %p91 = por %p89, %p90
    %s93 = sadd.s32 %s92, 1
    %p96 = scmp.eq.s32.totalorder %s16, 1
    %p97 = scmp.ne.s32.totalorder %s92, %s94
    %p98 = scmp.eq.s32.totalorder %s16, 0
    %p99 = por %p97, %p98
    %p100 = scmp.ne.s32.totalorder %s92, %s94
    %p101 = scmp.eq.s32.totalorder %s21, 1
    %p102 = por %p100, %p101
    %p103 = scmp.ne.s32.totalorder %s94, %s95
    %p104 = scmp.eq.s32.totalorder %s21, 0
    %p105 = por %p103, %p104
    %p106 = scmp.ne.s32.totalorder %s94, %s95
    %p107 = scmp.eq.s32.totalorder %s22, 1
    %p108 = por %p106, %p107
    %p110 = scmp.ne.s32.totalorder %s95, %s109
    %p111 = scmp.eq.s32.totalorder %s22, 0
    %p112 = por %p110, %p111
    %s114 = sadd.s32 %s113, 1
    %p117 = scmp.eq.s32.totalorder %s16, 1
    %p118 = scmp.ne.s32.totalorder %s113, %s115
    %p119 = scmp.eq.s32.totalorder %s16, 0
    %p120 = por %p118, %p119
    %p121 = scmp.ne.s32.totalorder %s113, %s115
    %p122 = scmp.eq.s32.totalorder %s21, 1
    %p123 = por %p121, %p122
    %p124 = scmp.ne.s32.totalorder %s115, %s116
    %p125 = scmp.eq.s32.totalorder %s21, 0
    %p126 = por %p124, %p125
    %p127 = scmp.ne.s32.totalorder %s115, %s116
    %p128 = scmp.eq.s32.totalorder %s22, 1
    %p129 = por %p127, %p128
    %p131 = scmp.ne.s32.totalorder %s116, %s130
    %p132 = scmp.eq.s32.totalorder %s22, 0
    %p133 = por %p131, %p132
    %s135 = sadd.s32 %s134, 1
    %p138 = scmp.eq.s32.totalorder %s16, 1
    %p139 = scmp.ne.s32.totalorder %s134, %s136
    %p140 = scmp.eq.s32.totalorder %s16, 0
    %p141 = por %p139, %p140
    %p142 = scmp.ne.s32.totalorder %s134, %s136
    %p143 = scmp.eq.s32.totalorder %s21, 1
    %p144 = por %p142, %p143
    %p145 = scmp.ne.s32.totalorder %s136, %s137
    %p146 = scmp.eq.s32.totalorder %s21, 0
    %p147 = por %p145, %p146
    %p148 = scmp.ne.s32.totalorder %s136, %s137
    %p149 = scmp.eq.s32.totalorder %s22, 1
    %p150 = por %p148, %p149
    %p152 = scmp.ne.s32.totalorder %s137, %s151
    %p153 = scmp.eq.s32.totalorder %s22, 0
    %p154 = por %p152, %p153
    %s155 = ssub.s32 %s16, %s23
    %p156 = scmp.eq.s32.totalorder %s155, 0
    %s158 = sadd.s32 %s157, 1
    %s159 = scalar_select %p156, %s157, %s158
    %p162 = pneg %p156
    %p163 = scmp.eq.s32.totalorder %s16, 1
    %p164 = por %p162, %p163
    %p165 = scmp.ne.s32.totalorder %s157, %s160
    %p166 = scmp.eq.s32.totalorder %s16, 0
    %p167 = por %p165, %p166
    %p168 = scmp.ne.s32.totalorder %s157, %s160
    %p169 = scmp.eq.s32.totalorder %s21, 1
    %p170 = por %p168, %p169
    %p171 = scmp.ne.s32.totalorder %s160, %s161
    %p172 = scmp.eq.s32.totalorder %s21, 0
    %p173 = por %p171, %p172
    %p174 = scmp.ne.s32.totalorder %s160, %s161
    %p175 = scmp.eq.s32.totalorder %s22, 1
    %p176 = por %p174, %p175
    %p178 = scmp.ne.s32.totalorder %s161, %s177
    %p179 = scmp.eq.s32.totalorder %s22, 0
    %p180 = por %p178, %p179
    %s181 = ssub.s32 %s16, %s23
    %p182 = scmp.eq.s32.totalorder %s181, 0
    %s184 = sadd.s32 %s183, 1
    %s185 = scalar_select %p182, %s183, %s184
    %p188 = pneg %p182
    %p189 = scmp.eq.s32.totalorder %s16, 1
    %p190 = por %p188, %p189
    %p191 = scmp.ne.s32.totalorder %s183, %s186
    %p192 = scmp.eq.s32.totalorder %s16, 0
    %p193 = por %p191, %p192
    %p194 = scmp.ne.s32.totalorder %s183, %s186
    %p195 = scmp.eq.s32.totalorder %s21, 1
    %p196 = por %p194, %p195
    %p197 = scmp.ne.s32.totalorder %s186, %s187
    %p198 = scmp.eq.s32.totalorder %s21, 0
    %p199 = por %p197, %p198
    %p200 = scmp.ne.s32.totalorder %s186, %s187
    %p201 = scmp.eq.s32.totalorder %s22, 1
    %p202 = por %p200, %p201
    %p204 = scmp.ne.s32.totalorder %s187, %s203
    %p205 = scmp.eq.s32.totalorder %s22, 0
    %p206 = por %p204, %p205
    %s207 = ssub.s32 %s16, %s23
    %p208 = scmp.eq.s32.totalorder %s207, 0
    %s210 = sadd.s32 %s209, 1
    %s211 = scalar_select %p208, %s209, %s210
    %p214 = pneg %p208
    %p215 = scmp.eq.s32.totalorder %s16, 1
    %p216 = por %p214, %p215
    %p217 = scmp.ne.s32.totalorder %s209, %s212
    %p218 = scmp.eq.s32.totalorder %s16, 0
    %p219 = por %p217, %p218
    %p220 = scmp.ne.s32.totalorder %s209, %s212
    %p221 = scmp.eq.s32.totalorder %s21, 1
    %p222 = por %p220, %p221
    %p223 = scmp.ne.s32.totalorder %s212, %s213
    %p224 = scmp.eq.s32.totalorder %s21, 0
    %p225 = por %p223, %p224
    %p226 = scmp.ne.s32.totalorder %s212, %s213
    %p227 = scmp.eq.s32.totalorder %s22, 1
    %p228 = por %p226, %p227
    %p230 = scmp.ne.s32.totalorder %s213, %s229
    %p231 = scmp.eq.s32.totalorder %s22, 0
    %p232 = por %p230, %p231
    %s233 = ssub.s32 %s16, %s23
    %p234 = scmp.eq.s32.totalorder %s233, 0
    %s236 = sadd.s32 %s235, 1
    %s237 = scalar_select %p234, %s235, %s236
    %p240 = pneg %p234
    %p241 = scmp.eq.s32.totalorder %s16, 1
    %p242 = por %p240, %p241
    %p243 = scmp.ne.s32.totalorder %s235, %s238
    %p244 = scmp.eq.s32.totalorder %s16, 0
    %p245 = por %p243, %p244
    %p246 = scmp.ne.s32.totalorder %s235, %s238
    %p247 = scmp.eq.s32.totalorder %s21, 1
    %p248 = por %p246, %p247
    %p249 = scmp.ne.s32.totalorder %s238, %s239
    %p250 = scmp.eq.s32.totalorder %s21, 0
    %p251 = por %p249, %p250
    %p252 = scmp.ne.s32.totalorder %s238, %s239
    %p253 = scmp.eq.s32.totalorder %s22, 1
    %p254 = por %p252, %p253
    %p256 = scmp.ne.s32.totalorder %s239, %s255
    %p257 = scmp.eq.s32.totalorder %s22, 0
    %p258 = por %p256, %p257
    %p259 = scmp.le.s32.totalorder 1, %s16
    %p260 = scmp.lt.s32.totalorder %s16, 3
    %p261 = pnand %p259, %p260
    %p262 = pneg %p261
    // Predicated region
    $region9: #{_lambda_.3} parent=5 // pred_check
      _
    $region10: #{_lambda_.3} parent=5 // pred_check_branch
      %264 = sbr.rel (%p261) target = $region12
    $region11: #{_lambda_.3} parent=5 // pred_region
      %s265 = ssub.s32 %s16, 1
      // Predicated region
      $region13: #{_lambda_.3} parent=11 // pred_check
        %p266 = pneg %p63
      $region14: #{_lambda_.3} parent=11 // pred_check_branch
        %268 = sbr.rel (%p266) target = $region16
      $region15: #{_lambda_.3} parent=11 // pred_region
        _
      $region16: #{_lambda_.3} parent=11 // pred_fallthru
        _
      // Predicated region
      $region17: #{_lambda_.3} parent=11 // pred_check
        %p269 = pneg %p84
      $region18: #{_lambda_.3} parent=11 // pred_check_branch
        %271 = sbr.rel (%p269) target = $region20
      $region19: #{_lambda_.3} parent=11 // pred_region
        _
      $region20: #{_lambda_.3} parent=11 // pred_fallthru
        _
      // Predicated region
      $region21: #{_lambda_.3} parent=11 // pred_check
        %p272 = pneg %p105
      $region22: #{_lambda_.3} parent=11 // pred_check_branch
        %274 = sbr.rel (%p272) target = $region24
      $region23: #{_lambda_.3} parent=11 // pred_region
        _
      $region24: #{_lambda_.3} parent=11 // pred_fallthru
        _
      // Predicated region
      $region25: #{_lambda_.3} parent=11 // pred_check
        %p275 = pneg %p126
      $region26: #{_lambda_.3} parent=11 // pred_check_branch
        %277 = sbr.rel (%p275) target = $region28
      $region27: #{_lambda_.3} parent=11 // pred_region
        _
      $region28: #{_lambda_.3} parent=11 // pred_fallthru
        _
      // Predicated region
      $region29: #{_lambda_.3} parent=11 // pred_check
        %p278 = pneg %p147
      $region30: #{_lambda_.3} parent=11 // pred_check_branch
        %280 = sbr.rel (%p278) target = $region32
      $region31: #{_lambda_.3} parent=11 // pred_region
        _
      $region32: #{_lambda_.3} parent=11 // pred_fallthru
        _
    $region12: #{_lambda_.3} parent=5 // pred_fallthru
      _
    %p281 = scmp.lt.s32.totalorder %s16, 2
    // Predicated region
    $region33: #{_lambda_.3} parent=5 // pred_check
      %p282 = pneg %p281
    $region34: #{_lambda_.3} parent=5 // pred_check_branch
      %284 = sbr.rel (%p282) target = $region36
    $region35: #{_lambda_.3} parent=5 // pred_region
      // Predicated region
      $region37: #{_lambda_.3} parent=35 // pred_check
        %p285 = pneg %p36
      $region38: #{_lambda_.3} parent=35 // pred_check_branch
        %287 = sbr.rel (%p285) target = $region40
      $region39: #{_lambda_.3} parent=35 // pred_region
        %p288 = scmp.lt.s32.totalorder %s16, 1
        %s289 = scalar_select %p288, %s16, 1
        %s290 = smul.addr %s289, 3
        %s291 = smul.addr %s290, 8
        %s292 = scalar_lea.vmem %s0, %s291
      $region40: #{_lambda_.3} parent=35 // pred_fallthru
        _
      // Predicated region
      $region41: #{_lambda_.3} parent=35 // pred_check
        %p293 = pneg %p167
      $region42: #{_lambda_.3} parent=35 // pred_check_branch
        %295 = sbr.rel (%p293) target = $region44
      $region43: #{_lambda_.3} parent=35 // pred_region
        %p296 = scmp.lt.s32.totalorder %s16, 1
        %s297 = scalar_select %p296, %s16, 1
        %s298 = smul.addr %s297, 3
        %s299 = smul.addr %s298, 8
        %s300 = scalar_lea.vmem %s6, %s299
      $region44: #{_lambda_.3} parent=35 // pred_fallthru
        _
      // Predicated region
      $region45: #{_lambda_.3} parent=35 // pred_check
        %p301 = pneg %p193
      $region46: #{_lambda_.3} parent=35 // pred_check_branch
        %303 = sbr.rel (%p301) target = $region48
      $region47: #{_lambda_.3} parent=35 // pred_region
        %p304 = scmp.lt.s32.totalorder %s16, 1
        %s305 = scalar_select %p304, %s16, 1
        %s306 = smul.addr %s305, 3
        %s307 = smul.addr %s306, 8
        %s308 = scalar_lea.vmem %s7, %s307
      $region48: #{_lambda_.3} parent=35 // pred_fallthru
        _
    $region36: #{_lambda_.3} parent=5 // pred_fallthru
      _
    %p309 = scmp.le.s32.totalorder 1, %s16
    %p310 = scmp.lt.s32.totalorder %s16, 3
    %p311 = pnand %p309, %p310
    %p312 = pneg %p311
    // Predicated region
    $region49: #{_lambda_.3} parent=5 // pred_check
      _
    $region50: #{_lambda_.3} parent=5 // pred_check_branch
      %314 = sbr.rel (%p311) target = $region52
    $region51: #{_lambda_.3} parent=5 // pred_region
      %s315 = ssub.s32 %s16, 1
      %p316 = scmp.lt.s32.totalorder %s21, 1
      %s317 = scalar_select %p316, %s21, 1
      %s318 = smul.addr %s317, 3
      %s319 = smul.addr %s318, 8
      %s320 = scalar_lea.vmem %s0, %s319
      %p321 = pneg %p42
      %p322 = pneg %p39
      %p323 = pneg %p63
      %p324 = pneg %p60
      %p325 = pneg %p84
      %p326 = pneg %p81
      %p327 = pneg %p105
      %p328 = pneg %p102
      %p329 = pneg %p126
      %p330 = pneg %p123
      %p331 = pneg %p147
      %p332 = pneg %p144
      %p333 = scmp.lt.s32.totalorder %s21, 1
      %s334 = scalar_select %p333, %s21, 1
      %s335 = smul.addr %s334, 3
      %s336 = smul.addr %s335, 8
      %s337 = scalar_lea.vmem %s6, %s336
      %p338 = pneg %p173
      %p339 = pneg %p170
      %p340 = scmp.lt.s32.totalorder %s21, 1
      %s341 = scalar_select %p340, %s21, 1
      %s342 = smul.addr %s341, 3
      %s343 = smul.addr %s342, 8
      %s344 = scalar_lea.vmem %s7, %s343
      %p345 = pneg %p199
      %p346 = pneg %p196
      %p347 = pneg %p225
      %p348 = pneg %p222
      %p349 = scmp.lt.s32.totalorder %s21, 1
      %s350 = scalar_select %p349, %s21, 1
      %s351 = smul.addr %s350, 3
      %s352 = smul.addr %s351, 8
      %s353 = scalar_lea.vmem %s8, %s352
      %p354 = pneg %p251
      %p355 = pneg %p248
      %p356 = scmp.lt.s32.totalorder %s21, 1
      %s357 = scalar_select %p356, %s21, 1
      %s358 = smul.addr %s357, 8
      %s359 = scalar_lea.vmem %s9, %s358
      %p360 = scmp.lt.s32.totalorder %s21, 1
      %s361 = scalar_select %p360, %s21, 1
      %s362 = smul.addr %s361, 3
      %s363 = smul.addr %s362, 8
      %s364 = scalar_lea.vmem %s0, %s363
      %p365 = scmp.lt.s32.totalorder %s21, 1
      %s366 = scalar_select %p365, %s21, 1
      %s367 = smul.addr %s366, 3
      %s368 = smul.addr %s367, 8
      %s369 = scalar_lea.vmem %s6, %s368
      %p370 = scmp.lt.s32.totalorder %s21, 1
      %s371 = scalar_select %p370, %s21, 1
      %s372 = smul.addr %s371, 3
      %s373 = smul.addr %s372, 8
      %s374 = scalar_lea.vmem %s7, %s373
      %p375 = scmp.lt.s32.totalorder %s21, 1
      %s376 = scalar_select %p375, %s21, 1
      %s377 = smul.addr %s376, 3
      %s378 = smul.addr %s377, 8
      %s379 = scalar_lea.vmem %s8, %s378
      %p380 = scmp.lt.s32.totalorder %s21, 1
      %s381 = scalar_select %p380, %s21, 1
      %s382 = smul.addr %s381, 8
      %s383 = scalar_lea.vmem %s9, %s382
      %v385 = vld [vmem:[%s364] sm:$0xff]
      %v386 = vld [vmem:[%s364 + $0x8] sm:$0xff]
      %v387 = vld [vmem:[%s364 + $0x10] sm:$0xff]
      %v388 = vld [vmem:[%s1] sm:$0xf]
      %v389 = vld [vmem:[%s1 + $0x4] sm:$0xf]
      %v390 = vld [vmem:[%s1 + $0x8] sm:$0xf]
      %v391 = vld [vmem:[%s1 + $0xc] sm:$0xf]
      %s392 = scalar_lea.vmem %s1, 16
      %v393 = vld [vmem:[%s392] sm:$0xf]
      %v394 = vld [vmem:[%s392 + $0x4] sm:$0xf]
      %v395 = vld [vmem:[%s392 + $0x8] sm:$0xf]
      %v396 = vld [vmem:[%s392 + $0xc] sm:$0xf]
      %s397 = scalar_lea.vmem %s1, 32
      %v398 = vld [vmem:[%s397] sm:$0xf]
      %v399 = vld [vmem:[%s397 + $0x4] sm:$0xf]
      %v400 = vld [vmem:[%s397 + $0x8] sm:$0xf]
      %v401 = vld [vmem:[%s397 + $0xc] sm:$0xf]
      %s402 = scalar_lea.vmem %s1, 48
      %v403 = vld [vmem:[%s402] sm:$0xf]
      %v404 = vld [vmem:[%s402 + $0x4] sm:$0xf]
      %v405 = vld [vmem:[%s402 + $0x8] sm:$0xf]
      %v406 = vld [vmem:[%s402 + $0xc] sm:$0xf]
      %v407 = vld [vmem:[%s2] sm:$0xf]
      %v408 = vld [vmem:[%s2 + $0x4] sm:$0xf]
      %v409 = vld [vmem:[%s2 + $0x8] sm:$0xf]
      %v410 = vld [vmem:[%s2 + $0xc] sm:$0xf]
      %v411 = vld [vmem:[%s3] sm:$0xf]
      %v412 = vld [vmem:[%s3 + $0x4] sm:$0xf]
      %v413 = vld [vmem:[%s3 + $0x8] sm:$0xf]
      %v414 = vld [vmem:[%s3 + $0xc] sm:$0xf]
      %v415 = vld [vmem:[%s3 + $0x10] sm:$0xf]
      %v416 = vld [vmem:[%s3 + $0x14] sm:$0xf]
      %v417 = vld [vmem:[%s3 + $0x18] sm:$0xf]
      %v418 = vld [vmem:[%s3 + $0x1c] sm:$0xf]
      %v419 = vld [vmem:[%s3 + $0x20] sm:$0xf]
      %v420 = vld [vmem:[%s3 + $0x24] sm:$0xf]
      %v421 = vld [vmem:[%s3 + $0x28] sm:$0xf]
      %v422 = vld [vmem:[%s3 + $0x2c] sm:$0xf]
      %v423 = vld [vmem:[%s3 + $0x30] sm:$0xf]
      %v424 = vld [vmem:[%s3 + $0x34] sm:$0xf]
      %v425 = vld [vmem:[%s3 + $0x38] sm:$0xf]
      %v426 = vld [vmem:[%s3 + $0x3c] sm:$0xf]
      %v427 = vld [vmem:[%s4] sm:$0x1]
      %v428 = vld [vmem:[%s4 + $0x1] sm:$0x1]
      %v429 = vld [vmem:[%s4 + $0x2] sm:$0x1]
      %v430 = vld [vmem:[%s4 + $0x3] sm:$0x1]
      %v431 = vld [vmem:[%s4 + $0x4] sm:$0x1]
      %v432 = vld [vmem:[%s4 + $0x5] sm:$0x1]
      %v433 = vld [vmem:[%s4 + $0x6] sm:$0x1]
      %v434 = vld [vmem:[%s4 + $0x7] sm:$0x1]
      %v435 = vld [vmem:[%s4 + $0x8] sm:$0x1]
      %v436 = vld [vmem:[%s4 + $0x9] sm:$0x1]
      %vm437 = vcmask 261120
      %v438 = vsel %vm437, %v385, 0.0
      %439 = vadd.xlane.f32.xlu0 %v438
      %v440 = vpop.xlane.xlu0 %439
      %v441 = vsel %vm437, %v386, 0.0
      %442 = vadd.xlane.f32.xlu0 %v441
      %v443 = vpop.xlane.xlu0 %442
      %v444 = vsel %vm437, %v387, 0.0
      %445 = vadd.xlane.f32.xlu0 %v444
      %v446 = vpop.xlane.xlu0 %445
      %v447 = vrcp.pop 32.0
      %v448 = vmul.f32 32.0, %v447
      %v449 = vsub.f32 1.0, %v448
      %v450 = vmul.f32 %v447, %v449
      %v451 = vadd.f32 %v447, %v450
      %vm452 = vweird.f32 %v447
      %v453 = vsel %vm452, %v447, %v451
      %v454 = vmul.f32 %v440, %v453
      %v455 = vmul.f32 %v443, %v453
      %v456 = vmul.f32 %v446, %v453
      %v457 = vsub.f32 %v385, %v454
      %v458 = vsub.f32 %v386, %v455
      %v459 = vsub.f32 %v387, %v456
      %v460 = vmul.f32 %v457, %v457
      %v461 = vmul.f32 %v458, %v458
      %v462 = vmul.f32 %v459, %v459
      %v463 = vsel %vm437, %v460, 0.0
      %464 = vadd.xlane.f32.xlu0 %v463
      %v465 = vpop.xlane.xlu0 %464
      %v466 = vsel %vm437, %v461, 0.0
      %467 = vadd.xlane.f32.xlu0 %v466
      %v468 = vpop.xlane.xlu0 %467
      %v469 = vsel %vm437, %v462, 0.0
      %470 = vadd.xlane.f32.xlu0 %v469
      %v471 = vpop.xlane.xlu0 %470
      %v472 = vmul.f32 %v465, %v453
      %v473 = vmul.f32 %v468, %v453
      %v474 = vmul.f32 %v471, %v453
      %v475 = vadd.f32 %v472, 1e-06
      %v476 = vadd.f32 %v473, 1e-06
      %v477 = vadd.f32 %v474, 1e-06
      %v478 = vrsqrt.pop %v475
      %v479 = vmul.f32 %v478, %v475
      %v480 = vmul.f32 %v479, %v478
      %v481 = vmul.f32 0.5, %v480
      %v482 = vsub.f32 1.5, %v481
      %v483 = vmul.f32 %v478, %v482
      %vm484 = vweird.f32 %v475
      %vm485 = vweird.f32 %v478
      %vm486 = vmor %vm484, %vm485
      %v487 = vsel %vm486, %v478, %v483
      %v488 = vrsqrt.pop %v476
      %v489 = vmul.f32 %v488, %v476
      %v490 = vmul.f32 %v489, %v488
      %v491 = vmul.f32 0.5, %v490
      %v492 = vsub.f32 1.5, %v491
      %v493 = vmul.f32 %v488, %v492
      %vm494 = vweird.f32 %v476
      %vm495 = vweird.f32 %v488
      %vm496 = vmor %vm494, %vm495
      %v497 = vsel %vm496, %v488, %v493
      %v498 = vrsqrt.pop %v477
      %v499 = vmul.f32 %v498, %v477
      %v500 = vmul.f32 %v499, %v498
      %v501 = vmul.f32 0.5, %v500
      %v502 = vsub.f32 1.5, %v501
      %v503 = vmul.f32 %v498, %v502
      %vm504 = vweird.f32 %v477
      %vm505 = vweird.f32 %v498
      %vm506 = vmor %vm504, %vm505
      %v507 = vsel %vm506, %v498, %v503
      %v508 = vmul.f32 %v457, %v487
      %v509 = vmul.f32 %v458, %v497
      %v510 = vmul.f32 %v459, %v507
      %v511 = vperm.slane %v427, 0
      %v512 = vmul.f32 %v508, %v511
      %v513 = vmul.f32 %v509, %v511
      %v514 = vmul.f32 %v510, %v511
      %v515 = vperm.slane %v428, 0
      %v516 = vadd.f32 %v512, %v515
      %v517 = vadd.f32 %v513, %v515
      %v518 = vadd.f32 %v514, %v515
      %v519 = vpack.c.bf16 %v517, %v516
      %v520 = vpack.c.bf16 %v518, %v518
      %v521 = vperm.slane %v429, 0
      %v526 = vunpack.c.l.b16 %v388
      %v527 = vunpack.c.l.b16 %v389
      %v528 = vunpack.c.l.b16 %v390
      %v529 = vunpack.c.l.b16 %v391
      %v530 = vpack.c.b16 %v527, %v526
      %v531 = vpack.c.b16 %v529, %v528
      %v535 = vsel %vm437, %v519, 0
      %v538 = vsel %vm437, %v520, 0
      %540 = vmatpush.bf16.msra.mxu0 0
      %541 = vmatpush.bf16.msra.mxu0 0
      %542 = vmatpush.bf16.msra.mxu0 0
      %543 = vmatpush.bf16.msra.mxu0 0
      %544 = vmatpush.bf16.msra.mxu0 0
      %545 = vmatpush.bf16.msra.mxu0 0
      %546 = vmatpush.bf16.msra.mxu0 %v531
      %547 = vmatpush.bf16.msra.mxu0 %v530
      %548 = vmatmul.bf16.gmra.mxu0 %v535
      %v549 = vpop.f32.mrf.mxu0
      %v550 = vadd.f32 %v521, %v549
      %v551 = vpop.f32.mrf.mxu0
      %v552 = vadd.f32 %v521, %v551
      %553 = vmatmul.bf16.gmra.mxu0 %v538
      %v554 = vpop.f32.mrf.mxu0
      %v555 = vadd.f32 %v521, %v554
      %v556 = vpop.f32.mrf.mxu0
      %557 = vdwg.mxu0
      %561 = vrot.lane.b32.xlu0 %v550, 120
      %v562 = vpop.permute.xlu0 %561
      %563 = vrot.lane.b32.xlu0 %v552, 120
      %v564 = vpop.permute.xlu0 %563
      %565 = vrot.lane.b32.xlu0 %v555, 120
      %v566 = vpop.permute.xlu0 %565
      %570 = vrot.lane.b32.xlu0 %v550, 112
      %v571 = vpop.permute.xlu0 %570
      %572 = vrot.lane.b32.xlu0 %v552, 112
      %v573 = vpop.permute.xlu0 %572
      %574 = vrot.lane.b32.xlu0 %v555, 112
      %v575 = vpop.permute.xlu0 %574
      %579 = vrot.lane.b32.xlu0 %v550, 104
      %v580 = vpop.permute.xlu0 %579
      %581 = vrot.lane.b32.xlu0 %v552, 104
      %v582 = vpop.permute.xlu0 %581
      %583 = vrot.lane.b32.xlu0 %v555, 104
      %v584 = vpop.permute.xlu0 %583
      %v588 = vrot.slane %v571, 4
      %vm589 = vcmask 1047556
      %v590 = vsel %vm589, %v588, %v550
      %v591 = vrot.slane %v550, 4
      %v592 = vsel %vm589, %v571, %v591
      %v594 = vunpack.c.l.s4 1983009808
      %v595 = vunpack.c.0.s8 %v594
      %v596 = vperm.slane %v590, %v595
      %v598 = vunpack.c.l.s4 1983009808
      %v599 = vunpack.c.0.s8 %v598
      %v600 = vperm.slane %v592, %v599
      %v601 = vrot.slane %v580, 4
      %v602 = vsel %vm589, %v601, %v562
      %v603 = vrot.slane %v562, 4
      %v604 = vsel %vm589, %v580, %v603
      %v606 = vunpack.c.l.s4 1983009808
      %v607 = vunpack.c.0.s8 %v606
      %v608 = vperm.slane %v602, %v607
      %v610 = vunpack.c.l.s4 1983009808
      %v611 = vunpack.c.0.s8 %v610
      %v612 = vperm.slane %v604, %v611
      %v613 = vrot.slane %v608, 4
      %v614 = vsel %vm589, %v613, %v596
      %v615 = vrot.slane %v596, 4
      %v616 = vsel %vm589, %v608, %v615
      %v618 = vunpack.c.l.s4 1934713408
      %v619 = vunpack.c.0.s8 %v618
      %v620 = vperm.slane %v614, %v619
      %v622 = vunpack.c.l.s4 1934713408
      %v623 = vunpack.c.0.s8 %v622
      %v624 = vperm.slane %v616, %v623
      %v625 = vrot.slane %v612, 4
      %v626 = vsel %vm589, %v625, %v600
      %v627 = vrot.slane %v600, 4
      %v628 = vsel %vm589, %v612, %v627
      %v630 = vunpack.c.l.s4 1934713408
      %v631 = vunpack.c.0.s8 %v630
      %v632 = vperm.slane %v626, %v631
      %v634 = vunpack.c.l.s4 1934713408
      %v635 = vunpack.c.0.s8 %v634
      %v636 = vperm.slane %v628, %v635
      %v637 = vrot.slane %v620, 4
      %v638 = vsel %vm589, 0.0, %v637
      %v639 = vrot.slane %v624, 4
      %v640 = vsel %vm589, 0.0, %v639
      %v641 = vrot.slane %v632, 4
      %v642 = vsel %vm589, 0.0, %v641
      %v643 = vrot.slane %v636, 4
      %v644 = vsel %vm589, 0.0, %v643
      %v645 = vrot.slane %v573, 4
      %v646 = vsel %vm589, %v645, %v552
      %v647 = vrot.slane %v552, 4
      %v648 = vsel %vm589, %v573, %v647
      %v650 = vunpack.c.l.s4 1983009808
      %v651 = vunpack.c.0.s8 %v650
      %v652 = vperm.slane %v646, %v651
      %v654 = vunpack.c.l.s4 1983009808
      %v655 = vunpack.c.0.s8 %v654
      %v656 = vperm.slane %v648, %v655
      %v657 = vrot.slane %v582, 4
      %v658 = vsel %vm589, %v657, %v564
      %v659 = vrot.slane %v564, 4
      %v660 = vsel %vm589, %v582, %v659
      %v662 = vunpack.c.l.s4 1983009808
      %v663 = vunpack.c.0.s8 %v662
      %v664 = vperm.slane %v658, %v663
      %v666 = vunpack.c.l.s4 1983009808
      %v667 = vunpack.c.0.s8 %v666
      %v668 = vperm.slane %v660, %v667
      %v669 = vrot.slane %v664, 4
      %v670 = vsel %vm589, %v669, %v652
      %v671 = vrot.slane %v652, 4
      %v672 = vsel %vm589, %v664, %v671
      %v674 = vunpack.c.l.s4 1934713408
      %v675 = vunpack.c.0.s8 %v674
      %v676 = vperm.slane %v670, %v675
      %v678 = vunpack.c.l.s4 1934713408
      %v679 = vunpack.c.0.s8 %v678
      %v680 = vperm.slane %v672, %v679
      %v681 = vrot.slane %v668, 4
      %v682 = vsel %vm589, %v681, %v656
      %v683 = vrot.slane %v656, 4
      %v684 = vsel %vm589, %v668, %v683
      %v686 = vunpack.c.l.s4 1934713408
      %v687 = vunpack.c.0.s8 %v686
      %v688 = vperm.slane %v682, %v687
      %v690 = vunpack.c.l.s4 1934713408
      %v691 = vunpack.c.0.s8 %v690
      %v692 = vperm.slane %v684, %v691
      %v693 = vrot.slane %v676, 4
      %v694 = vsel %vm589, 0.0, %v693
      %v695 = vrot.slane %v680, 4
      %v696 = vsel %vm589, 0.0, %v695
      %v697 = vrot.slane %v688, 4
      %v698 = vsel %vm589, 0.0, %v697
      %v699 = vrot.slane %v692, 4
      %v700 = vsel %vm589, 0.0, %v699
      %v701 = vrot.slane %v575, 4
      %v702 = vsel %vm589, %v701, %v555
      %v703 = vrot.slane %v555, 4
      %v704 = vsel %vm589, %v575, %v703
      %v706 = vunpack.c.l.s4 1983009808
      %v707 = vunpack.c.0.s8 %v706
      %v708 = vperm.slane %v702, %v707
      %v710 = vunpack.c.l.s4 1983009808
      %v711 = vunpack.c.0.s8 %v710
      %v712 = vperm.slane %v704, %v711
      %v713 = vrot.slane %v584, 4
      %v714 = vsel %vm589, %v713, %v566
      %v715 = vrot.slane %v566, 4
      %v716 = vsel %vm589, %v584, %v715
      %v718 = vunpack.c.l.s4 1983009808
      %v719 = vunpack.c.0.s8 %v718
      %v720 = vperm.slane %v714, %v719
      %v722 = vunpack.c.l.s4 1983009808
      %v723 = vunpack.c.0.s8 %v722
      %v724 = vperm.slane %v716, %v723
      %v725 = vrot.slane %v720, 4
      %v726 = vsel %vm589, %v725, %v708
      %v727 = vrot.slane %v708, 4
      %v728 = vsel %vm589, %v720, %v727
      %v730 = vunpack.c.l.s4 1934713408
      %v731 = vunpack.c.0.s8 %v730
      %v732 = vperm.slane %v726, %v731
      %v734 = vunpack.c.l.s4 1934713408
      %v735 = vunpack.c.0.s8 %v734
      %v736 = vperm.slane %v728, %v735
      %v737 = vrot.slane %v724, 4
      %v738 = vsel %vm589, %v737, %v712
      %v739 = vrot.slane %v712, 4
      %v740 = vsel %vm589, %v724, %v739
      %v742 = vunpack.c.l.s4 1934713408
      %v743 = vunpack.c.0.s8 %v742
      %v744 = vperm.slane %v738, %v743
      %v746 = vunpack.c.l.s4 1934713408
      %v747 = vunpack.c.0.s8 %v746
      %v748 = vperm.slane %v740, %v747
      %v749 = vrot.slane %v732, 4
      %v750 = vsel %vm589, 0.0, %v749
      %v751 = vrot.slane %v736, 4
      %v752 = vsel %vm589, 0.0, %v751
      %v753 = vrot.slane %v744, 4
      %v754 = vsel %vm589, 0.0, %v753
      %v755 = vrot.slane %v748, 4
      %v756 = vsel %vm589, 0.0, %v755
      %v757 = vperm.slane %v430, 0
      %v762 = vunpack.c.l.b16 %v393
      %v763 = vunpack.c.l.b16 %v394
      %v764 = vunpack.c.l.b16 %v395
      %v765 = vunpack.c.l.b16 %v396
      %v766 = vpack.c.b16 %v763, %v762
      %v767 = vpack.c.b16 %v765, %v764
      %770 = vmatpush.bf16.msra.mxu0 0
      %771 = vmatpush.bf16.msra.mxu0 0
      %772 = vmatpush.bf16.msra.mxu0 0
      %773 = vmatpush.bf16.msra.mxu0 0
      %774 = vmatpush.bf16.msra.mxu0 0
      %775 = vmatpush.bf16.msra.mxu0 0
      %776 = vmatpush.bf16.msra.mxu0 %v767
      %777 = vmatpush.bf16.msra.mxu0 %v766
      %778 = vmatmul.bf16.gmra.mxu0 %v535
      %v779 = vpop.f32.mrf.mxu0
      %v780 = vadd.f32 %v757, %v779
      %v781 = vpop.f32.mrf.mxu0
      %v782 = vadd.f32 %v757, %v781
      %783 = vmatmul.bf16.gmra.mxu0 %v538
      %v784 = vpop.f32.mrf.mxu0
      %v785 = vadd.f32 %v757, %v784
      %v786 = vpop.f32.mrf.mxu0
      %787 = vdwg.mxu0
      %791 = vrot.lane.b32.xlu0 %v780, 120
      %v792 = vpop.permute.xlu0 %791
      %793 = vrot.lane.b32.xlu0 %v782, 120
      %v794 = vpop.permute.xlu0 %793
      %795 = vrot.lane.b32.xlu0 %v785, 120
      %v796 = vpop.permute.xlu0 %795
      %800 = vrot.lane.b32.xlu0 %v780, 112
      %v801 = vpop.permute.xlu0 %800
      %802 = vrot.lane.b32.xlu0 %v782, 112
      %v803 = vpop.permute.xlu0 %802
      %804 = vrot.lane.b32.xlu0 %v785, 112
      %v805 = vpop.permute.xlu0 %804
      %809 = vrot.lane.b32.xlu0 %v780, 104
      %v810 = vpop.permute.xlu0 %809
      %811 = vrot.lane.b32.xlu0 %v782, 104
      %v812 = vpop.permute.xlu0 %811
      %813 = vrot.lane.b32.xlu0 %v785, 104
      %v814 = vpop.permute.xlu0 %813
      %v818 = vrot.slane %v801, 4
      %v819 = vsel %vm589, %v818, %v780
      %v820 = vrot.slane %v780, 4
      %v821 = vsel %vm589, %v801, %v820
      %v823 = vunpack.c.l.s4 1983009808
      %v824 = vunpack.c.0.s8 %v823
      %v825 = vperm.slane %v819, %v824
      %v827 = vunpack.c.l.s4 1983009808
      %v828 = vunpack.c.0.s8 %v827
      %v829 = vperm.slane %v821, %v828
      %v830 = vrot.slane %v810, 4
      %v831 = vsel %vm589, %v830, %v792
      %v832 = vrot.slane %v792, 4
      %v833 = vsel %vm589, %v810, %v832
      %v835 = vunpack.c.l.s4 1983009808
      %v836 = vunpack.c.0.s8 %v835
      %v837 = vperm.slane %v831, %v836
      %v839 = vunpack.c.l.s4 1983009808
      %v840 = vunpack.c.0.s8 %v839
      %v841 = vperm.slane %v833, %v840
      %v842 = vrot.slane %v837, 4
      %v843 = vsel %vm589, %v842, %v825
      %v844 = vrot.slane %v825, 4
      %v845 = vsel %vm589, %v837, %v844
      %v847 = vunpack.c.l.s4 1934713408
      %v848 = vunpack.c.0.s8 %v847
      %v849 = vperm.slane %v843, %v848
      %v851 = vunpack.c.l.s4 1934713408
      %v852 = vunpack.c.0.s8 %v851
      %v853 = vperm.slane %v845, %v852
      %v854 = vrot.slane %v841, 4
      %v855 = vsel %vm589, %v854, %v829
      %v856 = vrot.slane %v829, 4
      %v857 = vsel %vm589, %v841, %v856
      %v859 = vunpack.c.l.s4 1934713408
      %v860 = vunpack.c.0.s8 %v859
      %v861 = vperm.slane %v855, %v860
      %v863 = vunpack.c.l.s4 1934713408
      %v864 = vunpack.c.0.s8 %v863
      %v865 = vperm.slane %v857, %v864
      %v866 = vrot.slane %v849, 4
      %v867 = vsel %vm589, 0.0, %v866
      %v868 = vrot.slane %v853, 4
      %v869 = vsel %vm589, 0.0, %v868
      %v870 = vrot.slane %v861, 4
      %v871 = vsel %vm589, 0.0, %v870
      %v872 = vrot.slane %v865, 4
      %v873 = vsel %vm589, 0.0, %v872
      %v874 = vrot.slane %v803, 4
      %v875 = vsel %vm589, %v874, %v782
      %v876 = vrot.slane %v782, 4
      %v877 = vsel %vm589, %v803, %v876
      %v879 = vunpack.c.l.s4 1983009808
      %v880 = vunpack.c.0.s8 %v879
      %v881 = vperm.slane %v875, %v880
      %v883 = vunpack.c.l.s4 1983009808
      %v884 = vunpack.c.0.s8 %v883
      %v885 = vperm.slane %v877, %v884
      %v886 = vrot.slane %v812, 4
      %v887 = vsel %vm589, %v886, %v794
      %v888 = vrot.slane %v794, 4
      %v889 = vsel %vm589, %v812, %v888
      %v891 = vunpack.c.l.s4 1983009808
      %v892 = vunpack.c.0.s8 %v891
      %v893 = vperm.slane %v887, %v892
      %v895 = vunpack.c.l.s4 1983009808
      %v896 = vunpack.c.0.s8 %v895
      %v897 = vperm.slane %v889, %v896
      %v898 = vrot.slane %v893, 4
      %v899 = vsel %vm589, %v898, %v881
      %v900 = vrot.slane %v881, 4
      %v901 = vsel %vm589, %v893, %v900
      %v903 = vunpack.c.l.s4 1934713408
      %v904 = vunpack.c.0.s8 %v903
      %v905 = vperm.slane %v899, %v904
      %v907 = vunpack.c.l.s4 1934713408
      %v908 = vunpack.c.0.s8 %v907
      %v909 = vperm.slane %v901, %v908
      %v910 = vrot.slane %v897, 4
      %v911 = vsel %vm589, %v910, %v885
      %v912 = vrot.slane %v885, 4
      %v913 = vsel %vm589, %v897, %v912
      %v915 = vunpack.c.l.s4 1934713408
      %v916 = vunpack.c.0.s8 %v915
      %v917 = vperm.slane %v911, %v916
      %v919 = vunpack.c.l.s4 1934713408
      %v920 = vunpack.c.0.s8 %v919
      %v921 = vperm.slane %v913, %v920
      %v922 = vrot.slane %v905, 4
      %v923 = vsel %vm589, 0.0, %v922
      %v924 = vrot.slane %v909, 4
      %v925 = vsel %vm589, 0.0, %v924
      %v926 = vrot.slane %v917, 4
      %v927 = vsel %vm589, 0.0, %v926
      %v928 = vrot.slane %v921, 4
      %v929 = vsel %vm589, 0.0, %v928
      %v930 = vrot.slane %v805, 4
      %v931 = vsel %vm589, %v930, %v785
      %v932 = vrot.slane %v785, 4
      %v933 = vsel %vm589, %v805, %v932
      %v935 = vunpack.c.l.s4 1983009808
      %v936 = vunpack.c.0.s8 %v935
      %v937 = vperm.slane %v931, %v936
      %v939 = vunpack.c.l.s4 1983009808
      %v940 = vunpack.c.0.s8 %v939
      %v941 = vperm.slane %v933, %v940
      %v942 = vrot.slane %v814, 4
      %v943 = vsel %vm589, %v942, %v796
      %v944 = vrot.slane %v796, 4
      %v945 = vsel %vm589, %v814, %v944
      %v947 = vunpack.c.l.s4 1983009808
      %v948 = vunpack.c.0.s8 %v947
      %v949 = vperm.slane %v943, %v948
      %v951 = vunpack.c.l.s4 1983009808
      %v952 = vunpack.c.0.s8 %v951
      %v953 = vperm.slane %v945, %v952
      %v954 = vrot.slane %v949, 4
      %v955 = vsel %vm589, %v954, %v937
      %v956 = vrot.slane %v937, 4
      %v957 = vsel %vm589, %v949, %v956
      %v959 = vunpack.c.l.s4 1934713408
      %v960 = vunpack.c.0.s8 %v959
      %v961 = vperm.slane %v955, %v960
      %v963 = vunpack.c.l.s4 1934713408
      %v964 = vunpack.c.0.s8 %v963
      %v965 = vperm.slane %v957, %v964
      %v966 = vrot.slane %v953, 4
      %v967 = vsel %vm589, %v966, %v941
      %v968 = vrot.slane %v941, 4
      %v969 = vsel %vm589, %v953, %v968
      %v971 = vunpack.c.l.s4 1934713408
      %v972 = vunpack.c.0.s8 %v971
      %v973 = vperm.slane %v967, %v972
      %v975 = vunpack.c.l.s4 1934713408
      %v976 = vunpack.c.0.s8 %v975
      %v977 = vperm.slane %v969, %v976
      %v978 = vrot.slane %v961, 4
      %v979 = vsel %vm589, 0.0, %v978
      %v980 = vrot.slane %v965, 4
      %v981 = vsel %vm589, 0.0, %v980
      %v982 = vrot.slane %v973, 4
      %v983 = vsel %vm589, 0.0, %v982
      %v984 = vrot.slane %v977, 4
      %v985 = vsel %vm589, 0.0, %v984
      %v986 = vperm.slane %v431, 0
      %v991 = vunpack.c.l.b16 %v398
      %v992 = vunpack.c.l.b16 %v399
      %v993 = vunpack.c.l.b16 %v400
      %v994 = vunpack.c.l.b16 %v401
      %v995 = vpack.c.b16 %v992, %v991
      %v996 = vpack.c.b16 %v994, %v993
      %999 = vmatpush.bf16.msra.mxu0 0
      %1000 = vmatpush.bf16.msra.mxu0 0
      %1001 = vmatpush.bf16.msra.mxu0 0
      %1002 = vmatpush.bf16.msra.mxu0 0
      %1003 = vmatpush.bf16.msra.mxu0 0
      %1004 = vmatpush.bf16.msra.mxu0 0
      %1005 = vmatpush.bf16.msra.mxu0 %v996
      %1006 = vmatpush.bf16.msra.mxu0 %v995
      %1007 = vmatmul.bf16.gmra.mxu0 %v535
      %v1008 = vpop.f32.mrf.mxu0
      %v1009 = vadd.f32 %v986, %v1008
      %v1010 = vpop.f32.mrf.mxu0
      %v1011 = vadd.f32 %v986, %v1010
      %1012 = vmatmul.bf16.gmra.mxu0 %v538
      %v1013 = vpop.f32.mrf.mxu0
      %v1014 = vadd.f32 %v986, %v1013
      %v1015 = vpop.f32.mrf.mxu0
      %1016 = vdwg.mxu0
      %1020 = vrot.lane.b32.xlu0 %v1009, 120
      %v1021 = vpop.permute.xlu0 %1020
      %1022 = vrot.lane.b32.xlu0 %v1011, 120
      %v1023 = vpop.permute.xlu0 %1022
      %1024 = vrot.lane.b32.xlu0 %v1014, 120
      %v1025 = vpop.permute.xlu0 %1024
      %1029 = vrot.lane.b32.xlu0 %v1009, 112
      %v1030 = vpop.permute.xlu0 %1029
      %1031 = vrot.lane.b32.xlu0 %v1011, 112
      %v1032 = vpop.permute.xlu0 %1031
      %1033 = vrot.lane.b32.xlu0 %v1014, 112
      %v1034 = vpop.permute.xlu0 %1033
      %1038 = vrot.lane.b32.xlu0 %v1009, 104
      %v1039 = vpop.permute.xlu0 %1038
      %1040 = vrot.lane.b32.xlu0 %v1011, 104
      %v1041 = vpop.permute.xlu0 %1040
      %1042 = vrot.lane.b32.xlu0 %v1014, 104
      %v1043 = vpop.permute.xlu0 %1042
      %v1047 = vrot.slane %v1030, 4
      %v1048 = vsel %vm589, %v1047, %v1009
      %v1049 = vrot.slane %v1009, 4
      %v1050 = vsel %vm589, %v1030, %v1049
      %v1052 = vunpack.c.l.s4 1983009808
      %v1053 = vunpack.c.0.s8 %v1052
      %v1054 = vperm.slane %v1048, %v1053
      %v1056 = vunpack.c.l.s4 1983009808
      %v1057 = vunpack.c.0.s8 %v1056
      %v1058 = vperm.slane %v1050, %v1057
      %v1059 = vrot.slane %v1039, 4
      %v1060 = vsel %vm589, %v1059, %v1021
      %v1061 = vrot.slane %v1021, 4
      %v1062 = vsel %vm589, %v1039, %v1061
      %v1064 = vunpack.c.l.s4 1983009808
      %v1065 = vunpack.c.0.s8 %v1064
      %v1066 = vperm.slane %v1060, %v1065
      %v1068 = vunpack.c.l.s4 1983009808
      %v1069 = vunpack.c.0.s8 %v1068
      %v1070 = vperm.slane %v1062, %v1069
      %v1071 = vrot.slane %v1066, 4
      %v1072 = vsel %vm589, %v1071, %v1054
      %v1073 = vrot.slane %v1054, 4
      %v1074 = vsel %vm589, %v1066, %v1073
      %v1076 = vunpack.c.l.s4 1934713408
      %v1077 = vunpack.c.0.s8 %v1076
      %v1078 = vperm.slane %v1072, %v1077
      %v1080 = vunpack.c.l.s4 1934713408
      %v1081 = vunpack.c.0.s8 %v1080
      %v1082 = vperm.slane %v1074, %v1081
      %v1083 = vrot.slane %v1070, 4
      %v1084 = vsel %vm589, %v1083, %v1058
      %v1085 = vrot.slane %v1058, 4
      %v1086 = vsel %vm589, %v1070, %v1085
      %v1088 = vunpack.c.l.s4 1934713408
      %v1089 = vunpack.c.0.s8 %v1088
      %v1090 = vperm.slane %v1084, %v1089
      %v1092 = vunpack.c.l.s4 1934713408
      %v1093 = vunpack.c.0.s8 %v1092
      %v1094 = vperm.slane %v1086, %v1093
      %v1095 = vrot.slane %v1078, 4
      %v1096 = vsel %vm589, 0.0, %v1095
      %v1097 = vrot.slane %v1082, 4
      %v1098 = vsel %vm589, 0.0, %v1097
      %v1099 = vrot.slane %v1090, 4
      %v1100 = vsel %vm589, 0.0, %v1099
      %v1101 = vrot.slane %v1094, 4
      %v1102 = vsel %vm589, 0.0, %v1101
      %v1103 = vrot.slane %v1032, 4
      %v1104 = vsel %vm589, %v1103, %v1011
      %v1105 = vrot.slane %v1011, 4
      %v1106 = vsel %vm589, %v1032, %v1105
      %v1108 = vunpack.c.l.s4 1983009808
      %v1109 = vunpack.c.0.s8 %v1108
      %v1110 = vperm.slane %v1104, %v1109
      %v1112 = vunpack.c.l.s4 1983009808
      %v1113 = vunpack.c.0.s8 %v1112
      %v1114 = vperm.slane %v1106, %v1113
      %v1115 = vrot.slane %v1041, 4
      %v1116 = vsel %vm589, %v1115, %v1023
      %v1117 = vrot.slane %v1023, 4
      %v1118 = vsel %vm589, %v1041, %v1117
      %v1120 = vunpack.c.l.s4 1983009808
      %v1121 = vunpack.c.0.s8 %v1120
      %v1122 = vperm.slane %v1116, %v1121
      %v1124 = vunpack.c.l.s4 1983009808
      %v1125 = vunpack.c.0.s8 %v1124
      %v1126 = vperm.slane %v1118, %v1125
      %v1127 = vrot.slane %v1122, 4
      %v1128 = vsel %vm589, %v1127, %v1110
      %v1129 = vrot.slane %v1110, 4
      %v1130 = vsel %vm589, %v1122, %v1129
      %v1132 = vunpack.c.l.s4 1934713408
      %v1133 = vunpack.c.0.s8 %v1132
      %v1134 = vperm.slane %v1128, %v1133
      %v1136 = vunpack.c.l.s4 1934713408
      %v1137 = vunpack.c.0.s8 %v1136
      %v1138 = vperm.slane %v1130, %v1137
      %v1139 = vrot.slane %v1126, 4
      %v1140 = vsel %vm589, %v1139, %v1114
      %v1141 = vrot.slane %v1114, 4
      %v1142 = vsel %vm589, %v1126, %v1141
      %v1144 = vunpack.c.l.s4 1934713408
      %v1145 = vunpack.c.0.s8 %v1144
      %v1146 = vperm.slane %v1140, %v1145
      %v1148 = vunpack.c.l.s4 1934713408
      %v1149 = vunpack.c.0.s8 %v1148
      %v1150 = vperm.slane %v1142, %v1149
      %v1151 = vrot.slane %v1134, 4
      %v1152 = vsel %vm589, 0.0, %v1151
      %v1153 = vrot.slane %v1138, 4
      %v1154 = vsel %vm589, 0.0, %v1153
      %v1155 = vrot.slane %v1146, 4
      %v1156 = vsel %vm589, 0.0, %v1155
      %v1157 = vrot.slane %v1150, 4
      %v1158 = vsel %vm589, 0.0, %v1157
      %v1159 = vrot.slane %v1034, 4
      %v1160 = vsel %vm589, %v1159, %v1014
      %v1161 = vrot.slane %v1014, 4
      %v1162 = vsel %vm589, %v1034, %v1161
      %v1164 = vunpack.c.l.s4 1983009808
      %v1165 = vunpack.c.0.s8 %v1164
      %v1166 = vperm.slane %v1160, %v1165
      %v1168 = vunpack.c.l.s4 1983009808
      %v1169 = vunpack.c.0.s8 %v1168
      %v1170 = vperm.slane %v1162, %v1169
      %v1171 = vrot.slane %v1043, 4
      %v1172 = vsel %vm589, %v1171, %v1025
      %v1173 = vrot.slane %v1025, 4
      %v1174 = vsel %vm589, %v1043, %v1173
      %v1176 = vunpack.c.l.s4 1983009808
      %v1177 = vunpack.c.0.s8 %v1176
      %v1178 = vperm.slane %v1172, %v1177
      %v1180 = vunpack.c.l.s4 1983009808
      %v1181 = vunpack.c.0.s8 %v1180
      %v1182 = vperm.slane %v1174, %v1181
      %v1183 = vrot.slane %v1178, 4
      %v1184 = vsel %vm589, %v1183, %v1166
      %v1185 = vrot.slane %v1166, 4
      %v1186 = vsel %vm589, %v1178, %v1185
      %v1188 = vunpack.c.l.s4 1934713408
      %v1189 = vunpack.c.0.s8 %v1188
      %v1190 = vperm.slane %v1184, %v1189
      %v1192 = vunpack.c.l.s4 1934713408
      %v1193 = vunpack.c.0.s8 %v1192
      %v1194 = vperm.slane %v1186, %v1193
      %v1195 = vrot.slane %v1182, 4
      %v1196 = vsel %vm589, %v1195, %v1170
      %v1197 = vrot.slane %v1170, 4
      %v1198 = vsel %vm589, %v1182, %v1197
      %v1200 = vunpack.c.l.s4 1934713408
      %v1201 = vunpack.c.0.s8 %v1200
      %v1202 = vperm.slane %v1196, %v1201
      %v1204 = vunpack.c.l.s4 1934713408
      %v1205 = vunpack.c.0.s8 %v1204
      %v1206 = vperm.slane %v1198, %v1205
      %v1207 = vrot.slane %v1190, 4
      %v1208 = vsel %vm589, 0.0, %v1207
      %v1209 = vrot.slane %v1194, 4
      %v1210 = vsel %vm589, 0.0, %v1209
      %v1211 = vrot.slane %v1202, 4
      %v1212 = vsel %vm589, 0.0, %v1211
      %v1213 = vrot.slane %v1206, 4
      %v1214 = vsel %vm589, 0.0, %v1213
      %v1215 = vlaneseq
      %v1216 = vand.u32 %v1215, 127
      %vm1217 = vcmp.lt.s32.totalorder %v1216, 17
      %v1218 = vsel %vm1217, 0.0, -1e+30
      %v1219 = vpack.c.bf16 %v620, %v620
      %v1220 = vpack.c.bf16 %v638, %v638
      %v1221 = vpack.c.bf16 %v624, %v624
      %v1222 = vpack.c.bf16 %v640, %v640
      %v1223 = vpack.c.bf16 %v632, %v632
      %v1224 = vpack.c.bf16 %v642, %v642
      %v1225 = vpack.c.bf16 %v636, %v636
      %v1226 = vpack.c.bf16 %v644, %v644
      %v1227 = vpack.c.bf16 %v676, %v676
      %v1228 = vpack.c.bf16 %v694, %v694
      %v1229 = vpack.c.bf16 %v680, %v680
      %v1230 = vpack.c.bf16 %v696, %v696
      %v1231 = vpack.c.bf16 %v688, %v688
      %v1232 = vpack.c.bf16 %v698, %v698
      %v1233 = vpack.c.bf16 %v692, %v692
      %v1234 = vpack.c.bf16 %v700, %v700
      %v1235 = vpack.c.bf16 %v732, %v732
      %v1236 = vpack.c.bf16 %v750, %v750
      %v1237 = vpack.c.bf16 %v736, %v736
      %v1238 = vpack.c.bf16 %v752, %v752
      %v1239 = vpack.c.bf16 %v744, %v744
      %v1240 = vpack.c.bf16 %v754, %v754
      %v1241 = vpack.c.bf16 %v748, %v748
      %v1242 = vpack.c.bf16 %v756, %v756
      %v1243 = vpack.c.bf16 %v849, %v849
      %v1244 = vpack.c.bf16 %v867, %v867
      %v1245 = vpack.c.bf16 %v853, %v853
      %v1246 = vpack.c.bf16 %v869, %v869
      %v1247 = vpack.c.bf16 %v861, %v861
      %v1248 = vpack.c.bf16 %v871, %v871
      %v1249 = vpack.c.bf16 %v865, %v865
      %v1250 = vpack.c.bf16 %v873, %v873
      %v1251 = vpack.c.bf16 %v905, %v905
      %v1252 = vpack.c.bf16 %v923, %v923
      %v1253 = vpack.c.bf16 %v909, %v909
      %v1254 = vpack.c.bf16 %v925, %v925
      %v1255 = vpack.c.bf16 %v917, %v917
      %v1256 = vpack.c.bf16 %v927, %v927
      %v1257 = vpack.c.bf16 %v921, %v921
      %v1258 = vpack.c.bf16 %v929, %v929
      %v1259 = vpack.c.bf16 %v961, %v961
      %v1260 = vpack.c.bf16 %v979, %v979
      %v1261 = vpack.c.bf16 %v965, %v965
      %v1262 = vpack.c.bf16 %v981, %v981
      %v1263 = vpack.c.bf16 %v973, %v973
      %v1264 = vpack.c.bf16 %v983, %v983
      %v1265 = vpack.c.bf16 %v977, %v977
      %v1266 = vpack.c.bf16 %v985, %v985
      %v1267 = vrot.slane %v1223, 4
      %vm1268 = vcmask 1047556
      %v1269 = vsel %vm1268, %v1267, %v1219
      %v1271 = vunpack.c.l.s4 1983009808
      %v1272 = vunpack.c.0.s8 %v1271
      %v1273 = vperm.slane %v1269, %v1272
      %v1274 = vrot.slane %v1225, 4
      %v1275 = vsel %vm1268, %v1274, %v1221
      %v1277 = vunpack.c.l.s4 1983009808
      %v1278 = vunpack.c.0.s8 %v1277
      %v1279 = vperm.slane %v1275, %v1278
      %v1280 = vrot.slane %v1279, 4
      %v1281 = vsel %vm1268, %v1280, %v1273
      %v1283 = vunpack.c.l.s4 1934713408
      %v1284 = vunpack.c.0.s8 %v1283
      %v1285 = vperm.slane %v1281, %v1284
      %v1286 = vrot.slane %v1285, 4
      %v1287 = vsel %vm1268, 0, %v1286
      %v1288 = vrot.slane %v1224, 4
      %v1289 = vsel %vm1268, %v1288, %v1220
      %v1291 = vunpack.c.l.s4 1983009808
      %v1292 = vunpack.c.0.s8 %v1291
      %v1293 = vperm.slane %v1289, %v1292
      %v1294 = vrot.slane %v1226, 4
      %v1295 = vsel %vm1268, %v1294, %v1222
      %v1297 = vunpack.c.l.s4 1983009808
      %v1298 = vunpack.c.0.s8 %v1297
      %v1299 = vperm.slane %v1295, %v1298
      %v1300 = vrot.slane %v1299, 4
      %v1301 = vsel %vm1268, %v1300, %v1293
      %v1303 = vunpack.c.l.s4 1934713408
      %v1304 = vunpack.c.0.s8 %v1303
      %v1305 = vperm.slane %v1301, %v1304
      %v1306 = vrot.slane %v1305, 4
      %v1307 = vsel %vm1268, 0, %v1306
      %v1308 = vrot.slane %v1231, 4
      %v1309 = vsel %vm1268, %v1308, %v1227
      %v1311 = vunpack.c.l.s4 1983009808
      %v1312 = vunpack.c.0.s8 %v1311
      %v1313 = vperm.slane %v1309, %v1312
      %v1314 = vrot.slane %v1233, 4
      %v1315 = vsel %vm1268, %v1314, %v1229
      %v1317 = vunpack.c.l.s4 1983009808
      %v1318 = vunpack.c.0.s8 %v1317
      %v1319 = vperm.slane %v1315, %v1318
      %v1320 = vrot.slane %v1319, 4
      %v1321 = vsel %vm1268, %v1320, %v1313
      %v1323 = vunpack.c.l.s4 1934713408
      %v1324 = vunpack.c.0.s8 %v1323
      %v1325 = vperm.slane %v1321, %v1324
      %v1326 = vrot.slane %v1325, 4
      %v1327 = vsel %vm1268, 0, %v1326
      %v1328 = vrot.slane %v1232, 4
      %v1329 = vsel %vm1268, %v1328, %v1228
      %v1331 = vunpack.c.l.s4 1983009808
      %v1332 = vunpack.c.0.s8 %v1331
      %v1333 = vperm.slane %v1329, %v1332
      %v1334 = vrot.slane %v1234, 4
      %v1335 = vsel %vm1268, %v1334, %v1230
      %v1337 = vunpack.c.l.s4 1983009808
      %v1338 = vunpack.c.0.s8 %v1337
      %v1339 = vperm.slane %v1335, %v1338
      %v1340 = vrot.slane %v1339, 4
      %v1341 = vsel %vm1268, %v1340, %v1333
      %v1343 = vunpack.c.l.s4 1934713408
      %v1344 = vunpack.c.0.s8 %v1343
      %v1345 = vperm.slane %v1341, %v1344
      %v1346 = vrot.slane %v1345, 4
      %v1347 = vsel %vm1268, 0, %v1346
      %v1348 = vrot.slane %v1239, 4
      %v1349 = vsel %vm1268, %v1348, %v1235
      %v1351 = vunpack.c.l.s4 1983009808
      %v1352 = vunpack.c.0.s8 %v1351
      %v1353 = vperm.slane %v1349, %v1352
      %v1354 = vrot.slane %v1241, 4
      %v1355 = vsel %vm1268, %v1354, %v1237
      %v1357 = vunpack.c.l.s4 1983009808
      %v1358 = vunpack.c.0.s8 %v1357
      %v1359 = vperm.slane %v1355, %v1358
      %v1360 = vrot.slane %v1359, 4
      %v1361 = vsel %vm1268, %v1360, %v1353
      %v1363 = vunpack.c.l.s4 1934713408
      %v1364 = vunpack.c.0.s8 %v1363
      %v1365 = vperm.slane %v1361, %v1364
      %v1366 = vrot.slane %v1365, 4
      %v1367 = vsel %vm1268, 0, %v1366
      %v1368 = vrot.slane %v1240, 4
      %v1369 = vsel %vm1268, %v1368, %v1236
      %v1371 = vunpack.c.l.s4 1983009808
      %v1372 = vunpack.c.0.s8 %v1371
      %v1373 = vperm.slane %v1369, %v1372
      %v1374 = vrot.slane %v1242, 4
      %v1375 = vsel %vm1268, %v1374, %v1238
      %v1377 = vunpack.c.l.s4 1983009808
      %v1378 = vunpack.c.0.s8 %v1377
      %v1379 = vperm.slane %v1375, %v1378
      %v1380 = vrot.slane %v1379, 4
      %v1381 = vsel %vm1268, %v1380, %v1373
      %v1383 = vunpack.c.l.s4 1934713408
      %v1384 = vunpack.c.0.s8 %v1383
      %v1385 = vperm.slane %v1381, %v1384
      %v1386 = vrot.slane %v1385, 4
      %v1387 = vsel %vm1268, 0, %v1386
      %v1390 = vpack.i.b16 %v1305, %v1285
      %v1391 = vshrl.u32 %v1285, 16
      %v1392 = vshrl.u32 %v1305, 16
      %v1393 = vpack.i.b16 %v1392, %v1391
      %v1396 = vpack.i.b16 %v1307, %v1287
      %v1397 = vshrl.u32 %v1287, 16
      %v1398 = vshrl.u32 %v1307, 16
      %v1399 = vpack.i.b16 %v1398, %v1397
      %v1402 = vpack.i.b16 %v1345, %v1325
      %v1403 = vshrl.u32 %v1325, 16
      %v1404 = vshrl.u32 %v1345, 16
      %v1405 = vpack.i.b16 %v1404, %v1403
      %v1408 = vpack.i.b16 %v1347, %v1327
      %v1409 = vshrl.u32 %v1327, 16
      %v1410 = vshrl.u32 %v1347, 16
      %v1411 = vpack.i.b16 %v1410, %v1409
      %v1414 = vpack.i.b16 %v1385, %v1365
      %v1415 = vshrl.u32 %v1365, 16
      %v1416 = vshrl.u32 %v1385, 16
      %v1417 = vpack.i.b16 %v1416, %v1415
      %v1420 = vpack.i.b16 %v1387, %v1367
      %v1421 = vshrl.u32 %v1367, 16
      %v1422 = vshrl.u32 %v1387, 16
      %v1423 = vpack.i.b16 %v1422, %v1421
      %1424 = vxpose.xlu0.c.b16.start [1/8] %v1243, 128
      %1425 = vxpose.xlu0.c.b16.cont [2/8] 0, 128
      %1426 = vxpose.xlu0.c.b16.cont [3/8] 0, 128
      %1427 = vxpose.xlu0.c.b16.cont [4/8] 0, 128
      %1428 = vxpose.xlu0.c.b16.cont [5/8] 0, 128
      %1429 = vxpose.xlu0.c.b16.cont [6/8] 0, 128
      %1430 = vxpose.xlu0.c.b16.cont [7/8] 0, 128
      %1431 = vxpose.xlu0.c.b16.end [8/8] 0, 128
      %v1432 = vpop.trf.xlu0
      %v1433 = vpop.trf.xlu0
      %v1434 = vpop.trf.xlu0
      %v1435 = vpop.trf.xlu0
      %v1436 = vpop.trf.xlu0
      %v1437 = vpop.trf.xlu0
      %v1438 = vpop.trf.xlu0
      %v1439 = vpop.trf.xlu0
      %1440 = vxpose.xlu0.c.b16.start [1/8] %v1244, 128
      %1441 = vxpose.xlu0.c.b16.cont [2/8] 0, 128
      %1442 = vxpose.xlu0.c.b16.cont [3/8] 0, 128
      %1443 = vxpose.xlu0.c.b16.cont [4/8] 0, 128
      %1444 = vxpose.xlu0.c.b16.cont [5/8] 0, 128
      %1445 = vxpose.xlu0.c.b16.cont [6/8] 0, 128
      %1446 = vxpose.xlu0.c.b16.cont [7/8] 0, 128
      %1447 = vxpose.xlu0.c.b16.end [8/8] 0, 128
      %v1448 = vpop.trf.xlu0
      %v1449 = vpop.trf.xlu0
      %v1450 = vpop.trf.xlu0
      %v1451 = vpop.trf.xlu0
      %v1452 = vpop.trf.xlu0
      %v1453 = vpop.trf.xlu0
      %v1454 = vpop.trf.xlu0
      %v1455 = vpop.trf.xlu0
      %1456 = vxpose.xlu0.c.b16.start [1/8] %v1245, 128
      %1457 = vxpose.xlu0.c.b16.cont [2/8] 0, 128
      %1458 = vxpose.xlu0.c.b16.cont [3/8] 0, 128
      %1459 = vxpose.xlu0.c.b16.cont [4/8] 0, 128
      %1460 = vxpose.xlu0.c.b16.cont [5/8] 0, 128
      %1461 = vxpose.xlu0.c.b16.cont [6/8] 0, 128
      %1462 = vxpose.xlu0.c.b16.cont [7/8] 0, 128
      %1463 = vxpose.xlu0.c.b16.end [8/8] 0, 128
      %v1464 = vpop.trf.xlu0
      %v1465 = vpop.trf.xlu0
      %v1466 = vpop.trf.xlu0
      %v1467 = vpop.trf.xlu0
      %v1468 = vpop.trf.xlu0
      %v1469 = vpop.trf.xlu0
      %v1470 = vpop.trf.xlu0
      %v1471 = vpop.trf.xlu0
      %1472 = vxpose.xlu0.c.b16.start [1/8] %v1246, 128
      %1473 = vxpose.xlu0.c.b16.cont [2/8] 0, 128
      %1474 = vxpose.xlu0.c.b16.cont [3/8] 0, 128
      %1475 = vxpose.xlu0.c.b16.cont [4/8] 0, 128
      %1476 = vxpose.xlu0.c.b16.cont [5/8] 0, 128
      %1477 = vxpose.xlu0.c.b16.cont [6/8] 0, 128
      %1478 = vxpose.xlu0.c.b16.cont [7/8] 0, 128
      %1479 = vxpose.xlu0.c.b16.end [8/8] 0, 128
      %v1480 = vpop.trf.xlu0
      %v1481 = vpop.trf.xlu0
      %v1482 = vpop.trf.xlu0
      %v1483 = vpop.trf.xlu0
      %v1484 = vpop.trf.xlu0
      %v1485 = vpop.trf.xlu0
      %v1486 = vpop.trf.xlu0
      %v1487 = vpop.trf.xlu0
      %1488 = vxpose.xlu0.c.b16.start [1/8] %v1247, 128
      %1489 = vxpose.xlu0.c.b16.cont [2/8] 0, 128
      %1490 = vxpose.xlu0.c.b16.cont [3/8] 0, 128
      %1491 = vxpose.xlu0.c.b16.cont [4/8] 0, 128
      %1492 = vxpose.xlu0.c.b16.cont [5/8] 0, 128
      %1493 = vxpose.xlu0.c.b16.cont [6/8] 0, 128
      %1494 = vxpose.xlu0.c.b16.cont [7/8] 0, 128
      %1495 = vxpose.xlu0.c.b16.end [8/8] 0, 128
      %v1496 = vpop.trf.xlu0
      %v1497 = vpop.trf.xlu0
      %v1498 = vpop.trf.xlu0
      %v1499 = vpop.trf.xlu0
      %v1500 = vpop.trf.xlu0
      %v1501 = vpop.trf.xlu0
      %v1502 = vpop.trf.xlu0
      %v1503 = vpop.trf.xlu0
      %1504 = vxpose.xlu0.c.b16.start [1/8] %v1248, 128
      %1505 = vxpose.xlu0.c.b16.cont [2/8] 0, 128
      %1506 = vxpose.xlu0.c.b16.cont [3/8] 0, 128
      %1507 = vxpose.xlu0.c.b16.cont [4/8] 0, 128
      %1508 = vxpose.xlu0.c.b16.cont [5/8] 0, 128
      %1509 = vxpose.xlu0.c.b16.cont [6/8] 0, 128
      %1510 = vxpose.xlu0.c.b16.cont [7/8] 0, 128
      %1511 = vxpose.xlu0.c.b16.end [8/8] 0, 128
      %v1512 = vpop.trf.xlu0
      %v1513 = vpop.trf.xlu0
      %v1514 = vpop.trf.xlu0
      %v1515 = vpop.trf.xlu0
      %v1516 = vpop.trf.xlu0
      %v1517 = vpop.trf.xlu0
      %v1518 = vpop.trf.xlu0
      %v1519 = vpop.trf.xlu0
      %1520 = vxpose.xlu0.c.b16.start [1/8] %v1249, 128
      %1521 = vxpose.xlu0.c.b16.cont [2/8] 0, 128
      %1522 = vxpose.xlu0.c.b16.cont [3/8] 0, 128
      %1523 = vxpose.xlu0.c.b16.cont [4/8] 0, 128
      %1524 = vxpose.xlu0.c.b16.cont [5/8] 0, 128
      %1525 = vxpose.xlu0.c.b16.cont [6/8] 0, 128
      %1526 = vxpose.xlu0.c.b16.cont [7/8] 0, 128
      %1527 = vxpose.xlu0.c.b16.end [8/8] 0, 128
      %v1528 = vpop.trf.xlu0
      %v1529 = vpop.trf.xlu0
      %v1530 = vpop.trf.xlu0
      %v1531 = vpop.trf.xlu0
      %v1532 = vpop.trf.xlu0
      %v1533 = vpop.trf.xlu0
      %v1534 = vpop.trf.xlu0
      %v1535 = vpop.trf.xlu0
      %1536 = vxpose.xlu0.c.b16.start [1/8] %v1250, 128
      %1537 = vxpose.xlu0.c.b16.cont [2/8] 0, 128
      %1538 = vxpose.xlu0.c.b16.cont [3/8] 0, 128
      %1539 = vxpose.xlu0.c.b16.cont [4/8] 0, 128
      %1540 = vxpose.xlu0.c.b16.cont [5/8] 0, 128
      %1541 = vxpose.xlu0.c.b16.cont [6/8] 0, 128
      %1542 = vxpose.xlu0.c.b16.cont [7/8] 0, 128
      %1543 = vxpose.xlu0.c.b16.end [8/8] 0, 128
      %v1544 = vpop.trf.xlu0
      %v1545 = vpop.trf.xlu0
      %v1546 = vpop.trf.xlu0
      %v1547 = vpop.trf.xlu0
      %v1548 = vpop.trf.xlu0
      %v1549 = vpop.trf.xlu0
      %v1550 = vpop.trf.xlu0
      %v1551 = vpop.trf.xlu0
      %1552 = vxpose.xlu0.c.b16.start [1/8] %v1251, 128
      %1553 = vxpose.xlu0.c.b16.cont [2/8] 0, 128
      %1554 = vxpose.xlu0.c.b16.cont [3/8] 0, 128
      %1555 = vxpose.xlu0.c.b16.cont [4/8] 0, 128
      %1556 = vxpose.xlu0.c.b16.cont [5/8] 0, 128
      %1557 = vxpose.xlu0.c.b16.cont [6/8] 0, 128
      %1558 = vxpose.xlu0.c.b16.cont [7/8] 0, 128
      %1559 = vxpose.xlu0.c.b16.end [8/8] 0, 128
      %v1560 = vpop.trf.xlu0
      %v1561 = vpop.trf.xlu0
      %v1562 = vpop.trf.xlu0
      %v1563 = vpop.trf.xlu0
      %v1564 = vpop.trf.xlu0
      %v1565 = vpop.trf.xlu0
      %v1566 = vpop.trf.xlu0
      %v1567 = vpop.trf.xlu0
      %1568 = vxpose.xlu0.c.b16.start [1/8] %v1252, 128
      %1569 = vxpose.xlu0.c.b16.cont [2/8] 0, 128
      %1570 = vxpose.xlu0.c.b16.cont [3/8] 0, 128
      %1571 = vxpose.xlu0.c.b16.cont [4/8] 0, 128
      %1572 = vxpose.xlu0.c.b16.cont [5/8] 0, 128
      %1573 = vxpose.xlu0.c.b16.cont [6/8] 0, 128
      %1574 = vxpose.xlu0.c.b16.cont [7/8] 0, 128
      %1575 = vxpose.xlu0.c.b16.end [8/8] 0, 128
      %v1576 = vpop.trf.xlu0
      %v1577 = vpop.trf.xlu0
      %v1578 = vpop.trf.xlu0
      %v1579 = vpop.trf.xlu0
      %v1580 = vpop.trf.xlu0
      %v1581 = vpop.trf.xlu0
      %v1582 = vpop.trf.xlu0
      %v1583 = vpop.trf.xlu0
      %1584 = vxpose.xlu0.c.b16.start [1/8] %v1253, 128
      %1585 = vxpose.xlu0.c.b16.cont [2/8] 0, 128
      %1586 = vxpose.xlu0.c.b16.cont [3/8] 0, 128
      %1587 = vxpose.xlu0.c.b16.cont [4/8] 0, 128
      %1588 = vxpose.xlu0.c.b16.cont [5/8] 0, 128
      %1589 = vxpose.xlu0.c.b16.cont [6/8] 0, 128
      %1590 = vxpose.xlu0.c.b16.cont [7/8] 0, 128
      %1591 = vxpose.xlu0.c.b16.end [8/8] 0, 128
      %v1592 = vpop.trf.xlu0
      %v1593 = vpop.trf.xlu0
      %v1594 = vpop.trf.xlu0
      %v1595 = vpop.trf.xlu0
      %v1596 = vpop.trf.xlu0
      %v1597 = vpop.trf.xlu0
      %v1598 = vpop.trf.xlu0
      %v1599 = vpop.trf.xlu0
      %1600 = vxpose.xlu0.c.b16.start [1/8] %v1254, 128
      %1601 = vxpose.xlu0.c.b16.cont [2/8] 0, 128
      %1602 = vxpose.xlu0.c.b16.cont [3/8] 0, 128
      %1603 = vxpose.xlu0.c.b16.cont [4/8] 0, 128
      %1604 = vxpose.xlu0.c.b16.cont [5/8] 0, 128
      %1605 = vxpose.xlu0.c.b16.cont [6/8] 0, 128
      %1606 = vxpose.xlu0.c.b16.cont [7/8] 0, 128
      %1607 = vxpose.xlu0.c.b16.end [8/8] 0, 128
      %v1608 = vpop.trf.xlu0
      %v1609 = vpop.trf.xlu0
      %v1610 = vpop.trf.xlu0
      %v1611 = vpop.trf.xlu0
      %v1612 = vpop.trf.xlu0
      %v1613 = vpop.trf.xlu0
      %v1614 = vpop.trf.xlu0
      %v1615 = vpop.trf.xlu0
      %1616 = vxpose.xlu0.c.b16.start [1/8] %v1255, 128
      %1617 = vxpose.xlu0.c.b16.cont [2/8] 0, 128
      %1618 = vxpose.xlu0.c.b16.cont [3/8] 0, 128
      %1619 = vxpose.xlu0.c.b16.cont [4/8] 0, 128
      %1620 = vxpose.xlu0.c.b16.cont [5/8] 0, 128
      %1621 = vxpose.xlu0.c.b16.cont [6/8] 0, 128
      %1622 = vxpose.xlu0.c.b16.cont [7/8] 0, 128
      %1623 = vxpose.xlu0.c.b16.end [8/8] 0, 128
      %v1624 = vpop.trf.xlu0
      %v1625 = vpop.trf.xlu0
      %v1626 = vpop.trf.xlu0
      %v1627 = vpop.trf.xlu0
      %v1628 = vpop.trf.xlu0
      %v1629 = vpop.trf.xlu0
      %v1630 = vpop.trf.xlu0
      %v1631 = vpop.trf.xlu0
      %1632 = vxpose.xlu0.c.b16.start [1/8] %v1256, 128
      %1633 = vxpose.xlu0.c.b16.cont [2/8] 0, 128
      %1634 = vxpose.xlu0.c.b16.cont [3/8] 0, 128
      %1635 = vxpose.xlu0.c.b16.cont [4/8] 0, 128
      %1636 = vxpose.xlu0.c.b16.cont [5/8] 0, 128
      %1637 = vxpose.xlu0.c.b16.cont [6/8] 0, 128
      %1638 = vxpose.xlu0.c.b16.cont [7/8] 0, 128
      %1639 = vxpose.xlu0.c.b16.end [8/8] 0, 128
      %v1640 = vpop.trf.xlu0
      %v1641 = vpop.trf.xlu0
      %v1642 = vpop.trf.xlu0
      %v1643 = vpop.trf.xlu0
      %v1644 = vpop.trf.xlu0
      %v1645 = vpop.trf.xlu0
      %v1646 = vpop.trf.xlu0
      %v1647 = vpop.trf.xlu0
      %1648 = vxpose.xlu0.c.b16.start [1/8] %v1257, 128
      %1649 = vxpose.xlu0.c.b16.cont [2/8] 0, 128
      %1650 = vxpose.xlu0.c.b16.cont [3/8] 0, 128
      %1651 = vxpose.xlu0.c.b16.cont [4/8] 0, 128
      %1652 = vxpose.xlu0.c.b16.cont [5/8] 0, 128
      %1653 = vxpose.xlu0.c.b16.cont [6/8] 0, 128
      %1654 = vxpose.xlu0.c.b16.cont [7/8] 0, 128
      %1655 = vxpose.xlu0.c.b16.end [8/8] 0, 128
      %v1656 = vpop.trf.xlu0
      %v1657 = vpop.trf.xlu0
      %v1658 = vpop.trf.xlu0
      %v1659 = vpop.trf.xlu0
      %v1660 = vpop.trf.xlu0
      %v1661 = vpop.trf.xlu0
      %v1662 = vpop.trf.xlu0
      %v1663 = vpop.trf.xlu0
      %1664 = vxpose.xlu0.c.b16.start [1/8] %v1258, 128
      %1665 = vxpose.xlu0.c.b16.cont [2/8] 0, 128
      %1666 = vxpose.xlu0.c.b16.cont [3/8] 0, 128
      %1667 = vxpose.xlu0.c.b16.cont [4/8] 0, 128
      %1668 = vxpose.xlu0.c.b16.cont [5/8] 0, 128
      %1669 = vxpose.xlu0.c.b16.cont [6/8] 0, 128
      %1670 = vxpose.xlu0.c.b16.cont [7/8] 0, 128
      %1671 = vxpose.xlu0.c.b16.end [8/8] 0, 128
      %v1672 = vpop.trf.xlu0
      %v1673 = vpop.trf.xlu0
      %v1674 = vpop.trf.xlu0
      %v1675 = vpop.trf.xlu0
      %v1676 = vpop.trf.xlu0
      %v1677 = vpop.trf.xlu0
      %v1678 = vpop.trf.xlu0
      %v1679 = vpop.trf.xlu0
      %1680 = vxpose.xlu0.c.b16.start [1/8] %v1259, 128
      %1681 = vxpose.xlu0.c.b16.cont [2/8] 0, 128
      %1682 = vxpose.xlu0.c.b16.cont [3/8] 0, 128
      %1683 = vxpose.xlu0.c.b16.cont [4/8] 0, 128
      %1684 = vxpose.xlu0.c.b16.cont [5/8] 0, 128
      %1685 = vxpose.xlu0.c.b16.cont [6/8] 0, 128
      %1686 = vxpose.xlu0.c.b16.cont [7/8] 0, 128
      %1687 = vxpose.xlu0.c.b16.end [8/8] 0, 128
      %v1688 = vpop.trf.xlu0
      %v1689 = vpop.trf.xlu0
      %v1690 = vpop.trf.xlu0
      %v1691 = vpop.trf.xlu0
      %v1692 = vpop.trf.xlu0
      %v1693 = vpop.trf.xlu0
      %v1694 = vpop.trf.xlu0
      %v1695 = vpop.trf.xlu0
      %1696 = vxpose.xlu0.c.b16.start [1/8] %v1260, 128
      %1697 = vxpose.xlu0.c.b16.cont [2/8] 0, 128
      %1698 = vxpose.xlu0.c.b16.cont [3/8] 0, 128
      %1699 = vxpose.xlu0.c.b16.cont [4/8] 0, 128
      %1700 = vxpose.xlu0.c.b16.cont [5/8] 0, 128
      %1701 = vxpose.xlu0.c.b16.cont [6/8] 0, 128
      %1702 = vxpose.xlu0.c.b16.cont [7/8] 0, 128
      %1703 = vxpose.xlu0.c.b16.end [8/8] 0, 128
      %v1704 = vpop.trf.xlu0
      %v1705 = vpop.trf.xlu0
      %v1706 = vpop.trf.xlu0
      %v1707 = vpop.trf.xlu0
      %v1708 = vpop.trf.xlu0
      %v1709 = vpop.trf.xlu0
      %v1710 = vpop.trf.xlu0
      %v1711 = vpop.trf.xlu0
      %1712 = vxpose.xlu0.c.b16.start [1/8] %v1261, 128
      %1713 = vxpose.xlu0.c.b16.cont [2/8] 0, 128
      %1714 = vxpose.xlu0.c.b16.cont [3/8] 0, 128
      %1715 = vxpose.xlu0.c.b16.cont [4/8] 0, 128
      %1716 = vxpose.xlu0.c.b16.cont [5/8] 0, 128
      %1717 = vxpose.xlu0.c.b16.cont [6/8] 0, 128
      %1718 = vxpose.xlu0.c.b16.cont [7/8] 0, 128
      %1719 = vxpose.xlu0.c.b16.end [8/8] 0, 128
      %v1720 = vpop.trf.xlu0
      %v1721 = vpop.trf.xlu0
      %v1722 = vpop.trf.xlu0
      %v1723 = vpop.trf.xlu0
      %v1724 = vpop.trf.xlu0
      %v1725 = vpop.trf.xlu0
      %v1726 = vpop.trf.xlu0
      %v1727 = vpop.trf.xlu0
      %1728 = vxpose.xlu0.c.b16.start [1/8] %v1262, 128
      %1729 = vxpose.xlu0.c.b16.cont [2/8] 0, 128
      %1730 = vxpose.xlu0.c.b16.cont [3/8] 0, 128
      %1731 = vxpose.xlu0.c.b16.cont [4/8] 0, 128
      %1732 = vxpose.xlu0.c.b16.cont [5/8] 0, 128
      %1733 = vxpose.xlu0.c.b16.cont [6/8] 0, 128
      %1734 = vxpose.xlu0.c.b16.cont [7/8] 0, 128
      %1735 = vxpose.xlu0.c.b16.end [8/8] 0, 128
      %v1736 = vpop.trf.xlu0
      %v1737 = vpop.trf.xlu0
      %v1738 = vpop.trf.xlu0
      %v1739 = vpop.trf.xlu0
      %v1740 = vpop.trf.xlu0
      %v1741 = vpop.trf.xlu0
      %v1742 = vpop.trf.xlu0
      %v1743 = vpop.trf.xlu0
      %1744 = vxpose.xlu0.c.b16.start [1/8] %v1263, 128
      %1745 = vxpose.xlu0.c.b16.cont [2/8] 0, 128
      %1746 = vxpose.xlu0.c.b16.cont [3/8] 0, 128
      %1747 = vxpose.xlu0.c.b16.cont [4/8] 0, 128
      %1748 = vxpose.xlu0.c.b16.cont [5/8] 0, 128
      %1749 = vxpose.xlu0.c.b16.cont [6/8] 0, 128
      %1750 = vxpose.xlu0.c.b16.cont [7/8] 0, 128
      %1751 = vxpose.xlu0.c.b16.end [8/8] 0, 128
      %v1752 = vpop.trf.xlu0
      %v1753 = vpop.trf.xlu0
      %v1754 = vpop.trf.xlu0
      %v1755 = vpop.trf.xlu0
      %v1756 = vpop.trf.xlu0
      %v1757 = vpop.trf.xlu0
      %v1758 = vpop.trf.xlu0
      %v1759 = vpop.trf.xlu0
      %1760 = vxpose.xlu0.c.b16.start [1/8] %v1264, 128
      %1761 = vxpose.xlu0.c.b16.cont [2/8] 0, 128
      %1762 = vxpose.xlu0.c.b16.cont [3/8] 0, 128
      %1763 = vxpose.xlu0.c.b16.cont [4/8] 0, 128
      %1764 = vxpose.xlu0.c.b16.cont [5/8] 0, 128
      %1765 = vxpose.xlu0.c.b16.cont [6/8] 0, 128
      %1766 = vxpose.xlu0.c.b16.cont [7/8] 0, 128
      %1767 = vxpose.xlu0.c.b16.end [8/8] 0, 128
      %v1768 = vpop.trf.xlu0
      %v1769 = vpop.trf.xlu0
      %v1770 = vpop.trf.xlu0
      %v1771 = vpop.trf.xlu0
      %v1772 = vpop.trf.xlu0
      %v1773 = vpop.trf.xlu0
      %v1774 = vpop.trf.xlu0
      %v1775 = vpop.trf.xlu0
      %1776 = vxpose.xlu0.c.b16.start [1/8] %v1265, 128
      %1777 = vxpose.xlu0.c.b16.cont [2/8] 0, 128
      %1778 = vxpose.xlu0.c.b16.cont [3/8] 0, 128
      %1779 = vxpose.xlu0.c.b16.cont [4/8] 0, 128
      %1780 = vxpose.xlu0.c.b16.cont [5/8] 0, 128
      %1781 = vxpose.xlu0.c.b16.cont [6/8] 0, 128
      %1782 = vxpose.xlu0.c.b16.cont [7/8] 0, 128
      %1783 = vxpose.xlu0.c.b16.end [8/8] 0, 128
      %v1784 = vpop.trf.xlu0
      %v1785 = vpop.trf.xlu0
      %v1786 = vpop.trf.xlu0
      %v1787 = vpop.trf.xlu0
      %v1788 = vpop.trf.xlu0
      %v1789 = vpop.trf.xlu0
      %v1790 = vpop.trf.xlu0
      %v1791 = vpop.trf.xlu0
      %1792 = vxpose.xlu0.c.b16.start [1/8] %v1266, 128
      %1793 = vxpose.xlu0.c.b16.cont [2/8] 0, 128
      %1794 = vxpose.xlu0.c.b16.cont [3/8] 0, 128
      %1795 = vxpose.xlu0.c.b16.cont [4/8] 0, 128
      %1796 = vxpose.xlu0.c.b16.cont [5/8] 0, 128
      %1797 = vxpose.xlu0.c.b16.cont [6/8] 0, 128
      %1798 = vxpose.xlu0.c.b16.cont [7/8] 0, 128
      %1799 = vxpose.xlu0.c.b16.end [8/8] 0, 128
      %v1800 = vpop.trf.xlu0
      %v1801 = vpop.trf.xlu0
      %v1802 = vpop.trf.xlu0
      %v1803 = vpop.trf.xlu0
      %v1804 = vpop.trf.xlu0
      %v1805 = vpop.trf.xlu0
      %v1806 = vpop.trf.xlu0
      %v1807 = vpop.trf.xlu0
      %v1808 = vrot.slane %v1496, 4
      %v1809 = vsel %vm1268, %v1808, %v1432
      %v1811 = vunpack.c.l.s4 1983009808
      %v1812 = vunpack.c.0.s8 %v1811
      %v1813 = vperm.slane %v1809, %v1812
      %v1814 = vrot.slane %v1528, 4
      %v1815 = vsel %vm1268, %v1814, %v1464
      %v1817 = vunpack.c.l.s4 1983009808
      %v1818 = vunpack.c.0.s8 %v1817
      %v1819 = vperm.slane %v1815, %v1818
      %v1820 = vrot.slane %v1624, 4
      %v1821 = vsel %vm1268, %v1820, %v1560
      %v1823 = vunpack.c.l.s4 1983009808
      %v1824 = vunpack.c.0.s8 %v1823
      %v1825 = vperm.slane %v1821, %v1824
      %v1826 = vrot.slane %v1656, 4
      %v1827 = vsel %vm1268, %v1826, %v1592
      %v1829 = vunpack.c.l.s4 1983009808
      %v1830 = vunpack.c.0.s8 %v1829
      %v1831 = vperm.slane %v1827, %v1830
      %v1832 = vrot.slane %v1819, 4
      %v1833 = vsel %vm1268, %v1832, %v1813
      %v1834 = vrot.slane %v1813, 4
      %v1835 = vsel %vm1268, %v1819, %v1834
      %v1837 = vunpack.c.l.s4 1934713408
      %v1838 = vunpack.c.0.s8 %v1837
      %v1839 = vperm.slane %v1833, %v1838
      %v1841 = vunpack.c.l.s4 1934713408
      %v1842 = vunpack.c.0.s8 %v1841
      %v1843 = vperm.slane %v1835, %v1842
      %v1844 = vrot.slane %v1831, 4
      %v1845 = vsel %vm1268, %v1844, %v1825
      %v1846 = vrot.slane %v1825, 4
      %v1847 = vsel %vm1268, %v1831, %v1846
      %v1849 = vunpack.c.l.s4 1934713408
      %v1850 = vunpack.c.0.s8 %v1849
      %v1851 = vperm.slane %v1845, %v1850
      %v1853 = vunpack.c.l.s4 1934713408
      %v1854 = vunpack.c.0.s8 %v1853
      %v1855 = vperm.slane %v1847, %v1854
      %v1856 = vrot.slane %v1851, 4
      %v1857 = vsel %vm1268, %v1856, %v1839
      %v1858 = vrot.slane %v1839, 4
      %v1859 = vsel %vm1268, %v1851, %v1858
      %v1860 = vrot.slane %v1855, 4
      %v1861 = vsel %vm1268, %v1860, %v1843
      %v1862 = vrot.slane %v1843, 4
      %v1863 = vsel %vm1268, %v1855, %v1862
      %v1864 = vrot.slane %v1512, 4
      %v1865 = vsel %vm1268, %v1864, %v1448
      %v1867 = vunpack.c.l.s4 1983009808
      %v1868 = vunpack.c.0.s8 %v1867
      %v1869 = vperm.slane %v1865, %v1868
      %v1870 = vrot.slane %v1544, 4
      %v1871 = vsel %vm1268, %v1870, %v1480
      %v1873 = vunpack.c.l.s4 1983009808
      %v1874 = vunpack.c.0.s8 %v1873
      %v1875 = vperm.slane %v1871, %v1874
      %v1876 = vrot.slane %v1640, 4
      %v1877 = vsel %vm1268, %v1876, %v1576
      %v1879 = vunpack.c.l.s4 1983009808
      %v1880 = vunpack.c.0.s8 %v1879
      %v1881 = vperm.slane %v1877, %v1880
      %v1882 = vrot.slane %v1672, 4
      %v1883 = vsel %vm1268, %v1882, %v1608
      %v1885 = vunpack.c.l.s4 1983009808
      %v1886 = vunpack.c.0.s8 %v1885
      %v1887 = vperm.slane %v1883, %v1886
      %v1888 = vrot.slane %v1875, 4
      %v1889 = vsel %vm1268, %v1888, %v1869
      %v1890 = vrot.slane %v1869, 4
      %v1891 = vsel %vm1268, %v1875, %v1890
      %v1893 = vunpack.c.l.s4 1934713408
      %v1894 = vunpack.c.0.s8 %v1893
      %v1895 = vperm.slane %v1889, %v1894
      %v1897 = vunpack.c.l.s4 1934713408
      %v1898 = vunpack.c.0.s8 %v1897
      %v1899 = vperm.slane %v1891, %v1898
      %v1900 = vrot.slane %v1887, 4
      %v1901 = vsel %vm1268, %v1900, %v1881
      %v1902 = vrot.slane %v1881, 4
      %v1903 = vsel %vm1268, %v1887, %v1902
      %v1905 = vunpack.c.l.s4 1934713408
      %v1906 = vunpack.c.0.s8 %v1905
      %v1907 = vperm.slane %v1901, %v1906
      %v1909 = vunpack.c.l.s4 1934713408
      %v1910 = vunpack.c.0.s8 %v1909
      %v1911 = vperm.slane %v1903, %v1910
      %v1912 = vrot.slane %v1907, 4
      %v1913 = vsel %vm1268, %v1912, %v1895
      %v1914 = vrot.slane %v1895, 4
      %v1915 = vsel %vm1268, %v1907, %v1914
      %v1916 = vrot.slane %v1911, 4
      %v1917 = vsel %vm1268, %v1916, %v1899
      %v1918 = vrot.slane %v1899, 4
      %v1919 = vsel %vm1268, %v1911, %v1918
      %v1920 = vrot.slane %v1752, 4
      %v1921 = vsel %vm1268, %v1920, %v1688
      %v1923 = vunpack.c.l.s4 1983009808
      %v1924 = vunpack.c.0.s8 %v1923
      %v1925 = vperm.slane %v1921, %v1924
      %v1926 = vrot.slane %v1784, 4
      %v1927 = vsel %vm1268, %v1926, %v1720
      %v1929 = vunpack.c.l.s4 1983009808
      %v1930 = vunpack.c.0.s8 %v1929
      %v1931 = vperm.slane %v1927, %v1930
      %v1932 = vrot.slane %v1931, 4
      %v1933 = vsel %vm1268, %v1932, %v1925
      %v1934 = vrot.slane %v1925, 4
      %v1935 = vsel %vm1268, %v1931, %v1934
      %v1937 = vunpack.c.l.s4 1934713408
      %v1938 = vunpack.c.0.s8 %v1937
      %v1939 = vperm.slane %v1933, %v1938
      %v1941 = vunpack.c.l.s4 1934713408
      %v1942 = vunpack.c.0.s8 %v1941
      %v1943 = vperm.slane %v1935, %v1942
      %v1944 = vrot.slane %v1939, 4
      %v1945 = vsel %vm1268, 0, %v1944
      %v1946 = vrot.slane %v1943, 4
      %v1947 = vsel %vm1268, 0, %v1946
      %v1948 = vrot.slane %v1768, 4
      %v1949 = vsel %vm1268, %v1948, %v1704
      %v1951 = vunpack.c.l.s4 1983009808
      %v1952 = vunpack.c.0.s8 %v1951
      %v1953 = vperm.slane %v1949, %v1952
      %v1954 = vrot.slane %v1800, 4
      %v1955 = vsel %vm1268, %v1954, %v1736
      %v1957 = vunpack.c.l.s4 1983009808
      %v1958 = vunpack.c.0.s8 %v1957
      %v1959 = vperm.slane %v1955, %v1958
      %v1960 = vrot.slane %v1959, 4
      %v1961 = vsel %vm1268, %v1960, %v1953
      %v1962 = vrot.slane %v1953, 4
      %v1963 = vsel %vm1268, %v1959, %v1962
      %v1965 = vunpack.c.l.s4 1934713408
      %v1966 = vunpack.c.0.s8 %v1965
      %v1967 = vperm.slane %v1961, %v1966
      %v1969 = vunpack.c.l.s4 1934713408
      %v1970 = vunpack.c.0.s8 %v1969
      %v1971 = vperm.slane %v1963, %v1970
      %v1972 = vrot.slane %v1967, 4
      %v1973 = vsel %vm1268, 0, %v1972
      %v1974 = vrot.slane %v1971, 4
      %v1975 = vsel %vm1268, 0, %v1974
      %v1978 = vpack.i.b16 %v1913, %v1857
      %v1980 = vshrl.u32 %v1857, 16
      %v1981 = vshrl.u32 %v1913, 16
      %v1982 = vpack.i.b16 %v1981, %v1980
      %v1986 = vpack.i.b16 %v1915, %v1859
      %v1988 = vshrl.u32 %v1859, 16
      %v1989 = vshrl.u32 %v1915, 16
      %v1990 = vpack.i.b16 %v1989, %v1988
      %v1994 = vpack.i.b16 %v1917, %v1861
      %v1996 = vshrl.u32 %v1861, 16
      %v1997 = vshrl.u32 %v1917, 16
      %v1998 = vpack.i.b16 %v1997, %v1996
      %v2002 = vpack.i.b16 %v1919, %v1863
      %v2004 = vshrl.u32 %v1863, 16
      %v2005 = vshrl.u32 %v1919, 16
      %v2006 = vpack.i.b16 %v2005, %v2004
      %v2010 = vpack.i.b16 %v1967, %v1939
      %v2012 = vshrl.u32 %v1939, 16
      %v2013 = vshrl.u32 %v1967, 16
      %v2014 = vpack.i.b16 %v2013, %v2012
      %v2018 = vpack.i.b16 %v1973, %v1945
      %v2020 = vshrl.u32 %v1945, 16
      %v2021 = vshrl.u32 %v1973, 16
      %v2022 = vpack.i.b16 %v2021, %v2020
      %v2026 = vpack.i.b16 %v1971, %v1943
      %v2028 = vshrl.u32 %v1943, 16
      %v2029 = vshrl.u32 %v1971, 16
      %v2030 = vpack.i.b16 %v2029, %v2028
      %v2034 = vpack.i.b16 %v1975, %v1947
      %v2036 = vshrl.u32 %v1947, 16
      %v2037 = vshrl.u32 %v1975, 16
      %v2038 = vpack.i.b16 %v2037, %v2036
      %2040 = vxpose.xlu0.c.b16.start [1/8] %v1978, 128
      %2041 = vxpose.xlu0.c.b16.cont [2/8] %v2010, 128
      %2042 = vxpose.xlu0.c.b16.cont [3/8] 0, 128
      %2043 = vxpose.xlu0.c.b16.cont [4/8] 0, 128
      %2044 = vxpose.xlu0.c.b16.cont [5/8] 0, 128
      %2045 = vxpose.xlu0.c.b16.cont [6/8] 0, 128
      %2046 = vxpose.xlu0.c.b16.cont [7/8] 0, 128
      %2047 = vxpose.xlu0.c.b16.end [8/8] 0, 128
      %v2048 = vpop.trf.xlu0
      %v2049 = vpop.trf.xlu0
      %v2050 = vpop.trf.xlu0
      %v2051 = vpop.trf.xlu0
      %v2052 = vpop.trf.xlu0
      %v2053 = vpop.trf.xlu0
      %v2054 = vpop.trf.xlu0
      %v2055 = vpop.trf.xlu0
      %2056 = vxpose.xlu0.c.b16.start [1/8] %v1982, 128
      %2057 = vxpose.xlu0.c.b16.cont [2/8] %v2014, 128
      %2058 = vxpose.xlu0.c.b16.cont [3/8] 0, 128
      %2059 = vxpose.xlu0.c.b16.cont [4/8] 0, 128
      %2060 = vxpose.xlu0.c.b16.cont [5/8] 0, 128
      %2061 = vxpose.xlu0.c.b16.cont [6/8] 0, 128
      %2062 = vxpose.xlu0.c.b16.cont [7/8] 0, 128
      %2063 = vxpose.xlu0.c.b16.end [8/8] 0, 128
      %v2064 = vpop.trf.xlu0
      %v2065 = vpop.trf.xlu0
      %v2066 = vpop.trf.xlu0
      %v2067 = vpop.trf.xlu0
      %v2068 = vpop.trf.xlu0
      %v2069 = vpop.trf.xlu0
      %v2070 = vpop.trf.xlu0
      %v2071 = vpop.trf.xlu0
      %2072 = vxpose.xlu0.c.b16.start [1/8] %v1986, 128
      %2073 = vxpose.xlu0.c.b16.cont [2/8] %v2018, 128
      %2074 = vxpose.xlu0.c.b16.cont [3/8] 0, 128
      %2075 = vxpose.xlu0.c.b16.cont [4/8] 0, 128
      %2076 = vxpose.xlu0.c.b16.cont [5/8] 0, 128
      %2077 = vxpose.xlu0.c.b16.cont [6/8] 0, 128
      %2078 = vxpose.xlu0.c.b16.cont [7/8] 0, 128
      %2079 = vxpose.xlu0.c.b16.end [8/8] 0, 128
      %v2080 = vpop.trf.xlu0
      %v2081 = vpop.trf.xlu0
      %v2082 = vpop.trf.xlu0
      %v2083 = vpop.trf.xlu0
      %v2084 = vpop.trf.xlu0
      %v2085 = vpop.trf.xlu0
      %v2086 = vpop.trf.xlu0
      %v2087 = vpop.trf.xlu0
      %2088 = vxpose.xlu0.c.b16.start [1/8] %v1990, 128
      %2089 = vxpose.xlu0.c.b16.cont [2/8] %v2022, 128
      %2090 = vxpose.xlu0.c.b16.cont [3/8] 0, 128
      %2091 = vxpose.xlu0.c.b16.cont [4/8] 0, 128
      %2092 = vxpose.xlu0.c.b16.cont [5/8] 0, 128
      %2093 = vxpose.xlu0.c.b16.cont [6/8] 0, 128
      %2094 = vxpose.xlu0.c.b16.cont [7/8] 0, 128
      %2095 = vxpose.xlu0.c.b16.end [8/8] 0, 128
      %v2096 = vpop.trf.xlu0
      %v2097 = vpop.trf.xlu0
      %v2098 = vpop.trf.xlu0
      %v2099 = vpop.trf.xlu0
      %v2100 = vpop.trf.xlu0
      %v2101 = vpop.trf.xlu0
      %v2102 = vpop.trf.xlu0
      %v2103 = vpop.trf.xlu0
      %2104 = vxpose.xlu0.c.b16.start [1/8] %v1994, 128
      %2105 = vxpose.xlu0.c.b16.cont [2/8] %v2026, 128
      %2106 = vxpose.xlu0.c.b16.cont [3/8] 0, 128
      %2107 = vxpose.xlu0.c.b16.cont [4/8] 0, 128
      %2108 = vxpose.xlu0.c.b16.cont [5/8] 0, 128
      %2109 = vxpose.xlu0.c.b16.cont [6/8] 0, 128
      %2110 = vxpose.xlu0.c.b16.cont [7/8] 0, 128
      %2111 = vxpose.xlu0.c.b16.end [8/8] 0, 128
      %v2112 = vpop.trf.xlu0
      %v2113 = vpop.trf.xlu0
      %v2114 = vpop.trf.xlu0
      %v2115 = vpop.trf.xlu0
      %v2116 = vpop.trf.xlu0
      %v2117 = vpop.trf.xlu0
      %v2118 = vpop.trf.xlu0
      %v2119 = vpop.trf.xlu0
      %2120 = vxpose.xlu0.c.b16.start [1/8] %v1998, 128
      %2121 = vxpose.xlu0.c.b16.cont [2/8] %v2030, 128
      %2122 = vxpose.xlu0.c.b16.cont [3/8] 0, 128
      %2123 = vxpose.xlu0.c.b16.cont [4/8] 0, 128
      %2124 = vxpose.xlu0.c.b16.cont [5/8] 0, 128
      %2125 = vxpose.xlu0.c.b16.cont [6/8] 0, 128
      %2126 = vxpose.xlu0.c.b16.cont [7/8] 0, 128
      %2127 = vxpose.xlu0.c.b16.end [8/8] 0, 128
      %v2128 = vpop.trf.xlu0
      %v2129 = vpop.trf.xlu0
      %v2130 = vpop.trf.xlu0
      %v2131 = vpop.trf.xlu0
      %v2132 = vpop.trf.xlu0
      %v2133 = vpop.trf.xlu0
      %v2134 = vpop.trf.xlu0
      %v2135 = vpop.trf.xlu0
      %2136 = vxpose.xlu0.c.b16.start [1/8] %v2002, 128
      %2137 = vxpose.xlu0.c.b16.cont [2/8] %v2034, 128
      %2138 = vxpose.xlu0.c.b16.cont [3/8] 0, 128
      %2139 = vxpose.xlu0.c.b16.cont [4/8] 0, 128
      %2140 = vxpose.xlu0.c.b16.cont [5/8] 0, 128
      %2141 = vxpose.xlu0.c.b16.cont [6/8] 0, 128
      %2142 = vxpose.xlu0.c.b16.cont [7/8] 0, 128
      %2143 = vxpose.xlu0.c.b16.end [8/8] 0, 128
      %v2144 = vpop.trf.xlu0
      %v2145 = vpop.trf.xlu0
      %v2146 = vpop.trf.xlu0
      %v2147 = vpop.trf.xlu0
      %v2148 = vpop.trf.xlu0
      %v2149 = vpop.trf.xlu0
      %v2150 = vpop.trf.xlu0
      %v2151 = vpop.trf.xlu0
      %2152 = vxpose.xlu0.c.b16.start [1/8] %v2006, 128
      %2153 = vxpose.xlu0.c.b16.cont [2/8] %v2038, 128
      %2154 = vxpose.xlu0.c.b16.cont [3/8] 0, 128
      %2155 = vxpose.xlu0.c.b16.cont [4/8] 0, 128
      %2156 = vxpose.xlu0.c.b16.cont [5/8] 0, 128
      %2157 = vxpose.xlu0.c.b16.cont [6/8] 0, 128
      %2158 = vxpose.xlu0.c.b16.cont [7/8] 0, 128
      %2159 = vxpose.xlu0.c.b16.end [8/8] 0, 128
      %v2160 = vpop.trf.xlu0
      %v2161 = vpop.trf.xlu0
      %v2162 = vpop.trf.xlu0
      %v2163 = vpop.trf.xlu0
      %v2164 = vpop.trf.xlu0
      %v2165 = vpop.trf.xlu0
      %v2166 = vpop.trf.xlu0
      %v2167 = vpop.trf.xlu0
      %v2168 = vrot.slane %v2112, 4
      %v2169 = vsel %vm1268, %v2168, %v2048
      %v2171 = vunpack.c.l.s4 1983009808
      %v2172 = vunpack.c.0.s8 %v2171
      %v2173 = vperm.slane %v2169, %v2172
      %v2174 = vrot.slane %v2144, 4
      %v2175 = vsel %vm1268, %v2174, %v2080
      %v2177 = vunpack.c.l.s4 1983009808
      %v2178 = vunpack.c.0.s8 %v2177
      %v2179 = vperm.slane %v2175, %v2178
      %v2180 = vrot.slane %v2179, 4
      %v2181 = vsel %vm1268, %v2180, %v2173
      %v2183 = vunpack.c.l.s4 1934713408
      %v2184 = vunpack.c.0.s8 %v2183
      %v2185 = vperm.slane %v2181, %v2184
      %v2186 = vrot.slane %v2185, 4
      %v2187 = vsel %vm1268, 0, %v2186
      %v2188 = vrot.slane %v2128, 4
      %v2189 = vsel %vm1268, %v2188, %v2064
      %v2191 = vunpack.c.l.s4 1983009808
      %v2192 = vunpack.c.0.s8 %v2191
      %v2193 = vperm.slane %v2189, %v2192
      %v2194 = vrot.slane %v2160, 4
      %v2195 = vsel %vm1268, %v2194, %v2096
      %v2197 = vunpack.c.l.s4 1983009808
      %v2198 = vunpack.c.0.s8 %v2197
      %v2199 = vperm.slane %v2195, %v2198
      %v2200 = vrot.slane %v2199, 4
      %v2201 = vsel %vm1268, %v2200, %v2193
      %v2203 = vunpack.c.l.s4 1934713408
      %v2204 = vunpack.c.0.s8 %v2203
      %v2205 = vperm.slane %v2201, %v2204
      %v2206 = vrot.slane %v2205, 4
      %v2207 = vsel %vm1268, 0, %v2206
      %v2210 = vpack.i.b16 %v2205, %v2185
      %v2211 = vshrl.u32 %v2185, 16
      %v2212 = vshrl.u32 %v2205, 16
      %v2213 = vpack.i.b16 %v2212, %v2211
      %v2216 = vpack.i.b16 %v2207, %v2187
      %v2217 = vshrl.u32 %v2187, 16
      %v2218 = vshrl.u32 %v2207, 16
      %v2219 = vpack.i.b16 %v2218, %v2217
      %v2220 = vunpack.c.l.b16 %v1390
      %v2221 = vunpack.c.l.b16 %v1402
      %v2222 = vunpack.c.l.b16 %v1414
      %v2223 = vpack.c.b16 %v2221, %v2220
      %v2224 = vpack.c.b16 %v2222, %v2222
      %vm2225 = vcmask 64512
      %v2227 = vsel %vm2225, %v2223, 0
      %v2230 = vsel %vm2225, %v2224, 0
      %vm2232 = vcmask 1043456
      %v2234 = vsel %vm2232, %v2210, 0
      %2236 = vmatpush.bf16.msra.mxu0 0
      %2237 = vmatpush.bf16.msra.mxu0 0
      %2238 = vmatpush.bf16.msra.mxu0 0
      %2239 = vmatpush.bf16.msra.mxu0 0
      %2240 = vmatpush.bf16.msra.mxu0 0
      %2241 = vmatpush.bf16.msra.mxu0 0
      %2242 = vmatpush.bf16.msra.mxu0 0
      %2243 = vmatpush.bf16.msra.mxu0 %v2234
      %2244 = vmatmul.bf16.gmra.mxu0 %v2227
      %v2245 = vpop.f32.mrf.mxu0
      %v2246 = vadd.f32 0.0, %v2245
      %v2247 = vpop.f32.mrf.mxu0
      %v2248 = vadd.f32 0.0, %v2247
      %2249 = vmatmul.bf16.gmra.mxu0 %v2230
      %v2250 = vpop.f32.mrf.mxu0
      %v2251 = vadd.f32 0.0, %v2250
      %v2252 = vpop.f32.mrf.mxu0
      %2253 = vdwg.mxu0
      %v2254 = vunpack.c.l.b16 %v1393
      %v2255 = vunpack.c.l.b16 %v1405
      %v2256 = vunpack.c.l.b16 %v1417
      %v2257 = vpack.c.b16 %v2255, %v2254
      %v2258 = vpack.c.b16 %v2256, %v2256
      %v2260 = vsel %vm2225, %v2257, 0
      %v2263 = vsel %vm2225, %v2258, 0
      %v2266 = vsel %vm2232, %v2213, 0
      %2268 = vmatpush.bf16.msra.mxu0 0
      %2269 = vmatpush.bf16.msra.mxu0 0
      %2270 = vmatpush.bf16.msra.mxu0 0
      %2271 = vmatpush.bf16.msra.mxu0 0
      %2272 = vmatpush.bf16.msra.mxu0 0
      %2273 = vmatpush.bf16.msra.mxu0 0
      %2274 = vmatpush.bf16.msra.mxu0 0
      %2275 = vmatpush.bf16.msra.mxu0 %v2266
      %2276 = vmatmul.bf16.gmra.mxu0 %v2260
      %v2277 = vpop.f32.mrf.mxu0
      %v2278 = vadd.f32 0.0, %v2277
      %v2279 = vpop.f32.mrf.mxu0
      %v2280 = vadd.f32 0.0, %v2279
      %2281 = vmatmul.bf16.gmra.mxu0 %v2263
      %v2282 = vpop.f32.mrf.mxu0
      %v2283 = vadd.f32 0.0, %v2282
      %v2284 = vpop.f32.mrf.mxu0
      %2285 = vdwg.mxu0
      %v2286 = vunpack.c.l.b16 %v1396
      %v2287 = vunpack.c.l.b16 %v1408
      %v2288 = vunpack.c.l.b16 %v1420
      %v2289 = vpack.c.b16 %v2287, %v2286
      %v2290 = vpack.c.b16 %v2288, %v2288
      %v2292 = vsel %vm2225, %v2289, 0
      %v2295 = vsel %vm2225, %v2290, 0
      %v2298 = vsel %vm2232, %v2216, 0
      %2300 = vmatpush.bf16.msra.mxu0 0
      %2301 = vmatpush.bf16.msra.mxu0 0
      %2302 = vmatpush.bf16.msra.mxu0 0
      %2303 = vmatpush.bf16.msra.mxu0 0
      %2304 = vmatpush.bf16.msra.mxu0 0
      %2305 = vmatpush.bf16.msra.mxu0 0
      %2306 = vmatpush.bf16.msra.mxu0 0
      %2307 = vmatpush.bf16.msra.mxu0 %v2298
      %2308 = vmatmul.bf16.gmra.mxu0 %v2292
      %v2309 = vpop.f32.mrf.mxu0
      %v2310 = vadd.f32 0.0, %v2309
      %v2311 = vpop.f32.mrf.mxu0
      %v2312 = vadd.f32 0.0, %v2311
      %2313 = vmatmul.bf16.gmra.mxu0 %v2295
      %v2314 = vpop.f32.mrf.mxu0
      %v2315 = vadd.f32 0.0, %v2314
      %v2316 = vpop.f32.mrf.mxu0
      %2317 = vdwg.mxu0
      %v2318 = vunpack.c.l.b16 %v1399
      %v2319 = vunpack.c.l.b16 %v1411
      %v2320 = vunpack.c.l.b16 %v1423
      %v2321 = vpack.c.b16 %v2319, %v2318
      %v2322 = vpack.c.b16 %v2320, %v2320
      %v2324 = vsel %vm2225, %v2321, 0
      %v2327 = vsel %vm2225, %v2322, 0
      %v2330 = vsel %vm2232, %v2219, 0
      %2332 = vmatpush.bf16.msra.mxu0 0
      %2333 = vmatpush.bf16.msra.mxu0 0
      %2334 = vmatpush.bf16.msra.mxu0 0
      %2335 = vmatpush.bf16.msra.mxu0 0
      %2336 = vmatpush.bf16.msra.mxu0 0
      %2337 = vmatpush.bf16.msra.mxu0 0
      %2338 = vmatpush.bf16.msra.mxu0 0
      %2339 = vmatpush.bf16.msra.mxu0 %v2330
      %2340 = vmatmul.bf16.gmra.mxu0 %v2324
      %v2341 = vpop.f32.mrf.mxu0
      %v2342 = vadd.f32 0.0, %v2341
      %v2343 = vpop.f32.mrf.mxu0
      %v2344 = vadd.f32 0.0, %v2343
      %2345 = vmatmul.bf16.gmra.mxu0 %v2327
      %v2346 = vpop.f32.mrf.mxu0
      %v2347 = vadd.f32 0.0, %v2346
      %v2348 = vpop.f32.mrf.mxu0
      %2349 = vdwg.mxu0
      %v2350 = vmul.f32 %v2246, 0.35355338
      %v2351 = vmul.f32 %v2248, 0.35355338
      %v2352 = vmul.f32 %v2251, 0.35355338
      %v2353 = vmul.f32 %v2278, 0.35355338
      %v2354 = vmul.f32 %v2280, 0.35355338
      %v2355 = vmul.f32 %v2283, 0.35355338
      %v2356 = vmul.f32 %v2310, 0.35355338
      %v2357 = vmul.f32 %v2312, 0.35355338
      %v2358 = vmul.f32 %v2315, 0.35355338
      %v2359 = vmul.f32 %v2342, 0.35355338
      %v2360 = vmul.f32 %v2344, 0.35355338
      %v2361 = vmul.f32 %v2347, 0.35355338
      %v2362 = vadd.f32 %v2350, %v1218
      %v2363 = vadd.f32 %v2351, %v1218
      %v2364 = vadd.f32 %v2352, %v1218
      %v2365 = vadd.f32 %v2353, %v1218
      %v2366 = vadd.f32 %v2354, %v1218
      %v2367 = vadd.f32 %v2355, %v1218
      %v2368 = vadd.f32 %v2356, %v1218
      %v2369 = vadd.f32 %v2357, %v1218
      %v2370 = vadd.f32 %v2358, %v1218
      %v2371 = vadd.f32 %v2359, %v1218
      %v2372 = vadd.f32 %v2360, %v1218
      %v2373 = vadd.f32 %v2361, %v1218
      %vm2374 = vcmask 195584
      %v2375 = vsel %vm2374, %v2362, -inf
      %2376 = vmax.xlane.f32.xlu0 %v2375
      %v2377 = vpop.xlane.xlu0 %2376
      %v2378 = vsel %vm2374, %v2363, -inf
      %2379 = vmax.xlane.f32.xlu0 %v2378
      %v2380 = vpop.xlane.xlu0 %2379
      %v2381 = vsel %vm2374, %v2364, -inf
      %2382 = vmax.xlane.f32.xlu0 %v2381
      %v2383 = vpop.xlane.xlu0 %2382
      %v2384 = vsel %vm2374, %v2365, -inf
      %2385 = vmax.xlane.f32.xlu0 %v2384
      %v2386 = vpop.xlane.xlu0 %2385
      %v2387 = vsel %vm2374, %v2366, -inf
      %2388 = vmax.xlane.f32.xlu0 %v2387
      %v2389 = vpop.xlane.xlu0 %2388
      %v2390 = vsel %vm2374, %v2367, -inf
      %2391 = vmax.xlane.f32.xlu0 %v2390
      %v2392 = vpop.xlane.xlu0 %2391
      %v2393 = vsel %vm2374, %v2368, -inf
      %2394 = vmax.xlane.f32.xlu0 %v2393
      %v2395 = vpop.xlane.xlu0 %2394
      %v2396 = vsel %vm2374, %v2369, -inf
      %2397 = vmax.xlane.f32.xlu0 %v2396
      %v2398 = vpop.xlane.xlu0 %2397
      %v2399 = vsel %vm2374, %v2370, -inf
      %2400 = vmax.xlane.f32.xlu0 %v2399
      %v2401 = vpop.xlane.xlu0 %2400
      %v2402 = vsel %vm2374, %v2371, -inf
      %2403 = vmax.xlane.f32.xlu0 %v2402
      %v2404 = vpop.xlane.xlu0 %2403
      %v2405 = vsel %vm2374, %v2372, -inf
      %2406 = vmax.xlane.f32.xlu0 %v2405
      %v2407 = vpop.xlane.xlu0 %2406
      %v2408 = vsel %vm2374, %v2373, -inf
      %2409 = vmax.xlane.f32.xlu0 %v2408
      %v2410 = vpop.xlane.xlu0 %2409
      %v2411 = vsub.f32 %v2362, %v2377
      %v2412 = vsub.f32 %v2363, %v2380
      %v2413 = vsub.f32 %v2364, %v2383
      %v2414 = vsub.f32 %v2365, %v2386
      %v2415 = vsub.f32 %v2366, %v2389
      %v2416 = vsub.f32 %v2367, %v2392
      %v2417 = vsub.f32 %v2368, %v2395
      %v2418 = vsub.f32 %v2369, %v2398
      %v2419 = vsub.f32 %v2370, %v2401
      %v2420 = vsub.f32 %v2371, %v2404
      %v2421 = vsub.f32 %v2372, %v2407
      %v2422 = vsub.f32 %v2373, %v2410
      %v2423 = vmul.f32 %v2411, 1.442695
      %v2424 = vpow.pop %v2423
      %v2425 = vmul.f32 %v2412, 1.442695
      %v2426 = vpow.pop %v2425
      %v2427 = vmul.f32 %v2413, 1.442695
      %v2428 = vpow.pop %v2427
      %v2429 = vmul.f32 %v2414, 1.442695
      %v2430 = vpow.pop %v2429
      %v2431 = vmul.f32 %v2415, 1.442695
      %v2432 = vpow.pop %v2431
      %v2433 = vmul.f32 %v2416, 1.442695
      %v2434 = vpow.pop %v2433
      %v2435 = vmul.f32 %v2417, 1.442695
      %v2436 = vpow.pop %v2435
      %v2437 = vmul.f32 %v2418, 1.442695
      %v2438 = vpow.pop %v2437
      %v2439 = vmul.f32 %v2419, 1.442695
      %v2440 = vpow.pop %v2439
      %v2441 = vmul.f32 %v2420, 1.442695
      %v2442 = vpow.pop %v2441
      %v2443 = vmul.f32 %v2421, 1.442695
      %v2444 = vpow.pop %v2443
      %v2445 = vmul.f32 %v2422, 1.442695
      %v2446 = vpow.pop %v2445
      %v2447 = vsel %vm2374, %v2424, 0.0
      %2448 = vadd.xlane.f32.xlu0 %v2447
      %v2449 = vpop.xlane.xlu0 %2448
      %v2450 = vsel %vm2374, %v2426, 0.0
      %2451 = vadd.xlane.f32.xlu0 %v2450
      %v2452 = vpop.xlane.xlu0 %2451
      %v2453 = vsel %vm2374, %v2428, 0.0
      %2454 = vadd.xlane.f32.xlu0 %v2453
      %v2455 = vpop.xlane.xlu0 %2454
      %v2456 = vsel %vm2374, %v2430, 0.0
      %2457 = vadd.xlane.f32.xlu0 %v2456
      %v2458 = vpop.xlane.xlu0 %2457
      %v2459 = vsel %vm2374, %v2432, 0.0
      %2460 = vadd.xlane.f32.xlu0 %v2459
      %v2461 = vpop.xlane.xlu0 %2460
      %v2462 = vsel %vm2374, %v2434, 0.0
      %2463 = vadd.xlane.f32.xlu0 %v2462
      %v2464 = vpop.xlane.xlu0 %2463
      %v2465 = vsel %vm2374, %v2436, 0.0
      %2466 = vadd.xlane.f32.xlu0 %v2465
      %v2467 = vpop.xlane.xlu0 %2466
      %v2468 = vsel %vm2374, %v2438, 0.0
      %2469 = vadd.xlane.f32.xlu0 %v2468
      %v2470 = vpop.xlane.xlu0 %2469
      %v2471 = vsel %vm2374, %v2440, 0.0
      %2472 = vadd.xlane.f32.xlu0 %v2471
      %v2473 = vpop.xlane.xlu0 %2472
      %v2474 = vsel %vm2374, %v2442, 0.0
      %2475 = vadd.xlane.f32.xlu0 %v2474
      %v2476 = vpop.xlane.xlu0 %2475
      %v2477 = vsel %vm2374, %v2444, 0.0
      %2478 = vadd.xlane.f32.xlu0 %v2477
      %v2479 = vpop.xlane.xlu0 %2478
      %v2480 = vsel %vm2374, %v2446, 0.0
      %2481 = vadd.xlane.f32.xlu0 %v2480
      %v2482 = vpop.xlane.xlu0 %2481
      %v2483 = vrcp.pop %v2449
      %v2484 = vrcp.pop %v2452
      %v2485 = vrcp.pop %v2455
      %v2486 = vrcp.pop %v2458
      %v2487 = vrcp.pop %v2461
      %v2488 = vrcp.pop %v2464
      %v2489 = vrcp.pop %v2467
      %v2490 = vrcp.pop %v2470
      %v2491 = vrcp.pop %v2473
      %v2492 = vrcp.pop %v2476
      %v2493 = vrcp.pop %v2479
      %v2494 = vrcp.pop %v2482
      %v2495 = vmul.f32 %v2424, %v2483
      %v2496 = vmul.f32 %v2426, %v2484
      %v2497 = vmul.f32 %v2428, %v2485
      %v2498 = vmul.f32 %v2430, %v2486
      %v2499 = vmul.f32 %v2432, %v2487
      %v2500 = vmul.f32 %v2434, %v2488
      %v2501 = vmul.f32 %v2436, %v2489
      %v2502 = vmul.f32 %v2438, %v2490
      %v2503 = vmul.f32 %v2440, %v2491
      %v2504 = vmul.f32 %v2442, %v2492
      %v2505 = vmul.f32 %v2444, %v2493
      %v2506 = vmul.f32 %v2446, %v2494
      %v2507 = vpack.c.bf16 %v2495, %v2495
      %v2508 = vpack.c.bf16 %v2496, %v2496
      %v2509 = vpack.c.bf16 %v2497, %v2497
      %v2510 = vpack.c.bf16 %v2498, %v2498
      %v2511 = vpack.c.bf16 %v2499, %v2499
      %v2512 = vpack.c.bf16 %v2500, %v2500
      %v2513 = vpack.c.bf16 %v2501, %v2501
      %v2514 = vpack.c.bf16 %v2502, %v2502
      %v2515 = vpack.c.bf16 %v2503, %v2503
      %v2516 = vpack.c.bf16 %v2504, %v2504
      %v2517 = vpack.c.bf16 %v2505, %v2505
      %v2518 = vpack.c.bf16 %v2506, %v2506
      %v2519 = vpack.c.bf16 %v1078, %v1078
      %v2520 = vpack.c.bf16 %v1096, %v1096
      %v2521 = vpack.c.bf16 %v1082, %v1082
      %v2522 = vpack.c.bf16 %v1098, %v1098
      %v2523 = vpack.c.bf16 %v1090, %v1090
      %v2524 = vpack.c.bf16 %v1100, %v1100
      %v2525 = vpack.c.bf16 %v1094, %v1094
      %v2526 = vpack.c.bf16 %v1102, %v1102
      %v2527 = vpack.c.bf16 %v1134, %v1134
      %v2528 = vpack.c.bf16 %v1152, %v1152
      %v2529 = vpack.c.bf16 %v1138, %v1138
      %v2530 = vpack.c.bf16 %v1154, %v1154
      %v2531 = vpack.c.bf16 %v1146, %v1146
      %v2532 = vpack.c.bf16 %v1156, %v1156
      %v2533 = vpack.c.bf16 %v1150, %v1150
      %v2534 = vpack.c.bf16 %v1158, %v1158
      %v2535 = vpack.c.bf16 %v1190, %v1190
      %v2536 = vpack.c.bf16 %v1208, %v1208
      %v2537 = vpack.c.bf16 %v1194, %v1194
      %v2538 = vpack.c.bf16 %v1210, %v1210
      %v2539 = vpack.c.bf16 %v1202, %v1202
      %v2540 = vpack.c.bf16 %v1212, %v1212
      %v2541 = vpack.c.bf16 %v1206, %v1206
      %v2542 = vpack.c.bf16 %v1214, %v1214
      %2543 = vxpose.xlu0.c.b16.start [1/8] %v2519, 128
      %2544 = vxpose.xlu0.c.b16.cont [2/8] 0, 128
      %2545 = vxpose.xlu0.c.b16.cont [3/8] 0, 128
      %2546 = vxpose.xlu0.c.b16.cont [4/8] 0, 128
      %2547 = vxpose.xlu0.c.b16.cont [5/8] 0, 128
      %2548 = vxpose.xlu0.c.b16.cont [6/8] 0, 128
      %2549 = vxpose.xlu0.c.b16.cont [7/8] 0, 128
      %2550 = vxpose.xlu0.c.b16.end [8/8] 0, 128
      %v2551 = vpop.trf.xlu0
      %v2552 = vpop.trf.xlu0
      %v2553 = vpop.trf.xlu0
      %v2554 = vpop.trf.xlu0
      %v2555 = vpop.trf.xlu0
      %v2556 = vpop.trf.xlu0
      %v2557 = vpop.trf.xlu0
      %v2558 = vpop.trf.xlu0
      %2559 = vxpose.xlu0.c.b16.start [1/8] %v2520, 128
      %2560 = vxpose.xlu0.c.b16.cont [2/8] 0, 128
      %2561 = vxpose.xlu0.c.b16.cont [3/8] 0, 128
      %2562 = vxpose.xlu0.c.b16.cont [4/8] 0, 128
      %2563 = vxpose.xlu0.c.b16.cont [5/8] 0, 128
      %2564 = vxpose.xlu0.c.b16.cont [6/8] 0, 128
      %2565 = vxpose.xlu0.c.b16.cont [7/8] 0, 128
      %2566 = vxpose.xlu0.c.b16.end [8/8] 0, 128
      %v2567 = vpop.trf.xlu0
      %v2568 = vpop.trf.xlu0
      %v2569 = vpop.trf.xlu0
      %v2570 = vpop.trf.xlu0
      %v2571 = vpop.trf.xlu0
      %v2572 = vpop.trf.xlu0
      %v2573 = vpop.trf.xlu0
      %v2574 = vpop.trf.xlu0
      %2575 = vxpose.xlu0.c.b16.start [1/8] %v2521, 128
      %2576 = vxpose.xlu0.c.b16.cont [2/8] 0, 128
      %2577 = vxpose.xlu0.c.b16.cont [3/8] 0, 128
      %2578 = vxpose.xlu0.c.b16.cont [4/8] 0, 128
      %2579 = vxpose.xlu0.c.b16.cont [5/8] 0, 128
      %2580 = vxpose.xlu0.c.b16.cont [6/8] 0, 128
      %2581 = vxpose.xlu0.c.b16.cont [7/8] 0, 128
      %2582 = vxpose.xlu0.c.b16.end [8/8] 0, 128
      %v2583 = vpop.trf.xlu0
      %v2584 = vpop.trf.xlu0
      %v2585 = vpop.trf.xlu0
      %v2586 = vpop.trf.xlu0
      %v2587 = vpop.trf.xlu0
      %v2588 = vpop.trf.xlu0
      %v2589 = vpop.trf.xlu0
      %v2590 = vpop.trf.xlu0
      %2591 = vxpose.xlu0.c.b16.start [1/8] %v2522, 128
      %2592 = vxpose.xlu0.c.b16.cont [2/8] 0, 128
      %2593 = vxpose.xlu0.c.b16.cont [3/8] 0, 128
      %2594 = vxpose.xlu0.c.b16.cont [4/8] 0, 128
      %2595 = vxpose.xlu0.c.b16.cont [5/8] 0, 128
      %2596 = vxpose.xlu0.c.b16.cont [6/8] 0, 128
      %2597 = vxpose.xlu0.c.b16.cont [7/8] 0, 128
      %2598 = vxpose.xlu0.c.b16.end [8/8] 0, 128
      %v2599 = vpop.trf.xlu0
      %v2600 = vpop.trf.xlu0
      %v2601 = vpop.trf.xlu0
      %v2602 = vpop.trf.xlu0
      %v2603 = vpop.trf.xlu0
      %v2604 = vpop.trf.xlu0
      %v2605 = vpop.trf.xlu0
      %v2606 = vpop.trf.xlu0
      %2607 = vxpose.xlu0.c.b16.start [1/8] %v2523, 128
      %2608 = vxpose.xlu0.c.b16.cont [2/8] 0, 128
      %2609 = vxpose.xlu0.c.b16.cont [3/8] 0, 128
      %2610 = vxpose.xlu0.c.b16.cont [4/8] 0, 128
      %2611 = vxpose.xlu0.c.b16.cont [5/8] 0, 128
      %2612 = vxpose.xlu0.c.b16.cont [6/8] 0, 128
      %2613 = vxpose.xlu0.c.b16.cont [7/8] 0, 128
      %2614 = vxpose.xlu0.c.b16.end [8/8] 0, 128
      %v2615 = vpop.trf.xlu0
      %v2616 = vpop.trf.xlu0
      %v2617 = vpop.trf.xlu0
      %v2618 = vpop.trf.xlu0
      %v2619 = vpop.trf.xlu0
      %v2620 = vpop.trf.xlu0
      %v2621 = vpop.trf.xlu0
      %v2622 = vpop.trf.xlu0
      %2623 = vxpose.xlu0.c.b16.start [1/8] %v2524, 128
      %2624 = vxpose.xlu0.c.b16.cont [2/8] 0, 128
      %2625 = vxpose.xlu0.c.b16.cont [3/8] 0, 128
      %2626 = vxpose.xlu0.c.b16.cont [4/8] 0, 128
      %2627 = vxpose.xlu0.c.b16.cont [5/8] 0, 128
      %2628 = vxpose.xlu0.c.b16.cont [6/8] 0, 128
      %2629 = vxpose.xlu0.c.b16.cont [7/8] 0, 128
      %2630 = vxpose.xlu0.c.b16.end [8/8] 0, 128
      %v2631 = vpop.trf.xlu0
      %v2632 = vpop.trf.xlu0
      %v2633 = vpop.trf.xlu0
      %v2634 = vpop.trf.xlu0
      %v2635 = vpop.trf.xlu0
      %v2636 = vpop.trf.xlu0
      %v2637 = vpop.trf.xlu0
      %v2638 = vpop.trf.xlu0
      %2639 = vxpose.xlu0.c.b16.start [1/8] %v2525, 128
      %2640 = vxpose.xlu0.c.b16.cont [2/8] 0, 128
      %2641 = vxpose.xlu0.c.b16.cont [3/8] 0, 128
      %2642 = vxpose.xlu0.c.b16.cont [4/8] 0, 128
      %2643 = vxpose.xlu0.c.b16.cont [5/8] 0, 128
      %2644 = vxpose.xlu0.c.b16.cont [6/8] 0, 128
      %2645 = vxpose.xlu0.c.b16.cont [7/8] 0, 128
      %2646 = vxpose.xlu0.c.b16.end [8/8] 0, 128
      %v2647 = vpop.trf.xlu0
      %v2648 = vpop.trf.xlu0
      %v2649 = vpop.trf.xlu0
      %v2650 = vpop.trf.xlu0
      %v2651 = vpop.trf.xlu0
      %v2652 = vpop.trf.xlu0
      %v2653 = vpop.trf.xlu0
      %v2654 = vpop.trf.xlu0
      %2655 = vxpose.xlu0.c.b16.start [1/8] %v2526, 128
      %2656 = vxpose.xlu0.c.b16.cont [2/8] 0, 128
      %2657 = vxpose.xlu0.c.b16.cont [3/8] 0, 128
      %2658 = vxpose.xlu0.c.b16.cont [4/8] 0, 128
      %2659 = vxpose.xlu0.c.b16.cont [5/8] 0, 128
      %2660 = vxpose.xlu0.c.b16.cont [6/8] 0, 128
      %2661 = vxpose.xlu0.c.b16.cont [7/8] 0, 128
      %2662 = vxpose.xlu0.c.b16.end [8/8] 0, 128
      %v2663 = vpop.trf.xlu0
      %v2664 = vpop.trf.xlu0
      %v2665 = vpop.trf.xlu0
      %v2666 = vpop.trf.xlu0
      %v2667 = vpop.trf.xlu0
      %v2668 = vpop.trf.xlu0
      %v2669 = vpop.trf.xlu0
      %v2670 = vpop.trf.xlu0
      %2671 = vxpose.xlu0.c.b16.start [1/8] %v2527, 128
      %2672 = vxpose.xlu0.c.b16.cont [2/8] 0, 128
      %2673 = vxpose.xlu0.c.b16.cont [3/8] 0, 128
      %2674 = vxpose.xlu0.c.b16.cont [4/8] 0, 128
      %2675 = vxpose.xlu0.c.b16.cont [5/8] 0, 128
      %2676 = vxpose.xlu0.c.b16.cont [6/8] 0, 128
      %2677 = vxpose.xlu0.c.b16.cont [7/8] 0, 128
      %2678 = vxpose.xlu0.c.b16.end [8/8] 0, 128
      %v2679 = vpop.trf.xlu0
      %v2680 = vpop.trf.xlu0
      %v2681 = vpop.trf.xlu0
      %v2682 = vpop.trf.xlu0
      %v2683 = vpop.trf.xlu0
      %v2684 = vpop.trf.xlu0
      %v2685 = vpop.trf.xlu0
      %v2686 = vpop.trf.xlu0
      %2687 = vxpose.xlu0.c.b16.start [1/8] %v2528, 128
      %2688 = vxpose.xlu0.c.b16.cont [2/8] 0, 128
      %2689 = vxpose.xlu0.c.b16.cont [3/8] 0, 128
      %2690 = vxpose.xlu0.c.b16.cont [4/8] 0, 128
      %2691 = vxpose.xlu0.c.b16.cont [5/8] 0, 128
      %2692 = vxpose.xlu0.c.b16.cont [6/8] 0, 128
      %2693 = vxpose.xlu0.c.b16.cont [7/8] 0, 128
      %2694 = vxpose.xlu0.c.b16.end [8/8] 0, 128
      %v2695 = vpop.trf.xlu0
      %v2696 = vpop.trf.xlu0
      %v2697 = vpop.trf.xlu0
      %v2698 = vpop.trf.xlu0
      %v2699 = vpop.trf.xlu0
      %v2700 = vpop.trf.xlu0
      %v2701 = vpop.trf.xlu0
      %v2702 = vpop.trf.xlu0
      %2703 = vxpose.xlu0.c.b16.start [1/8] %v2529, 128
      %2704 = vxpose.xlu0.c.b16.cont [2/8] 0, 128
      %2705 = vxpose.xlu0.c.b16.cont [3/8] 0, 128
      %2706 = vxpose.xlu0.c.b16.cont [4/8] 0, 128
      %2707 = vxpose.xlu0.c.b16.cont [5/8] 0, 128
      %2708 = vxpose.xlu0.c.b16.cont [6/8] 0, 128
      %2709 = vxpose.xlu0.c.b16.cont [7/8] 0, 128
      %2710 = vxpose.xlu0.c.b16.end [8/8] 0, 128
      %v2711 = vpop.trf.xlu0
      %v2712 = vpop.trf.xlu0
      %v2713 = vpop.trf.xlu0
      %v2714 = vpop.trf.xlu0
      %v2715 = vpop.trf.xlu0
      %v2716 = vpop.trf.xlu0
      %v2717 = vpop.trf.xlu0
      %v2718 = vpop.trf.xlu0
      %2719 = vxpose.xlu0.c.b16.start [1/8] %v2530, 128
      %2720 = vxpose.xlu0.c.b16.cont [2/8] 0, 128
      %2721 = vxpose.xlu0.c.b16.cont [3/8] 0, 128
      %2722 = vxpose.xlu0.c.b16.cont [4/8] 0, 128
      %2723 = vxpose.xlu0.c.b16.cont [5/8] 0, 128
      %2724 = vxpose.xlu0.c.b16.cont [6/8] 0, 128
      %2725 = vxpose.xlu0.c.b16.cont [7/8] 0, 128
      %2726 = vxpose.xlu0.c.b16.end [8/8] 0, 128
      %v2727 = vpop.trf.xlu0
      %v2728 = vpop.trf.xlu0
      %v2729 = vpop.trf.xlu0
      %v2730 = vpop.trf.xlu0
      %v2731 = vpop.trf.xlu0
      %v2732 = vpop.trf.xlu0
      %v2733 = vpop.trf.xlu0
      %v2734 = vpop.trf.xlu0
      %2735 = vxpose.xlu0.c.b16.start [1/8] %v2531, 128
      %2736 = vxpose.xlu0.c.b16.cont [2/8] 0, 128
      %2737 = vxpose.xlu0.c.b16.cont [3/8] 0, 128
      %2738 = vxpose.xlu0.c.b16.cont [4/8] 0, 128
      %2739 = vxpose.xlu0.c.b16.cont [5/8] 0, 128
      %2740 = vxpose.xlu0.c.b16.cont [6/8] 0, 128
      %2741 = vxpose.xlu0.c.b16.cont [7/8] 0, 128
      %2742 = vxpose.xlu0.c.b16.end [8/8] 0, 128
      %v2743 = vpop.trf.xlu0
      %v2744 = vpop.trf.xlu0
      %v2745 = vpop.trf.xlu0
      %v2746 = vpop.trf.xlu0
      %v2747 = vpop.trf.xlu0
      %v2748 = vpop.trf.xlu0
      %v2749 = vpop.trf.xlu0
      %v2750 = vpop.trf.xlu0
      %2751 = vxpose.xlu0.c.b16.start [1/8] %v2532, 128
      %2752 = vxpose.xlu0.c.b16.cont [2/8] 0, 128
      %2753 = vxpose.xlu0.c.b16.cont [3/8] 0, 128
      %2754 = vxpose.xlu0.c.b16.cont [4/8] 0, 128
      %2755 = vxpose.xlu0.c.b16.cont [5/8] 0, 128
      %2756 = vxpose.xlu0.c.b16.cont [6/8] 0, 128
      %2757 = vxpose.xlu0.c.b16.cont [7/8] 0, 128
      %2758 = vxpose.xlu0.c.b16.end [8/8] 0, 128
      %v2759 = vpop.trf.xlu0
      %v2760 = vpop.trf.xlu0
      %v2761 = vpop.trf.xlu0
      %v2762 = vpop.trf.xlu0
      %v2763 = vpop.trf.xlu0
      %v2764 = vpop.trf.xlu0
      %v2765 = vpop.trf.xlu0
      %v2766 = vpop.trf.xlu0
      %2767 = vxpose.xlu0.c.b16.start [1/8] %v2533, 128
      %2768 = vxpose.xlu0.c.b16.cont [2/8] 0, 128
      %2769 = vxpose.xlu0.c.b16.cont [3/8] 0, 128
      %2770 = vxpose.xlu0.c.b16.cont [4/8] 0, 128
      %2771 = vxpose.xlu0.c.b16.cont [5/8] 0, 128
      %2772 = vxpose.xlu0.c.b16.cont [6/8] 0, 128
      %2773 = vxpose.xlu0.c.b16.cont [7/8] 0, 128
      %2774 = vxpose.xlu0.c.b16.end [8/8] 0, 128
      %v2775 = vpop.trf.xlu0
      %v2776 = vpop.trf.xlu0
      %v2777 = vpop.trf.xlu0
      %v2778 = vpop.trf.xlu0
      %v2779 = vpop.trf.xlu0
      %v2780 = vpop.trf.xlu0
      %v2781 = vpop.trf.xlu0
      %v2782 = vpop.trf.xlu0
      %2783 = vxpose.xlu0.c.b16.start [1/8] %v2534, 128
      %2784 = vxpose.xlu0.c.b16.cont [2/8] 0, 128
      %2785 = vxpose.xlu0.c.b16.cont [3/8] 0, 128
      %2786 = vxpose.xlu0.c.b16.cont [4/8] 0, 128
      %2787 = vxpose.xlu0.c.b16.cont [5/8] 0, 128
      %2788 = vxpose.xlu0.c.b16.cont [6/8] 0, 128
      %2789 = vxpose.xlu0.c.b16.cont [7/8] 0, 128
      %2790 = vxpose.xlu0.c.b16.end [8/8] 0, 128
      %v2791 = vpop.trf.xlu0
      %v2792 = vpop.trf.xlu0
      %v2793 = vpop.trf.xlu0
      %v2794 = vpop.trf.xlu0
      %v2795 = vpop.trf.xlu0
      %v2796 = vpop.trf.xlu0
      %v2797 = vpop.trf.xlu0
      %v2798 = vpop.trf.xlu0
      %2799 = vxpose.xlu0.c.b16.start [1/8] %v2535, 128
      %2800 = vxpose.xlu0.c.b16.cont [2/8] 0, 128
      %2801 = vxpose.xlu0.c.b16.cont [3/8] 0, 128
      %2802 = vxpose.xlu0.c.b16.cont [4/8] 0, 128
      %2803 = vxpose.xlu0.c.b16.cont [5/8] 0, 128
      %2804 = vxpose.xlu0.c.b16.cont [6/8] 0, 128
      %2805 = vxpose.xlu0.c.b16.cont [7/8] 0, 128
      %2806 = vxpose.xlu0.c.b16.end [8/8] 0, 128
      %v2807 = vpop.trf.xlu0
      %v2808 = vpop.trf.xlu0
      %v2809 = vpop.trf.xlu0
      %v2810 = vpop.trf.xlu0
      %v2811 = vpop.trf.xlu0
      %v2812 = vpop.trf.xlu0
      %v2813 = vpop.trf.xlu0
      %v2814 = vpop.trf.xlu0
      %2815 = vxpose.xlu0.c.b16.start [1/8] %v2536, 128
      %2816 = vxpose.xlu0.c.b16.cont [2/8] 0, 128
      %2817 = vxpose.xlu0.c.b16.cont [3/8] 0, 128
      %2818 = vxpose.xlu0.c.b16.cont [4/8] 0, 128
      %2819 = vxpose.xlu0.c.b16.cont [5/8] 0, 128
      %2820 = vxpose.xlu0.c.b16.cont [6/8] 0, 128
      %2821 = vxpose.xlu0.c.b16.cont [7/8] 0, 128
      %2822 = vxpose.xlu0.c.b16.end [8/8] 0, 128
      %v2823 = vpop.trf.xlu0
      %v2824 = vpop.trf.xlu0
      %v2825 = vpop.trf.xlu0
      %v2826 = vpop.trf.xlu0
      %v2827 = vpop.trf.xlu0
      %v2828 = vpop.trf.xlu0
      %v2829 = vpop.trf.xlu0
      %v2830 = vpop.trf.xlu0
      %2831 = vxpose.xlu0.c.b16.start [1/8] %v2537, 128
      %2832 = vxpose.xlu0.c.b16.cont [2/8] 0, 128
      %2833 = vxpose.xlu0.c.b16.cont [3/8] 0, 128
      %2834 = vxpose.xlu0.c.b16.cont [4/8] 0, 128
      %2835 = vxpose.xlu0.c.b16.cont [5/8] 0, 128
      %2836 = vxpose.xlu0.c.b16.cont [6/8] 0, 128
      %2837 = vxpose.xlu0.c.b16.cont [7/8] 0, 128
      %2838 = vxpose.xlu0.c.b16.end [8/8] 0, 128
      %v2839 = vpop.trf.xlu0
      %v2840 = vpop.trf.xlu0
      %v2841 = vpop.trf.xlu0
      %v2842 = vpop.trf.xlu0
      %v2843 = vpop.trf.xlu0
      %v2844 = vpop.trf.xlu0
      %v2845 = vpop.trf.xlu0
      %v2846 = vpop.trf.xlu0
      %2847 = vxpose.xlu0.c.b16.start [1/8] %v2538, 128
      %2848 = vxpose.xlu0.c.b16.cont [2/8] 0, 128
      %2849 = vxpose.xlu0.c.b16.cont [3/8] 0, 128
      %2850 = vxpose.xlu0.c.b16.cont [4/8] 0, 128
      %2851 = vxpose.xlu0.c.b16.cont [5/8] 0, 128
      %2852 = vxpose.xlu0.c.b16.cont [6/8] 0, 128
      %2853 = vxpose.xlu0.c.b16.cont [7/8] 0, 128
      %2854 = vxpose.xlu0.c.b16.end [8/8] 0, 128
      %v2855 = vpop.trf.xlu0
      %v2856 = vpop.trf.xlu0
      %v2857 = vpop.trf.xlu0
      %v2858 = vpop.trf.xlu0
      %v2859 = vpop.trf.xlu0
      %v2860 = vpop.trf.xlu0
      %v2861 = vpop.trf.xlu0
      %v2862 = vpop.trf.xlu0
      %2863 = vxpose.xlu0.c.b16.start [1/8] %v2539, 128
      %2864 = vxpose.xlu0.c.b16.cont [2/8] 0, 128
      %2865 = vxpose.xlu0.c.b16.cont [3/8] 0, 128
      %2866 = vxpose.xlu0.c.b16.cont [4/8] 0, 128
      %2867 = vxpose.xlu0.c.b16.cont [5/8] 0, 128
      %2868 = vxpose.xlu0.c.b16.cont [6/8] 0, 128
      %2869 = vxpose.xlu0.c.b16.cont [7/8] 0, 128
      %2870 = vxpose.xlu0.c.b16.end [8/8] 0, 128
      %v2871 = vpop.trf.xlu0
      %v2872 = vpop.trf.xlu0
      %v2873 = vpop.trf.xlu0
      %v2874 = vpop.trf.xlu0
      %v2875 = vpop.trf.xlu0
      %v2876 = vpop.trf.xlu0
      %v2877 = vpop.trf.xlu0
      %v2878 = vpop.trf.xlu0
      %2879 = vxpose.xlu0.c.b16.start [1/8] %v2540, 128
      %2880 = vxpose.xlu0.c.b16.cont [2/8] 0, 128
      %2881 = vxpose.xlu0.c.b16.cont [3/8] 0, 128
      %2882 = vxpose.xlu0.c.b16.cont [4/8] 0, 128
      %2883 = vxpose.xlu0.c.b16.cont [5/8] 0, 128
      %2884 = vxpose.xlu0.c.b16.cont [6/8] 0, 128
      %2885 = vxpose.xlu0.c.b16.cont [7/8] 0, 128
      %2886 = vxpose.xlu0.c.b16.end [8/8] 0, 128
      %v2887 = vpop.trf.xlu0
      %v2888 = vpop.trf.xlu0
      %v2889 = vpop.trf.xlu0
      %v2890 = vpop.trf.xlu0
      %v2891 = vpop.trf.xlu0
      %v2892 = vpop.trf.xlu0
      %v2893 = vpop.trf.xlu0
      %v2894 = vpop.trf.xlu0
      %2895 = vxpose.xlu0.c.b16.start [1/8] %v2541, 128
      %2896 = vxpose.xlu0.c.b16.cont [2/8] 0, 128
      %2897 = vxpose.xlu0.c.b16.cont [3/8] 0, 128
      %2898 = vxpose.xlu0.c.b16.cont [4/8] 0, 128
      %2899 = vxpose.xlu0.c.b16.cont [5/8] 0, 128
      %2900 = vxpose.xlu0.c.b16.cont [6/8] 0, 128
      %2901 = vxpose.xlu0.c.b16.cont [7/8] 0, 128
      %2902 = vxpose.xlu0.c.b16.end [8/8] 0, 128
      %v2903 = vpop.trf.xlu0
      %v2904 = vpop.trf.xlu0
      %v2905 = vpop.trf.xlu0
      %v2906 = vpop.trf.xlu0
      %v2907 = vpop.trf.xlu0
      %v2908 = vpop.trf.xlu0
      %v2909 = vpop.trf.xlu0
      %v2910 = vpop.trf.xlu0
      %2911 = vxpose.xlu0.c.b16.start [1/8] %v2542, 128
      %2912 = vxpose.xlu0.c.b16.cont [2/8] 0, 128
      %2913 = vxpose.xlu0.c.b16.cont [3/8] 0, 128
      %2914 = vxpose.xlu0.c.b16.cont [4/8] 0, 128
      %2915 = vxpose.xlu0.c.b16.cont [5/8] 0, 128
      %2916 = vxpose.xlu0.c.b16.cont [6/8] 0, 128
      %2917 = vxpose.xlu0.c.b16.cont [7/8] 0, 128
      %2918 = vxpose.xlu0.c.b16.end [8/8] 0, 128
      %v2919 = vpop.trf.xlu0
      %v2920 = vpop.trf.xlu0
      %v2921 = vpop.trf.xlu0
      %v2922 = vpop.trf.xlu0
      %v2923 = vpop.trf.xlu0
      %v2924 = vpop.trf.xlu0
      %v2925 = vpop.trf.xlu0
      %v2926 = vpop.trf.xlu0
      %v2927 = vrot.slane %v2615, 4
      %v2928 = vsel %vm1268, %v2927, %v2551
      %v2930 = vunpack.c.l.s4 1983009808
      %v2931 = vunpack.c.0.s8 %v2930
      %v2932 = vperm.slane %v2928, %v2931
      %v2933 = vrot.slane %v2647, 4
      %v2934 = vsel %vm1268, %v2933, %v2583
      %v2936 = vunpack.c.l.s4 1983009808
      %v2937 = vunpack.c.0.s8 %v2936
      %v2938 = vperm.slane %v2934, %v2937
      %v2939 = vrot.slane %v2743, 4
      %v2940 = vsel %vm1268, %v2939, %v2679
      %v2942 = vunpack.c.l.s4 1983009808
      %v2943 = vunpack.c.0.s8 %v2942
      %v2944 = vperm.slane %v2940, %v2943
      %v2945 = vrot.slane %v2775, 4
      %v2946 = vsel %vm1268, %v2945, %v2711
      %v2948 = vunpack.c.l.s4 1983009808
      %v2949 = vunpack.c.0.s8 %v2948
      %v2950 = vperm.slane %v2946, %v2949
      %v2951 = vrot.slane %v2938, 4
      %v2952 = vsel %vm1268, %v2951, %v2932
      %v2953 = vrot.slane %v2932, 4
      %v2954 = vsel %vm1268, %v2938, %v2953
      %v2956 = vunpack.c.l.s4 1934713408
      %v2957 = vunpack.c.0.s8 %v2956
      %v2958 = vperm.slane %v2952, %v2957
      %v2960 = vunpack.c.l.s4 1934713408
      %v2961 = vunpack.c.0.s8 %v2960
      %v2962 = vperm.slane %v2954, %v2961
      %v2963 = vrot.slane %v2950, 4
      %v2964 = vsel %vm1268, %v2963, %v2944
      %v2965 = vrot.slane %v2944, 4
      %v2966 = vsel %vm1268, %v2950, %v2965
      %v2968 = vunpack.c.l.s4 1934713408
      %v2969 = vunpack.c.0.s8 %v2968
      %v2970 = vperm.slane %v2964, %v2969
      %v2972 = vunpack.c.l.s4 1934713408
      %v2973 = vunpack.c.0.s8 %v2972
      %v2974 = vperm.slane %v2966, %v2973
      %v2975 = vrot.slane %v2970, 4
      %v2976 = vsel %vm1268, %v2975, %v2958
      %v2977 = vrot.slane %v2958, 4
      %v2978 = vsel %vm1268, %v2970, %v2977
      %v2979 = vrot.slane %v2974, 4
      %v2980 = vsel %vm1268, %v2979, %v2962
      %v2981 = vrot.slane %v2962, 4
      %v2982 = vsel %vm1268, %v2974, %v2981
      %v2983 = vrot.slane %v2631, 4
      %v2984 = vsel %vm1268, %v2983, %v2567
      %v2986 = vunpack.c.l.s4 1983009808
      %v2987 = vunpack.c.0.s8 %v2986
      %v2988 = vperm.slane %v2984, %v2987
      %v2989 = vrot.slane %v2663, 4
      %v2990 = vsel %vm1268, %v2989, %v2599
      %v2992 = vunpack.c.l.s4 1983009808
      %v2993 = vunpack.c.0.s8 %v2992
      %v2994 = vperm.slane %v2990, %v2993
      %v2995 = vrot.slane %v2759, 4
      %v2996 = vsel %vm1268, %v2995, %v2695
      %v2998 = vunpack.c.l.s4 1983009808
      %v2999 = vunpack.c.0.s8 %v2998
      %v3000 = vperm.slane %v2996, %v2999
      %v3001 = vrot.slane %v2791, 4
      %v3002 = vsel %vm1268, %v3001, %v2727
      %v3004 = vunpack.c.l.s4 1983009808
      %v3005 = vunpack.c.0.s8 %v3004
      %v3006 = vperm.slane %v3002, %v3005
      %v3007 = vrot.slane %v2994, 4
      %v3008 = vsel %vm1268, %v3007, %v2988
      %v3009 = vrot.slane %v2988, 4
      %v3010 = vsel %vm1268, %v2994, %v3009
      %v3012 = vunpack.c.l.s4 1934713408
      %v3013 = vunpack.c.0.s8 %v3012
      %v3014 = vperm.slane %v3008, %v3013
      %v3016 = vunpack.c.l.s4 1934713408
      %v3017 = vunpack.c.0.s8 %v3016
      %v3018 = vperm.slane %v3010, %v3017
      %v3019 = vrot.slane %v3006, 4
      %v3020 = vsel %vm1268, %v3019, %v3000
      %v3021 = vrot.slane %v3000, 4
      %v3022 = vsel %vm1268, %v3006, %v3021
      %v3024 = vunpack.c.l.s4 1934713408
      %v3025 = vunpack.c.0.s8 %v3024
      %v3026 = vperm.slane %v3020, %v3025
      %v3028 = vunpack.c.l.s4 1934713408
      %v3029 = vunpack.c.0.s8 %v3028
      %v3030 = vperm.slane %v3022, %v3029
      %v3031 = vrot.slane %v3026, 4
      %v3032 = vsel %vm1268, %v3031, %v3014
      %v3033 = vrot.slane %v3014, 4
      %v3034 = vsel %vm1268, %v3026, %v3033
      %v3035 = vrot.slane %v3030, 4
      %v3036 = vsel %vm1268, %v3035, %v3018
      %v3037 = vrot.slane %v3018, 4
      %v3038 = vsel %vm1268, %v3030, %v3037
      %v3039 = vrot.slane %v2871, 4
      %v3040 = vsel %vm1268, %v3039, %v2807
      %v3042 = vunpack.c.l.s4 1983009808
      %v3043 = vunpack.c.0.s8 %v3042
      %v3044 = vperm.slane %v3040, %v3043
      %v3045 = vrot.slane %v2903, 4
      %v3046 = vsel %vm1268, %v3045, %v2839
      %v3048 = vunpack.c.l.s4 1983009808
      %v3049 = vunpack.c.0.s8 %v3048
      %v3050 = vperm.slane %v3046, %v3049
      %v3051 = vrot.slane %v3050, 4
      %v3052 = vsel %vm1268, %v3051, %v3044
      %v3053 = vrot.slane %v3044, 4
      %v3054 = vsel %vm1268, %v3050, %v3053
      %v3056 = vunpack.c.l.s4 1934713408
      %v3057 = vunpack.c.0.s8 %v3056
      %v3058 = vperm.slane %v3052, %v3057
      %v3060 = vunpack.c.l.s4 1934713408
      %v3061 = vunpack.c.0.s8 %v3060
      %v3062 = vperm.slane %v3054, %v3061
      %v3063 = vrot.slane %v3058, 4
      %v3064 = vsel %vm1268, 0, %v3063
      %v3065 = vrot.slane %v3062, 4
      %v3066 = vsel %vm1268, 0, %v3065
      %v3067 = vrot.slane %v2887, 4
      %v3068 = vsel %vm1268, %v3067, %v2823
      %v3070 = vunpack.c.l.s4 1983009808
      %v3071 = vunpack.c.0.s8 %v3070
      %v3072 = vperm.slane %v3068, %v3071
      %v3073 = vrot.slane %v2919, 4
      %v3074 = vsel %vm1268, %v3073, %v2855
      %v3076 = vunpack.c.l.s4 1983009808
      %v3077 = vunpack.c.0.s8 %v3076
      %v3078 = vperm.slane %v3074, %v3077
      %v3079 = vrot.slane %v3078, 4
      %v3080 = vsel %vm1268, %v3079, %v3072
      %v3081 = vrot.slane %v3072, 4
      %v3082 = vsel %vm1268, %v3078, %v3081
      %v3084 = vunpack.c.l.s4 1934713408
      %v3085 = vunpack.c.0.s8 %v3084
      %v3086 = vperm.slane %v3080, %v3085
      %v3088 = vunpack.c.l.s4 1934713408
      %v3089 = vunpack.c.0.s8 %v3088
      %v3090 = vperm.slane %v3082, %v3089
      %v3091 = vrot.slane %v3086, 4
      %v3092 = vsel %vm1268, 0, %v3091
      %v3093 = vrot.slane %v3090, 4
      %v3094 = vsel %vm1268, 0, %v3093
      %v3097 = vpack.i.b16 %v3032, %v2976
      %v3099 = vshrl.u32 %v2976, 16
      %v3100 = vshrl.u32 %v3032, 16
      %v3101 = vpack.i.b16 %v3100, %v3099
      %v3105 = vpack.i.b16 %v3034, %v2978
      %v3107 = vshrl.u32 %v2978, 16
      %v3108 = vshrl.u32 %v3034, 16
      %v3109 = vpack.i.b16 %v3108, %v3107
      %v3113 = vpack.i.b16 %v3036, %v2980
      %v3115 = vshrl.u32 %v2980, 16
      %v3116 = vshrl.u32 %v3036, 16
      %v3117 = vpack.i.b16 %v3116, %v3115
      %v3121 = vpack.i.b16 %v3038, %v2982
      %v3123 = vshrl.u32 %v2982, 16
      %v3124 = vshrl.u32 %v3038, 16
      %v3125 = vpack.i.b16 %v3124, %v3123
      %v3129 = vpack.i.b16 %v3086, %v3058
      %v3131 = vshrl.u32 %v3058, 16
      %v3132 = vshrl.u32 %v3086, 16
      %v3133 = vpack.i.b16 %v3132, %v3131
      %v3137 = vpack.i.b16 %v3092, %v3064
      %v3139 = vshrl.u32 %v3064, 16
      %v3140 = vshrl.u32 %v3092, 16
      %v3141 = vpack.i.b16 %v3140, %v3139
      %v3145 = vpack.i.b16 %v3090, %v3062
      %v3147 = vshrl.u32 %v3062, 16
      %v3148 = vshrl.u32 %v3090, 16
      %v3149 = vpack.i.b16 %v3148, %v3147
      %v3153 = vpack.i.b16 %v3094, %v3066
      %v3155 = vshrl.u32 %v3066, 16
      %v3156 = vshrl.u32 %v3094, 16
      %v3157 = vpack.i.b16 %v3156, %v3155
      %3159 = vxpose.xlu0.c.b16.start [1/8] %v3097, 128
      %3160 = vxpose.xlu0.c.b16.cont [2/8] %v3129, 128
      %3161 = vxpose.xlu0.c.b16.cont [3/8] 0, 128
      %3162 = vxpose.xlu0.c.b16.cont [4/8] 0, 128
      %3163 = vxpose.xlu0.c.b16.cont [5/8] 0, 128
      %3164 = vxpose.xlu0.c.b16.cont [6/8] 0, 128
      %3165 = vxpose.xlu0.c.b16.cont [7/8] 0, 128
      %3166 = vxpose.xlu0.c.b16.end [8/8] 0, 128
      %v3167 = vpop.trf.xlu0
      %v3168 = vpop.trf.xlu0
      %v3169 = vpop.trf.xlu0
      %v3170 = vpop.trf.xlu0
      %v3171 = vpop.trf.xlu0
      %v3172 = vpop.trf.xlu0
      %v3173 = vpop.trf.xlu0
      %v3174 = vpop.trf.xlu0
      %3175 = vxpose.xlu0.c.b16.start [1/8] %v3101, 128
      %3176 = vxpose.xlu0.c.b16.cont [2/8] %v3133, 128
      %3177 = vxpose.xlu0.c.b16.cont [3/8] 0, 128
      %3178 = vxpose.xlu0.c.b16.cont [4/8] 0, 128
      %3179 = vxpose.xlu0.c.b16.cont [5/8] 0, 128
      %3180 = vxpose.xlu0.c.b16.cont [6/8] 0, 128
      %3181 = vxpose.xlu0.c.b16.cont [7/8] 0, 128
      %3182 = vxpose.xlu0.c.b16.end [8/8] 0, 128
      %v3183 = vpop.trf.xlu0
      %v3184 = vpop.trf.xlu0
      %v3185 = vpop.trf.xlu0
      %v3186 = vpop.trf.xlu0
      %v3187 = vpop.trf.xlu0
      %v3188 = vpop.trf.xlu0
      %v3189 = vpop.trf.xlu0
      %v3190 = vpop.trf.xlu0
      %3191 = vxpose.xlu0.c.b16.start [1/8] %v3105, 128
      %3192 = vxpose.xlu0.c.b16.cont [2/8] %v3137, 128
      %3193 = vxpose.xlu0.c.b16.cont [3/8] 0, 128
      %3194 = vxpose.xlu0.c.b16.cont [4/8] 0, 128
      %3195 = vxpose.xlu0.c.b16.cont [5/8] 0, 128
      %3196 = vxpose.xlu0.c.b16.cont [6/8] 0, 128
      %3197 = vxpose.xlu0.c.b16.cont [7/8] 0, 128
      %3198 = vxpose.xlu0.c.b16.end [8/8] 0, 128
      %v3199 = vpop.trf.xlu0
      %v3200 = vpop.trf.xlu0
      %v3201 = vpop.trf.xlu0
      %v3202 = vpop.trf.xlu0
      %v3203 = vpop.trf.xlu0
      %v3204 = vpop.trf.xlu0
      %v3205 = vpop.trf.xlu0
      %v3206 = vpop.trf.xlu0
      %3207 = vxpose.xlu0.c.b16.start [1/8] %v3109, 128
      %3208 = vxpose.xlu0.c.b16.cont [2/8] %v3141, 128
      %3209 = vxpose.xlu0.c.b16.cont [3/8] 0, 128
      %3210 = vxpose.xlu0.c.b16.cont [4/8] 0, 128
      %3211 = vxpose.xlu0.c.b16.cont [5/8] 0, 128
      %3212 = vxpose.xlu0.c.b16.cont [6/8] 0, 128
      %3213 = vxpose.xlu0.c.b16.cont [7/8] 0, 128
      %3214 = vxpose.xlu0.c.b16.end [8/8] 0, 128
      %v3215 = vpop.trf.xlu0
      %v3216 = vpop.trf.xlu0
      %v3217 = vpop.trf.xlu0
      %v3218 = vpop.trf.xlu0
      %v3219 = vpop.trf.xlu0
      %v3220 = vpop.trf.xlu0
      %v3221 = vpop.trf.xlu0
      %v3222 = vpop.trf.xlu0
      %3223 = vxpose.xlu0.c.b16.start [1/8] %v3113, 128
      %3224 = vxpose.xlu0.c.b16.cont [2/8] %v3145, 128
      %3225 = vxpose.xlu0.c.b16.cont [3/8] 0, 128
      %3226 = vxpose.xlu0.c.b16.cont [4/8] 0, 128
      %3227 = vxpose.xlu0.c.b16.cont [5/8] 0, 128
      %3228 = vxpose.xlu0.c.b16.cont [6/8] 0, 128
      %3229 = vxpose.xlu0.c.b16.cont [7/8] 0, 128
      %3230 = vxpose.xlu0.c.b16.end [8/8] 0, 128
      %v3231 = vpop.trf.xlu0
      %v3232 = vpop.trf.xlu0
      %v3233 = vpop.trf.xlu0
      %v3234 = vpop.trf.xlu0
      %v3235 = vpop.trf.xlu0
      %v3236 = vpop.trf.xlu0
      %v3237 = vpop.trf.xlu0
      %v3238 = vpop.trf.xlu0
      %3239 = vxpose.xlu0.c.b16.start [1/8] %v3117, 128
      %3240 = vxpose.xlu0.c.b16.cont [2/8] %v3149, 128
      %3241 = vxpose.xlu0.c.b16.cont [3/8] 0, 128
      %3242 = vxpose.xlu0.c.b16.cont [4/8] 0, 128
      %3243 = vxpose.xlu0.c.b16.cont [5/8] 0, 128
      %3244 = vxpose.xlu0.c.b16.cont [6/8] 0, 128
      %3245 = vxpose.xlu0.c.b16.cont [7/8] 0, 128
      %3246 = vxpose.xlu0.c.b16.end [8/8] 0, 128
      %v3247 = vpop.trf.xlu0
      %v3248 = vpop.trf.xlu0
      %v3249 = vpop.trf.xlu0
      %v3250 = vpop.trf.xlu0
      %v3251 = vpop.trf.xlu0
      %v3252 = vpop.trf.xlu0
      %v3253 = vpop.trf.xlu0
      %v3254 = vpop.trf.xlu0
      %3255 = vxpose.xlu0.c.b16.start [1/8] %v3121, 128
      %3256 = vxpose.xlu0.c.b16.cont [2/8] %v3153, 128
      %3257 = vxpose.xlu0.c.b16.cont [3/8] 0, 128
      %3258 = vxpose.xlu0.c.b16.cont [4/8] 0, 128
      %3259 = vxpose.xlu0.c.b16.cont [5/8] 0, 128
      %3260 = vxpose.xlu0.c.b16.cont [6/8] 0, 128
      %3261 = vxpose.xlu0.c.b16.cont [7/8] 0, 128
      %3262 = vxpose.xlu0.c.b16.end [8/8] 0, 128
      %v3263 = vpop.trf.xlu0
      %v3264 = vpop.trf.xlu0
      %v3265 = vpop.trf.xlu0
      %v3266 = vpop.trf.xlu0
      %v3267 = vpop.trf.xlu0
      %v3268 = vpop.trf.xlu0
      %v3269 = vpop.trf.xlu0
      %v3270 = vpop.trf.xlu0
      %3271 = vxpose.xlu0.c.b16.start [1/8] %v3125, 128
      %3272 = vxpose.xlu0.c.b16.cont [2/8] %v3157, 128
      %3273 = vxpose.xlu0.c.b16.cont [3/8] 0, 128
      %3274 = vxpose.xlu0.c.b16.cont [4/8] 0, 128
      %3275 = vxpose.xlu0.c.b16.cont [5/8] 0, 128
      %3276 = vxpose.xlu0.c.b16.cont [6/8] 0, 128
      %3277 = vxpose.xlu0.c.b16.cont [7/8] 0, 128
      %3278 = vxpose.xlu0.c.b16.end [8/8] 0, 128
      %v3279 = vpop.trf.xlu0
      %v3280 = vpop.trf.xlu0
      %v3281 = vpop.trf.xlu0
      %v3282 = vpop.trf.xlu0
      %v3283 = vpop.trf.xlu0
      %v3284 = vpop.trf.xlu0
      %v3285 = vpop.trf.xlu0
      %v3286 = vpop.trf.xlu0
      %v3287 = vrot.slane %v3231, 4
      %v3288 = vsel %vm1268, %v3287, %v3167
      %v3290 = vunpack.c.l.s4 1983009808
      %v3291 = vunpack.c.0.s8 %v3290
      %v3292 = vperm.slane %v3288, %v3291
      %v3293 = vrot.slane %v3263, 4
      %v3294 = vsel %vm1268, %v3293, %v3199
      %v3296 = vunpack.c.l.s4 1983009808
      %v3297 = vunpack.c.0.s8 %v3296
      %v3298 = vperm.slane %v3294, %v3297
      %v3299 = vrot.slane %v3298, 4
      %v3300 = vsel %vm1268, %v3299, %v3292
      %v3302 = vunpack.c.l.s4 1934713408
      %v3303 = vunpack.c.0.s8 %v3302
      %v3304 = vperm.slane %v3300, %v3303
      %v3305 = vrot.slane %v3304, 4
      %v3306 = vsel %vm1268, 0, %v3305
      %v3307 = vrot.slane %v3247, 4
      %v3308 = vsel %vm1268, %v3307, %v3183
      %v3310 = vunpack.c.l.s4 1983009808
      %v3311 = vunpack.c.0.s8 %v3310
      %v3312 = vperm.slane %v3308, %v3311
      %v3313 = vrot.slane %v3279, 4
      %v3314 = vsel %vm1268, %v3313, %v3215
      %v3316 = vunpack.c.l.s4 1983009808
      %v3317 = vunpack.c.0.s8 %v3316
      %v3318 = vperm.slane %v3314, %v3317
      %v3319 = vrot.slane %v3318, 4
      %v3320 = vsel %vm1268, %v3319, %v3312
      %v3322 = vunpack.c.l.s4 1934713408
      %v3323 = vunpack.c.0.s8 %v3322
      %v3324 = vperm.slane %v3320, %v3323
      %v3325 = vrot.slane %v3324, 4
      %v3326 = vsel %vm1268, 0, %v3325
      %v3329 = vpack.i.b16 %v3324, %v3304
      %v3330 = vshrl.u32 %v3304, 16
      %v3331 = vshrl.u32 %v3324, 16
      %v3332 = vpack.i.b16 %v3331, %v3330
      %v3335 = vpack.i.b16 %v3326, %v3306
      %v3336 = vshrl.u32 %v3306, 16
      %v3337 = vshrl.u32 %v3326, 16
      %v3338 = vpack.i.b16 %v3337, %v3336
      %v3342 = vunpack.c.l.b16 %v2507
      %v3343 = vunpack.c.l.b16 %v2508
      %v3344 = vunpack.c.l.b16 %v2509
      %v3345 = vpack.c.b16 %v3343, %v3342
      %v3346 = vpack.c.b16 %v3344, %v3344
      %v3348 = vsel %vm2374, %v3329, 0
      %v3351 = vsel %vm2374, %v3345, 0
      %v3354 = vsel %vm2374, %v3346, 0
      %3356 = vmatpush.bf16.xpose.msra.mxu0 0
      %3357 = vmatpush.bf16.xpose.msra.mxu0 0
      %3358 = vmatpush.bf16.xpose.msra.mxu0 0
      %3359 = vmatpush.bf16.xpose.msra.mxu0 0
      %3360 = vmatpush.bf16.xpose.msra.mxu0 0
      %3361 = vmatpush.bf16.xpose.msra.mxu0 0
      %3362 = vmatpush.bf16.xpose.msra.mxu0 %v3354
      %3363 = vmatpush.bf16.xpose.msra.mxu0 %v3351
      %3364 = vmatmul.bf16.gmra.mxu0 %v3348
      %v3365 = vpop.f32.mrf.mxu0
      %v3366 = vadd.f32 0.0, %v3365
      %v3367 = vpop.f32.mrf.mxu0
      %3368 = vdwg.mxu0
      %v3372 = vunpack.c.l.b16 %v2510
      %v3373 = vunpack.c.l.b16 %v2511
      %v3374 = vunpack.c.l.b16 %v2512
      %v3375 = vpack.c.b16 %v3373, %v3372
      %v3376 = vpack.c.b16 %v3374, %v3374
      %v3378 = vsel %vm2374, %v3332, 0
      %v3381 = vsel %vm2374, %v3375, 0
      %v3384 = vsel %vm2374, %v3376, 0
      %3386 = vmatpush.bf16.xpose.msra.mxu0 0
      %3387 = vmatpush.bf16.xpose.msra.mxu0 0
      %3388 = vmatpush.bf16.xpose.msra.mxu0 0
      %3389 = vmatpush.bf16.xpose.msra.mxu0 0
      %3390 = vmatpush.bf16.xpose.msra.mxu0 0
      %3391 = vmatpush.bf16.xpose.msra.mxu0 0
      %3392 = vmatpush.bf16.xpose.msra.mxu0 %v3384
      %3393 = vmatpush.bf16.xpose.msra.mxu0 %v3381
      %3394 = vmatmul.bf16.gmra.mxu0 %v3378
      %v3395 = vpop.f32.mrf.mxu0
      %v3396 = vadd.f32 0.0, %v3395
      %v3397 = vpop.f32.mrf.mxu0
      %3398 = vdwg.mxu0
      %v3402 = vunpack.c.l.b16 %v2513
      %v3403 = vunpack.c.l.b16 %v2514
      %v3404 = vunpack.c.l.b16 %v2515
      %v3405 = vpack.c.b16 %v3403, %v3402
      %v3406 = vpack.c.b16 %v3404, %v3404
      %v3408 = vsel %vm2374, %v3335, 0
      %v3411 = vsel %vm2374, %v3405, 0
      %v3414 = vsel %vm2374, %v3406, 0
      %3416 = vmatpush.bf16.xpose.msra.mxu0 0
      %3417 = vmatpush.bf16.xpose.msra.mxu0 0
      %3418 = vmatpush.bf16.xpose.msra.mxu0 0
      %3419 = vmatpush.bf16.xpose.msra.mxu0 0
      %3420 = vmatpush.bf16.xpose.msra.mxu0 0
      %3421 = vmatpush.bf16.xpose.msra.mxu0 0
      %3422 = vmatpush.bf16.xpose.msra.mxu0 %v3414
      %3423 = vmatpush.bf16.xpose.msra.mxu0 %v3411
      %3424 = vmatmul.bf16.gmra.mxu0 %v3408
      %v3425 = vpop.f32.mrf.mxu0
      %v3426 = vadd.f32 0.0, %v3425
      %v3427 = vpop.f32.mrf.mxu0
      %3428 = vdwg.mxu0
      %v3432 = vunpack.c.l.b16 %v2516
      %v3433 = vunpack.c.l.b16 %v2517
      %v3434 = vunpack.c.l.b16 %v2518
      %v3435 = vpack.c.b16 %v3433, %v3432
      %v3436 = vpack.c.b16 %v3434, %v3434
      %v3438 = vsel %vm2374, %v3338, 0
      %v3441 = vsel %vm2374, %v3435, 0
      %v3444 = vsel %vm2374, %v3436, 0
      %3446 = vmatpush.bf16.xpose.msra.mxu0 0
      %3447 = vmatpush.bf16.xpose.msra.mxu0 0
      %3448 = vmatpush.bf16.xpose.msra.mxu0 0
      %3449 = vmatpush.bf16.xpose.msra.mxu0 0
      %3450 = vmatpush.bf16.xpose.msra.mxu0 0
      %3451 = vmatpush.bf16.xpose.msra.mxu0 0
      %3452 = vmatpush.bf16.xpose.msra.mxu0 %v3444
      %3453 = vmatpush.bf16.xpose.msra.mxu0 %v3441
      %3454 = vmatmul.bf16.gmra.mxu0 %v3438
      %v3455 = vpop.f32.mrf.mxu0
      %v3456 = vadd.f32 0.0, %v3455
      %v3457 = vpop.f32.mrf.mxu0
      %3458 = vdwg.mxu0
      %3459 = vxpose.xlu0.b32.start [1/16] %v3366, 128
      %3460 = vxpose.xlu0.b32.cont [2/16] 0.0, 128
      %3461 = vxpose.xlu0.b32.cont [3/16] 0.0, 128
      %3462 = vxpose.xlu0.b32.cont [4/16] 0.0, 128
      %3463 = vxpose.xlu0.b32.cont [5/16] 0.0, 128
      %3464 = vxpose.xlu0.b32.cont [6/16] 0.0, 128
      %3465 = vxpose.xlu0.b32.cont [7/16] 0.0, 128
      %3466 = vxpose.xlu0.b32.cont [8/16] 0.0, 128
      %3467 = vxpose.xlu0.b32.cont [9/16] 0.0, 128
      %3468 = vxpose.xlu0.b32.cont [10/16] 0.0, 128
      %3469 = vxpose.xlu0.b32.cont [11/16] 0.0, 128
      %3470 = vxpose.xlu0.b32.cont [12/16] 0.0, 128
      %3471 = vxpose.xlu0.b32.cont [13/16] 0.0, 128
      %3472 = vxpose.xlu0.b32.cont [14/16] 0.0, 128
      %3473 = vxpose.xlu0.b32.cont [15/16] 0.0, 128
      %3474 = vxpose.xlu0.b32.end [16/16] 0.0, 128
      %v3475 = vpop.trf.xlu0
      %v3476 = vpop.trf.xlu0
      %v3477 = vpop.trf.xlu0
      %v3478 = vpop.trf.xlu0
      %v3479 = vpop.trf.xlu0
      %v3480 = vpop.trf.xlu0
      %v3481 = vpop.trf.xlu0
      %v3482 = vpop.trf.xlu0
      %v3483 = vpop.trf.xlu0
      %v3484 = vpop.trf.xlu0
      %v3485 = vpop.trf.xlu0
      %v3486 = vpop.trf.xlu0
      %v3487 = vpop.trf.xlu0
      %v3488 = vpop.trf.xlu0
      %v3489 = vpop.trf.xlu0
      %v3490 = vpop.trf.xlu0
      %3491 = vxpose.xlu0.b32.start [1/16] %v3396, 128
      %3492 = vxpose.xlu0.b32.cont [2/16] 0.0, 128
      %3493 = vxpose.xlu0.b32.cont [3/16] 0.0, 128
      %3494 = vxpose.xlu0.b32.cont [4/16] 0.0, 128
      %3495 = vxpose.xlu0.b32.cont [5/16] 0.0, 128
      %3496 = vxpose.xlu0.b32.cont [6/16] 0.0, 128
      %3497 = vxpose.xlu0.b32.cont [7/16] 0.0, 128
      %3498 = vxpose.xlu0.b32.cont [8/16] 0.0, 128
      %3499 = vxpose.xlu0.b32.cont [9/16] 0.0, 128
      %3500 = vxpose.xlu0.b32.cont [10/16] 0.0, 128
      %3501 = vxpose.xlu0.b32.cont [11/16] 0.0, 128
      %3502 = vxpose.xlu0.b32.cont [12/16] 0.0, 128
      %3503 = vxpose.xlu0.b32.cont [13/16] 0.0, 128
      %3504 = vxpose.xlu0.b32.cont [14/16] 0.0, 128
      %3505 = vxpose.xlu0.b32.cont [15/16] 0.0, 128
      %3506 = vxpose.xlu0.b32.end [16/16] 0.0, 128
      %v3507 = vpop.trf.xlu0
      %v3508 = vpop.trf.xlu0
      %v3509 = vpop.trf.xlu0
      %v3510 = vpop.trf.xlu0
      %v3511 = vpop.trf.xlu0
      %v3512 = vpop.trf.xlu0
      %v3513 = vpop.trf.xlu0
      %v3514 = vpop.trf.xlu0
      %v3515 = vpop.trf.xlu0
      %v3516 = vpop.trf.xlu0
      %v3517 = vpop.trf.xlu0
      %v3518 = vpop.trf.xlu0
      %v3519 = vpop.trf.xlu0
      %v3520 = vpop.trf.xlu0
      %v3521 = vpop.trf.xlu0
      %v3522 = vpop.trf.xlu0
      %3523 = vxpose.xlu0.b32.start [1/16] %v3426, 128
      %3524 = vxpose.xlu0.b32.cont [2/16] 0.0, 128
      %3525 = vxpose.xlu0.b32.cont [3/16] 0.0, 128
      %3526 = vxpose.xlu0.b32.cont [4/16] 0.0, 128
      %3527 = vxpose.xlu0.b32.cont [5/16] 0.0, 128
      %3528 = vxpose.xlu0.b32.cont [6/16] 0.0, 128
      %3529 = vxpose.xlu0.b32.cont [7/16] 0.0, 128
      %3530 = vxpose.xlu0.b32.cont [8/16] 0.0, 128
      %3531 = vxpose.xlu0.b32.cont [9/16] 0.0, 128
      %3532 = vxpose.xlu0.b32.cont [10/16] 0.0, 128
      %3533 = vxpose.xlu0.b32.cont [11/16] 0.0, 128
      %3534 = vxpose.xlu0.b32.cont [12/16] 0.0, 128
      %3535 = vxpose.xlu0.b32.cont [13/16] 0.0, 128
      %3536 = vxpose.xlu0.b32.cont [14/16] 0.0, 128
      %3537 = vxpose.xlu0.b32.cont [15/16] 0.0, 128
      %3538 = vxpose.xlu0.b32.end [16/16] 0.0, 128
      %v3539 = vpop.trf.xlu0
      %v3540 = vpop.trf.xlu0
      %v3541 = vpop.trf.xlu0
      %v3542 = vpop.trf.xlu0
      %v3543 = vpop.trf.xlu0
      %v3544 = vpop.trf.xlu0
      %v3545 = vpop.trf.xlu0
      %v3546 = vpop.trf.xlu0
      %v3547 = vpop.trf.xlu0
      %v3548 = vpop.trf.xlu0
      %v3549 = vpop.trf.xlu0
      %v3550 = vpop.trf.xlu0
      %v3551 = vpop.trf.xlu0
      %v3552 = vpop.trf.xlu0
      %v3553 = vpop.trf.xlu0
      %v3554 = vpop.trf.xlu0
      %3555 = vxpose.xlu0.b32.start [1/16] %v3456, 128
      %3556 = vxpose.xlu0.b32.cont [2/16] 0.0, 128
      %3557 = vxpose.xlu0.b32.cont [3/16] 0.0, 128
      %3558 = vxpose.xlu0.b32.cont [4/16] 0.0, 128
      %3559 = vxpose.xlu0.b32.cont [5/16] 0.0, 128
      %3560 = vxpose.xlu0.b32.cont [6/16] 0.0, 128
      %3561 = vxpose.xlu0.b32.cont [7/16] 0.0, 128
      %3562 = vxpose.xlu0.b32.cont [8/16] 0.0, 128
      %3563 = vxpose.xlu0.b32.cont [9/16] 0.0, 128
      %3564 = vxpose.xlu0.b32.cont [10/16] 0.0, 128
      %3565 = vxpose.xlu0.b32.cont [11/16] 0.0, 128
      %3566 = vxpose.xlu0.b32.cont [12/16] 0.0, 128
      %3567 = vxpose.xlu0.b32.cont [13/16] 0.0, 128
      %3568 = vxpose.xlu0.b32.cont [14/16] 0.0, 128
      %3569 = vxpose.xlu0.b32.cont [15/16] 0.0, 128
      %3570 = vxpose.xlu0.b32.end [16/16] 0.0, 128
      %v3571 = vpop.trf.xlu0
      %v3572 = vpop.trf.xlu0
      %v3573 = vpop.trf.xlu0
      %v3574 = vpop.trf.xlu0
      %v3575 = vpop.trf.xlu0
      %v3576 = vpop.trf.xlu0
      %v3577 = vpop.trf.xlu0
      %v3578 = vpop.trf.xlu0
      %v3579 = vpop.trf.xlu0
      %v3580 = vpop.trf.xlu0
      %v3581 = vpop.trf.xlu0
      %v3582 = vpop.trf.xlu0
      %v3583 = vpop.trf.xlu0
      %v3584 = vpop.trf.xlu0
      %v3585 = vpop.trf.xlu0
      %v3586 = vpop.trf.xlu0
      %v3587 = vrot.slane %v3539, 4
      %v3588 = vsel %vm589, %v3587, %v3475
      %v3589 = vrot.slane %v3475, 4
      %v3590 = vsel %vm589, %v3539, %v3589
      %v3592 = vunpack.c.l.s4 1983009808
      %v3593 = vunpack.c.0.s8 %v3592
      %v3594 = vperm.slane %v3588, %v3593
      %v3596 = vunpack.c.l.s4 1983009808
      %v3597 = vunpack.c.0.s8 %v3596
      %v3598 = vperm.slane %v3590, %v3597
      %v3599 = vrot.slane %v3571, 4
      %v3600 = vsel %vm589, %v3599, %v3507
      %v3601 = vrot.slane %v3507, 4
      %v3602 = vsel %vm589, %v3571, %v3601
      %v3604 = vunpack.c.l.s4 1983009808
      %v3605 = vunpack.c.0.s8 %v3604
      %v3606 = vperm.slane %v3600, %v3605
      %v3608 = vunpack.c.l.s4 1983009808
      %v3609 = vunpack.c.0.s8 %v3608
      %v3610 = vperm.slane %v3602, %v3609
      %v3611 = vrot.slane %v3606, 4
      %v3612 = vsel %vm589, %v3611, %v3594
      %v3613 = vrot.slane %v3594, 4
      %v3614 = vsel %vm589, %v3606, %v3613
      %v3616 = vunpack.c.l.s4 1934713408
      %v3617 = vunpack.c.0.s8 %v3616
      %v3618 = vperm.slane %v3612, %v3617
      %v3620 = vunpack.c.l.s4 1934713408
      %v3621 = vunpack.c.0.s8 %v3620
      %v3622 = vperm.slane %v3614, %v3621
      %v3623 = vrot.slane %v3610, 4
      %v3624 = vsel %vm589, %v3623, %v3598
      %v3625 = vrot.slane %v3598, 4
      %v3626 = vsel %vm589, %v3610, %v3625
      %v3628 = vunpack.c.l.s4 1934713408
      %v3629 = vunpack.c.0.s8 %v3628
      %v3630 = vperm.slane %v3624, %v3629
      %v3632 = vunpack.c.l.s4 1934713408
      %v3633 = vunpack.c.0.s8 %v3632
      %v3634 = vperm.slane %v3626, %v3633
      %v3635 = vrot.slane %v3618, 4
      %v3636 = vsel %vm589, 0.0, %v3635
      %v3637 = vrot.slane %v3622, 4
      %v3638 = vsel %vm589, 0.0, %v3637
      %v3639 = vrot.slane %v3630, 4
      %v3640 = vsel %vm589, 0.0, %v3639
      %v3641 = vrot.slane %v3634, 4
      %v3642 = vsel %vm589, 0.0, %v3641
      %v3643 = vrot.slane %v3540, 4
      %v3644 = vsel %vm589, %v3643, %v3476
      %v3645 = vrot.slane %v3476, 4
      %v3646 = vsel %vm589, %v3540, %v3645
      %v3648 = vunpack.c.l.s4 1983009808
      %v3649 = vunpack.c.0.s8 %v3648
      %v3650 = vperm.slane %v3644, %v3649
      %v3652 = vunpack.c.l.s4 1983009808
      %v3653 = vunpack.c.0.s8 %v3652
      %v3654 = vperm.slane %v3646, %v3653
      %v3655 = vrot.slane %v3572, 4
      %v3656 = vsel %vm589, %v3655, %v3508
      %v3657 = vrot.slane %v3508, 4
      %v3658 = vsel %vm589, %v3572, %v3657
      %v3660 = vunpack.c.l.s4 1983009808
      %v3661 = vunpack.c.0.s8 %v3660
      %v3662 = vperm.slane %v3656, %v3661
      %v3664 = vunpack.c.l.s4 1983009808
      %v3665 = vunpack.c.0.s8 %v3664
      %v3666 = vperm.slane %v3658, %v3665
      %v3667 = vrot.slane %v3662, 4
      %v3668 = vsel %vm589, %v3667, %v3650
      %v3669 = vrot.slane %v3650, 4
      %v3670 = vsel %vm589, %v3662, %v3669
      %v3672 = vunpack.c.l.s4 1934713408
      %v3673 = vunpack.c.0.s8 %v3672
      %v3674 = vperm.slane %v3668, %v3673
      %v3676 = vunpack.c.l.s4 1934713408
      %v3677 = vunpack.c.0.s8 %v3676
      %v3678 = vperm.slane %v3670, %v3677
      %v3679 = vrot.slane %v3666, 4
      %v3680 = vsel %vm589, %v3679, %v3654
      %v3681 = vrot.slane %v3654, 4
      %v3682 = vsel %vm589, %v3666, %v3681
      %v3684 = vunpack.c.l.s4 1934713408
      %v3685 = vunpack.c.0.s8 %v3684
      %v3686 = vperm.slane %v3680, %v3685
      %v3688 = vunpack.c.l.s4 1934713408
      %v3689 = vunpack.c.0.s8 %v3688
      %v3690 = vperm.slane %v3682, %v3689
      %v3691 = vrot.slane %v3674, 4
      %v3692 = vsel %vm589, 0.0, %v3691
      %v3693 = vrot.slane %v3678, 4
      %v3694 = vsel %vm589, 0.0, %v3693
      %v3695 = vrot.slane %v3686, 4
      %v3696 = vsel %vm589, 0.0, %v3695
      %v3697 = vrot.slane %v3690, 4
      %v3698 = vsel %vm589, 0.0, %v3697
      %v3699 = vrot.slane %v3541, 4
      %v3700 = vsel %vm589, %v3699, %v3477
      %v3701 = vrot.slane %v3477, 4
      %v3702 = vsel %vm589, %v3541, %v3701
      %v3704 = vunpack.c.l.s4 1983009808
      %v3705 = vunpack.c.0.s8 %v3704
      %v3706 = vperm.slane %v3700, %v3705
      %v3708 = vunpack.c.l.s4 1983009808
      %v3709 = vunpack.c.0.s8 %v3708
      %v3710 = vperm.slane %v3702, %v3709
      %v3711 = vrot.slane %v3573, 4
      %v3712 = vsel %vm589, %v3711, %v3509
      %v3713 = vrot.slane %v3509, 4
      %v3714 = vsel %vm589, %v3573, %v3713
      %v3716 = vunpack.c.l.s4 1983009808
      %v3717 = vunpack.c.0.s8 %v3716
      %v3718 = vperm.slane %v3712, %v3717
      %v3720 = vunpack.c.l.s4 1983009808
      %v3721 = vunpack.c.0.s8 %v3720
      %v3722 = vperm.slane %v3714, %v3721
      %v3723 = vrot.slane %v3718, 4
      %v3724 = vsel %vm589, %v3723, %v3706
      %v3725 = vrot.slane %v3706, 4
      %v3726 = vsel %vm589, %v3718, %v3725
      %v3728 = vunpack.c.l.s4 1934713408
      %v3729 = vunpack.c.0.s8 %v3728
      %v3730 = vperm.slane %v3724, %v3729
      %v3732 = vunpack.c.l.s4 1934713408
      %v3733 = vunpack.c.0.s8 %v3732
      %v3734 = vperm.slane %v3726, %v3733
      %v3735 = vrot.slane %v3722, 4
      %v3736 = vsel %vm589, %v3735, %v3710
      %v3737 = vrot.slane %v3710, 4
      %v3738 = vsel %vm589, %v3722, %v3737
      %v3740 = vunpack.c.l.s4 1934713408
      %v3741 = vunpack.c.0.s8 %v3740
      %v3742 = vperm.slane %v3736, %v3741
      %v3744 = vunpack.c.l.s4 1934713408
      %v3745 = vunpack.c.0.s8 %v3744
      %v3746 = vperm.slane %v3738, %v3745
      %v3747 = vrot.slane %v3730, 4
      %v3748 = vsel %vm589, 0.0, %v3747
      %v3749 = vrot.slane %v3734, 4
      %v3750 = vsel %vm589, 0.0, %v3749
      %v3751 = vrot.slane %v3742, 4
      %v3752 = vsel %vm589, 0.0, %v3751
      %v3753 = vrot.slane %v3746, 4
      %v3754 = vsel %vm589, 0.0, %v3753
      %v3755 = vsel %vm589, %v3637, %v3618
      %v3757 = vunpack.c.l.s4 1983009808
      %v3758 = vunpack.c.0.s8 %v3757
      %v3759 = vperm.slane %v3755, %v3758
      %v3760 = vrot.slane %v3638, 4
      %v3761 = vsel %vm589, %v3760, %v3636
      %v3763 = vunpack.c.l.s4 1983009808
      %v3764 = vunpack.c.0.s8 %v3763
      %v3765 = vperm.slane %v3761, %v3764
      %v3766 = vsel %vm589, %v3641, %v3630
      %v3768 = vunpack.c.l.s4 1983009808
      %v3769 = vunpack.c.0.s8 %v3768
      %v3770 = vperm.slane %v3766, %v3769
      %v3771 = vrot.slane %v3642, 4
      %v3772 = vsel %vm589, %v3771, %v3640
      %v3774 = vunpack.c.l.s4 1983009808
      %v3775 = vunpack.c.0.s8 %v3774
      %v3776 = vperm.slane %v3772, %v3775
      %v3777 = vrot.slane %v3765, 4
      %v3778 = vsel %vm589, %v3777, %v3759
      %v3779 = vrot.slane %v3759, 4
      %v3780 = vsel %vm589, %v3765, %v3779
      %v3782 = vunpack.c.l.s4 1934713408
      %v3783 = vunpack.c.0.s8 %v3782
      %v3784 = vperm.slane %v3778, %v3783
      %v3786 = vunpack.c.l.s4 1934713408
      %v3787 = vunpack.c.0.s8 %v3786
      %v3788 = vperm.slane %v3780, %v3787
      %v3789 = vrot.slane %v3776, 4
      %v3790 = vsel %vm589, %v3789, %v3770
      %v3791 = vrot.slane %v3770, 4
      %v3792 = vsel %vm589, %v3776, %v3791
      %v3794 = vunpack.c.l.s4 1934713408
      %v3795 = vunpack.c.0.s8 %v3794
      %v3796 = vperm.slane %v3790, %v3795
      %v3798 = vunpack.c.l.s4 1934713408
      %v3799 = vunpack.c.0.s8 %v3798
      %v3800 = vperm.slane %v3792, %v3799
      %v3801 = vrot.slane %v3796, 4
      %v3802 = vsel %vm589, %v3801, %v3784
      %v3803 = vrot.slane %v3784, 4
      %v3804 = vsel %vm589, %v3796, %v3803
      %v3805 = vrot.slane %v3800, 4
      %v3806 = vsel %vm589, %v3805, %v3788
      %v3807 = vrot.slane %v3788, 4
      %v3808 = vsel %vm589, %v3800, %v3807
      %v3809 = vsel %vm589, %v3693, %v3674
      %v3811 = vunpack.c.l.s4 1983009808
      %v3812 = vunpack.c.0.s8 %v3811
      %v3813 = vperm.slane %v3809, %v3812
      %v3814 = vrot.slane %v3694, 4
      %v3815 = vsel %vm589, %v3814, %v3692
      %v3817 = vunpack.c.l.s4 1983009808
      %v3818 = vunpack.c.0.s8 %v3817
      %v3819 = vperm.slane %v3815, %v3818
      %v3820 = vsel %vm589, %v3697, %v3686
      %v3822 = vunpack.c.l.s4 1983009808
      %v3823 = vunpack.c.0.s8 %v3822
      %v3824 = vperm.slane %v3820, %v3823
      %v3825 = vrot.slane %v3698, 4
      %v3826 = vsel %vm589, %v3825, %v3696
      %v3828 = vunpack.c.l.s4 1983009808
      %v3829 = vunpack.c.0.s8 %v3828
      %v3830 = vperm.slane %v3826, %v3829
      %v3831 = vrot.slane %v3819, 4
      %v3832 = vsel %vm589, %v3831, %v3813
      %v3833 = vrot.slane %v3813, 4
      %v3834 = vsel %vm589, %v3819, %v3833
      %v3836 = vunpack.c.l.s4 1934713408
      %v3837 = vunpack.c.0.s8 %v3836
      %v3838 = vperm.slane %v3832, %v3837
      %v3840 = vunpack.c.l.s4 1934713408
      %v3841 = vunpack.c.0.s8 %v3840
      %v3842 = vperm.slane %v3834, %v3841
      %v3843 = vrot.slane %v3830, 4
      %v3844 = vsel %vm589, %v3843, %v3824
      %v3845 = vrot.slane %v3824, 4
      %v3846 = vsel %vm589, %v3830, %v3845
      %v3848 = vunpack.c.l.s4 1934713408
      %v3849 = vunpack.c.0.s8 %v3848
      %v3850 = vperm.slane %v3844, %v3849
      %v3852 = vunpack.c.l.s4 1934713408
      %v3853 = vunpack.c.0.s8 %v3852
      %v3854 = vperm.slane %v3846, %v3853
      %v3855 = vrot.slane %v3850, 4
      %v3856 = vsel %vm589, %v3855, %v3838
      %v3857 = vrot.slane %v3838, 4
      %v3858 = vsel %vm589, %v3850, %v3857
      %v3859 = vrot.slane %v3854, 4
      %v3860 = vsel %vm589, %v3859, %v3842
      %v3861 = vrot.slane %v3842, 4
      %v3862 = vsel %vm589, %v3854, %v3861
      %v3863 = vsel %vm589, %v3749, %v3730
      %v3865 = vunpack.c.l.s4 1983009808
      %v3866 = vunpack.c.0.s8 %v3865
      %v3867 = vperm.slane %v3863, %v3866
      %v3868 = vrot.slane %v3750, 4
      %v3869 = vsel %vm589, %v3868, %v3748
      %v3871 = vunpack.c.l.s4 1983009808
      %v3872 = vunpack.c.0.s8 %v3871
      %v3873 = vperm.slane %v3869, %v3872
      %v3874 = vsel %vm589, %v3753, %v3742
      %v3876 = vunpack.c.l.s4 1983009808
      %v3877 = vunpack.c.0.s8 %v3876
      %v3878 = vperm.slane %v3874, %v3877
      %v3879 = vrot.slane %v3754, 4
      %v3880 = vsel %vm589, %v3879, %v3752
      %v3882 = vunpack.c.l.s4 1983009808
      %v3883 = vunpack.c.0.s8 %v3882
      %v3884 = vperm.slane %v3880, %v3883
      %v3885 = vrot.slane %v3873, 4
      %v3886 = vsel %vm589, %v3885, %v3867
      %v3887 = vrot.slane %v3867, 4
      %v3888 = vsel %vm589, %v3873, %v3887
      %v3890 = vunpack.c.l.s4 1934713408
      %v3891 = vunpack.c.0.s8 %v3890
      %v3892 = vperm.slane %v3886, %v3891
      %v3894 = vunpack.c.l.s4 1934713408
      %v3895 = vunpack.c.0.s8 %v3894
      %v3896 = vperm.slane %v3888, %v3895
      %v3897 = vrot.slane %v3884, 4
      %v3898 = vsel %vm589, %v3897, %v3878
      %v3899 = vrot.slane %v3878, 4
      %v3900 = vsel %vm589, %v3884, %v3899
      %v3902 = vunpack.c.l.s4 1934713408
      %v3903 = vunpack.c.0.s8 %v3902
      %v3904 = vperm.slane %v3898, %v3903
      %v3906 = vunpack.c.l.s4 1934713408
      %v3907 = vunpack.c.0.s8 %v3906
      %v3908 = vperm.slane %v3900, %v3907
      %v3909 = vrot.slane %v3904, 4
      %v3910 = vsel %vm589, %v3909, %v3892
      %v3911 = vrot.slane %v3892, 4
      %v3912 = vsel %vm589, %v3904, %v3911
      %v3913 = vrot.slane %v3908, 4
      %v3914 = vsel %vm589, %v3913, %v3896
      %v3915 = vrot.slane %v3896, 4
      %v3916 = vsel %vm589, %v3908, %v3915
      %3920 = vrot.lane.b32.xlu0 %v3804, 8
      %v3921 = vpop.permute.xlu0 %3920
      %3922 = vrot.lane.b32.xlu0 %v3858, 8
      %v3923 = vpop.permute.xlu0 %3922
      %3924 = vrot.lane.b32.xlu0 %v3912, 8
      %v3925 = vpop.permute.xlu0 %3924
      %3932 = vrot.lane.b32.xlu0 %v3806, 16
      %v3933 = vpop.permute.xlu0 %3932
      %3934 = vrot.lane.b32.xlu0 %v3860, 16
      %v3935 = vpop.permute.xlu0 %3934
      %3936 = vrot.lane.b32.xlu0 %v3914, 16
      %v3937 = vpop.permute.xlu0 %3936
      %3944 = vrot.lane.b32.xlu0 %v3808, 24
      %v3945 = vpop.permute.xlu0 %3944
      %3946 = vrot.lane.b32.xlu0 %v3862, 24
      %v3947 = vpop.permute.xlu0 %3946
      %3948 = vrot.lane.b32.xlu0 %v3916, 24
      %v3949 = vpop.permute.xlu0 %3948
      %v3953 = vsel %vm2225, %v3802, %v3921
      %v3954 = vsel %vm2225, %v3856, %v3923
      %v3955 = vsel %vm2225, %v3910, %v3925
      %vm3956 = vcmask 130048
      %v3957 = vsel %vm3956, %v3953, %v3933
      %v3958 = vsel %vm3956, %v3954, %v3935
      %v3959 = vsel %vm3956, %v3955, %v3937
      %v3960 = vsel %vm2374, %v3957, %v3945
      %v3961 = vsel %vm2374, %v3958, %v3947
      %v3962 = vsel %vm2374, %v3959, %v3949
      %v3963 = vpack.c.bf16 %v3961, %v3960
      %v3964 = vpack.c.bf16 %v3962, %v3962
      %v3965 = vperm.slane %v432, 0
      %v3970 = vunpack.c.l.b16 %v403
      %v3971 = vunpack.c.l.b16 %v404
      %v3972 = vunpack.c.l.b16 %v405
      %v3973 = vunpack.c.l.b16 %v406
      %v3974 = vpack.c.b16 %v3971, %v3970
      %v3975 = vpack.c.b16 %v3973, %v3972
      %v3979 = vsel %vm437, %v3963, 0
      %v3982 = vsel %vm437, %v3964, 0
      %3984 = vmatpush.bf16.msra.mxu0 0
      %3985 = vmatpush.bf16.msra.mxu0 0
      %3986 = vmatpush.bf16.msra.mxu0 0
      %3987 = vmatpush.bf16.msra.mxu0 0
      %3988 = vmatpush.bf16.msra.mxu0 0
      %3989 = vmatpush.bf16.msra.mxu0 0
      %3990 = vmatpush.bf16.msra.mxu0 %v3975
      %3991 = vmatpush.bf16.msra.mxu0 %v3974
      %3992 = vmatmul.bf16.gmra.mxu0 %v3979
      %v3993 = vpop.f32.mrf.mxu0
      %v3994 = vadd.f32 %v3965, %v3993
      %v3995 = vpop.f32.mrf.mxu0
      %v3996 = vadd.f32 %v3965, %v3995
      %3997 = vmatmul.bf16.gmra.mxu0 %v3982
      %v3998 = vpop.f32.mrf.mxu0
      %v3999 = vadd.f32 %v3965, %v3998
      %v4000 = vpop.f32.mrf.mxu0
      %4001 = vdwg.mxu0
      %v4002 = vadd.f32 %v385, %v3994
      %v4003 = vadd.f32 %v386, %v3996
      %v4004 = vadd.f32 %v387, %v3999
      %v4005 = vsel %vm437, %v4002, 0.0
      %4006 = vadd.xlane.f32.xlu0 %v4005
      %v4007 = vpop.xlane.xlu0 %4006
      %v4008 = vsel %vm437, %v4003, 0.0
      %4009 = vadd.xlane.f32.xlu0 %v4008
      %v4010 = vpop.xlane.xlu0 %4009
      %v4011 = vsel %vm437, %v4004, 0.0
      %4012 = vadd.xlane.f32.xlu0 %v4011
      %v4013 = vpop.xlane.xlu0 %4012
      %v4014 = vmul.f32 %v4007, %v453
      %v4015 = vmul.f32 %v4010, %v453
      %v4016 = vmul.f32 %v4013, %v453
      %v4017 = vsub.f32 %v4002, %v4014
      %v4018 = vsub.f32 %v4003, %v4015
      %v4019 = vsub.f32 %v4004, %v4016
      %v4020 = vmul.f32 %v4017, %v4017
      %v4021 = vmul.f32 %v4018, %v4018
      %v4022 = vmul.f32 %v4019, %v4019
      %v4023 = vsel %vm437, %v4020, 0.0
      %4024 = vadd.xlane.f32.xlu0 %v4023
      %v4025 = vpop.xlane.xlu0 %4024
      %v4026 = vsel %vm437, %v4021, 0.0
      %4027 = vadd.xlane.f32.xlu0 %v4026
      %v4028 = vpop.xlane.xlu0 %4027
      %v4029 = vsel %vm437, %v4022, 0.0
      %4030 = vadd.xlane.f32.xlu0 %v4029
      %v4031 = vpop.xlane.xlu0 %4030
      %v4032 = vmul.f32 %v4025, %v453
      %v4033 = vmul.f32 %v4028, %v453
      %v4034 = vmul.f32 %v4031, %v453
      %v4035 = vadd.f32 %v4032, 1e-06
      %v4036 = vadd.f32 %v4033, 1e-06
      %v4037 = vadd.f32 %v4034, 1e-06
      %v4038 = vrsqrt.pop %v4035
      %v4039 = vmul.f32 %v4038, %v4035
      %v4040 = vmul.f32 %v4039, %v4038
      %v4041 = vmul.f32 0.5, %v4040
      %v4042 = vsub.f32 1.5, %v4041
      %v4043 = vmul.f32 %v4038, %v4042
      %vm4044 = vweird.f32 %v4035
      %vm4045 = vweird.f32 %v4038
      %vm4046 = vmor %vm4044, %vm4045
      %v4047 = vsel %vm4046, %v4038, %v4043
      %v4048 = vrsqrt.pop %v4036
      %v4049 = vmul.f32 %v4048, %v4036
      %v4050 = vmul.f32 %v4049, %v4048
      %v4051 = vmul.f32 0.5, %v4050
      %v4052 = vsub.f32 1.5, %v4051
      %v4053 = vmul.f32 %v4048, %v4052
      %vm4054 = vweird.f32 %v4036
      %vm4055 = vweird.f32 %v4048
      %vm4056 = vmor %vm4054, %vm4055
      %v4057 = vsel %vm4056, %v4048, %v4053
      %v4058 = vrsqrt.pop %v4037
      %v4059 = vmul.f32 %v4058, %v4037
      %v4060 = vmul.f32 %v4059, %v4058
      %v4061 = vmul.f32 0.5, %v4060
      %v4062 = vsub.f32 1.5, %v4061
      %v4063 = vmul.f32 %v4058, %v4062
      %vm4064 = vweird.f32 %v4037
      %vm4065 = vweird.f32 %v4058
      %vm4066 = vmor %vm4064, %vm4065
      %v4067 = vsel %vm4066, %v4058, %v4063
      %v4068 = vmul.f32 %v4017, %v4047
      %v4069 = vmul.f32 %v4018, %v4057
      %v4070 = vmul.f32 %v4019, %v4067
      %v4071 = vperm.slane %v433, 0
      %v4072 = vmul.f32 %v4068, %v4071
      %v4073 = vmul.f32 %v4069, %v4071
      %v4074 = vmul.f32 %v4070, %v4071
      %v4075 = vperm.slane %v434, 0
      %v4076 = vadd.f32 %v4072, %v4075
      %v4077 = vadd.f32 %v4073, %v4075
      %v4078 = vadd.f32 %v4074, %v4075
      %v4079 = vpack.c.bf16 %v4077, %v4076
      %v4080 = vpack.c.bf16 %v4078, %v4078
      %v4081 = vperm.slane %v435, 0
      %v4086 = vunpack.c.l.b16 %v407
      %v4087 = vunpack.c.l.b16 %v408
      %v4088 = vunpack.c.l.b16 %v409
      %v4089 = vunpack.c.l.b16 %v410
      %v4090 = vpack.c.b16 %v4087, %v4086
      %v4091 = vpack.c.b16 %v4089, %v4088
      %v4095 = vsel %vm437, %v4079, 0
      %v4098 = vsel %vm437, %v4080, 0
      %4100 = vmatpush.bf16.msra.mxu0 0
      %4101 = vmatpush.bf16.msra.mxu0 0
      %4102 = vmatpush.bf16.msra.mxu0 0
      %4103 = vmatpush.bf16.msra.mxu0 0
      %4104 = vmatpush.bf16.msra.mxu0 0
      %4105 = vmatpush.bf16.msra.mxu0 0
      %4106 = vmatpush.bf16.msra.mxu0 %v4091
      %4107 = vmatpush.bf16.msra.mxu0 %v4090
      %4108 = vmatmul.bf16.gmra.mxu0 %v4095
      %v4109 = vpop.f32.mrf.mxu0
      %v4110 = vadd.f32 %v4081, %v4109
      %v4111 = vpop.f32.mrf.mxu0
      %v4112 = vadd.f32 %v4081, %v4111
      %4113 = vmatmul.bf16.gmra.mxu0 %v4098
      %v4114 = vpop.f32.mrf.mxu0
      %v4115 = vadd.f32 %v4081, %v4114
      %v4116 = vpop.f32.mrf.mxu0
      %4117 = vdwg.mxu0
      %v4118 = vmul.f32 %v4110, 0.5
      %v4119 = vmul.f32 %v4112, 0.5
      %v4120 = vmul.f32 %v4115, 0.5
      %v4121 = vmul.f32 %v4110, 0.044715
      %v4122 = vmul.f32 %v4112, 0.044715
      %v4123 = vmul.f32 %v4115, 0.044715
      %v4124 = vmul.f32 %v4121, %v4110
      %v4125 = vmul.f32 %v4122, %v4112
      %v4126 = vmul.f32 %v4123, %v4115
      %v4127 = vmul.f32 %v4124, %v4110
      %v4128 = vmul.f32 %v4125, %v4112
      %v4129 = vmul.f32 %v4126, %v4115
      %v4130 = vadd.f32 %v4110, %v4127
      %v4131 = vadd.f32 %v4112, %v4128
      %v4132 = vadd.f32 %v4115, %v4129
      %v4133 = vmul.f32 %v4130, 0.7978846
      %v4134 = vmul.f32 %v4131, 0.7978846
      %v4135 = vmul.f32 %v4132, 0.7978846
      %v4136 = vtanh.pop %v4133
      %v4137 = vtanh.pop %v4134
      %v4138 = vtanh.pop %v4135
      %v4139 = vadd.f32 %v4136, 1.0
      %v4140 = vadd.f32 %v4137, 1.0
      %v4141 = vadd.f32 %v4138, 1.0
      %v4142 = vmul.f32 %v4118, %v4139
      %v4143 = vmul.f32 %v4119, %v4140
      %v4144 = vmul.f32 %v4120, %v4141
      %v4145 = vpack.c.bf16 %v4143, %v4142
      %v4146 = vpack.c.bf16 %v4144, %v4144
      %v4147 = vperm.slane %v436, 0
      %v4164 = vunpack.c.l.b16 %v411
      %v4165 = vunpack.c.l.b16 %v412
      %v4166 = vunpack.c.l.b16 %v413
      %v4167 = vunpack.c.l.b16 %v414
      %v4168 = vunpack.c.l.b16 %v415
      %v4169 = vunpack.c.l.b16 %v416
      %v4170 = vunpack.c.l.b16 %v417
      %v4171 = vunpack.c.l.b16 %v418
      %v4172 = vunpack.c.l.b16 %v419
      %v4173 = vunpack.c.l.b16 %v420
      %v4174 = vunpack.c.l.b16 %v421
      %v4175 = vunpack.c.l.b16 %v422
      %v4176 = vunpack.c.l.b16 %v423
      %v4177 = vunpack.c.l.b16 %v424
      %v4178 = vunpack.c.l.b16 %v425
      %v4179 = vunpack.c.l.b16 %v426
      %v4180 = vpack.c.b16 %v4165, %v4164
      %v4181 = vpack.c.b16 %v4167, %v4166
      %v4182 = vpack.c.b16 %v4169, %v4168
      %v4183 = vpack.c.b16 %v4171, %v4170
      %v4184 = vpack.c.b16 %v4173, %v4172
      %v4185 = vpack.c.b16 %v4175, %v4174
      %v4186 = vpack.c.b16 %v4177, %v4176
      %v4187 = vpack.c.b16 %v4179, %v4178
      %4196 = vmatpush.bf16.msra.mxu0 %v4187
      %4197 = vmatpush.bf16.msra.mxu0 %v4186
      %4198 = vmatpush.bf16.msra.mxu0 %v4185
      %4199 = vmatpush.bf16.msra.mxu0 %v4184
      %4200 = vmatpush.bf16.msra.mxu0 %v4183
      %4201 = vmatpush.bf16.msra.mxu0 %v4182
      %4202 = vmatpush.bf16.msra.mxu0 %v4181
      %4203 = vmatpush.bf16.msra.mxu0 %v4180
      %4204 = vmatmul.bf16.gmra.mxu0 %v4145
      %v4205 = vpop.f32.mrf.mxu0
      %v4206 = vadd.f32 %v4147, %v4205
      %v4207 = vpop.f32.mrf.mxu0
      %v4208 = vadd.f32 %v4147, %v4207
      %4209 = vmatmul.bf16.gmra.mxu0 %v4146
      %v4210 = vpop.f32.mrf.mxu0
      %v4211 = vadd.f32 %v4147, %v4210
      %v4212 = vpop.f32.mrf.mxu0
      %4213 = vdwg.mxu0
      %v4214 = vadd.f32 %v4002, %v4206
      %v4215 = vadd.f32 %v4003, %v4208
      %v4216 = vadd.f32 %v4004, %v4211
      %v4217 = vld [vmem:[%s4 + $0xa] sm:$0x1]
      %v4218 = vld [vmem:[%s4 + $0xb] sm:$0x1]
      %v4219 = vsel %vm437, %v4214, 0.0
      %4220 = vadd.xlane.f32.xlu0 %v4219
      %v4221 = vpop.xlane.xlu0 %4220
      %v4222 = vsel %vm437, %v4215, 0.0
      %4223 = vadd.xlane.f32.xlu0 %v4222
      %v4224 = vpop.xlane.xlu0 %4223
      %v4225 = vsel %vm437, %v4216, 0.0
      %4226 = vadd.xlane.f32.xlu0 %v4225
      %v4227 = vpop.xlane.xlu0 %4226
      %v4228 = vmul.f32 %v4221, %v453
      %v4229 = vmul.f32 %v4224, %v453
      %v4230 = vmul.f32 %v4227, %v453
      %v4231 = vsub.f32 %v4214, %v4228
      %v4232 = vsub.f32 %v4215, %v4229
      %v4233 = vsub.f32 %v4216, %v4230
      %v4234 = vmul.f32 %v4231, %v4231
      %v4235 = vmul.f32 %v4232, %v4232
      %v4236 = vmul.f32 %v4233, %v4233
      %v4237 = vsel %vm437, %v4234, 0.0
      %4238 = vadd.xlane.f32.xlu0 %v4237
      %v4239 = vpop.xlane.xlu0 %4238
      %v4240 = vsel %vm437, %v4235, 0.0
      %4241 = vadd.xlane.f32.xlu0 %v4240
      %v4242 = vpop.xlane.xlu0 %4241
      %v4243 = vsel %vm437, %v4236, 0.0
      %4244 = vadd.xlane.f32.xlu0 %v4243
      %v4245 = vpop.xlane.xlu0 %4244
      %v4246 = vmul.f32 %v4239, %v453
      %v4247 = vmul.f32 %v4242, %v453
      %v4248 = vmul.f32 %v4245, %v453
      %v4249 = vadd.f32 %v4246, 1e-06
      %v4250 = vadd.f32 %v4247, 1e-06
      %v4251 = vadd.f32 %v4248, 1e-06
      %v4252 = vrsqrt.pop %v4249
      %v4253 = vmul.f32 %v4252, %v4249
      %v4254 = vmul.f32 %v4253, %v4252
      %v4255 = vmul.f32 0.5, %v4254
      %v4256 = vsub.f32 1.5, %v4255
      %v4257 = vmul.f32 %v4252, %v4256
      %vm4258 = vweird.f32 %v4249
      %vm4259 = vweird.f32 %v4252
      %vm4260 = vmor %vm4258, %vm4259
      %v4261 = vsel %vm4260, %v4252, %v4257
      %v4262 = vrsqrt.pop %v4250
      %v4263 = vmul.f32 %v4262, %v4250
      %v4264 = vmul.f32 %v4263, %v4262
      %v4265 = vmul.f32 0.5, %v4264
      %v4266 = vsub.f32 1.5, %v4265
      %v4267 = vmul.f32 %v4262, %v4266
      %vm4268 = vweird.f32 %v4250
      %vm4269 = vweird.f32 %v4262
      %vm4270 = vmor %vm4268, %vm4269
      %v4271 = vsel %vm4270, %v4262, %v4267
      %v4272 = vrsqrt.pop %v4251
      %v4273 = vmul.f32 %v4272, %v4251
      %v4274 = vmul.f32 %v4273, %v4272
      %v4275 = vmul.f32 0.5, %v4274
      %v4276 = vsub.f32 1.5, %v4275
      %v4277 = vmul.f32 %v4272, %v4276
      %vm4278 = vweird.f32 %v4251
      %vm4279 = vweird.f32 %v4272
      %vm4280 = vmor %vm4278, %vm4279
      %v4281 = vsel %vm4280, %v4272, %v4277
      %v4282 = vmul.f32 %v4231, %v4261
      %v4283 = vmul.f32 %v4232, %v4271
      %v4284 = vmul.f32 %v4233, %v4281
      %v4285 = vperm.slane %v4217, 0
      %v4286 = vmul.f32 %v4282, %v4285
      %v4287 = vmul.f32 %v4283, %v4285
      %v4288 = vmul.f32 %v4284, %v4285
      %v4289 = vperm.slane %v4218, 0
      %v4290 = vadd.f32 %v4286, %v4289
      %v4291 = vadd.f32 %v4287, %v4289
      %v4292 = vadd.f32 %v4288, %v4289
      %v4293 = vld [vmem:[%s4 + $0xc] sm:$0x1]
      %v4294 = vpack.c.bf16 %v4291, %v4290
      %v4295 = vpack.c.bf16 %v4292, %v4292
      %v4296 = vld [vmem:[%s5] sm:$0xf]
      %v4297 = vld [vmem:[%s5 + $0x4] sm:$0xf]
      %v4298 = vld [vmem:[%s5 + $0x8] sm:$0xf]
      %v4299 = vld [vmem:[%s5 + $0xc] sm:$0xf]
      %v4300 = vperm.slane %v4293, 0
      %v4305 = vunpack.c.l.b16 %v4296
      %v4306 = vunpack.c.l.b16 %v4297
      %v4307 = vunpack.c.l.b16 %v4298
      %v4308 = vunpack.c.l.b16 %v4299
      %v4309 = vpack.c.b16 %v4306, %v4305
      %v4310 = vpack.c.b16 %v4308, %v4307
      %v4314 = vsel %vm437, %v4294, 0
      %v4317 = vsel %vm437, %v4295, 0
      %4319 = vmatpush.bf16.msra.mxu0 0
      %4320 = vmatpush.bf16.msra.mxu0 0
      %4321 = vmatpush.bf16.msra.mxu0 0
      %4322 = vmatpush.bf16.msra.mxu0 0
      %4323 = vmatpush.bf16.msra.mxu0 0
      %4324 = vmatpush.bf16.msra.mxu0 0
      %4325 = vmatpush.bf16.msra.mxu0 %v4310
      %4326 = vmatpush.bf16.msra.mxu0 %v4309
      %4327 = vmatmul.bf16.gmra.mxu0 %v4314
      %v4328 = vpop.f32.mrf.mxu0
      %v4329 = vadd.f32 %v4300, %v4328
      %v4330 = vpop.f32.mrf.mxu0
      %v4331 = vadd.f32 %v4300, %v4330
      %4332 = vmatmul.bf16.gmra.mxu0 %v4317
      %v4333 = vpop.f32.mrf.mxu0
      %v4334 = vadd.f32 %v4300, %v4333
      %v4335 = vpop.f32.mrf.mxu0
      %4336 = vdwg.mxu0
      %4337 = vst [vmem:[%s379] sm:$0xff] %v4329
      %4338 = vst [vmem:[%s379 + $0x8] sm:$0xff] %v4331
      %4339 = vst [vmem:[%s379 + $0x10] sm:$0xff] %v4334
      %v4340 = vld [vmem:[%s369] sm:$0xff]
      %v4341 = vld [vmem:[%s369 + $0x8] sm:$0xff]
      %v4342 = vld [vmem:[%s369 + $0x10] sm:$0xff]
      %v4343 = vld [vmem:[%s374] sm:$0xff]
      %v4344 = vld [vmem:[%s374 + $0x8] sm:$0xff]
      %v4345 = vld [vmem:[%s374 + $0x10] sm:$0xff]
      %vm4346 = vcmp.lt.s32.totalorder %v1216, 48
      %4347 = vadd.xlane.f32.xlu0 %v4340
      %v4348 = vpop.xlane.xlu0 %4347
      %4349 = vadd.xlane.f32.xlu0 %v4341
      %v4350 = vpop.xlane.xlu0 %4349
      %4351 = vadd.xlane.f32.xlu0 %v4342
      %v4352 = vpop.xlane.xlu0 %4351
      %v4353 = vmul.f32 %v4348, 0.020833334
      %v4354 = vmul.f32 %v4350, 0.020833334
      %v4355 = vmul.f32 %v4352, 0.020833334
      %v4356 = vsub.f32 %v4340, %v4353
      %v4357 = vsub.f32 %v4341, %v4354
      %v4358 = vsub.f32 %v4342, %v4355
      %v4359 = vsel %vm4346, 1, 0
      %vm4360 = vcmp.eq.s32.totalorder %v4359, 1
      %v4361 = vsel %vm4360, %v4356, 0.0
      %v4362 = vsel %vm4360, %v4357, 0.0
      %v4363 = vsel %vm4360, %v4358, 0.0
      %v4364 = vmul.f32 %v4361, %v4361
      %v4365 = vmul.f32 %v4362, %v4362
      %v4366 = vmul.f32 %v4363, %v4363
      %4367 = vadd.xlane.f32.xlu0 %v4364
      %v4368 = vpop.xlane.xlu0 %4367
      %4369 = vadd.xlane.f32.xlu0 %v4365
      %v4370 = vpop.xlane.xlu0 %4369
      %4371 = vadd.xlane.f32.xlu0 %v4366
      %v4372 = vpop.xlane.xlu0 %4371
      %v4373 = vmul.f32 %v4368, 0.021276595
      %v4374 = vmul.f32 %v4370, 0.021276595
      %v4375 = vmul.f32 %v4372, 0.021276595
      %v4376 = vadd.f32 %v4373, 1e-06
      %v4377 = vadd.f32 %v4374, 1e-06
      %v4378 = vadd.f32 %v4375, 1e-06
      %v4379 = vrsqrt.pop %v4376
      %v4380 = vmul.f32 %v4379, %v4376
      %v4381 = vmul.f32 %v4380, %v4379
      %v4382 = vmul.f32 0.5, %v4381
      %v4383 = vsub.f32 1.5, %v4382
      %v4384 = vmul.f32 %v4379, %v4383
      %vm4385 = vweird.f32 %v4376
      %vm4386 = vweird.f32 %v4379
      %vm4387 = vmor %vm4385, %vm4386
      %v4388 = vsel %vm4387, %v4379, %v4384
      %v4389 = vrsqrt.pop %v4377
      %v4390 = vmul.f32 %v4389, %v4377
      %v4391 = vmul.f32 %v4390, %v4389
      %v4392 = vmul.f32 0.5, %v4391
      %v4393 = vsub.f32 1.5, %v4392
      %v4394 = vmul.f32 %v4389, %v4393
      %vm4395 = vweird.f32 %v4377
      %vm4396 = vweird.f32 %v4389
      %vm4397 = vmor %vm4395, %vm4396
      %v4398 = vsel %vm4397, %v4389, %v4394
      %v4399 = vrsqrt.pop %v4378
      %v4400 = vmul.f32 %v4399, %v4378
      %v4401 = vmul.f32 %v4400, %v4399
      %v4402 = vmul.f32 0.5, %v4401
      %v4403 = vsub.f32 1.5, %v4402
      %v4404 = vmul.f32 %v4399, %v4403
      %vm4405 = vweird.f32 %v4378
      %vm4406 = vweird.f32 %v4399
      %vm4407 = vmor %vm4405, %vm4406
      %v4408 = vsel %vm4407, %v4399, %v4404
      %v4409 = vmul.f32 %v4361, %v4388
      %v4410 = vmul.f32 %v4362, %v4398
      %v4411 = vmul.f32 %v4363, %v4408
      %v4412 = vsub.f32 %v4329, %v4409
      %v4413 = vsub.f32 %v4331, %v4410
      %v4414 = vsub.f32 %v4334, %v4411
      %v4415 = vmul.f32 %v4412, %v4412
      %v4416 = vmul.f32 %v4413, %v4413
      %v4417 = vmul.f32 %v4414, %v4414
      %4418 = vadd.xlane.f32.xlu0 %v4415
      %v4419 = vpop.xlane.xlu0 %4418
      %4420 = vadd.xlane.f32.xlu0 %v4416
      %v4421 = vpop.xlane.xlu0 %4420
      %4422 = vadd.xlane.f32.xlu0 %v4417
      %v4423 = vpop.xlane.xlu0 %4422
      %v4424 = vmul.f32 %v4419, 0.020833334
      %v4425 = vmul.f32 %v4421, 0.020833334
      %v4426 = vmul.f32 %v4423, 0.020833334
      %v4427 = vmul.f32 %v4424, %v4343
      %v4428 = vmul.f32 %v4425, %v4344
      %v4429 = vmul.f32 %v4426, %v4345
      %vm4430 = vcmask 7168
      %v4431 = vsel %vm4430, %v4427, 0.0
      %v4432 = vsel %vm4430, %v4428, 0.0
      %v4433 = vadd.f32 %v4431, %v4432
      %v4434 = vsel %vm4430, %v4429, 0.0
      %v4435 = vadd.f32 %v4433, %v4434
      %4436 = vadd.xlane.f32.xlu0 %v4435
      %v4437 = vpop.xlane.xlu0 %4436
      %v4438 = vrot.slane %v4437, 4
      %v4439 = vadd.f32 %v4437, %v4438
      %v4440 = vrot.slane %v4439, 2
      %v4441 = vadd.f32 %v4439, %v4440
      %v4442 = vrot.slane %v4441, 1
      %v4443 = vadd.f32 %v4441, %v4442
      %s4444 = vtos %v4443
      %v4445 = vsel %vm4430, %v4343, 0.0
      %v4446 = vsel %vm4430, %v4344, 0.0
      %v4447 = vadd.f32 %v4445, %v4446
      %v4448 = vsel %vm4430, %v4345, 0.0
      %v4449 = vadd.f32 %v4447, %v4448
      %4450 = vadd.xlane.f32.xlu0 %v4449
      %v4451 = vpop.xlane.xlu0 %4450
      %v4452 = vrot.slane %v4451, 4
      %v4453 = vadd.f32 %v4451, %v4452
      %v4454 = vrot.slane %v4453, 2
      %v4455 = vadd.f32 %v4453, %v4454
      %v4456 = vrot.slane %v4455, 1
      %v4457 = vadd.f32 %v4455, %v4456
      %s4458 = vtos %v4457
      %vm4459 = vcmp.eq.s32.totalorder %v1216, 0
      %v4460 = vstv %s4444
      %v4461 = vsel %vm4459, %v4460, 0.0
      %vm4462 = vcmp.eq.s32.totalorder %v1216, 1
      %v4463 = vstv %s4458
      %v4464 = vsel %vm4462, %v4463, 0.0
      %v4465 = vadd.f32 %v4461, %v4464
      %4466 = vst [vmem:[%s383] sm:$0xff] %v4465
      %p4467 = scmp.lt.s32.totalorder %s21, 1
      %s4468 = scalar_select %p4467, %s21, 1
      %s4469 = smul.addr %s4468, 3
      %s4470 = smul.addr %s4469, 8
      %s4471 = scalar_lea.vmem %s8, %s4470
      %p4472 = scmp.lt.s32.totalorder %s21, 1
      %s4473 = scalar_select %p4472, %s21, 1
      %s4474 = smul.addr %s4473, 8
      %s4475 = scalar_lea.vmem %s9, %s4474
      // Predicated region
      $region53: #{_lambda_.3} parent=51 // pred_check
        %p4476 = pneg %p222
      $region54: #{_lambda_.3} parent=51 // pred_check_branch
        %4478 = sbr.rel (%p4476) target = $region56
      $region55: #{_lambda_.3} parent=51 // pred_region
        _
      $region56: #{_lambda_.3} parent=51 // pred_fallthru
        _
      // Predicated region
      $region57: #{_lambda_.3} parent=51 // pred_check
        %p4479 = pneg %p248
      $region58: #{_lambda_.3} parent=51 // pred_check_branch
        %4481 = sbr.rel (%p4479) target = $region60
      $region59: #{_lambda_.3} parent=51 // pred_region
        _
      $region60: #{_lambda_.3} parent=51 // pred_fallthru
        _
    $region52: #{_lambda_.3} parent=5 // pred_fallthru
      _
    %p4482 = scmp.le.s32.totalorder 2, %s16
    // Predicated region
    $region61: #{_lambda_.3} parent=5 // pred_check
      %p4483 = pneg %p4482
    $region62: #{_lambda_.3} parent=5 // pred_check_branch
      %4485 = sbr.rel (%p4483) target = $region64
    $region63: #{_lambda_.3} parent=5 // pred_region
      %s4486 = ssub.s32 %s16, 2
      // Predicated region
      $region65: #{_lambda_.3} parent=63 // pred_check
        %p4487 = pneg %p228
      $region66: #{_lambda_.3} parent=63 // pred_check_branch
        %4489 = sbr.rel (%p4487) target = $region68
      $region67: #{_lambda_.3} parent=63 // pred_region
        %p4490 = scmp.lt.s32.totalorder %s22, 1
        %s4491 = scalar_select %p4490, %s22, 1
        %s4492 = smul.addr %s4491, 3
        %s4493 = smul.addr %s4492, 8
        %s4494 = scalar_lea.vmem %s8, %s4493
      $region68: #{_lambda_.3} parent=63 // pred_fallthru
        _
      // Predicated region
      $region69: #{_lambda_.3} parent=63 // pred_check
        %p4495 = pneg %p254
      $region70: #{_lambda_.3} parent=63 // pred_check_branch
        %4497 = sbr.rel (%p4495) target = $region72
      $region71: #{_lambda_.3} parent=63 // pred_region
        %p4498 = scmp.lt.s32.totalorder %s22, 1
        %s4499 = scalar_select %p4498, %s22, 1
        %s4500 = smul.addr %s4499, 8
        %s4501 = scalar_lea.vmem %s9, %s4500
      $region72: #{_lambda_.3} parent=63 // pred_fallthru
        _
    $region64: #{_lambda_.3} parent=5 // pred_fallthru
      _
  $region6: #{_lambda_.3} parent=0 // loop_footer
    %s20 = sadd.s32 1, %s16
  $region7: #{_lambda_.3} parent=0 // loop_footer_branch
    %15 = sbr.rel target = $region3
  $region8: #{_lambda_.3} parent=0 // loop_exit
    _

</llo_original>
